<compile_context>
chip_gen: v7x
topology: tpu7x:2x2x1
jax: 0.10.0
libtpu: 0.0.40
codegen_flags: <defaults>
</compile_context>

<pallas_src>
import jax
import jax.numpy as jnp
from jax.experimental import pallas as pl
from jax.experimental.pallas import tpu as pltpu

# ----------------------------- config (small) --------------------------------
B = 2           # batch
L = 8           # word-level length
LP = 10         # sub-word (bert piece) length  L'
H = 32          # bert_hid_size / feature_dim
LSTM_HID = 32   # lstm_hid_size (bidirectional total)
DIST_EMB = 8    # dist_emb_size
TYPE_EMB = 8    # type_emb_size
CONV_HID = 16   # conv_hid_size
DILATIONS = (1, 2)
BIAFFINE = 16
FFNN_HID = 16
LABEL_NUM = 4
IMG_C, IMG_H, IMG_W = 1, 8, 8
PIN_VOCAB = 30
PIN_DIM = 16
BERT_VOCAB = 50
HD = LSTM_HID // 2


# ----------------------------- BlockSpec helpers -----------------------------
def _bspec(shape):
    """Per-batch block: (1, *rest), grid axis 0 indexes batch."""
    rest = tuple(int(s) for s in shape[1:])
    zeros = (0,) * len(rest)
    return pl.BlockSpec((1,) + rest, lambda b: (b,) + zeros)


def _fspec(shape):
    """Whole-array block replicated across the batch grid (constant index_map)."""
    dims = tuple(int(s) for s in shape)
    zeros = (0,) * len(dims)
    return pl.BlockSpec(dims, lambda b: zeros)


WEIGHT_ORDER = (
    "w_rp", "b_rp", "wq2", "bq2", "wkv_r", "bkv_r", "wo_r", "bo_r",
    "wkv_p", "bkv_p", "wo_p", "bo_p",
    "gmu_w", "gmu_b", "gmu_wz", "gmu_bz",
    "lf_wih", "lf_whh", "lf_b", "lb_wih", "lb_whh", "lb_b",
    "cln_wg", "cln_wb", "cln_g", "cln_be",
    "conv_w1c", "conv_b1", "conv_wd", "conv_bd",
    "pred_w12", "pred_b12", "pred_u", "pred_wr", "pred_br", "pred_wl", "pred_bl",
)


# ----------------------------- fused Pallas kernel ----------------------------
def _fused_kernel(
    bert_ref, rp_ref, p2w_ref, drb_ref, mask_ref, slen_ref,
    w_rp, b_rp, wq2, bq2, wkv_r, bkv_r, wo_r, bo_r,
    wkv_p, bkv_p, wo_p, bo_p,
    gmu_w, gmu_b, gmu_wz, gmu_bz,
    lf_wih, lf_whh, lf_b, lb_wih, lb_whh, lb_b,
    cln_wg, cln_wb, cln_g, cln_be,
    conv_w1c, conv_b1, conv_wd, conv_bd,
    pred_w12, pred_b12, pred_u, pred_wr, pred_br, pred_wl, pred_bl,
    o_ref,
):
    f32 = jnp.float32
    bert = bert_ref[0]                                                  # [LP, H]

    # ---- radical / pinyin encoder stand-ins: one block-diagonal matmul ----
    # TODO(synk): RadicalEncoder / CNNPinyinLevelEmbedding replaced by tanh projections.
    rp_h = jnp.tanh(jnp.dot(rp_ref[0], w_rp[...], preferred_element_type=f32) + b_rp[...])
    radical0 = rp_h[:, :H]
    pinyin0 = rp_h[:, H:]

    # ---- PanGu cross-attention (fused Q for both branches, fused K|V per branch) ----
    # TODO(synk): PanGuTransformerEncoder approximated by single-head cross-attn + residual.
    q2 = jnp.dot(bert, wq2[...], preferred_element_type=f32) + bq2[...]         # [LP, 2H]
    kvr = jnp.dot(radical0, wkv_r[...], preferred_element_type=f32) + bkv_r[...]
    kvp = jnp.dot(pinyin0, wkv_p[...], preferred_element_type=f32) + bkv_p[...]
    scale = 1.0 / (H ** 0.5)

    def attend(q, k, v, wo, bo):
        s = jax.lax.dot_general(q, k, (((1,), (1,)), ((), ())),
                                preferred_element_type=f32) * scale
        p = jax.nn.softmax(s, axis=-1)
        ctx = jnp.dot(p, v, preferred_element_type=f32)
        return jnp.dot(ctx, wo[...], preferred_element_type=f32) + bo[...] + bert

    radical = attend(q2[:, :H], kvr[:, :H], kvr[:, H:], wo_r, bo_r)
    pinyin = attend(q2[:, H:], kvp[:, :H], kvp[:, H:], wo_p, bo_p)

    # ---- GMU fusion: block-diagonal tanh projections + softmax gates ----
    # TODO(synk): exact 3-modality GatedMultimodalLayer unavailable; standard GMU extension.
    cat = jnp.concatenate([bert, radical, pinyin], axis=-1)                     # [LP, 3H]
    h123 = jnp.tanh(jnp.dot(cat, gmu_w[...], preferred_element_type=f32) + gmu_b[...])
    z = jax.nn.softmax(jnp.dot(cat, gmu_wz[...], preferred_element_type=f32) + gmu_bz[...],
                       axis=-1)
    fusion = (z[:, 0:1] * h123[:, :H] + z[:, 1:2] * h123[:, H:2 * H]
              + z[:, 2:3] * h123[:, 2 * H:])                                    # [LP, H]

    # ---- pieces2word masked max-pool (masked_fill with min, then max over pieces) ----
    minv = jnp.min(fusion)
    p2w = p2w_ref[0]                                                            # [L, LP]
    expanded = jnp.where(p2w[:, :, None] != 0, fusion[None, :, :], minv)
    word_pre = jnp.max(expanded, axis=1)                                        # [L, H]

    # ---- BiLSTM, unrolled over L, masked (pack_padded / pad_packed semantics) ----
    slen = slen_ref[pl.program_id(0)]

    def lstm_dir(wih, whh, bias, reverse):
        xg = jnp.dot(word_pre, wih[...], preferred_element_type=f32) + bias[...]  # [L, 4*HD]
        h = jnp.zeros((1, HD), f32)
        c = jnp.zeros((1, HD), f32)
        outs = [None] * L
        order = range(L - 1, -1, -1) if reverse else range(L)
        for t in order:
            gates = xg[t:t + 1, :] + jnp.dot(h, whh[...], preferred_element_type=f32)
            ig = jax.nn.sigmoid(gates[:, 0:HD])
            fg = jax.nn.sigmoid(gates[:, HD:2 * HD])
            gg = jnp.tanh(gates[:, 2 * HD:3 * HD])
            og = jax.nn.sigmoid(gates[:, 3 * HD:])
            c_new = fg * c + ig * gg
            h_new = og * jnp.tanh(c_new)
            mt = jnp.where(t < slen, jnp.float32(1.0), jnp.float32(0.0))
            h = mt * h_new + (1.0 - mt) * h
            c = mt * c_new + (1.0 - mt) * c
            outs[t] = mt * h_new
        return jnp.concatenate(outs, axis=0)                                    # [L, HD]

    word = jnp.concatenate(
        [lstm_dir(lf_wih, lf_whh, lf_b, False),
         lstm_dir(lb_wih, lb_whh, lb_b, True)], axis=-1)                        # [L, LSTM_HID]

    # ---- conditional layer norm -> [L, L, LSTM_HID] ----
    mean = jnp.mean(word, axis=-1, keepdims=True)
    xc = word - mean
    var = jnp.mean(xc * xc, axis=-1, keepdims=True)
    xn = xc * jax.lax.rsqrt(var + 1e-12)
    gamma = jnp.dot(word, cln_wg[...], preferred_element_type=f32) + cln_g[...]
    beta = jnp.dot(word, cln_wb[...], preferred_element_type=f32) + cln_be[...]
    cln = xn[:, None, :] * gamma[None, :, :] + beta[None, :, :]
    cln_flat = cln.reshape(L * L, LSTM_HID)

    # ---- ConvolutionLayer: 1x1 base (dist/region contributions folded in) ----
    mask = mask_ref[0]                                                          # [L*L, 1]
    base = (jnp.dot(cln_flat, conv_w1c[...], preferred_element_type=f32) + drb_ref[0]) * mask
    cur = jax.nn.gelu(base + conv_b1[...], approximate=True).reshape(L, L, CONV_HID)

    # chained dilated depthwise 3x3 convs (channels-last)
    wd = conv_wd[...]                                                           # [ndil*9, C]
    bd = conv_bd[...]                                                           # [ndil, C]
    outs = []
    for k, dil in enumerate(DILATIONS):
        zr = jnp.zeros((dil, L, CONV_HID), f32)
        xr = jnp.concatenate([zr, cur, zr], axis=0)
        zc = jnp.zeros((L + 2 * dil, dil, CONV_HID), f32)
        xp = jnp.concatenate([zc, xr, zc], axis=1)
        acc = jnp.zeros((L, L, CONV_HID), f32) + bd[k][None, None, :]
        for ki in range(3):
            for kj in range(3):
                acc = acc + (xp[ki * dil:ki * dil + L, kj * dil:kj * dil + L, :]
                             * wd[k * 9 + ki * 3 + kj][None, None, :])
        cur = jax.nn.gelu(acc, approximate=True)
        outs.append(cur)
    conv_out = (jnp.concatenate(outs, axis=-1)
                .reshape(L * L, CONV_HID * len(DILATIONS)) * mask)              # [L*L, 32]

    # ---- CoPredictor: fused MLP1|MLP2 + flattened biaffine + conv MLP ----
    ht = jax.nn.gelu(jnp.dot(word, pred_w12[...], preferred_element_type=f32) + pred_b12[...],
                     approximate=True)                                          # [L, 2*BIAFFINE]
    ones = jnp.ones((L, 1), f32)
    h1 = jnp.concatenate([ht[:, :BIAFFINE], ones], axis=-1)                     # [L, BIAFFINE+1]
    t1 = jnp.concatenate([ht[:, BIAFFINE:], ones], axis=-1)
    m_all = jnp.dot(h1, pred_u[...], preferred_element_type=f32)                # [L, LN*(BF+1)]
    bp1 = BIAFFINE + 1
    chans = []
    for o in range(LABEL_NUM):
        m_o = m_all[:, o * bp1:(o + 1) * bp1]
        chans.append(jax.lax.dot_general(m_o, t1, (((1,), (1,)), ((), ())),
                                         preferred_element_type=f32))           # [L, L]
    o1 = jnp.stack(chans, axis=-1)                                              # [L, L, LN]

    zrel = jax.nn.gelu(jnp.dot(conv_out, pred_wr[...], preferred_element_type=f32) + pred_br[...],
                       approximate=True)
    o2 = (jnp.dot(zrel, pred_wl[...], preferred_element_type=f32)
          + pred_bl[...]).reshape(L, L, LABEL_NUM)

    o_ref[0] = o1 + o2


# ----------------------------- parameters ------------------------------------
def init_params():
    key = jax.random.PRNGKey(42)
    keys = iter(jax.random.split(key, 64))

    def nrm(shape, scale=0.1):
        return scale * jax.random.normal(next(keys), shape, dtype=jnp.float32)

    p = {}
    # TODO(synk): pretrained BERT not reproducible in-script; deterministic embedding table.
    p["bert_emb"] = nrm((BERT_VOCAB, H), 0.5)
    p["rad_w"] = nrm((IMG_C * IMG_H * IMG_W, H))
    p["rad_b"] = nrm((H,), 0.01)
    p["pin_emb"] = nrm((PIN_VOCAB, PIN_DIM), 0.5)
    p["pin_w"] = nrm((3 * PIN_DIM, H))
    p["pin_b"] = nrm((H,), 0.01)

    def attn_params():
        return tuple(nrm((H, H)) for _ in range(4)) + tuple(nrm((1, H), 0.01) for _ in range(4))

    p["pangu_rad"] = attn_params()
    p["pangu_pin"] = attn_params()
    p["gmu"] = dict(w1=nrm((H, H)), w2=nrm((H, H)), w3=nrm((H, H)),
                    b1=nrm((1, H), 0.01), b2=nrm((1, H), 0.01), b3=nrm((1, H), 0.01),
                    wz=nrm((3 * H, 3)), bz=nrm((1, 3), 0.01))
    p["lstm"] = dict(
        f=dict(Wih=nrm((4 * HD, H)), Whh=nrm((4 * HD, HD)),
               bih=nrm((4 * HD,), 0.01), bhh=nrm((4 * HD,), 0.01)),
        b=dict(Wih=nrm((4 * HD, H)), Whh=nrm((4 * HD, HD)),
               bih=nrm((4 * HD,), 0.01), bhh=nrm((4 * HD,), 0.01)))
    p["cln"] = dict(wg=nrm((LSTM_HID, LSTM_HID), 0.05), wb=nrm((LSTM_HID, LSTM_HID), 0.05),
                    gamma=jnp.ones((1, LSTM_HID), jnp.float32),
                    beta=jnp.zeros((1, LSTM_HID), jnp.float32))
    p["dis_emb"] = nrm((20, DIST_EMB), 0.5)
    p["reg_emb"] = nrm((3, TYPE_EMB), 0.5)
    d_conv_in = LSTM_HID + DIST_EMB + TYPE_EMB
    p["conv"] = dict(w1=nrm((d_conv_in, CONV_HID)), b1=nrm((1, CONV_HID), 0.01),
                     wd=nrm((len(DILATIONS), 3, 3, CONV_HID)),
                     bd=nrm((len(DILATIONS), CONV_HID), 0.01))
    p["pred"] = dict(w1=nrm((LSTM_HID, BIAFFINE)), b1=nrm((1, BIAFFINE), 0.01),
                     w2=nrm((LSTM_HID, BIAFFINE)), b2=nrm((1, BIAFFINE), 0.01),
                     u=nrm((LABEL_NUM, BIAFFINE + 1, BIAFFINE + 1)),
                     wr=nrm((CONV_HID * len(DILATIONS), FFNN_HID)),
                     br=nrm((1, FFNN_HID), 0.01),
                     wl=nrm((FFNN_HID, LABEL_NUM)), bl=nrm((1, LABEL_NUM), 0.01))
    return p


def _block_diag(*ms):
    rows = sum(m.shape[0] for m in ms)
    cols = sum(m.shape[1] for m in ms)
    out = jnp.zeros((rows, cols), jnp.float32)
    r = c = 0
    for m in ms:
        out = out.at[r:r + m.shape[0], c:c + m.shape[1]].set(m)
        r += m.shape[0]
        c += m.shape[1]
    return out


def prepare_fused(p):
    """Rearrange the canonical parameters into the fused-kernel layout (done once)."""
    f = {"bert_emb": p["bert_emb"], "pin_emb": p["pin_emb"]}
    # fold dist/region embedding tables through the 1x1 conv weight
    f["dis_w1"] = p["dis_emb"] @ p["conv"]["w1"][:DIST_EMB]
    f["reg_w1"] = p["reg_emb"] @ p["conv"]["w1"][DIST_EMB:DIST_EMB + TYPE_EMB]

    f["w_rp"] = _block_diag(p["rad_w"], p["pin_w"])
    f["b_rp"] = jnp.concatenate([p["rad_b"].reshape(1, -1), p["pin_b"].reshape(1, -1)], axis=1)

    wq_r, wk_r, wv_r, wo_r, bq_r, bk_r, bv_r, bo_r = p["pangu_rad"]
    wq_p, wk_p, wv_p, wo_p, bq_p, bk_p, bv_p, bo_p = p["pangu_pin"]
    f["wq2"] = jnp.concatenate([wq_r, wq_p], axis=1)
    f["bq2"] = jnp.concatenate([bq_r, bq_p], axis=1)
    f["wkv_r"] = jnp.concatenate([wk_r, wv_r], axis=1)
    f["bkv_r"] = jnp.concatenate([bk_r, bv_r], axis=1)
    f["wo_r"], f["bo_r"] = wo_r, bo_r
    f["wkv_p"] = jnp.concatenate([wk_p, wv_p], axis=1)
    f["bkv_p"] = jnp.concatenate([bk_p, bv_p], axis=1)
    f["wo_p"], f["bo_p"] = wo_p, bo_p

    g = p["gmu"]
    f["gmu_w"] = _block_diag(g["w1"], g["w2"], g["w3"])
    f["gmu_b"] = jnp.concatenate([g["b1"], g["b2"], g["b3"]], axis=1)
    f["gmu_wz"], f["gmu_bz"] = g["wz"], g["bz"]

    lf, lb = p["lstm"]["f"], p["lstm"]["b"]
    f["lf_wih"] = lf["Wih"].T
    f["lf_whh"] = lf["Whh"].T
    f["lf_b"] = (lf["bih"] + lf["bhh"]).reshape(1, -1)
    f["lb_wih"] = lb["Wih"].T
    f["lb_whh"] = lb["Whh"].T
    f["lb_b"] = (lb["bih"] + lb["bhh"]).reshape(1, -1)

    c = p["cln"]
    f["cln_wg"], f["cln_wb"], f["cln_g"], f["cln_be"] = c["wg"], c["wb"], c["gamma"], c["beta"]

    cv = p["conv"]
    f["conv_w1c"] = cv["w1"][DIST_EMB + TYPE_EMB:]
    f["conv_b1"] = cv["b1"]
    f["conv_wd"] = cv["wd"].reshape(len(DILATIONS) * 9, CONV_HID)
    f["conv_bd"] = cv["bd"]

    pr = p["pred"]
    f["pred_w12"] = jnp.concatenate([pr["w1"], pr["w2"]], axis=1)
    f["pred_b12"] = jnp.concatenate([pr["b1"], pr["b2"]], axis=1)
    f["pred_u"] = jnp.transpose(pr["u"], (1, 0, 2)).reshape(BIAFFINE + 1,
                                                            LABEL_NUM * (BIAFFINE + 1))
    f["pred_wr"], f["pred_br"] = pr["wr"], pr["br"]
    f["pred_wl"], f["pred_bl"] = pr["wl"], pr["bl"]
    return f


# ------------------------------- forward --------------------------------------
def forward(fp, bert_inputs, img_inputs, pinyin_inputs, grid_mask2d,
            dist_inputs, pieces2word, sent_length):
    # --- cheap XLA glue: embedding gathers / flattening only ---
    bert_embs = fp["bert_emb"][bert_inputs]                                     # [B, LP, H]
    img_flat = img_inputs.reshape(B, LP, IMG_C * IMG_H * IMG_W)
    pin_flat = fp["pin_emb"][pinyin_inputs].reshape(B, LP, 3 * PIN_DIM)
    rp_flat = jnp.concatenate([img_flat, pin_flat], axis=-1)                    # [B, LP, 112]

    tril_mask = jnp.tril(grid_mask2d)
    reg_inputs = tril_mask + grid_mask2d                                        # values {0,1,2}
    drb = (fp["dis_w1"][dist_inputs]
           + fp["reg_w1"][reg_inputs]).reshape(B, L * L, CONV_HID)              # folded dist+reg
    mask2d = grid_mask2d.astype(jnp.float32).reshape(B, L * L, 1)

    weights = [fp[k] for k in WEIGHT_ORDER]
    ins = [bert_embs, rp_flat, pieces2word.astype(jnp.int32), drb, mask2d,
           sent_length.astype(jnp.int32)]

    out = pl.pallas_call(
        _fused_kernel,
        grid=(B,),
        in_specs=[_bspec(bert_embs.shape), _bspec(rp_flat.shape),
                  _bspec(pieces2word.shape), _bspec(drb.shape), _bspec(mask2d.shape),
                  pl.BlockSpec(memory_space=pltpu.MemorySpace.SMEM)]
                 + [_fspec(w.shape) for w in weights],
        out_specs=_bspec((B, L, L, LABEL_NUM)),
        out_shape=jax.ShapeDtypeStruct((B, L, L, LABEL_NUM), jnp.float32),
        compiler_params=pltpu.CompilerParams(dimension_semantics=("parallel",)),
    )(*ins, *weights)
    return out


# --------------------------------- main ---------------------------------------
if __name__ == "__main__":
    key = jax.random.PRNGKey(0)
    k1, k2, k3, k4 = jax.random.split(key, 4)

    bert_inputs = jax.random.randint(k1, (B, LP), 1, BERT_VOCAB, dtype=jnp.int32)
    img_inputs = jax.random.normal(k2, (B, LP, IMG_C, IMG_H, IMG_W), jnp.float32)
    pinyin_inputs = jax.random.randint(k3, (B, LP, 3), 0, PIN_VOCAB, dtype=jnp.int32)
    dist_inputs = jax.random.randint(k4, (B, L, L), 0, 20, dtype=jnp.int32)
    sent_length = jnp.array([8, 6], dtype=jnp.int32)

    idx = jnp.arange(L)
    grid_mask2d = ((idx[None, :, None] < sent_length[:, None, None])
                   & (idx[None, None, :] < sent_length[:, None, None])).astype(jnp.int32)
    # word i <- piece i+1 (skip a CLS-like piece 0), only for valid words
    pieces2word = ((jnp.arange(LP)[None, None, :] == (idx[None, :, None] + 1))
                   & (idx[None, :, None] < sent_length[:, None, None])).astype(jnp.int32)

    params = init_params()
    fused_params = prepare_fused(params)

    fwd = jax.jit(forward)
    out = fwd(fused_params, bert_inputs, img_inputs, pinyin_inputs, grid_mask2d,
              dist_inputs, pieces2word, sent_length)
    out = jax.block_until_ready(out)

    assert out.shape == (B, L, L, LABEL_NUM), out.shape
    assert not bool(jnp.isnan(out).any()), "NaN in outputs"
    print("KERNEL_OK")
</pallas_src>

<mosaic_0001>
module attributes {stable_mosaic.version = 11 : i64} {
  func.func @_fused_kernel(%arg0: i32, %arg1: memref<1x10x32xf32, #tpu.memory_space<vmem>>, %arg2: memref<1x10x112xf32, #tpu.memory_space<vmem>>, %arg3: memref<1x8x10xi32, #tpu.memory_space<vmem>>, %arg4: memref<1x64x16xf32, #tpu.memory_space<vmem>>, %arg5: memref<1x64x1xf32, #tpu.memory_space<vmem>>, %arg6: memref<2xi32, #tpu.memory_space<smem>>, %arg7: memref<112x64xf32, #tpu.memory_space<vmem>>, %arg8: memref<1x64xf32, #tpu.memory_space<vmem>>, %arg9: memref<32x64xf32, #tpu.memory_space<vmem>>, %arg10: memref<1x64xf32, #tpu.memory_space<vmem>>, %arg11: memref<32x64xf32, #tpu.memory_space<vmem>>, %arg12: memref<1x64xf32, #tpu.memory_space<vmem>>, %arg13: memref<32x32xf32, #tpu.memory_space<vmem>>, %arg14: memref<1x32xf32, #tpu.memory_space<vmem>>, %arg15: memref<32x64xf32, #tpu.memory_space<vmem>>, %arg16: memref<1x64xf32, #tpu.memory_space<vmem>>, %arg17: memref<32x32xf32, #tpu.memory_space<vmem>>, %arg18: memref<1x32xf32, #tpu.memory_space<vmem>>, %arg19: memref<96x96xf32, #tpu.memory_space<vmem>>, %arg20: memref<1x96xf32, #tpu.memory_space<vmem>>, %arg21: memref<96x3xf32, #tpu.memory_space<vmem>>, %arg22: memref<1x3xf32, #tpu.memory_space<vmem>>, %arg23: memref<32x64xf32, #tpu.memory_space<vmem>>, %arg24: memref<16x64xf32, #tpu.memory_space<vmem>>, %arg25: memref<1x64xf32, #tpu.memory_space<vmem>>, %arg26: memref<32x64xf32, #tpu.memory_space<vmem>>, %arg27: memref<16x64xf32, #tpu.memory_space<vmem>>, %arg28: memref<1x64xf32, #tpu.memory_space<vmem>>, %arg29: memref<32x32xf32, #tpu.memory_space<vmem>>, %arg30: memref<32x32xf32, #tpu.memory_space<vmem>>, %arg31: memref<1x32xf32, #tpu.memory_space<vmem>>, %arg32: memref<1x32xf32, #tpu.memory_space<vmem>>, %arg33: memref<32x16xf32, #tpu.memory_space<vmem>>, %arg34: memref<1x16xf32, #tpu.memory_space<vmem>>, %arg35: memref<18x16xf32, #tpu.memory_space<vmem>>, %arg36: memref<2x16xf32, #tpu.memory_space<vmem>>, %arg37: memref<32x32xf32, #tpu.memory_space<vmem>>, %arg38: memref<1x32xf32, #tpu.memory_space<vmem>>, %arg39: memref<17x68xf32, #tpu.memory_space<vmem>>, %arg40: memref<32x16xf32, #tpu.memory_space<vmem>>, %arg41: memref<1x16xf32, #tpu.memory_space<vmem>>, %arg42: memref<16x4xf32, #tpu.memory_space<vmem>>, %arg43: memref<1x4xf32, #tpu.memory_space<vmem>>, %arg44: memref<1x8x8x4xf32, #tpu.memory_space<vmem>>) attributes {dimension_semantics = [#tpu.dimension_semantics<parallel>], iteration_bounds = array<i64: 2>, scalar_prefetch = 0 : i64, scratch_operands = 0 : i64, tpu.core_type = #tpu.core_type<tc>, window_params = [{transform_indices = @transform_0, window_bounds = array<i64: 1, 10, 32>}, {transform_indices = @transform_1, window_bounds = array<i64: 1, 10, 112>}, {transform_indices = @transform_2, window_bounds = array<i64: 1, 8, 10>}, {transform_indices = @transform_3, window_bounds = array<i64: 1, 64, 16>}, {transform_indices = @transform_4, window_bounds = array<i64: 1, 64, 1>}, {transform_indices = @transform_5, window_bounds = array<i64: 2>}, {pipeline_mode = #tpu.pipeline_mode<synchronous>, transform_indices = @transform_6, window_bounds = array<i64: 112, 64>}, {pipeline_mode = #tpu.pipeline_mode<synchronous>, transform_indices = @transform_7, window_bounds = array<i64: 1, 64>}, {pipeline_mode = #tpu.pipeline_mode<synchronous>, transform_indices = @transform_8, window_bounds = array<i64: 32, 64>}, {pipeline_mode = #tpu.pipeline_mode<synchronous>, transform_indices = @transform_9, window_bounds = array<i64: 1, 64>}, {pipeline_mode = #tpu.pipeline_mode<synchronous>, transform_indices = @transform_10, window_bounds = array<i64: 32, 64>}, {pipeline_mode = #tpu.pipeline_mode<synchronous>, transform_indices = @transform_11, window_bounds = array<i64: 1, 64>}, {pipeline_mode = #tpu.pipeline_mode<synchronous>, transform_indices = @transform_12, window_bounds = array<i64: 32, 32>}, {pipeline_mode = #tpu.pipeline_mode<synchronous>, transform_indices = @transform_13, window_bounds = array<i64: 1, 32>}, {pipeline_mode = #tpu.pipeline_mode<synchronous>, transform_indices = @transform_14, window_bounds = array<i64: 32, 64>}, {pipeline_mode = #tpu.pipeline_mode<synchronous>, transform_indices = @transform_15, window_bounds = array<i64: 1, 64>}, {pipeline_mode = #tpu.pipeline_mode<synchronous>, transform_indices = @transform_16, window_bounds = array<i64: 32, 32>}, {pipeline_mode = #tpu.pipeline_mode<synchronous>, transform_indices = @transform_17, window_bounds = array<i64: 1, 32>}, {pipeline_mode = #tpu.pipeline_mode<synchronous>, transform_indices = @transform_18, window_bounds = array<i64: 96, 96>}, {pipeline_mode = #tpu.pipeline_mode<synchronous>, transform_indices = @transform_19, window_bounds = array<i64: 1, 96>}, {pipeline_mode = #tpu.pipeline_mode<synchronous>, transform_indices = @transform_20, window_bounds = array<i64: 96, 3>}, {pipeline_mode = #tpu.pipeline_mode<synchronous>, transform_indices = @transform_21, window_bounds = array<i64: 1, 3>}, {pipeline_mode = #tpu.pipeline_mode<synchronous>, transform_indices = @transform_22, window_bounds = array<i64: 32, 64>}, {pipeline_mode = #tpu.pipeline_mode<synchronous>, transform_indices = @transform_23, window_bounds = array<i64: 16, 64>}, {pipeline_mode = #tpu.pipeline_mode<synchronous>, transform_indices = @transform_24, window_bounds = array<i64: 1, 64>}, {pipeline_mode = #tpu.pipeline_mode<synchronous>, transform_indices = @transform_25, window_bounds = array<i64: 32, 64>}, {pipeline_mode = #tpu.pipeline_mode<synchronous>, transform_indices = @transform_26, window_bounds = array<i64: 16, 64>}, {pipeline_mode = #tpu.pipeline_mode<synchronous>, transform_indices = @transform_27, window_bounds = array<i64: 1, 64>}, {pipeline_mode = #tpu.pipeline_mode<synchronous>, transform_indices = @transform_28, window_bounds = array<i64: 32, 32>}, {pipeline_mode = #tpu.pipeline_mode<synchronous>, transform_indices = @transform_29, window_bounds = array<i64: 32, 32>}, {pipeline_mode = #tpu.pipeline_mode<synchronous>, transform_indices = @transform_30, window_bounds = array<i64: 1, 32>}, {pipeline_mode = #tpu.pipeline_mode<synchronous>, transform_indices = @transform_31, window_bounds = array<i64: 1, 32>}, {pipeline_mode = #tpu.pipeline_mode<synchronous>, transform_indices = @transform_32, window_bounds = array<i64: 32, 16>}, {pipeline_mode = #tpu.pipeline_mode<synchronous>, transform_indices = @transform_33, window_bounds = array<i64: 1, 16>}, {pipeline_mode = #tpu.pipeline_mode<synchronous>, transform_indices = @transform_34, window_bounds = array<i64: 18, 16>}, {pipeline_mode = #tpu.pipeline_mode<synchronous>, transform_indices = @transform_35, window_bounds = array<i64: 2, 16>}, {pipeline_mode = #tpu.pipeline_mode<synchronous>, transform_indices = @transform_36, window_bounds = array<i64: 32, 32>}, {pipeline_mode = #tpu.pipeline_mode<synchronous>, transform_indices = @transform_37, window_bounds = array<i64: 1, 32>}, {pipeline_mode = #tpu.pipeline_mode<synchronous>, transform_indices = @transform_38, window_bounds = array<i64: 17, 68>}, {pipeline_mode = #tpu.pipeline_mode<synchronous>, transform_indices = @transform_39, window_bounds = array<i64: 32, 16>}, {pipeline_mode = #tpu.pipeline_mode<synchronous>, transform_indices = @transform_40, window_bounds = array<i64: 1, 16>}, {pipeline_mode = #tpu.pipeline_mode<synchronous>, transform_indices = @transform_41, window_bounds = array<i64: 16, 4>}, {pipeline_mode = #tpu.pipeline_mode<synchronous>, transform_indices = @transform_42, window_bounds = array<i64: 1, 4>}, {transform_indices = @transform_43, window_bounds = array<i64: 1, 8, 8, 4>}]} {
    %c0 = arith.constant 0 : index
    %c0_0 = arith.constant 0 : index
    %c0_1 = arith.constant 0 : index
    %0 = vector.load %arg1[%c0, %c0_0, %c0_1] : memref<1x10x32xf32, #tpu.memory_space<vmem>>, vector<1x10x32xf32>
    %1 = vector.shape_cast %0 : vector<1x10x32xf32> to vector<10x32xf32>
    %c0_2 = arith.constant 0 : index
    %c0_3 = arith.constant 0 : index
    %c0_4 = arith.constant 0 : index
    %2 = vector.load %arg2[%c0_2, %c0_3, %c0_4] : memref<1x10x112xf32, #tpu.memory_space<vmem>>, vector<1x10x112xf32>
    %3 = vector.shape_cast %2 : vector<1x10x112xf32> to vector<10x112xf32>
    %c0_5 = arith.constant 0 : index
    %c0_6 = arith.constant 0 : index
    %4 = vector.load %arg7[%c0_5, %c0_6] : memref<112x64xf32, #tpu.memory_space<vmem>>, vector<112x64xf32>
    %cst = arith.constant dense<0.000000e+00> : vector<10x64xf32>
    %5 = tpu.matmul %3, %4, %cst {dimension_numbers = #tpu.dot_dimension_numbers<[1], [0], [0], [1], [0, 0, 1, 1], [], []>} : vector<10x112xf32>, vector<112x64xf32>, vector<10x64xf32> -> vector<10x64xf32>
    %c0_7 = arith.constant 0 : index
    %c0_8 = arith.constant 0 : index
    %6 = vector.load %arg8[%c0_7, %c0_8] : memref<1x64xf32, #tpu.memory_space<vmem>>, vector<1x64xf32>
    %7 = vector.broadcast %6 : vector<1x64xf32> to vector<10x64xf32>
    %8 = arith.addf %5, %7 : vector<10x64xf32>
    %9 = math.tanh %8 : vector<10x64xf32>
    %10 = vector.extract_strided_slice %9 {offsets = [0, 0], sizes = [10, 32], strides = [1, 1]} : vector<10x64xf32> to vector<10x32xf32>
    %11 = vector.extract_strided_slice %9 {offsets = [0, 32], sizes = [10, 32], strides = [1, 1]} : vector<10x64xf32> to vector<10x32xf32>
    %c0_9 = arith.constant 0 : index
    %c0_10 = arith.constant 0 : index
    %12 = vector.load %arg9[%c0_9, %c0_10] : memref<32x64xf32, #tpu.memory_space<vmem>>, vector<32x64xf32>
    %cst_11 = arith.constant dense<0.000000e+00> : vector<10x64xf32>
    %13 = tpu.matmul %1, %12, %cst_11 {dimension_numbers = #tpu.dot_dimension_numbers<[1], [0], [0], [1], [0, 0, 1, 1], [], []>} : vector<10x32xf32>, vector<32x64xf32>, vector<10x64xf32> -> vector<10x64xf32>
    %c0_12 = arith.constant 0 : index
    %c0_13 = arith.constant 0 : index
    %14 = vector.load %arg10[%c0_12, %c0_13] : memref<1x64xf32, #tpu.memory_space<vmem>>, vector<1x64xf32>
    %15 = vector.broadcast %14 : vector<1x64xf32> to vector<10x64xf32>
    %16 = arith.addf %13, %15 : vector<10x64xf32>
    %c0_14 = arith.constant 0 : index
    %c0_15 = arith.constant 0 : index
    %17 = vector.load %arg11[%c0_14, %c0_15] : memref<32x64xf32, #tpu.memory_space<vmem>>, vector<32x64xf32>
    %cst_16 = arith.constant dense<0.000000e+00> : vector<10x64xf32>
    %18 = tpu.matmul %10, %17, %cst_16 {dimension_numbers = #tpu.dot_dimension_numbers<[1], [0], [0], [1], [0, 0, 1, 1], [], []>} : vector<10x32xf32>, vector<32x64xf32>, vector<10x64xf32> -> vector<10x64xf32>
    %c0_17 = arith.constant 0 : index
    %c0_18 = arith.constant 0 : index
    %19 = vector.load %arg12[%c0_17, %c0_18] : memref<1x64xf32, #tpu.memory_space<vmem>>, vector<1x64xf32>
    %20 = vector.broadcast %19 : vector<1x64xf32> to vector<10x64xf32>
    %21 = arith.addf %18, %20 : vector<10x64xf32>
    %c0_19 = arith.constant 0 : index
    %c0_20 = arith.constant 0 : index
    %22 = vector.load %arg15[%c0_19, %c0_20] : memref<32x64xf32, #tpu.memory_space<vmem>>, vector<32x64xf32>
    %cst_21 = arith.constant dense<0.000000e+00> : vector<10x64xf32>
    %23 = tpu.matmul %11, %22, %cst_21 {dimension_numbers = #tpu.dot_dimension_numbers<[1], [0], [0], [1], [0, 0, 1, 1], [], []>} : vector<10x32xf32>, vector<32x64xf32>, vector<10x64xf32> -> vector<10x64xf32>
    %c0_22 = arith.constant 0 : index
    %c0_23 = arith.constant 0 : index
    %24 = vector.load %arg16[%c0_22, %c0_23] : memref<1x64xf32, #tpu.memory_space<vmem>>, vector<1x64xf32>
    %25 = vector.broadcast %24 : vector<1x64xf32> to vector<10x64xf32>
    %26 = arith.addf %23, %25 : vector<10x64xf32>
    %27 = vector.extract_strided_slice %16 {offsets = [0, 0], sizes = [10, 32], strides = [1, 1]} : vector<10x64xf32> to vector<10x32xf32>
    %28 = vector.extract_strided_slice %21 {offsets = [0, 0], sizes = [10, 32], strides = [1, 1]} : vector<10x64xf32> to vector<10x32xf32>
    %29 = vector.extract_strided_slice %21 {offsets = [0, 32], sizes = [10, 32], strides = [1, 1]} : vector<10x64xf32> to vector<10x32xf32>
    %cst_24 = arith.constant dense<0.000000e+00> : vector<10x10xf32>
    %30 = tpu.matmul %27, %28, %cst_24 {dimension_numbers = #tpu.dot_dimension_numbers<[1], [1], [0], [0], [0, 0, 1, 0], [], []>} : vector<10x32xf32>, vector<10x32xf32>, vector<10x10xf32> -> vector<10x10xf32>
    %cst_25 = arith.constant 0.176776692 : f32
    %31 = vector.broadcast %cst_25 : f32 to vector<10x10xf32>
    %32 = arith.mulf %30, %31 : vector<10x10xf32>
    %cst_26 = arith.constant dense<0xFF800000> : vector<10xf32>
    %33 = vector.multi_reduction <maximumf>, %32, %cst_26 [1] : vector<10x10xf32> to vector<10xf32>
    %cst_27 = arith.constant 0xFF800000 : f32
    %34 = vector.broadcast %cst_27 : f32 to vector<10xf32>
    %35 = arith.maximumf %34, %33 : vector<10xf32>
    %36 = vector.shape_cast %35 : vector<10xf32> to vector<10x1xf32>
    %37 = vector.broadcast %36 : vector<10x1xf32> to vector<10x10xf32>
    %38 = arith.subf %32, %37 : vector<10x10xf32>
    %39 = math.exp %38 : vector<10x10xf32>
    %cst_28 = arith.constant dense<0.000000e+00> : vector<10xf32>
    %40 = vector.multi_reduction <add>, %39, %cst_28 [1] : vector<10x10xf32> to vector<10xf32>
    %41 = vector.shape_cast %40 : vector<10xf32> to vector<10x1xf32>
    %42 = vector.broadcast %41 : vector<10x1xf32> to vector<10x10xf32>
    %43 = arith.divf %39, %42 : vector<10x10xf32>
    %cst_29 = arith.constant dense<0.000000e+00> : vector<10x32xf32>
    %44 = tpu.matmul %43, %29, %cst_29 {dimension_numbers = #tpu.dot_dimension_numbers<[1], [0], [0], [1], [0, 0, 1, 1], [], []>} : vector<10x10xf32>, vector<10x32xf32>, vector<10x32xf32> -> vector<10x32xf32>
    %c0_30 = arith.constant 0 : index
    %c0_31 = arith.constant 0 : index
    %45 = vector.load %arg13[%c0_30, %c0_31] : memref<32x32xf32, #tpu.memory_space<vmem>>, vector<32x32xf32>
    %cst_32 = arith.constant dense<0.000000e+00> : vector<10x32xf32>
    %46 = tpu.matmul %44, %45, %cst_32 {dimension_numbers = #tpu.dot_dimension_numbers<[1], [0], [0], [1], [0, 0, 1, 1], [], []>} : vector<10x32xf32>, vector<32x32xf32>, vector<10x32xf32> -> vector<10x32xf32>
    %c0_33 = arith.constant 0 : index
    %c0_34 = arith.constant 0 : index
    %47 = vector.load %arg14[%c0_33, %c0_34] : memref<1x32xf32, #tpu.memory_space<vmem>>, vector<1x32xf32>
    %48 = vector.broadcast %47 : vector<1x32xf32> to vector<10x32xf32>
    %49 = arith.addf %46, %48 : vector<10x32xf32>
    %50 = arith.addf %49, %1 : vector<10x32xf32>
    %51 = vector.extract_strided_slice %16 {offsets = [0, 32], sizes = [10, 32], strides = [1, 1]} : vector<10x64xf32> to vector<10x32xf32>
    %52 = vector.extract_strided_slice %26 {offsets = [0, 0], sizes = [10, 32], strides = [1, 1]} : vector<10x64xf32> to vector<10x32xf32>
    %53 = vector.extract_strided_slice %26 {offsets = [0, 32], sizes = [10, 32], strides = [1, 1]} : vector<10x64xf32> to vector<10x32xf32>
    %cst_35 = arith.constant dense<0.000000e+00> : vector<10x10xf32>
    %54 = tpu.matmul %51, %52, %cst_35 {dimension_numbers = #tpu.dot_dimension_numbers<[1], [1], [0], [0], [0, 0, 1, 0], [], []>} : vector<10x32xf32>, vector<10x32xf32>, vector<10x10xf32> -> vector<10x10xf32>
    %cst_36 = arith.constant 0.176776692 : f32
    %55 = vector.broadcast %cst_36 : f32 to vector<10x10xf32>
    %56 = arith.mulf %54, %55 : vector<10x10xf32>
    %cst_37 = arith.constant dense<0xFF800000> : vector<10xf32>
    %57 = vector.multi_reduction <maximumf>, %56, %cst_37 [1] : vector<10x10xf32> to vector<10xf32>
    %cst_38 = arith.constant 0xFF800000 : f32
    %58 = vector.broadcast %cst_38 : f32 to vector<10xf32>
    %59 = arith.maximumf %58, %57 : vector<10xf32>
    %60 = vector.shape_cast %59 : vector<10xf32> to vector<10x1xf32>
    %61 = vector.broadcast %60 : vector<10x1xf32> to vector<10x10xf32>
    %62 = arith.subf %56, %61 : vector<10x10xf32>
    %63 = math.exp %62 : vector<10x10xf32>
    %cst_39 = arith.constant dense<0.000000e+00> : vector<10xf32>
    %64 = vector.multi_reduction <add>, %63, %cst_39 [1] : vector<10x10xf32> to vector<10xf32>
    %65 = vector.shape_cast %64 : vector<10xf32> to vector<10x1xf32>
    %66 = vector.broadcast %65 : vector<10x1xf32> to vector<10x10xf32>
    %67 = arith.divf %63, %66 : vector<10x10xf32>
    %cst_40 = arith.constant dense<0.000000e+00> : vector<10x32xf32>
    %68 = tpu.matmul %67, %53, %cst_40 {dimension_numbers = #tpu.dot_dimension_numbers<[1], [0], [0], [1], [0, 0, 1, 1], [], []>} : vector<10x10xf32>, vector<10x32xf32>, vector<10x32xf32> -> vector<10x32xf32>
    %c0_41 = arith.constant 0 : index
    %c0_42 = arith.constant 0 : index
    %69 = vector.load %arg17[%c0_41, %c0_42] : memref<32x32xf32, #tpu.memory_space<vmem>>, vector<32x32xf32>
    %cst_43 = arith.constant dense<0.000000e+00> : vector<10x32xf32>
    %70 = tpu.matmul %68, %69, %cst_43 {dimension_numbers = #tpu.dot_dimension_numbers<[1], [0], [0], [1], [0, 0, 1, 1], [], []>} : vector<10x32xf32>, vector<32x32xf32>, vector<10x32xf32> -> vector<10x32xf32>
    %c0_44 = arith.constant 0 : index
    %c0_45 = arith.constant 0 : index
    %71 = vector.load %arg18[%c0_44, %c0_45] : memref<1x32xf32, #tpu.memory_space<vmem>>, vector<1x32xf32>
    %72 = vector.broadcast %71 : vector<1x32xf32> to vector<10x32xf32>
    %73 = arith.addf %70, %72 : vector<10x32xf32>
    %74 = arith.addf %73, %1 : vector<10x32xf32>
    %75 = tpu.concatenate %1, %50, %74 in 1 : vector<10x32xf32>, vector<10x32xf32>, vector<10x32xf32> -> vector<10x96xf32>
    %c0_46 = arith.constant 0 : index
    %c0_47 = arith.constant 0 : index
    %76 = vector.load %arg19[%c0_46, %c0_47] : memref<96x96xf32, #tpu.memory_space<vmem>>, vector<96x96xf32>
    %cst_48 = arith.constant dense<0.000000e+00> : vector<10x96xf32>
    %77 = tpu.matmul %75, %76, %cst_48 {dimension_numbers = #tpu.dot_dimension_numbers<[1], [0], [0], [1], [0, 0, 1, 1], [], []>} : vector<10x96xf32>, vector<96x96xf32>, vector<10x96xf32> -> vector<10x96xf32>
    %c0_49 = arith.constant 0 : index
    %c0_50 = arith.constant 0 : index
    %78 = vector.load %arg20[%c0_49, %c0_50] : memref<1x96xf32, #tpu.memory_space<vmem>>, vector<1x96xf32>
    %79 = vector.broadcast %78 : vector<1x96xf32> to vector<10x96xf32>
    %80 = arith.addf %77, %79 : vector<10x96xf32>
    %81 = math.tanh %80 : vector<10x96xf32>
    %c0_51 = arith.constant 0 : index
    %c0_52 = arith.constant 0 : index
    %82 = vector.load %arg21[%c0_51, %c0_52] : memref<96x3xf32, #tpu.memory_space<vmem>>, vector<96x3xf32>
    %cst_53 = arith.constant dense<0.000000e+00> : vector<10x3xf32>
    %83 = tpu.matmul %75, %82, %cst_53 {dimension_numbers = #tpu.dot_dimension_numbers<[1], [0], [0], [1], [0, 0, 1, 1], [], []>} : vector<10x96xf32>, vector<96x3xf32>, vector<10x3xf32> -> vector<10x3xf32>
    %c0_54 = arith.constant 0 : index
    %c0_55 = arith.constant 0 : index
    %84 = vector.load %arg22[%c0_54, %c0_55] : memref<1x3xf32, #tpu.memory_space<vmem>>, vector<1x3xf32>
    %85 = vector.broadcast %84 : vector<1x3xf32> to vector<10x3xf32>
    %86 = arith.addf %83, %85 : vector<10x3xf32>
    %cst_56 = arith.constant dense<0xFF800000> : vector<10xf32>
    %87 = vector.multi_reduction <maximumf>, %86, %cst_56 [1] : vector<10x3xf32> to vector<10xf32>
    %cst_57 = arith.constant 0xFF800000 : f32
    %88 = vector.broadcast %cst_57 : f32 to vector<10xf32>
    %89 = arith.maximumf %88, %87 : vector<10xf32>
    %90 = vector.shape_cast %89 : vector<10xf32> to vector<10x1xf32>
    %91 = vector.broadcast %90 : vector<10x1xf32> to vector<10x3xf32>
    %92 = arith.subf %86, %91 : vector<10x3xf32>
    %93 = math.exp %92 : vector<10x3xf32>
    %cst_58 = arith.constant dense<0.000000e+00> : vector<10xf32>
    %94 = vector.multi_reduction <add>, %93, %cst_58 [1] : vector<10x3xf32> to vector<10xf32>
    %95 = vector.shape_cast %94 : vector<10xf32> to vector<10x1xf32>
    %96 = vector.broadcast %95 : vector<10x1xf32> to vector<10x3xf32>
    %97 = arith.divf %93, %96 : vector<10x3xf32>
    %98 = vector.extract_strided_slice %97 {offsets = [0, 0], sizes = [10, 1], strides = [1, 1]} : vector<10x3xf32> to vector<10x1xf32>
    %99 = vector.extract_strided_slice %81 {offsets = [0, 0], sizes = [10, 32], strides = [1, 1]} : vector<10x96xf32> to vector<10x32xf32>
    %100 = vector.broadcast %98 : vector<10x1xf32> to vector<10x32xf32>
    %101 = arith.mulf %100, %99 : vector<10x32xf32>
    %102 = vector.extract_strided_slice %97 {offsets = [0, 1], sizes = [10, 1], strides = [1, 1]} : vector<10x3xf32> to vector<10x1xf32>
    %103 = vector.extract_strided_slice %81 {offsets = [0, 32], sizes = [10, 32], strides = [1, 1]} : vector<10x96xf32> to vector<10x32xf32>
    %104 = vector.broadcast %102 : vector<10x1xf32> to vector<10x32xf32>
    %105 = arith.mulf %104, %103 : vector<10x32xf32>
    %106 = arith.addf %101, %105 : vector<10x32xf32>
    %107 = vector.extract_strided_slice %97 {offsets = [0, 2], sizes = [10, 1], strides = [1, 1]} : vector<10x3xf32> to vector<10x1xf32>
    %108 = vector.extract_strided_slice %81 {offsets = [0, 64], sizes = [10, 32], strides = [1, 1]} : vector<10x96xf32> to vector<10x32xf32>
    %109 = vector.broadcast %107 : vector<10x1xf32> to vector<10x32xf32>
    %110 = arith.mulf %109, %108 : vector<10x32xf32>
    %111 = arith.addf %106, %110 : vector<10x32xf32>
    %112 = vector.shape_cast %111 : vector<10x32xf32> to vector<1x10x32xf32>
    %cst_59 = arith.constant dense<0x7F800000> : vector<1xf32>
    %113 = vector.multi_reduction <minimumf>, %112, %cst_59 [1, 2] : vector<1x10x32xf32> to vector<1xf32>
    %114 = vector.shape_cast %113 : vector<1xf32> to vector<1x1x1xf32>
    %115 = vector.extract %114[0, 0, 0] : f32 from vector<1x1x1xf32>
    %c0_60 = arith.constant 0 : index
    %c0_61 = arith.constant 0 : index
    %c0_62 = arith.constant 0 : index
    %116 = vector.load %arg3[%c0_60, %c0_61, %c0_62] : memref<1x8x10xi32, #tpu.memory_space<vmem>>, vector<1x8x10xi32>
    %117 = vector.shape_cast %116 : vector<1x8x10xi32> to vector<8x10xi32>
    %118 = vector.shape_cast %117 : vector<8x10xi32> to vector<8x10x1xi32>
    %c0_i32 = arith.constant 0 : i32
    %119 = vector.broadcast %c0_i32 : i32 to vector<8x10x1xi32>
    %120 = arith.cmpi ne, %118, %119 : vector<8x10x1xi32>
    %121 = vector.shape_cast %111 : vector<10x32xf32> to vector<1x10x32xf32>
    %122 = vector.shape_cast %120 : vector<8x10x1xi1> to vector<8x10x1xi1>
    %123 = vector.broadcast %122 : vector<8x10x1xi1> to vector<8x10x32xi1>
    %124 = vector.shape_cast %121 : vector<1x10x32xf32> to vector<1x10x32xf32>
    %125 = vector.broadcast %124 : vector<1x10x32xf32> to vector<8x10x32xf32>
    %126 = vector.broadcast %115 : f32 to vector<8x10x32xf32>
    %127 = arith.select %123, %125, %126 : vector<8x10x32xi1>, vector<8x10x32xf32>
    %cst_63 = arith.constant dense<0xFF800000> : vector<8x32xf32>
    %128 = vector.multi_reduction <maximumf>, %127, %cst_63 [1] : vector<8x10x32xf32> to vector<8x32xf32>
    %129 = arith.index_cast %arg0 : i32 to index
    %130 = memref.load %arg6[%129] : memref<2xi32, #tpu.memory_space<smem>>
    %c0_64 = arith.constant 0 : index
    %c0_65 = arith.constant 0 : index
    %131 = vector.load %arg23[%c0_64, %c0_65] : memref<32x64xf32, #tpu.memory_space<vmem>>, vector<32x64xf32>
    %cst_66 = arith.constant dense<0.000000e+00> : vector<8x64xf32>
    %132 = tpu.matmul %128, %131, %cst_66 {dimension_numbers = #tpu.dot_dimension_numbers<[1], [0], [0], [1], [0, 0, 1, 1], [], []>} : vector<8x32xf32>, vector<32x64xf32>, vector<8x64xf32> -> vector<8x64xf32>
    %c0_67 = arith.constant 0 : index
    %c0_68 = arith.constant 0 : index
    %133 = vector.load %arg25[%c0_67, %c0_68] : memref<1x64xf32, #tpu.memory_space<vmem>>, vector<1x64xf32>
    %134 = vector.broadcast %133 : vector<1x64xf32> to vector<8x64xf32>
    %135 = arith.addf %132, %134 : vector<8x64xf32>
    %cst_69 = arith.constant 0.000000e+00 : f32
    %136 = vector.broadcast %cst_69 : f32 to vector<1x16xf32>
    %cst_70 = arith.constant 0.000000e+00 : f32
    %137 = vector.broadcast %cst_70 : f32 to vector<1x16xf32>
    %138 = vector.extract_strided_slice %135 {offsets = [0, 0], sizes = [1, 64], strides = [1, 1]} : vector<8x64xf32> to vector<1x64xf32>
    %c0_71 = arith.constant 0 : index
    %c0_72 = arith.constant 0 : index
    %139 = vector.load %arg24[%c0_71, %c0_72] : memref<16x64xf32, #tpu.memory_space<vmem>>, vector<16x64xf32>
    %cst_73 = arith.constant dense<0.000000e+00> : vector<1x64xf32>
    %140 = tpu.matmul %136, %139, %cst_73 {dimension_numbers = #tpu.dot_dimension_numbers<[1], [0], [0], [1], [0, 0, 1, 1], [], []>} : vector<1x16xf32>, vector<16x64xf32>, vector<1x64xf32> -> vector<1x64xf32>
    %141 = arith.addf %138, %140 : vector<1x64xf32>
    %142 = vector.extract_strided_slice %141 {offsets = [0, 0], sizes = [1, 16], strides = [1, 1]} : vector<1x64xf32> to vector<1x16xf32>
    %143 = arith.negf %142 : vector<1x16xf32>
    %144 = math.exp %143 : vector<1x16xf32>
    %cst_74 = arith.constant 1.000000e+00 : f32
    %145 = vector.broadcast %cst_74 : f32 to vector<1x16xf32>
    %146 = arith.addf %145, %144 : vector<1x16xf32>
    %147 = arith.divf %145, %146 : vector<1x16xf32>
    %148 = vector.extract_strided_slice %141 {offsets = [0, 16], sizes = [1, 16], strides = [1, 1]} : vector<1x64xf32> to vector<1x16xf32>
    %149 = arith.negf %148 : vector<1x16xf32>
    %150 = math.exp %149 : vector<1x16xf32>
    %cst_75 = arith.constant 1.000000e+00 : f32
    %151 = vector.broadcast %cst_75 : f32 to vector<1x16xf32>
    %152 = arith.addf %151, %150 : vector<1x16xf32>
    %153 = arith.divf %151, %152 : vector<1x16xf32>
    %154 = vector.extract_strided_slice %141 {offsets = [0, 32], sizes = [1, 16], strides = [1, 1]} : vector<1x64xf32> to vector<1x16xf32>
    %155 = math.tanh %154 : vector<1x16xf32>
    %156 = vector.extract_strided_slice %141 {offsets = [0, 48], sizes = [1, 16], strides = [1, 1]} : vector<1x64xf32> to vector<1x16xf32>
    %157 = arith.negf %156 : vector<1x16xf32>
    %158 = math.exp %157 : vector<1x16xf32>
    %cst_76 = arith.constant 1.000000e+00 : f32
    %159 = vector.broadcast %cst_76 : f32 to vector<1x16xf32>
    %160 = arith.addf %159, %158 : vector<1x16xf32>
    %161 = arith.divf %159, %160 : vector<1x16xf32>
    %162 = arith.mulf %153, %137 : vector<1x16xf32>
    %163 = arith.mulf %147, %155 : vector<1x16xf32>
    %164 = arith.addf %162, %163 : vector<1x16xf32>
    %165 = math.tanh %164 : vector<1x16xf32>
    %166 = arith.mulf %161, %165 : vector<1x16xf32>
    %c0_i32_77 = arith.constant 0 : i32
    %167 = arith.cmpi sgt, %130, %c0_i32_77 : i32
    %cst_78 = arith.constant 1.000000e+00 : f32
    %cst_79 = arith.constant 0.000000e+00 : f32
    %168 = arith.select %167, %cst_78, %cst_79 : f32
    %169 = vector.broadcast %168 : f32 to vector<1x16xf32>
    %170 = arith.mulf %169, %166 : vector<1x16xf32>
    %cst_80 = arith.constant 1.000000e+00 : f32
    %171 = arith.subf %cst_80, %168 : f32
    %172 = vector.broadcast %171 : f32 to vector<1x16xf32>
    %173 = arith.mulf %172, %136 : vector<1x16xf32>
    %174 = arith.addf %170, %173 : vector<1x16xf32>
    %175 = vector.broadcast %168 : f32 to vector<1x16xf32>
    %176 = arith.mulf %175, %164 : vector<1x16xf32>
    %cst_81 = arith.constant 1.000000e+00 : f32
    %177 = arith.subf %cst_81, %168 : f32
    %178 = vector.broadcast %177 : f32 to vector<1x16xf32>
    %179 = arith.mulf %178, %137 : vector<1x16xf32>
    %180 = arith.addf %176, %179 : vector<1x16xf32>
    %181 = vector.broadcast %168 : f32 to vector<1x16xf32>
    %182 = arith.mulf %181, %166 : vector<1x16xf32>
    %183 = vector.extract_strided_slice %135 {offsets = [1, 0], sizes = [1, 64], strides = [1, 1]} : vector<8x64xf32> to vector<1x64xf32>
    %c0_82 = arith.constant 0 : index
    %c0_83 = arith.constant 0 : index
    %184 = vector.load %arg24[%c0_82, %c0_83] : memref<16x64xf32, #tpu.memory_space<vmem>>, vector<16x64xf32>
    %cst_84 = arith.constant dense<0.000000e+00> : vector<1x64xf32>
    %185 = tpu.matmul %174, %184, %cst_84 {dimension_numbers = #tpu.dot_dimension_numbers<[1], [0], [0], [1], [0, 0, 1, 1], [], []>} : vector<1x16xf32>, vector<16x64xf32>, vector<1x64xf32> -> vector<1x64xf32>
    %186 = arith.addf %183, %185 : vector<1x64xf32>
    %187 = vector.extract_strided_slice %186 {offsets = [0, 0], sizes = [1, 16], strides = [1, 1]} : vector<1x64xf32> to vector<1x16xf32>
    %188 = arith.negf %187 : vector<1x16xf32>
    %189 = math.exp %188 : vector<1x16xf32>
    %cst_85 = arith.constant 1.000000e+00 : f32
    %190 = vector.broadcast %cst_85 : f32 to vector<1x16xf32>
    %191 = arith.addf %190, %189 : vector<1x16xf32>
    %192 = arith.divf %190, %191 : vector<1x16xf32>
    %193 = vector.extract_strided_slice %186 {offsets = [0, 16], sizes = [1, 16], strides = [1, 1]} : vector<1x64xf32> to vector<1x16xf32>
    %194 = arith.negf %193 : vector<1x16xf32>
    %195 = math.exp %194 : vector<1x16xf32>
    %cst_86 = arith.constant 1.000000e+00 : f32
    %196 = vector.broadcast %cst_86 : f32 to vector<1x16xf32>
    %197 = arith.addf %196, %195 : vector<1x16xf32>
    %198 = arith.divf %196, %197 : vector<1x16xf32>
    %199 = vector.extract_strided_slice %186 {offsets = [0, 32], sizes = [1, 16], strides = [1, 1]} : vector<1x64xf32> to vector<1x16xf32>
    %200 = math.tanh %199 : vector<1x16xf32>
    %201 = vector.extract_strided_slice %186 {offsets = [0, 48], sizes = [1, 16], strides = [1, 1]} : vector<1x64xf32> to vector<1x16xf32>
    %202 = arith.negf %201 : vector<1x16xf32>
    %203 = math.exp %202 : vector<1x16xf32>
    %cst_87 = arith.constant 1.000000e+00 : f32
    %204 = vector.broadcast %cst_87 : f32 to vector<1x16xf32>
    %205 = arith.addf %204, %203 : vector<1x16xf32>
    %206 = arith.divf %204, %205 : vector<1x16xf32>
    %207 = arith.mulf %198, %180 : vector<1x16xf32>
    %208 = arith.mulf %192, %200 : vector<1x16xf32>
    %209 = arith.addf %207, %208 : vector<1x16xf32>
    %210 = math.tanh %209 : vector<1x16xf32>
    %211 = arith.mulf %206, %210 : vector<1x16xf32>
    %c1_i32 = arith.constant 1 : i32
    %212 = arith.cmpi sgt, %130, %c1_i32 : i32
    %cst_88 = arith.constant 1.000000e+00 : f32
    %cst_89 = arith.constant 0.000000e+00 : f32
    %213 = arith.select %212, %cst_88, %cst_89 : f32
    %214 = vector.broadcast %213 : f32 to vector<1x16xf32>
    %215 = arith.mulf %214, %211 : vector<1x16xf32>
    %cst_90 = arith.constant 1.000000e+00 : f32
    %216 = arith.subf %cst_90, %213 : f32
    %217 = vector.broadcast %216 : f32 to vector<1x16xf32>
    %218 = arith.mulf %217, %174 : vector<1x16xf32>
    %219 = arith.addf %215, %218 : vector<1x16xf32>
    %220 = vector.broadcast %213 : f32 to vector<1x16xf32>
    %221 = arith.mulf %220, %209 : vector<1x16xf32>
    %cst_91 = arith.constant 1.000000e+00 : f32
    %222 = arith.subf %cst_91, %213 : f32
    %223 = vector.broadcast %222 : f32 to vector<1x16xf32>
    %224 = arith.mulf %223, %180 : vector<1x16xf32>
    %225 = arith.addf %221, %224 : vector<1x16xf32>
    %226 = vector.broadcast %213 : f32 to vector<1x16xf32>
    %227 = arith.mulf %226, %211 : vector<1x16xf32>
    %228 = vector.extract_strided_slice %135 {offsets = [2, 0], sizes = [1, 64], strides = [1, 1]} : vector<8x64xf32> to vector<1x64xf32>
    %c0_92 = arith.constant 0 : index
    %c0_93 = arith.constant 0 : index
    %229 = vector.load %arg24[%c0_92, %c0_93] : memref<16x64xf32, #tpu.memory_space<vmem>>, vector<16x64xf32>
    %cst_94 = arith.constant dense<0.000000e+00> : vector<1x64xf32>
    %230 = tpu.matmul %219, %229, %cst_94 {dimension_numbers = #tpu.dot_dimension_numbers<[1], [0], [0], [1], [0, 0, 1, 1], [], []>} : vector<1x16xf32>, vector<16x64xf32>, vector<1x64xf32> -> vector<1x64xf32>
    %231 = arith.addf %228, %230 : vector<1x64xf32>
    %232 = vector.extract_strided_slice %231 {offsets = [0, 0], sizes = [1, 16], strides = [1, 1]} : vector<1x64xf32> to vector<1x16xf32>
    %233 = arith.negf %232 : vector<1x16xf32>
    %234 = math.exp %233 : vector<1x16xf32>
    %cst_95 = arith.constant 1.000000e+00 : f32
    %235 = vector.broadcast %cst_95 : f32 to vector<1x16xf32>
    %236 = arith.addf %235, %234 : vector<1x16xf32>
    %237 = arith.divf %235, %236 : vector<1x16xf32>
    %238 = vector.extract_strided_slice %231 {offsets = [0, 16], sizes = [1, 16], strides = [1, 1]} : vector<1x64xf32> to vector<1x16xf32>
    %239 = arith.negf %238 : vector<1x16xf32>
    %240 = math.exp %239 : vector<1x16xf32>
    %cst_96 = arith.constant 1.000000e+00 : f32
    %241 = vector.broadcast %cst_96 : f32 to vector<1x16xf32>
    %242 = arith.addf %241, %240 : vector<1x16xf32>
    %243 = arith.divf %241, %242 : vector<1x16xf32>
    %244 = vector.extract_strided_slice %231 {offsets = [0, 32], sizes = [1, 16], strides = [1, 1]} : vector<1x64xf32> to vector<1x16xf32>
    %245 = math.tanh %244 : vector<1x16xf32>
    %246 = vector.extract_strided_slice %231 {offsets = [0, 48], sizes = [1, 16], strides = [1, 1]} : vector<1x64xf32> to vector<1x16xf32>
    %247 = arith.negf %246 : vector<1x16xf32>
    %248 = math.exp %247 : vector<1x16xf32>
    %cst_97 = arith.constant 1.000000e+00 : f32
    %249 = vector.broadcast %cst_97 : f32 to vector<1x16xf32>
    %250 = arith.addf %249, %248 : vector<1x16xf32>
    %251 = arith.divf %249, %250 : vector<1x16xf32>
    %252 = arith.mulf %243, %225 : vector<1x16xf32>
    %253 = arith.mulf %237, %245 : vector<1x16xf32>
    %254 = arith.addf %252, %253 : vector<1x16xf32>
    %255 = math.tanh %254 : vector<1x16xf32>
    %256 = arith.mulf %251, %255 : vector<1x16xf32>
    %c2_i32 = arith.constant 2 : i32
    %257 = arith.cmpi sgt, %130, %c2_i32 : i32
    %cst_98 = arith.constant 1.000000e+00 : f32
    %cst_99 = arith.constant 0.000000e+00 : f32
    %258 = arith.select %257, %cst_98, %cst_99 : f32
    %259 = vector.broadcast %258 : f32 to vector<1x16xf32>
    %260 = arith.mulf %259, %256 : vector<1x16xf32>
    %cst_100 = arith.constant 1.000000e+00 : f32
    %261 = arith.subf %cst_100, %258 : f32
    %262 = vector.broadcast %261 : f32 to vector<1x16xf32>
    %263 = arith.mulf %262, %219 : vector<1x16xf32>
    %264 = arith.addf %260, %263 : vector<1x16xf32>
    %265 = vector.broadcast %258 : f32 to vector<1x16xf32>
    %266 = arith.mulf %265, %254 : vector<1x16xf32>
    %cst_101 = arith.constant 1.000000e+00 : f32
    %267 = arith.subf %cst_101, %258 : f32
    %268 = vector.broadcast %267 : f32 to vector<1x16xf32>
    %269 = arith.mulf %268, %225 : vector<1x16xf32>
    %270 = arith.addf %266, %269 : vector<1x16xf32>
    %271 = vector.broadcast %258 : f32 to vector<1x16xf32>
    %272 = arith.mulf %271, %256 : vector<1x16xf32>
    %273 = vector.extract_strided_slice %135 {offsets = [3, 0], sizes = [1, 64], strides = [1, 1]} : vector<8x64xf32> to vector<1x64xf32>
    %c0_102 = arith.constant 0 : index
    %c0_103 = arith.constant 0 : index
    %274 = vector.load %arg24[%c0_102, %c0_103] : memref<16x64xf32, #tpu.memory_space<vmem>>, vector<16x64xf32>
    %cst_104 = arith.constant dense<0.000000e+00> : vector<1x64xf32>
    %275 = tpu.matmul %264, %274, %cst_104 {dimension_numbers = #tpu.dot_dimension_numbers<[1], [0], [0], [1], [0, 0, 1, 1], [], []>} : vector<1x16xf32>, vector<16x64xf32>, vector<1x64xf32> -> vector<1x64xf32>
    %276 = arith.addf %273, %275 : vector<1x64xf32>
    %277 = vector.extract_strided_slice %276 {offsets = [0, 0], sizes = [1, 16], strides = [1, 1]} : vector<1x64xf32> to vector<1x16xf32>
    %278 = arith.negf %277 : vector<1x16xf32>
    %279 = math.exp %278 : vector<1x16xf32>
    %cst_105 = arith.constant 1.000000e+00 : f32
    %280 = vector.broadcast %cst_105 : f32 to vector<1x16xf32>
    %281 = arith.addf %280, %279 : vector<1x16xf32>
    %282 = arith.divf %280, %281 : vector<1x16xf32>
    %283 = vector.extract_strided_slice %276 {offsets = [0, 16], sizes = [1, 16], strides = [1, 1]} : vector<1x64xf32> to vector<1x16xf32>
    %284 = arith.negf %283 : vector<1x16xf32>
    %285 = math.exp %284 : vector<1x16xf32>
    %cst_106 = arith.constant 1.000000e+00 : f32
    %286 = vector.broadcast %cst_106 : f32 to vector<1x16xf32>
    %287 = arith.addf %286, %285 : vector<1x16xf32>
    %288 = arith.divf %286, %287 : vector<1x16xf32>
    %289 = vector.extract_strided_slice %276 {offsets = [0, 32], sizes = [1, 16], strides = [1, 1]} : vector<1x64xf32> to vector<1x16xf32>
    %290 = math.tanh %289 : vector<1x16xf32>
    %291 = vector.extract_strided_slice %276 {offsets = [0, 48], sizes = [1, 16], strides = [1, 1]} : vector<1x64xf32> to vector<1x16xf32>
    %292 = arith.negf %291 : vector<1x16xf32>
    %293 = math.exp %292 : vector<1x16xf32>
    %cst_107 = arith.constant 1.000000e+00 : f32
    %294 = vector.broadcast %cst_107 : f32 to vector<1x16xf32>
    %295 = arith.addf %294, %293 : vector<1x16xf32>
    %296 = arith.divf %294, %295 : vector<1x16xf32>
    %297 = arith.mulf %288, %270 : vector<1x16xf32>
    %298 = arith.mulf %282, %290 : vector<1x16xf32>
    %299 = arith.addf %297, %298 : vector<1x16xf32>
    %300 = math.tanh %299 : vector<1x16xf32>
    %301 = arith.mulf %296, %300 : vector<1x16xf32>
    %c3_i32 = arith.constant 3 : i32
    %302 = arith.cmpi sgt, %130, %c3_i32 : i32
    %cst_108 = arith.constant 1.000000e+00 : f32
    %cst_109 = arith.constant 0.000000e+00 : f32
    %303 = arith.select %302, %cst_108, %cst_109 : f32
    %304 = vector.broadcast %303 : f32 to vector<1x16xf32>
    %305 = arith.mulf %304, %301 : vector<1x16xf32>
    %cst_110 = arith.constant 1.000000e+00 : f32
    %306 = arith.subf %cst_110, %303 : f32
    %307 = vector.broadcast %306 : f32 to vector<1x16xf32>
    %308 = arith.mulf %307, %264 : vector<1x16xf32>
    %309 = arith.addf %305, %308 : vector<1x16xf32>
    %310 = vector.broadcast %303 : f32 to vector<1x16xf32>
    %311 = arith.mulf %310, %299 : vector<1x16xf32>
    %cst_111 = arith.constant 1.000000e+00 : f32
    %312 = arith.subf %cst_111, %303 : f32
    %313 = vector.broadcast %312 : f32 to vector<1x16xf32>
    %314 = arith.mulf %313, %270 : vector<1x16xf32>
    %315 = arith.addf %311, %314 : vector<1x16xf32>
    %316 = vector.broadcast %303 : f32 to vector<1x16xf32>
    %317 = arith.mulf %316, %301 : vector<1x16xf32>
    %318 = vector.extract_strided_slice %135 {offsets = [4, 0], sizes = [1, 64], strides = [1, 1]} : vector<8x64xf32> to vector<1x64xf32>
    %c0_112 = arith.constant 0 : index
    %c0_113 = arith.constant 0 : index
    %319 = vector.load %arg24[%c0_112, %c0_113] : memref<16x64xf32, #tpu.memory_space<vmem>>, vector<16x64xf32>
    %cst_114 = arith.constant dense<0.000000e+00> : vector<1x64xf32>
    %320 = tpu.matmul %309, %319, %cst_114 {dimension_numbers = #tpu.dot_dimension_numbers<[1], [0], [0], [1], [0, 0, 1, 1], [], []>} : vector<1x16xf32>, vector<16x64xf32>, vector<1x64xf32> -> vector<1x64xf32>
    %321 = arith.addf %318, %320 : vector<1x64xf32>
    %322 = vector.extract_strided_slice %321 {offsets = [0, 0], sizes = [1, 16], strides = [1, 1]} : vector<1x64xf32> to vector<1x16xf32>
    %323 = arith.negf %322 : vector<1x16xf32>
    %324 = math.exp %323 : vector<1x16xf32>
    %cst_115 = arith.constant 1.000000e+00 : f32
    %325 = vector.broadcast %cst_115 : f32 to vector<1x16xf32>
    %326 = arith.addf %325, %324 : vector<1x16xf32>
    %327 = arith.divf %325, %326 : vector<1x16xf32>
    %328 = vector.extract_strided_slice %321 {offsets = [0, 16], sizes = [1, 16], strides = [1, 1]} : vector<1x64xf32> to vector<1x16xf32>
    %329 = arith.negf %328 : vector<1x16xf32>
    %330 = math.exp %329 : vector<1x16xf32>
    %cst_116 = arith.constant 1.000000e+00 : f32
    %331 = vector.broadcast %cst_116 : f32 to vector<1x16xf32>
    %332 = arith.addf %331, %330 : vector<1x16xf32>
    %333 = arith.divf %331, %332 : vector<1x16xf32>
    %334 = vector.extract_strided_slice %321 {offsets = [0, 32], sizes = [1, 16], strides = [1, 1]} : vector<1x64xf32> to vector<1x16xf32>
    %335 = math.tanh %334 : vector<1x16xf32>
    %336 = vector.extract_strided_slice %321 {offsets = [0, 48], sizes = [1, 16], strides = [1, 1]} : vector<1x64xf32> to vector<1x16xf32>
    %337 = arith.negf %336 : vector<1x16xf32>
    %338 = math.exp %337 : vector<1x16xf32>
    %cst_117 = arith.constant 1.000000e+00 : f32
    %339 = vector.broadcast %cst_117 : f32 to vector<1x16xf32>
    %340 = arith.addf %339, %338 : vector<1x16xf32>
    %341 = arith.divf %339, %340 : vector<1x16xf32>
    %342 = arith.mulf %333, %315 : vector<1x16xf32>
    %343 = arith.mulf %327, %335 : vector<1x16xf32>
    %344 = arith.addf %342, %343 : vector<1x16xf32>
    %345 = math.tanh %344 : vector<1x16xf32>
    %346 = arith.mulf %341, %345 : vector<1x16xf32>
    %c4_i32 = arith.constant 4 : i32
    %347 = arith.cmpi sgt, %130, %c4_i32 : i32
    %cst_118 = arith.constant 1.000000e+00 : f32
    %cst_119 = arith.constant 0.000000e+00 : f32
    %348 = arith.select %347, %cst_118, %cst_119 : f32
    %349 = vector.broadcast %348 : f32 to vector<1x16xf32>
    %350 = arith.mulf %349, %346 : vector<1x16xf32>
    %cst_120 = arith.constant 1.000000e+00 : f32
    %351 = arith.subf %cst_120, %348 : f32
    %352 = vector.broadcast %351 : f32 to vector<1x16xf32>
    %353 = arith.mulf %352, %309 : vector<1x16xf32>
    %354 = arith.addf %350, %353 : vector<1x16xf32>
    %355 = vector.broadcast %348 : f32 to vector<1x16xf32>
    %356 = arith.mulf %355, %344 : vector<1x16xf32>
    %cst_121 = arith.constant 1.000000e+00 : f32
    %357 = arith.subf %cst_121, %348 : f32
    %358 = vector.broadcast %357 : f32 to vector<1x16xf32>
    %359 = arith.mulf %358, %315 : vector<1x16xf32>
    %360 = arith.addf %356, %359 : vector<1x16xf32>
    %361 = vector.broadcast %348 : f32 to vector<1x16xf32>
    %362 = arith.mulf %361, %346 : vector<1x16xf32>
    %363 = vector.extract_strided_slice %135 {offsets = [5, 0], sizes = [1, 64], strides = [1, 1]} : vector<8x64xf32> to vector<1x64xf32>
    %c0_122 = arith.constant 0 : index
    %c0_123 = arith.constant 0 : index
    %364 = vector.load %arg24[%c0_122, %c0_123] : memref<16x64xf32, #tpu.memory_space<vmem>>, vector<16x64xf32>
    %cst_124 = arith.constant dense<0.000000e+00> : vector<1x64xf32>
    %365 = tpu.matmul %354, %364, %cst_124 {dimension_numbers = #tpu.dot_dimension_numbers<[1], [0], [0], [1], [0, 0, 1, 1], [], []>} : vector<1x16xf32>, vector<16x64xf32>, vector<1x64xf32> -> vector<1x64xf32>
    %366 = arith.addf %363, %365 : vector<1x64xf32>
    %367 = vector.extract_strided_slice %366 {offsets = [0, 0], sizes = [1, 16], strides = [1, 1]} : vector<1x64xf32> to vector<1x16xf32>
    %368 = arith.negf %367 : vector<1x16xf32>
    %369 = math.exp %368 : vector<1x16xf32>
    %cst_125 = arith.constant 1.000000e+00 : f32
    %370 = vector.broadcast %cst_125 : f32 to vector<1x16xf32>
    %371 = arith.addf %370, %369 : vector<1x16xf32>
    %372 = arith.divf %370, %371 : vector<1x16xf32>
    %373 = vector.extract_strided_slice %366 {offsets = [0, 16], sizes = [1, 16], strides = [1, 1]} : vector<1x64xf32> to vector<1x16xf32>
    %374 = arith.negf %373 : vector<1x16xf32>
    %375 = math.exp %374 : vector<1x16xf32>
    %cst_126 = arith.constant 1.000000e+00 : f32
    %376 = vector.broadcast %cst_126 : f32 to vector<1x16xf32>
    %377 = arith.addf %376, %375 : vector<1x16xf32>
    %378 = arith.divf %376, %377 : vector<1x16xf32>
    %379 = vector.extract_strided_slice %366 {offsets = [0, 32], sizes = [1, 16], strides = [1, 1]} : vector<1x64xf32> to vector<1x16xf32>
    %380 = math.tanh %379 : vector<1x16xf32>
    %381 = vector.extract_strided_slice %366 {offsets = [0, 48], sizes = [1, 16], strides = [1, 1]} : vector<1x64xf32> to vector<1x16xf32>
    %382 = arith.negf %381 : vector<1x16xf32>
    %383 = math.exp %382 : vector<1x16xf32>
    %cst_127 = arith.constant 1.000000e+00 : f32
    %384 = vector.broadcast %cst_127 : f32 to vector<1x16xf32>
    %385 = arith.addf %384, %383 : vector<1x16xf32>
    %386 = arith.divf %384, %385 : vector<1x16xf32>
    %387 = arith.mulf %378, %360 : vector<1x16xf32>
    %388 = arith.mulf %372, %380 : vector<1x16xf32>
    %389 = arith.addf %387, %388 : vector<1x16xf32>
    %390 = math.tanh %389 : vector<1x16xf32>
    %391 = arith.mulf %386, %390 : vector<1x16xf32>
    %c5_i32 = arith.constant 5 : i32
    %392 = arith.cmpi sgt, %130, %c5_i32 : i32
    %cst_128 = arith.constant 1.000000e+00 : f32
    %cst_129 = arith.constant 0.000000e+00 : f32
    %393 = arith.select %392, %cst_128, %cst_129 : f32
    %394 = vector.broadcast %393 : f32 to vector<1x16xf32>
    %395 = arith.mulf %394, %391 : vector<1x16xf32>
    %cst_130 = arith.constant 1.000000e+00 : f32
    %396 = arith.subf %cst_130, %393 : f32
    %397 = vector.broadcast %396 : f32 to vector<1x16xf32>
    %398 = arith.mulf %397, %354 : vector<1x16xf32>
    %399 = arith.addf %395, %398 : vector<1x16xf32>
    %400 = vector.broadcast %393 : f32 to vector<1x16xf32>
    %401 = arith.mulf %400, %389 : vector<1x16xf32>
    %cst_131 = arith.constant 1.000000e+00 : f32
    %402 = arith.subf %cst_131, %393 : f32
    %403 = vector.broadcast %402 : f32 to vector<1x16xf32>
    %404 = arith.mulf %403, %360 : vector<1x16xf32>
    %405 = arith.addf %401, %404 : vector<1x16xf32>
    %406 = vector.broadcast %393 : f32 to vector<1x16xf32>
    %407 = arith.mulf %406, %391 : vector<1x16xf32>
    %408 = vector.extract_strided_slice %135 {offsets = [6, 0], sizes = [1, 64], strides = [1, 1]} : vector<8x64xf32> to vector<1x64xf32>
    %c0_132 = arith.constant 0 : index
    %c0_133 = arith.constant 0 : index
    %409 = vector.load %arg24[%c0_132, %c0_133] : memref<16x64xf32, #tpu.memory_space<vmem>>, vector<16x64xf32>
    %cst_134 = arith.constant dense<0.000000e+00> : vector<1x64xf32>
    %410 = tpu.matmul %399, %409, %cst_134 {dimension_numbers = #tpu.dot_dimension_numbers<[1], [0], [0], [1], [0, 0, 1, 1], [], []>} : vector<1x16xf32>, vector<16x64xf32>, vector<1x64xf32> -> vector<1x64xf32>
    %411 = arith.addf %408, %410 : vector<1x64xf32>
    %412 = vector.extract_strided_slice %411 {offsets = [0, 0], sizes = [1, 16], strides = [1, 1]} : vector<1x64xf32> to vector<1x16xf32>
    %413 = arith.negf %412 : vector<1x16xf32>
    %414 = math.exp %413 : vector<1x16xf32>
    %cst_135 = arith.constant 1.000000e+00 : f32
    %415 = vector.broadcast %cst_135 : f32 to vector<1x16xf32>
    %416 = arith.addf %415, %414 : vector<1x16xf32>
    %417 = arith.divf %415, %416 : vector<1x16xf32>
    %418 = vector.extract_strided_slice %411 {offsets = [0, 16], sizes = [1, 16], strides = [1, 1]} : vector<1x64xf32> to vector<1x16xf32>
    %419 = arith.negf %418 : vector<1x16xf32>
    %420 = math.exp %419 : vector<1x16xf32>
    %cst_136 = arith.constant 1.000000e+00 : f32
    %421 = vector.broadcast %cst_136 : f32 to vector<1x16xf32>
    %422 = arith.addf %421, %420 : vector<1x16xf32>
    %423 = arith.divf %421, %422 : vector<1x16xf32>
    %424 = vector.extract_strided_slice %411 {offsets = [0, 32], sizes = [1, 16], strides = [1, 1]} : vector<1x64xf32> to vector<1x16xf32>
    %425 = math.tanh %424 : vector<1x16xf32>
    %426 = vector.extract_strided_slice %411 {offsets = [0, 48], sizes = [1, 16], strides = [1, 1]} : vector<1x64xf32> to vector<1x16xf32>
    %427 = arith.negf %426 : vector<1x16xf32>
    %428 = math.exp %427 : vector<1x16xf32>
    %cst_137 = arith.constant 1.000000e+00 : f32
    %429 = vector.broadcast %cst_137 : f32 to vector<1x16xf32>
    %430 = arith.addf %429, %428 : vector<1x16xf32>
    %431 = arith.divf %429, %430 : vector<1x16xf32>
    %432 = arith.mulf %423, %405 : vector<1x16xf32>
    %433 = arith.mulf %417, %425 : vector<1x16xf32>
    %434 = arith.addf %432, %433 : vector<1x16xf32>
    %435 = math.tanh %434 : vector<1x16xf32>
    %436 = arith.mulf %431, %435 : vector<1x16xf32>
    %c6_i32 = arith.constant 6 : i32
    %437 = arith.cmpi sgt, %130, %c6_i32 : i32
    %cst_138 = arith.constant 1.000000e+00 : f32
    %cst_139 = arith.constant 0.000000e+00 : f32
    %438 = arith.select %437, %cst_138, %cst_139 : f32
    %439 = vector.broadcast %438 : f32 to vector<1x16xf32>
    %440 = arith.mulf %439, %436 : vector<1x16xf32>
    %cst_140 = arith.constant 1.000000e+00 : f32
    %441 = arith.subf %cst_140, %438 : f32
    %442 = vector.broadcast %441 : f32 to vector<1x16xf32>
    %443 = arith.mulf %442, %399 : vector<1x16xf32>
    %444 = arith.addf %440, %443 : vector<1x16xf32>
    %445 = vector.broadcast %438 : f32 to vector<1x16xf32>
    %446 = arith.mulf %445, %434 : vector<1x16xf32>
    %cst_141 = arith.constant 1.000000e+00 : f32
    %447 = arith.subf %cst_141, %438 : f32
    %448 = vector.broadcast %447 : f32 to vector<1x16xf32>
    %449 = arith.mulf %448, %405 : vector<1x16xf32>
    %450 = arith.addf %446, %449 : vector<1x16xf32>
    %451 = vector.broadcast %438 : f32 to vector<1x16xf32>
    %452 = arith.mulf %451, %436 : vector<1x16xf32>
    %453 = vector.extract_strided_slice %135 {offsets = [7, 0], sizes = [1, 64], strides = [1, 1]} : vector<8x64xf32> to vector<1x64xf32>
    %c0_142 = arith.constant 0 : index
    %c0_143 = arith.constant 0 : index
    %454 = vector.load %arg24[%c0_142, %c0_143] : memref<16x64xf32, #tpu.memory_space<vmem>>, vector<16x64xf32>
    %cst_144 = arith.constant dense<0.000000e+00> : vector<1x64xf32>
    %455 = tpu.matmul %444, %454, %cst_144 {dimension_numbers = #tpu.dot_dimension_numbers<[1], [0], [0], [1], [0, 0, 1, 1], [], []>} : vector<1x16xf32>, vector<16x64xf32>, vector<1x64xf32> -> vector<1x64xf32>
    %456 = arith.addf %453, %455 : vector<1x64xf32>
    %457 = vector.extract_strided_slice %456 {offsets = [0, 0], sizes = [1, 16], strides = [1, 1]} : vector<1x64xf32> to vector<1x16xf32>
    %458 = arith.negf %457 : vector<1x16xf32>
    %459 = math.exp %458 : vector<1x16xf32>
    %cst_145 = arith.constant 1.000000e+00 : f32
    %460 = vector.broadcast %cst_145 : f32 to vector<1x16xf32>
    %461 = arith.addf %460, %459 : vector<1x16xf32>
    %462 = arith.divf %460, %461 : vector<1x16xf32>
    %463 = vector.extract_strided_slice %456 {offsets = [0, 16], sizes = [1, 16], strides = [1, 1]} : vector<1x64xf32> to vector<1x16xf32>
    %464 = arith.negf %463 : vector<1x16xf32>
    %465 = math.exp %464 : vector<1x16xf32>
    %cst_146 = arith.constant 1.000000e+00 : f32
    %466 = vector.broadcast %cst_146 : f32 to vector<1x16xf32>
    %467 = arith.addf %466, %465 : vector<1x16xf32>
    %468 = arith.divf %466, %467 : vector<1x16xf32>
    %469 = vector.extract_strided_slice %456 {offsets = [0, 32], sizes = [1, 16], strides = [1, 1]} : vector<1x64xf32> to vector<1x16xf32>
    %470 = math.tanh %469 : vector<1x16xf32>
    %471 = vector.extract_strided_slice %456 {offsets = [0, 48], sizes = [1, 16], strides = [1, 1]} : vector<1x64xf32> to vector<1x16xf32>
    %472 = arith.negf %471 : vector<1x16xf32>
    %473 = math.exp %472 : vector<1x16xf32>
    %cst_147 = arith.constant 1.000000e+00 : f32
    %474 = vector.broadcast %cst_147 : f32 to vector<1x16xf32>
    %475 = arith.addf %474, %473 : vector<1x16xf32>
    %476 = arith.divf %474, %475 : vector<1x16xf32>
    %477 = arith.mulf %468, %450 : vector<1x16xf32>
    %478 = arith.mulf %462, %470 : vector<1x16xf32>
    %479 = arith.addf %477, %478 : vector<1x16xf32>
    %480 = math.tanh %479 : vector<1x16xf32>
    %481 = arith.mulf %476, %480 : vector<1x16xf32>
    %c7_i32 = arith.constant 7 : i32
    %482 = arith.cmpi sgt, %130, %c7_i32 : i32
    %cst_148 = arith.constant 1.000000e+00 : f32
    %cst_149 = arith.constant 0.000000e+00 : f32
    %483 = arith.select %482, %cst_148, %cst_149 : f32
    %484 = vector.broadcast %483 : f32 to vector<1x16xf32>
    %485 = arith.mulf %484, %481 : vector<1x16xf32>
    %486 = tpu.concatenate %182, %227, %272, %317, %362, %407, %452, %485 in 0 : vector<1x16xf32>, vector<1x16xf32>, vector<1x16xf32>, vector<1x16xf32>, vector<1x16xf32>, vector<1x16xf32>, vector<1x16xf32>, vector<1x16xf32> -> vector<8x16xf32>
    %c0_150 = arith.constant 0 : index
    %c0_151 = arith.constant 0 : index
    %487 = vector.load %arg26[%c0_150, %c0_151] : memref<32x64xf32, #tpu.memory_space<vmem>>, vector<32x64xf32>
    %cst_152 = arith.constant dense<0.000000e+00> : vector<8x64xf32>
    %488 = tpu.matmul %128, %487, %cst_152 {dimension_numbers = #tpu.dot_dimension_numbers<[1], [0], [0], [1], [0, 0, 1, 1], [], []>} : vector<8x32xf32>, vector<32x64xf32>, vector<8x64xf32> -> vector<8x64xf32>
    %c0_153 = arith.constant 0 : index
    %c0_154 = arith.constant 0 : index
    %489 = vector.load %arg28[%c0_153, %c0_154] : memref<1x64xf32, #tpu.memory_space<vmem>>, vector<1x64xf32>
    %490 = vector.broadcast %489 : vector<1x64xf32> to vector<8x64xf32>
    %491 = arith.addf %488, %490 : vector<8x64xf32>
    %cst_155 = arith.constant 0.000000e+00 : f32
    %492 = vector.broadcast %cst_155 : f32 to vector<1x16xf32>
    %cst_156 = arith.constant 0.000000e+00 : f32
    %493 = vector.broadcast %cst_156 : f32 to vector<1x16xf32>
    %494 = vector.extract_strided_slice %491 {offsets = [7, 0], sizes = [1, 64], strides = [1, 1]} : vector<8x64xf32> to vector<1x64xf32>
    %c0_157 = arith.constant 0 : index
    %c0_158 = arith.constant 0 : index
    %495 = vector.load %arg27[%c0_157, %c0_158] : memref<16x64xf32, #tpu.memory_space<vmem>>, vector<16x64xf32>
    %cst_159 = arith.constant dense<0.000000e+00> : vector<1x64xf32>
    %496 = tpu.matmul %492, %495, %cst_159 {dimension_numbers = #tpu.dot_dimension_numbers<[1], [0], [0], [1], [0, 0, 1, 1], [], []>} : vector<1x16xf32>, vector<16x64xf32>, vector<1x64xf32> -> vector<1x64xf32>
    %497 = arith.addf %494, %496 : vector<1x64xf32>
    %498 = vector.extract_strided_slice %497 {offsets = [0, 0], sizes = [1, 16], strides = [1, 1]} : vector<1x64xf32> to vector<1x16xf32>
    %499 = arith.negf %498 : vector<1x16xf32>
    %500 = math.exp %499 : vector<1x16xf32>
    %cst_160 = arith.constant 1.000000e+00 : f32
    %501 = vector.broadcast %cst_160 : f32 to vector<1x16xf32>
    %502 = arith.addf %501, %500 : vector<1x16xf32>
    %503 = arith.divf %501, %502 : vector<1x16xf32>
    %504 = vector.extract_strided_slice %497 {offsets = [0, 16], sizes = [1, 16], strides = [1, 1]} : vector<1x64xf32> to vector<1x16xf32>
    %505 = arith.negf %504 : vector<1x16xf32>
    %506 = math.exp %505 : vector<1x16xf32>
    %cst_161 = arith.constant 1.000000e+00 : f32
    %507 = vector.broadcast %cst_161 : f32 to vector<1x16xf32>
    %508 = arith.addf %507, %506 : vector<1x16xf32>
    %509 = arith.divf %507, %508 : vector<1x16xf32>
    %510 = vector.extract_strided_slice %497 {offsets = [0, 32], sizes = [1, 16], strides = [1, 1]} : vector<1x64xf32> to vector<1x16xf32>
    %511 = math.tanh %510 : vector<1x16xf32>
    %512 = vector.extract_strided_slice %497 {offsets = [0, 48], sizes = [1, 16], strides = [1, 1]} : vector<1x64xf32> to vector<1x16xf32>
    %513 = arith.negf %512 : vector<1x16xf32>
    %514 = math.exp %513 : vector<1x16xf32>
    %cst_162 = arith.constant 1.000000e+00 : f32
    %515 = vector.broadcast %cst_162 : f32 to vector<1x16xf32>
    %516 = arith.addf %515, %514 : vector<1x16xf32>
    %517 = arith.divf %515, %516 : vector<1x16xf32>
    %518 = arith.mulf %509, %493 : vector<1x16xf32>
    %519 = arith.mulf %503, %511 : vector<1x16xf32>
    %520 = arith.addf %518, %519 : vector<1x16xf32>
    %521 = math.tanh %520 : vector<1x16xf32>
    %522 = arith.mulf %517, %521 : vector<1x16xf32>
    %c7_i32_163 = arith.constant 7 : i32
    %523 = arith.cmpi sgt, %130, %c7_i32_163 : i32
    %cst_164 = arith.constant 1.000000e+00 : f32
    %cst_165 = arith.constant 0.000000e+00 : f32
    %524 = arith.select %523, %cst_164, %cst_165 : f32
    %525 = vector.broadcast %524 : f32 to vector<1x16xf32>
    %526 = arith.mulf %525, %522 : vector<1x16xf32>
    %cst_166 = arith.constant 1.000000e+00 : f32
    %527 = arith.subf %cst_166, %524 : f32
    %528 = vector.broadcast %527 : f32 to vector<1x16xf32>
    %529 = arith.mulf %528, %492 : vector<1x16xf32>
    %530 = arith.addf %526, %529 : vector<1x16xf32>
    %531 = vector.broadcast %524 : f32 to vector<1x16xf32>
    %532 = arith.mulf %531, %520 : vector<1x16xf32>
    %cst_167 = arith.constant 1.000000e+00 : f32
    %533 = arith.subf %cst_167, %524 : f32
    %534 = vector.broadcast %533 : f32 to vector<1x16xf32>
    %535 = arith.mulf %534, %493 : vector<1x16xf32>
    %536 = arith.addf %532, %535 : vector<1x16xf32>
    %537 = vector.broadcast %524 : f32 to vector<1x16xf32>
    %538 = arith.mulf %537, %522 : vector<1x16xf32>
    %539 = vector.extract_strided_slice %491 {offsets = [6, 0], sizes = [1, 64], strides = [1, 1]} : vector<8x64xf32> to vector<1x64xf32>
    %c0_168 = arith.constant 0 : index
    %c0_169 = arith.constant 0 : index
    %540 = vector.load %arg27[%c0_168, %c0_169] : memref<16x64xf32, #tpu.memory_space<vmem>>, vector<16x64xf32>
    %cst_170 = arith.constant dense<0.000000e+00> : vector<1x64xf32>
    %541 = tpu.matmul %530, %540, %cst_170 {dimension_numbers = #tpu.dot_dimension_numbers<[1], [0], [0], [1], [0, 0, 1, 1], [], []>} : vector<1x16xf32>, vector<16x64xf32>, vector<1x64xf32> -> vector<1x64xf32>
    %542 = arith.addf %539, %541 : vector<1x64xf32>
    %543 = vector.extract_strided_slice %542 {offsets = [0, 0], sizes = [1, 16], strides = [1, 1]} : vector<1x64xf32> to vector<1x16xf32>
    %544 = arith.negf %543 : vector<1x16xf32>
    %545 = math.exp %544 : vector<1x16xf32>
    %cst_171 = arith.constant 1.000000e+00 : f32
    %546 = vector.broadcast %cst_171 : f32 to vector<1x16xf32>
    %547 = arith.addf %546, %545 : vector<1x16xf32>
    %548 = arith.divf %546, %547 : vector<1x16xf32>
    %549 = vector.extract_strided_slice %542 {offsets = [0, 16], sizes = [1, 16], strides = [1, 1]} : vector<1x64xf32> to vector<1x16xf32>
    %550 = arith.negf %549 : vector<1x16xf32>
    %551 = math.exp %550 : vector<1x16xf32>
    %cst_172 = arith.constant 1.000000e+00 : f32
    %552 = vector.broadcast %cst_172 : f32 to vector<1x16xf32>
    %553 = arith.addf %552, %551 : vector<1x16xf32>
    %554 = arith.divf %552, %553 : vector<1x16xf32>
    %555 = vector.extract_strided_slice %542 {offsets = [0, 32], sizes = [1, 16], strides = [1, 1]} : vector<1x64xf32> to vector<1x16xf32>
    %556 = math.tanh %555 : vector<1x16xf32>
    %557 = vector.extract_strided_slice %542 {offsets = [0, 48], sizes = [1, 16], strides = [1, 1]} : vector<1x64xf32> to vector<1x16xf32>
    %558 = arith.negf %557 : vector<1x16xf32>
    %559 = math.exp %558 : vector<1x16xf32>
    %cst_173 = arith.constant 1.000000e+00 : f32
    %560 = vector.broadcast %cst_173 : f32 to vector<1x16xf32>
    %561 = arith.addf %560, %559 : vector<1x16xf32>
    %562 = arith.divf %560, %561 : vector<1x16xf32>
    %563 = arith.mulf %554, %536 : vector<1x16xf32>
    %564 = arith.mulf %548, %556 : vector<1x16xf32>
    %565 = arith.addf %563, %564 : vector<1x16xf32>
    %566 = math.tanh %565 : vector<1x16xf32>
    %567 = arith.mulf %562, %566 : vector<1x16xf32>
    %c6_i32_174 = arith.constant 6 : i32
    %568 = arith.cmpi sgt, %130, %c6_i32_174 : i32
    %cst_175 = arith.constant 1.000000e+00 : f32
    %cst_176 = arith.constant 0.000000e+00 : f32
    %569 = arith.select %568, %cst_175, %cst_176 : f32
    %570 = vector.broadcast %569 : f32 to vector<1x16xf32>
    %571 = arith.mulf %570, %567 : vector<1x16xf32>
    %cst_177 = arith.constant 1.000000e+00 : f32
    %572 = arith.subf %cst_177, %569 : f32
    %573 = vector.broadcast %572 : f32 to vector<1x16xf32>
    %574 = arith.mulf %573, %530 : vector<1x16xf32>
    %575 = arith.addf %571, %574 : vector<1x16xf32>
    %576 = vector.broadcast %569 : f32 to vector<1x16xf32>
    %577 = arith.mulf %576, %565 : vector<1x16xf32>
    %cst_178 = arith.constant 1.000000e+00 : f32
    %578 = arith.subf %cst_178, %569 : f32
    %579 = vector.broadcast %578 : f32 to vector<1x16xf32>
    %580 = arith.mulf %579, %536 : vector<1x16xf32>
    %581 = arith.addf %577, %580 : vector<1x16xf32>
    %582 = vector.broadcast %569 : f32 to vector<1x16xf32>
    %583 = arith.mulf %582, %567 : vector<1x16xf32>
    %584 = vector.extract_strided_slice %491 {offsets = [5, 0], sizes = [1, 64], strides = [1, 1]} : vector<8x64xf32> to vector<1x64xf32>
    %c0_179 = arith.constant 0 : index
    %c0_180 = arith.constant 0 : index
    %585 = vector.load %arg27[%c0_179, %c0_180] : memref<16x64xf32, #tpu.memory_space<vmem>>, vector<16x64xf32>
    %cst_181 = arith.constant dense<0.000000e+00> : vector<1x64xf32>
    %586 = tpu.matmul %575, %585, %cst_181 {dimension_numbers = #tpu.dot_dimension_numbers<[1], [0], [0], [1], [0, 0, 1, 1], [], []>} : vector<1x16xf32>, vector<16x64xf32>, vector<1x64xf32> -> vector<1x64xf32>
    %587 = arith.addf %584, %586 : vector<1x64xf32>
    %588 = vector.extract_strided_slice %587 {offsets = [0, 0], sizes = [1, 16], strides = [1, 1]} : vector<1x64xf32> to vector<1x16xf32>
    %589 = arith.negf %588 : vector<1x16xf32>
    %590 = math.exp %589 : vector<1x16xf32>
    %cst_182 = arith.constant 1.000000e+00 : f32
    %591 = vector.broadcast %cst_182 : f32 to vector<1x16xf32>
    %592 = arith.addf %591, %590 : vector<1x16xf32>
    %593 = arith.divf %591, %592 : vector<1x16xf32>
    %594 = vector.extract_strided_slice %587 {offsets = [0, 16], sizes = [1, 16], strides = [1, 1]} : vector<1x64xf32> to vector<1x16xf32>
    %595 = arith.negf %594 : vector<1x16xf32>
    %596 = math.exp %595 : vector<1x16xf32>
    %cst_183 = arith.constant 1.000000e+00 : f32
    %597 = vector.broadcast %cst_183 : f32 to vector<1x16xf32>
    %598 = arith.addf %597, %596 : vector<1x16xf32>
    %599 = arith.divf %597, %598 : vector<1x16xf32>
    %600 = vector.extract_strided_slice %587 {offsets = [0, 32], sizes = [1, 16], strides = [1, 1]} : vector<1x64xf32> to vector<1x16xf32>
    %601 = math.tanh %600 : vector<1x16xf32>
    %602 = vector.extract_strided_slice %587 {offsets = [0, 48], sizes = [1, 16], strides = [1, 1]} : vector<1x64xf32> to vector<1x16xf32>
    %603 = arith.negf %602 : vector<1x16xf32>
    %604 = math.exp %603 : vector<1x16xf32>
    %cst_184 = arith.constant 1.000000e+00 : f32
    %605 = vector.broadcast %cst_184 : f32 to vector<1x16xf32>
    %606 = arith.addf %605, %604 : vector<1x16xf32>
    %607 = arith.divf %605, %606 : vector<1x16xf32>
    %608 = arith.mulf %599, %581 : vector<1x16xf32>
    %609 = arith.mulf %593, %601 : vector<1x16xf32>
    %610 = arith.addf %608, %609 : vector<1x16xf32>
    %611 = math.tanh %610 : vector<1x16xf32>
    %612 = arith.mulf %607, %611 : vector<1x16xf32>
    %c5_i32_185 = arith.constant 5 : i32
    %613 = arith.cmpi sgt, %130, %c5_i32_185 : i32
    %cst_186 = arith.constant 1.000000e+00 : f32
    %cst_187 = arith.constant 0.000000e+00 : f32
    %614 = arith.select %613, %cst_186, %cst_187 : f32
    %615 = vector.broadcast %614 : f32 to vector<1x16xf32>
    %616 = arith.mulf %615, %612 : vector<1x16xf32>
    %cst_188 = arith.constant 1.000000e+00 : f32
    %617 = arith.subf %cst_188, %614 : f32
    %618 = vector.broadcast %617 : f32 to vector<1x16xf32>
    %619 = arith.mulf %618, %575 : vector<1x16xf32>
    %620 = arith.addf %616, %619 : vector<1x16xf32>
    %621 = vector.broadcast %614 : f32 to vector<1x16xf32>
    %622 = arith.mulf %621, %610 : vector<1x16xf32>
    %cst_189 = arith.constant 1.000000e+00 : f32
    %623 = arith.subf %cst_189, %614 : f32
    %624 = vector.broadcast %623 : f32 to vector<1x16xf32>
    %625 = arith.mulf %624, %581 : vector<1x16xf32>
    %626 = arith.addf %622, %625 : vector<1x16xf32>
    %627 = vector.broadcast %614 : f32 to vector<1x16xf32>
    %628 = arith.mulf %627, %612 : vector<1x16xf32>
    %629 = vector.extract_strided_slice %491 {offsets = [4, 0], sizes = [1, 64], strides = [1, 1]} : vector<8x64xf32> to vector<1x64xf32>
    %c0_190 = arith.constant 0 : index
    %c0_191 = arith.constant 0 : index
    %630 = vector.load %arg27[%c0_190, %c0_191] : memref<16x64xf32, #tpu.memory_space<vmem>>, vector<16x64xf32>
    %cst_192 = arith.constant dense<0.000000e+00> : vector<1x64xf32>
    %631 = tpu.matmul %620, %630, %cst_192 {dimension_numbers = #tpu.dot_dimension_numbers<[1], [0], [0], [1], [0, 0, 1, 1], [], []>} : vector<1x16xf32>, vector<16x64xf32>, vector<1x64xf32> -> vector<1x64xf32>
    %632 = arith.addf %629, %631 : vector<1x64xf32>
    %633 = vector.extract_strided_slice %632 {offsets = [0, 0], sizes = [1, 16], strides = [1, 1]} : vector<1x64xf32> to vector<1x16xf32>
    %634 = arith.negf %633 : vector<1x16xf32>
    %635 = math.exp %634 : vector<1x16xf32>
    %cst_193 = arith.constant 1.000000e+00 : f32
    %636 = vector.broadcast %cst_193 : f32 to vector<1x16xf32>
    %637 = arith.addf %636, %635 : vector<1x16xf32>
    %638 = arith.divf %636, %637 : vector<1x16xf32>
    %639 = vector.extract_strided_slice %632 {offsets = [0, 16], sizes = [1, 16], strides = [1, 1]} : vector<1x64xf32> to vector<1x16xf32>
    %640 = arith.negf %639 : vector<1x16xf32>
    %641 = math.exp %640 : vector<1x16xf32>
    %cst_194 = arith.constant 1.000000e+00 : f32
    %642 = vector.broadcast %cst_194 : f32 to vector<1x16xf32>
    %643 = arith.addf %642, %641 : vector<1x16xf32>
    %644 = arith.divf %642, %643 : vector<1x16xf32>
    %645 = vector.extract_strided_slice %632 {offsets = [0, 32], sizes = [1, 16], strides = [1, 1]} : vector<1x64xf32> to vector<1x16xf32>
    %646 = math.tanh %645 : vector<1x16xf32>
    %647 = vector.extract_strided_slice %632 {offsets = [0, 48], sizes = [1, 16], strides = [1, 1]} : vector<1x64xf32> to vector<1x16xf32>
    %648 = arith.negf %647 : vector<1x16xf32>
    %649 = math.exp %648 : vector<1x16xf32>
    %cst_195 = arith.constant 1.000000e+00 : f32
    %650 = vector.broadcast %cst_195 : f32 to vector<1x16xf32>
    %651 = arith.addf %650, %649 : vector<1x16xf32>
    %652 = arith.divf %650, %651 : vector<1x16xf32>
    %653 = arith.mulf %644, %626 : vector<1x16xf32>
    %654 = arith.mulf %638, %646 : vector<1x16xf32>
    %655 = arith.addf %653, %654 : vector<1x16xf32>
    %656 = math.tanh %655 : vector<1x16xf32>
    %657 = arith.mulf %652, %656 : vector<1x16xf32>
    %c4_i32_196 = arith.constant 4 : i32
    %658 = arith.cmpi sgt, %130, %c4_i32_196 : i32
    %cst_197 = arith.constant 1.000000e+00 : f32
    %cst_198 = arith.constant 0.000000e+00 : f32
    %659 = arith.select %658, %cst_197, %cst_198 : f32
    %660 = vector.broadcast %659 : f32 to vector<1x16xf32>
    %661 = arith.mulf %660, %657 : vector<1x16xf32>
    %cst_199 = arith.constant 1.000000e+00 : f32
    %662 = arith.subf %cst_199, %659 : f32
    %663 = vector.broadcast %662 : f32 to vector<1x16xf32>
    %664 = arith.mulf %663, %620 : vector<1x16xf32>
    %665 = arith.addf %661, %664 : vector<1x16xf32>
    %666 = vector.broadcast %659 : f32 to vector<1x16xf32>
    %667 = arith.mulf %666, %655 : vector<1x16xf32>
    %cst_200 = arith.constant 1.000000e+00 : f32
    %668 = arith.subf %cst_200, %659 : f32
    %669 = vector.broadcast %668 : f32 to vector<1x16xf32>
    %670 = arith.mulf %669, %626 : vector<1x16xf32>
    %671 = arith.addf %667, %670 : vector<1x16xf32>
    %672 = vector.broadcast %659 : f32 to vector<1x16xf32>
    %673 = arith.mulf %672, %657 : vector<1x16xf32>
    %674 = vector.extract_strided_slice %491 {offsets = [3, 0], sizes = [1, 64], strides = [1, 1]} : vector<8x64xf32> to vector<1x64xf32>
    %c0_201 = arith.constant 0 : index
    %c0_202 = arith.constant 0 : index
    %675 = vector.load %arg27[%c0_201, %c0_202] : memref<16x64xf32, #tpu.memory_space<vmem>>, vector<16x64xf32>
    %cst_203 = arith.constant dense<0.000000e+00> : vector<1x64xf32>
    %676 = tpu.matmul %665, %675, %cst_203 {dimension_numbers = #tpu.dot_dimension_numbers<[1], [0], [0], [1], [0, 0, 1, 1], [], []>} : vector<1x16xf32>, vector<16x64xf32>, vector<1x64xf32> -> vector<1x64xf32>
    %677 = arith.addf %674, %676 : vector<1x64xf32>
    %678 = vector.extract_strided_slice %677 {offsets = [0, 0], sizes = [1, 16], strides = [1, 1]} : vector<1x64xf32> to vector<1x16xf32>
    %679 = arith.negf %678 : vector<1x16xf32>
    %680 = math.exp %679 : vector<1x16xf32>
    %cst_204 = arith.constant 1.000000e+00 : f32
    %681 = vector.broadcast %cst_204 : f32 to vector<1x16xf32>
    %682 = arith.addf %681, %680 : vector<1x16xf32>
    %683 = arith.divf %681, %682 : vector<1x16xf32>
    %684 = vector.extract_strided_slice %677 {offsets = [0, 16], sizes = [1, 16], strides = [1, 1]} : vector<1x64xf32> to vector<1x16xf32>
    %685 = arith.negf %684 : vector<1x16xf32>
    %686 = math.exp %685 : vector<1x16xf32>
    %cst_205 = arith.constant 1.000000e+00 : f32
    %687 = vector.broadcast %cst_205 : f32 to vector<1x16xf32>
    %688 = arith.addf %687, %686 : vector<1x16xf32>
    %689 = arith.divf %687, %688 : vector<1x16xf32>
    %690 = vector.extract_strided_slice %677 {offsets = [0, 32], sizes = [1, 16], strides = [1, 1]} : vector<1x64xf32> to vector<1x16xf32>
    %691 = math.tanh %690 : vector<1x16xf32>
    %692 = vector.extract_strided_slice %677 {offsets = [0, 48], sizes = [1, 16], strides = [1, 1]} : vector<1x64xf32> to vector<1x16xf32>
    %693 = arith.negf %692 : vector<1x16xf32>
    %694 = math.exp %693 : vector<1x16xf32>
    %cst_206 = arith.constant 1.000000e+00 : f32
    %695 = vector.broadcast %cst_206 : f32 to vector<1x16xf32>
    %696 = arith.addf %695, %694 : vector<1x16xf32>
    %697 = arith.divf %695, %696 : vector<1x16xf32>
    %698 = arith.mulf %689, %671 : vector<1x16xf32>
    %699 = arith.mulf %683, %691 : vector<1x16xf32>
    %700 = arith.addf %698, %699 : vector<1x16xf32>
    %701 = math.tanh %700 : vector<1x16xf32>
    %702 = arith.mulf %697, %701 : vector<1x16xf32>
    %c3_i32_207 = arith.constant 3 : i32
    %703 = arith.cmpi sgt, %130, %c3_i32_207 : i32
    %cst_208 = arith.constant 1.000000e+00 : f32
    %cst_209 = arith.constant 0.000000e+00 : f32
    %704 = arith.select %703, %cst_208, %cst_209 : f32
    %705 = vector.broadcast %704 : f32 to vector<1x16xf32>
    %706 = arith.mulf %705, %702 : vector<1x16xf32>
    %cst_210 = arith.constant 1.000000e+00 : f32
    %707 = arith.subf %cst_210, %704 : f32
    %708 = vector.broadcast %707 : f32 to vector<1x16xf32>
    %709 = arith.mulf %708, %665 : vector<1x16xf32>
    %710 = arith.addf %706, %709 : vector<1x16xf32>
    %711 = vector.broadcast %704 : f32 to vector<1x16xf32>
    %712 = arith.mulf %711, %700 : vector<1x16xf32>
    %cst_211 = arith.constant 1.000000e+00 : f32
    %713 = arith.subf %cst_211, %704 : f32
    %714 = vector.broadcast %713 : f32 to vector<1x16xf32>
    %715 = arith.mulf %714, %671 : vector<1x16xf32>
    %716 = arith.addf %712, %715 : vector<1x16xf32>
    %717 = vector.broadcast %704 : f32 to vector<1x16xf32>
    %718 = arith.mulf %717, %702 : vector<1x16xf32>
    %719 = vector.extract_strided_slice %491 {offsets = [2, 0], sizes = [1, 64], strides = [1, 1]} : vector<8x64xf32> to vector<1x64xf32>
    %c0_212 = arith.constant 0 : index
    %c0_213 = arith.constant 0 : index
    %720 = vector.load %arg27[%c0_212, %c0_213] : memref<16x64xf32, #tpu.memory_space<vmem>>, vector<16x64xf32>
    %cst_214 = arith.constant dense<0.000000e+00> : vector<1x64xf32>
    %721 = tpu.matmul %710, %720, %cst_214 {dimension_numbers = #tpu.dot_dimension_numbers<[1], [0], [0], [1], [0, 0, 1, 1], [], []>} : vector<1x16xf32>, vector<16x64xf32>, vector<1x64xf32> -> vector<1x64xf32>
    %722 = arith.addf %719, %721 : vector<1x64xf32>
    %723 = vector.extract_strided_slice %722 {offsets = [0, 0], sizes = [1, 16], strides = [1, 1]} : vector<1x64xf32> to vector<1x16xf32>
    %724 = arith.negf %723 : vector<1x16xf32>
    %725 = math.exp %724 : vector<1x16xf32>
    %cst_215 = arith.constant 1.000000e+00 : f32
    %726 = vector.broadcast %cst_215 : f32 to vector<1x16xf32>
    %727 = arith.addf %726, %725 : vector<1x16xf32>
    %728 = arith.divf %726, %727 : vector<1x16xf32>
    %729 = vector.extract_strided_slice %722 {offsets = [0, 16], sizes = [1, 16], strides = [1, 1]} : vector<1x64xf32> to vector<1x16xf32>
    %730 = arith.negf %729 : vector<1x16xf32>
    %731 = math.exp %730 : vector<1x16xf32>
    %cst_216 = arith.constant 1.000000e+00 : f32
    %732 = vector.broadcast %cst_216 : f32 to vector<1x16xf32>
    %733 = arith.addf %732, %731 : vector<1x16xf32>
    %734 = arith.divf %732, %733 : vector<1x16xf32>
    %735 = vector.extract_strided_slice %722 {offsets = [0, 32], sizes = [1, 16], strides = [1, 1]} : vector<1x64xf32> to vector<1x16xf32>
    %736 = math.tanh %735 : vector<1x16xf32>
    %737 = vector.extract_strided_slice %722 {offsets = [0, 48], sizes = [1, 16], strides = [1, 1]} : vector<1x64xf32> to vector<1x16xf32>
    %738 = arith.negf %737 : vector<1x16xf32>
    %739 = math.exp %738 : vector<1x16xf32>
    %cst_217 = arith.constant 1.000000e+00 : f32
    %740 = vector.broadcast %cst_217 : f32 to vector<1x16xf32>
    %741 = arith.addf %740, %739 : vector<1x16xf32>
    %742 = arith.divf %740, %741 : vector<1x16xf32>
    %743 = arith.mulf %734, %716 : vector<1x16xf32>
    %744 = arith.mulf %728, %736 : vector<1x16xf32>
    %745 = arith.addf %743, %744 : vector<1x16xf32>
    %746 = math.tanh %745 : vector<1x16xf32>
    %747 = arith.mulf %742, %746 : vector<1x16xf32>
    %c2_i32_218 = arith.constant 2 : i32
    %748 = arith.cmpi sgt, %130, %c2_i32_218 : i32
    %cst_219 = arith.constant 1.000000e+00 : f32
    %cst_220 = arith.constant 0.000000e+00 : f32
    %749 = arith.select %748, %cst_219, %cst_220 : f32
    %750 = vector.broadcast %749 : f32 to vector<1x16xf32>
    %751 = arith.mulf %750, %747 : vector<1x16xf32>
    %cst_221 = arith.constant 1.000000e+00 : f32
    %752 = arith.subf %cst_221, %749 : f32
    %753 = vector.broadcast %752 : f32 to vector<1x16xf32>
    %754 = arith.mulf %753, %710 : vector<1x16xf32>
    %755 = arith.addf %751, %754 : vector<1x16xf32>
    %756 = vector.broadcast %749 : f32 to vector<1x16xf32>
    %757 = arith.mulf %756, %745 : vector<1x16xf32>
    %cst_222 = arith.constant 1.000000e+00 : f32
    %758 = arith.subf %cst_222, %749 : f32
    %759 = vector.broadcast %758 : f32 to vector<1x16xf32>
    %760 = arith.mulf %759, %716 : vector<1x16xf32>
    %761 = arith.addf %757, %760 : vector<1x16xf32>
    %762 = vector.broadcast %749 : f32 to vector<1x16xf32>
    %763 = arith.mulf %762, %747 : vector<1x16xf32>
    %764 = vector.extract_strided_slice %491 {offsets = [1, 0], sizes = [1, 64], strides = [1, 1]} : vector<8x64xf32> to vector<1x64xf32>
    %c0_223 = arith.constant 0 : index
    %c0_224 = arith.constant 0 : index
    %765 = vector.load %arg27[%c0_223, %c0_224] : memref<16x64xf32, #tpu.memory_space<vmem>>, vector<16x64xf32>
    %cst_225 = arith.constant dense<0.000000e+00> : vector<1x64xf32>
    %766 = tpu.matmul %755, %765, %cst_225 {dimension_numbers = #tpu.dot_dimension_numbers<[1], [0], [0], [1], [0, 0, 1, 1], [], []>} : vector<1x16xf32>, vector<16x64xf32>, vector<1x64xf32> -> vector<1x64xf32>
    %767 = arith.addf %764, %766 : vector<1x64xf32>
    %768 = vector.extract_strided_slice %767 {offsets = [0, 0], sizes = [1, 16], strides = [1, 1]} : vector<1x64xf32> to vector<1x16xf32>
    %769 = arith.negf %768 : vector<1x16xf32>
    %770 = math.exp %769 : vector<1x16xf32>
    %cst_226 = arith.constant 1.000000e+00 : f32
    %771 = vector.broadcast %cst_226 : f32 to vector<1x16xf32>
    %772 = arith.addf %771, %770 : vector<1x16xf32>
    %773 = arith.divf %771, %772 : vector<1x16xf32>
    %774 = vector.extract_strided_slice %767 {offsets = [0, 16], sizes = [1, 16], strides = [1, 1]} : vector<1x64xf32> to vector<1x16xf32>
    %775 = arith.negf %774 : vector<1x16xf32>
    %776 = math.exp %775 : vector<1x16xf32>
    %cst_227 = arith.constant 1.000000e+00 : f32
    %777 = vector.broadcast %cst_227 : f32 to vector<1x16xf32>
    %778 = arith.addf %777, %776 : vector<1x16xf32>
    %779 = arith.divf %777, %778 : vector<1x16xf32>
    %780 = vector.extract_strided_slice %767 {offsets = [0, 32], sizes = [1, 16], strides = [1, 1]} : vector<1x64xf32> to vector<1x16xf32>
    %781 = math.tanh %780 : vector<1x16xf32>
    %782 = vector.extract_strided_slice %767 {offsets = [0, 48], sizes = [1, 16], strides = [1, 1]} : vector<1x64xf32> to vector<1x16xf32>
    %783 = arith.negf %782 : vector<1x16xf32>
    %784 = math.exp %783 : vector<1x16xf32>
    %cst_228 = arith.constant 1.000000e+00 : f32
    %785 = vector.broadcast %cst_228 : f32 to vector<1x16xf32>
    %786 = arith.addf %785, %784 : vector<1x16xf32>
    %787 = arith.divf %785, %786 : vector<1x16xf32>
    %788 = arith.mulf %779, %761 : vector<1x16xf32>
    %789 = arith.mulf %773, %781 : vector<1x16xf32>
    %790 = arith.addf %788, %789 : vector<1x16xf32>
    %791 = math.tanh %790 : vector<1x16xf32>
    %792 = arith.mulf %787, %791 : vector<1x16xf32>
    %c1_i32_229 = arith.constant 1 : i32
    %793 = arith.cmpi sgt, %130, %c1_i32_229 : i32
    %cst_230 = arith.constant 1.000000e+00 : f32
    %cst_231 = arith.constant 0.000000e+00 : f32
    %794 = arith.select %793, %cst_230, %cst_231 : f32
    %795 = vector.broadcast %794 : f32 to vector<1x16xf32>
    %796 = arith.mulf %795, %792 : vector<1x16xf32>
    %cst_232 = arith.constant 1.000000e+00 : f32
    %797 = arith.subf %cst_232, %794 : f32
    %798 = vector.broadcast %797 : f32 to vector<1x16xf32>
    %799 = arith.mulf %798, %755 : vector<1x16xf32>
    %800 = arith.addf %796, %799 : vector<1x16xf32>
    %801 = vector.broadcast %794 : f32 to vector<1x16xf32>
    %802 = arith.mulf %801, %790 : vector<1x16xf32>
    %cst_233 = arith.constant 1.000000e+00 : f32
    %803 = arith.subf %cst_233, %794 : f32
    %804 = vector.broadcast %803 : f32 to vector<1x16xf32>
    %805 = arith.mulf %804, %761 : vector<1x16xf32>
    %806 = arith.addf %802, %805 : vector<1x16xf32>
    %807 = vector.broadcast %794 : f32 to vector<1x16xf32>
    %808 = arith.mulf %807, %792 : vector<1x16xf32>
    %809 = vector.extract_strided_slice %491 {offsets = [0, 0], sizes = [1, 64], strides = [1, 1]} : vector<8x64xf32> to vector<1x64xf32>
    %c0_234 = arith.constant 0 : index
    %c0_235 = arith.constant 0 : index
    %810 = vector.load %arg27[%c0_234, %c0_235] : memref<16x64xf32, #tpu.memory_space<vmem>>, vector<16x64xf32>
    %cst_236 = arith.constant dense<0.000000e+00> : vector<1x64xf32>
    %811 = tpu.matmul %800, %810, %cst_236 {dimension_numbers = #tpu.dot_dimension_numbers<[1], [0], [0], [1], [0, 0, 1, 1], [], []>} : vector<1x16xf32>, vector<16x64xf32>, vector<1x64xf32> -> vector<1x64xf32>
    %812 = arith.addf %809, %811 : vector<1x64xf32>
    %813 = vector.extract_strided_slice %812 {offsets = [0, 0], sizes = [1, 16], strides = [1, 1]} : vector<1x64xf32> to vector<1x16xf32>
    %814 = arith.negf %813 : vector<1x16xf32>
    %815 = math.exp %814 : vector<1x16xf32>
    %cst_237 = arith.constant 1.000000e+00 : f32
    %816 = vector.broadcast %cst_237 : f32 to vector<1x16xf32>
    %817 = arith.addf %816, %815 : vector<1x16xf32>
    %818 = arith.divf %816, %817 : vector<1x16xf32>
    %819 = vector.extract_strided_slice %812 {offsets = [0, 16], sizes = [1, 16], strides = [1, 1]} : vector<1x64xf32> to vector<1x16xf32>
    %820 = arith.negf %819 : vector<1x16xf32>
    %821 = math.exp %820 : vector<1x16xf32>
    %cst_238 = arith.constant 1.000000e+00 : f32
    %822 = vector.broadcast %cst_238 : f32 to vector<1x16xf32>
    %823 = arith.addf %822, %821 : vector<1x16xf32>
    %824 = arith.divf %822, %823 : vector<1x16xf32>
    %825 = vector.extract_strided_slice %812 {offsets = [0, 32], sizes = [1, 16], strides = [1, 1]} : vector<1x64xf32> to vector<1x16xf32>
    %826 = math.tanh %825 : vector<1x16xf32>
    %827 = vector.extract_strided_slice %812 {offsets = [0, 48], sizes = [1, 16], strides = [1, 1]} : vector<1x64xf32> to vector<1x16xf32>
    %828 = arith.negf %827 : vector<1x16xf32>
    %829 = math.exp %828 : vector<1x16xf32>
    %cst_239 = arith.constant 1.000000e+00 : f32
    %830 = vector.broadcast %cst_239 : f32 to vector<1x16xf32>
    %831 = arith.addf %830, %829 : vector<1x16xf32>
    %832 = arith.divf %830, %831 : vector<1x16xf32>
    %833 = arith.mulf %824, %806 : vector<1x16xf32>
    %834 = arith.mulf %818, %826 : vector<1x16xf32>
    %835 = arith.addf %833, %834 : vector<1x16xf32>
    %836 = math.tanh %835 : vector<1x16xf32>
    %837 = arith.mulf %832, %836 : vector<1x16xf32>
    %c0_i32_240 = arith.constant 0 : i32
    %838 = arith.cmpi sgt, %130, %c0_i32_240 : i32
    %cst_241 = arith.constant 1.000000e+00 : f32
    %cst_242 = arith.constant 0.000000e+00 : f32
    %839 = arith.select %838, %cst_241, %cst_242 : f32
    %840 = vector.broadcast %839 : f32 to vector<1x16xf32>
    %841 = arith.mulf %840, %837 : vector<1x16xf32>
    %842 = tpu.concatenate %841, %808, %763, %718, %673, %628, %583, %538 in 0 : vector<1x16xf32>, vector<1x16xf32>, vector<1x16xf32>, vector<1x16xf32>, vector<1x16xf32>, vector<1x16xf32>, vector<1x16xf32>, vector<1x16xf32> -> vector<8x16xf32>
    %843 = tpu.concatenate %486, %842 in 1 : vector<8x16xf32>, vector<8x16xf32> -> vector<8x32xf32>
    %cst_243 = arith.constant dense<0.000000e+00> : vector<8xf32>
    %844 = vector.multi_reduction <add>, %843, %cst_243 [1] : vector<8x32xf32> to vector<8xf32>
    %845 = vector.shape_cast %844 : vector<8xf32> to vector<8x1xf32>
    %cst_244 = arith.constant 3.200000e+01 : f32
    %846 = vector.broadcast %cst_244 : f32 to vector<8x1xf32>
    %847 = arith.divf %845, %846 : vector<8x1xf32>
    %848 = vector.broadcast %847 : vector<8x1xf32> to vector<8x32xf32>
    %849 = arith.subf %843, %848 : vector<8x32xf32>
    %850 = arith.mulf %849, %849 : vector<8x32xf32>
    %cst_245 = arith.constant dense<0.000000e+00> : vector<8xf32>
    %851 = vector.multi_reduction <add>, %850, %cst_245 [1] : vector<8x32xf32> to vector<8xf32>
    %852 = vector.shape_cast %851 : vector<8xf32> to vector<8x1xf32>
    %cst_246 = arith.constant 3.200000e+01 : f32
    %853 = vector.broadcast %cst_246 : f32 to vector<8x1xf32>
    %854 = arith.divf %852, %853 : vector<8x1xf32>
    %cst_247 = arith.constant 9.99999996E-13 : f32
    %855 = vector.broadcast %cst_247 : f32 to vector<8x1xf32>
    %856 = arith.addf %854, %855 : vector<8x1xf32>
    %857 = math.rsqrt %856 : vector<8x1xf32>
    %858 = vector.broadcast %857 : vector<8x1xf32> to vector<8x32xf32>
    %859 = arith.mulf %849, %858 : vector<8x32xf32>
    %c0_248 = arith.constant 0 : index
    %c0_249 = arith.constant 0 : index
    %860 = vector.load %arg29[%c0_248, %c0_249] : memref<32x32xf32, #tpu.memory_space<vmem>>, vector<32x32xf32>
    %cst_250 = arith.constant dense<0.000000e+00> : vector<8x32xf32>
    %861 = tpu.matmul %843, %860, %cst_250 {dimension_numbers = #tpu.dot_dimension_numbers<[1], [0], [0], [1], [0, 0, 1, 1], [], []>} : vector<8x32xf32>, vector<32x32xf32>, vector<8x32xf32> -> vector<8x32xf32>
    %c0_251 = arith.constant 0 : index
    %c0_252 = arith.constant 0 : index
    %862 = vector.load %arg31[%c0_251, %c0_252] : memref<1x32xf32, #tpu.memory_space<vmem>>, vector<1x32xf32>
    %863 = vector.broadcast %862 : vector<1x32xf32> to vector<8x32xf32>
    %864 = arith.addf %861, %863 : vector<8x32xf32>
    %c0_253 = arith.constant 0 : index
    %c0_254 = arith.constant 0 : index
    %865 = vector.load %arg30[%c0_253, %c0_254] : memref<32x32xf32, #tpu.memory_space<vmem>>, vector<32x32xf32>
    %cst_255 = arith.constant dense<0.000000e+00> : vector<8x32xf32>
    %866 = tpu.matmul %843, %865, %cst_255 {dimension_numbers = #tpu.dot_dimension_numbers<[1], [0], [0], [1], [0, 0, 1, 1], [], []>} : vector<8x32xf32>, vector<32x32xf32>, vector<8x32xf32> -> vector<8x32xf32>
    %c0_256 = arith.constant 0 : index
    %c0_257 = arith.constant 0 : index
    %867 = vector.load %arg32[%c0_256, %c0_257] : memref<1x32xf32, #tpu.memory_space<vmem>>, vector<1x32xf32>
    %868 = vector.broadcast %867 : vector<1x32xf32> to vector<8x32xf32>
    %869 = arith.addf %866, %868 : vector<8x32xf32>
    %870 = vector.shape_cast %859 : vector<8x32xf32> to vector<8x1x32xf32>
    %871 = vector.shape_cast %864 : vector<8x32xf32> to vector<1x8x32xf32>
    %872 = vector.broadcast %870 : vector<8x1x32xf32> to vector<8x8x32xf32>
    %873 = vector.broadcast %871 : vector<1x8x32xf32> to vector<8x8x32xf32>
    %874 = arith.mulf %872, %873 : vector<8x8x32xf32>
    %875 = vector.shape_cast %869 : vector<8x32xf32> to vector<1x8x32xf32>
    %876 = vector.broadcast %875 : vector<1x8x32xf32> to vector<8x8x32xf32>
    %877 = arith.addf %874, %876 : vector<8x8x32xf32>
    %878 = vector.shape_cast %877 : vector<8x8x32xf32> to vector<64x32xf32>
    %c0_258 = arith.constant 0 : index
    %c0_259 = arith.constant 0 : index
    %c0_260 = arith.constant 0 : index
    %879 = vector.load %arg5[%c0_258, %c0_259, %c0_260] : memref<1x64x1xf32, #tpu.memory_space<vmem>>, vector<1x64x1xf32>
    %880 = vector.shape_cast %879 : vector<1x64x1xf32> to vector<64x1xf32>
    %c0_261 = arith.constant 0 : index
    %c0_262 = arith.constant 0 : index
    %881 = vector.load %arg33[%c0_261, %c0_262] : memref<32x16xf32, #tpu.memory_space<vmem>>, vector<32x16xf32>
    %cst_263 = arith.constant dense<0.000000e+00> : vector<64x16xf32>
    %882 = tpu.matmul %878, %881, %cst_263 {dimension_numbers = #tpu.dot_dimension_numbers<[1], [0], [0], [1], [0, 0, 1, 1], [], []>} : vector<64x32xf32>, vector<32x16xf32>, vector<64x16xf32> -> vector<64x16xf32>
    %c0_264 = arith.constant 0 : index
    %c0_265 = arith.constant 0 : index
    %c0_266 = arith.constant 0 : index
    %883 = vector.load %arg4[%c0_264, %c0_265, %c0_266] : memref<1x64x16xf32, #tpu.memory_space<vmem>>, vector<1x64x16xf32>
    %884 = vector.shape_cast %883 : vector<1x64x16xf32> to vector<64x16xf32>
    %885 = arith.addf %882, %884 : vector<64x16xf32>
    %886 = vector.broadcast %880 : vector<64x1xf32> to vector<64x16xf32>
    %887 = arith.mulf %885, %886 : vector<64x16xf32>
    %c0_267 = arith.constant 0 : index
    %c0_268 = arith.constant 0 : index
    %888 = vector.load %arg34[%c0_267, %c0_268] : memref<1x16xf32, #tpu.memory_space<vmem>>, vector<1x16xf32>
    %889 = vector.broadcast %888 : vector<1x16xf32> to vector<64x16xf32>
    %890 = arith.addf %887, %889 : vector<64x16xf32>
    %891 = arith.mulf %890, %890 : vector<64x16xf32>
    %892 = arith.mulf %890, %891 : vector<64x16xf32>
    %cst_269 = arith.constant 4.471500e-02 : f32
    %893 = vector.broadcast %cst_269 : f32 to vector<64x16xf32>
    %894 = arith.mulf %893, %892 : vector<64x16xf32>
    %895 = arith.addf %890, %894 : vector<64x16xf32>
    %cst_270 = arith.constant 0.797884583 : f32
    %896 = vector.broadcast %cst_270 : f32 to vector<64x16xf32>
    %897 = arith.mulf %896, %895 : vector<64x16xf32>
    %898 = math.tanh %897 : vector<64x16xf32>
    %cst_271 = arith.constant 1.000000e+00 : f32
    %899 = vector.broadcast %cst_271 : f32 to vector<64x16xf32>
    %900 = arith.addf %899, %898 : vector<64x16xf32>
    %cst_272 = arith.constant 5.000000e-01 : f32
    %901 = vector.broadcast %cst_272 : f32 to vector<64x16xf32>
    %902 = arith.mulf %901, %900 : vector<64x16xf32>
    %903 = arith.mulf %890, %902 : vector<64x16xf32>
    %904 = vector.shape_cast %903 : vector<64x16xf32> to vector<8x8x16xf32>
    %c0_273 = arith.constant 0 : index
    %c0_274 = arith.constant 0 : index
    %905 = vector.load %arg35[%c0_273, %c0_274] : memref<18x16xf32, #tpu.memory_space<vmem>>, vector<18x16xf32>
    %c0_275 = arith.constant 0 : index
    %c0_276 = arith.constant 0 : index
    %906 = vector.load %arg36[%c0_275, %c0_276] : memref<2x16xf32, #tpu.memory_space<vmem>>, vector<2x16xf32>
    %cst_277 = arith.constant 0.000000e+00 : f32
    %907 = vector.broadcast %cst_277 : f32 to vector<1x8x16xf32>
    %908 = tpu.concatenate %907, %904, %907 in 0 : vector<1x8x16xf32>, vector<8x8x16xf32>, vector<1x8x16xf32> -> vector<10x8x16xf32>
    %cst_278 = arith.constant 0.000000e+00 : f32
    %909 = vector.broadcast %cst_278 : f32 to vector<10x1x16xf32>
    %910 = tpu.concatenate %909, %908, %909 in 1 : vector<10x1x16xf32>, vector<10x8x16xf32>, vector<10x1x16xf32> -> vector<10x10x16xf32>
    %cst_279 = arith.constant 0.000000e+00 : f32
    %911 = vector.broadcast %cst_279 : f32 to vector<8x8x16xf32>
    %912 = vector.extract_strided_slice %906 {offsets = [0, 0], sizes = [1, 16], strides = [1, 1]} : vector<2x16xf32> to vector<1x16xf32>
    %913 = vector.shape_cast %912 : vector<1x16xf32> to vector<16xf32>
    %914 = vector.shape_cast %913 : vector<16xf32> to vector<1x1x16xf32>
    %915 = vector.broadcast %914 : vector<1x1x16xf32> to vector<8x8x16xf32>
    %916 = arith.addf %911, %915 : vector<8x8x16xf32>
    %917 = vector.extract_strided_slice %910 {offsets = [0, 0, 0], sizes = [8, 8, 16], strides = [1, 1, 1]} : vector<10x10x16xf32> to vector<8x8x16xf32>
    %918 = vector.extract_strided_slice %905 {offsets = [0, 0], sizes = [1, 16], strides = [1, 1]} : vector<18x16xf32> to vector<1x16xf32>
    %919 = vector.shape_cast %918 : vector<1x16xf32> to vector<16xf32>
    %920 = vector.shape_cast %919 : vector<16xf32> to vector<1x1x16xf32>
    %921 = vector.broadcast %920 : vector<1x1x16xf32> to vector<8x8x16xf32>
    %922 = arith.mulf %917, %921 : vector<8x8x16xf32>
    %923 = arith.addf %916, %922 : vector<8x8x16xf32>
    %924 = vector.extract_strided_slice %910 {offsets = [0, 1, 0], sizes = [8, 8, 16], strides = [1, 1, 1]} : vector<10x10x16xf32> to vector<8x8x16xf32>
    %925 = vector.extract_strided_slice %905 {offsets = [1, 0], sizes = [1, 16], strides = [1, 1]} : vector<18x16xf32> to vector<1x16xf32>
    %926 = vector.shape_cast %925 : vector<1x16xf32> to vector<16xf32>
    %927 = vector.shape_cast %926 : vector<16xf32> to vector<1x1x16xf32>
    %928 = vector.broadcast %927 : vector<1x1x16xf32> to vector<8x8x16xf32>
    %929 = arith.mulf %924, %928 : vector<8x8x16xf32>
    %930 = arith.addf %923, %929 : vector<8x8x16xf32>
    %931 = vector.extract_strided_slice %910 {offsets = [0, 2, 0], sizes = [8, 8, 16], strides = [1, 1, 1]} : vector<10x10x16xf32> to vector<8x8x16xf32>
    %932 = vector.extract_strided_slice %905 {offsets = [2, 0], sizes = [1, 16], strides = [1, 1]} : vector<18x16xf32> to vector<1x16xf32>
    %933 = vector.shape_cast %932 : vector<1x16xf32> to vector<16xf32>
    %934 = vector.shape_cast %933 : vector<16xf32> to vector<1x1x16xf32>
    %935 = vector.broadcast %934 : vector<1x1x16xf32> to vector<8x8x16xf32>
    %936 = arith.mulf %931, %935 : vector<8x8x16xf32>
    %937 = arith.addf %930, %936 : vector<8x8x16xf32>
    %938 = vector.extract_strided_slice %910 {offsets = [1, 0, 0], sizes = [8, 8, 16], strides = [1, 1, 1]} : vector<10x10x16xf32> to vector<8x8x16xf32>
    %939 = vector.extract_strided_slice %905 {offsets = [3, 0], sizes = [1, 16], strides = [1, 1]} : vector<18x16xf32> to vector<1x16xf32>
    %940 = vector.shape_cast %939 : vector<1x16xf32> to vector<16xf32>
    %941 = vector.shape_cast %940 : vector<16xf32> to vector<1x1x16xf32>
    %942 = vector.broadcast %941 : vector<1x1x16xf32> to vector<8x8x16xf32>
    %943 = arith.mulf %938, %942 : vector<8x8x16xf32>
    %944 = arith.addf %937, %943 : vector<8x8x16xf32>
    %945 = vector.extract_strided_slice %910 {offsets = [1, 1, 0], sizes = [8, 8, 16], strides = [1, 1, 1]} : vector<10x10x16xf32> to vector<8x8x16xf32>
    %946 = vector.extract_strided_slice %905 {offsets = [4, 0], sizes = [1, 16], strides = [1, 1]} : vector<18x16xf32> to vector<1x16xf32>
    %947 = vector.shape_cast %946 : vector<1x16xf32> to vector<16xf32>
    %948 = vector.shape_cast %947 : vector<16xf32> to vector<1x1x16xf32>
    %949 = vector.broadcast %948 : vector<1x1x16xf32> to vector<8x8x16xf32>
    %950 = arith.mulf %945, %949 : vector<8x8x16xf32>
    %951 = arith.addf %944, %950 : vector<8x8x16xf32>
    %952 = vector.extract_strided_slice %910 {offsets = [1, 2, 0], sizes = [8, 8, 16], strides = [1, 1, 1]} : vector<10x10x16xf32> to vector<8x8x16xf32>
    %953 = vector.extract_strided_slice %905 {offsets = [5, 0], sizes = [1, 16], strides = [1, 1]} : vector<18x16xf32> to vector<1x16xf32>
    %954 = vector.shape_cast %953 : vector<1x16xf32> to vector<16xf32>
    %955 = vector.shape_cast %954 : vector<16xf32> to vector<1x1x16xf32>
    %956 = vector.broadcast %955 : vector<1x1x16xf32> to vector<8x8x16xf32>
    %957 = arith.mulf %952, %956 : vector<8x8x16xf32>
    %958 = arith.addf %951, %957 : vector<8x8x16xf32>
    %959 = vector.extract_strided_slice %910 {offsets = [2, 0, 0], sizes = [8, 8, 16], strides = [1, 1, 1]} : vector<10x10x16xf32> to vector<8x8x16xf32>
    %960 = vector.extract_strided_slice %905 {offsets = [6, 0], sizes = [1, 16], strides = [1, 1]} : vector<18x16xf32> to vector<1x16xf32>
    %961 = vector.shape_cast %960 : vector<1x16xf32> to vector<16xf32>
    %962 = vector.shape_cast %961 : vector<16xf32> to vector<1x1x16xf32>
    %963 = vector.broadcast %962 : vector<1x1x16xf32> to vector<8x8x16xf32>
    %964 = arith.mulf %959, %963 : vector<8x8x16xf32>
    %965 = arith.addf %958, %964 : vector<8x8x16xf32>
    %966 = vector.extract_strided_slice %910 {offsets = [2, 1, 0], sizes = [8, 8, 16], strides = [1, 1, 1]} : vector<10x10x16xf32> to vector<8x8x16xf32>
    %967 = vector.extract_strided_slice %905 {offsets = [7, 0], sizes = [1, 16], strides = [1, 1]} : vector<18x16xf32> to vector<1x16xf32>
    %968 = vector.shape_cast %967 : vector<1x16xf32> to vector<16xf32>
    %969 = vector.shape_cast %968 : vector<16xf32> to vector<1x1x16xf32>
    %970 = vector.broadcast %969 : vector<1x1x16xf32> to vector<8x8x16xf32>
    %971 = arith.mulf %966, %970 : vector<8x8x16xf32>
    %972 = arith.addf %965, %971 : vector<8x8x16xf32>
    %973 = vector.extract_strided_slice %910 {offsets = [2, 2, 0], sizes = [8, 8, 16], strides = [1, 1, 1]} : vector<10x10x16xf32> to vector<8x8x16xf32>
    %974 = vector.extract_strided_slice %905 {offsets = [8, 0], sizes = [1, 16], strides = [1, 1]} : vector<18x16xf32> to vector<1x16xf32>
    %975 = vector.shape_cast %974 : vector<1x16xf32> to vector<16xf32>
    %976 = vector.shape_cast %975 : vector<16xf32> to vector<1x1x16xf32>
    %977 = vector.broadcast %976 : vector<1x1x16xf32> to vector<8x8x16xf32>
    %978 = arith.mulf %973, %977 : vector<8x8x16xf32>
    %979 = arith.addf %972, %978 : vector<8x8x16xf32>
    %980 = arith.mulf %979, %979 : vector<8x8x16xf32>
    %981 = arith.mulf %979, %980 : vector<8x8x16xf32>
    %cst_280 = arith.constant 4.471500e-02 : f32
    %982 = vector.broadcast %cst_280 : f32 to vector<8x8x16xf32>
    %983 = arith.mulf %982, %981 : vector<8x8x16xf32>
    %984 = arith.addf %979, %983 : vector<8x8x16xf32>
    %cst_281 = arith.constant 0.797884583 : f32
    %985 = vector.broadcast %cst_281 : f32 to vector<8x8x16xf32>
    %986 = arith.mulf %985, %984 : vector<8x8x16xf32>
    %987 = math.tanh %986 : vector<8x8x16xf32>
    %cst_282 = arith.constant 1.000000e+00 : f32
    %988 = vector.broadcast %cst_282 : f32 to vector<8x8x16xf32>
    %989 = arith.addf %988, %987 : vector<8x8x16xf32>
    %cst_283 = arith.constant 5.000000e-01 : f32
    %990 = vector.broadcast %cst_283 : f32 to vector<8x8x16xf32>
    %991 = arith.mulf %990, %989 : vector<8x8x16xf32>
    %992 = arith.mulf %979, %991 : vector<8x8x16xf32>
    %cst_284 = arith.constant 0.000000e+00 : f32
    %993 = vector.broadcast %cst_284 : f32 to vector<2x8x16xf32>
    %994 = tpu.concatenate %993, %992, %993 in 0 : vector<2x8x16xf32>, vector<8x8x16xf32>, vector<2x8x16xf32> -> vector<12x8x16xf32>
    %cst_285 = arith.constant 0.000000e+00 : f32
    %995 = vector.broadcast %cst_285 : f32 to vector<12x2x16xf32>
    %996 = tpu.concatenate %995, %994, %995 in 1 : vector<12x2x16xf32>, vector<12x8x16xf32>, vector<12x2x16xf32> -> vector<12x12x16xf32>
    %cst_286 = arith.constant 0.000000e+00 : f32
    %997 = vector.broadcast %cst_286 : f32 to vector<8x8x16xf32>
    %998 = vector.extract_strided_slice %906 {offsets = [1, 0], sizes = [1, 16], strides = [1, 1]} : vector<2x16xf32> to vector<1x16xf32>
    %999 = vector.shape_cast %998 : vector<1x16xf32> to vector<16xf32>
    %1000 = vector.shape_cast %999 : vector<16xf32> to vector<1x1x16xf32>
    %1001 = vector.broadcast %1000 : vector<1x1x16xf32> to vector<8x8x16xf32>
    %1002 = arith.addf %997, %1001 : vector<8x8x16xf32>
    %1003 = vector.extract_strided_slice %996 {offsets = [0, 0, 0], sizes = [8, 8, 16], strides = [1, 1, 1]} : vector<12x12x16xf32> to vector<8x8x16xf32>
    %1004 = vector.extract_strided_slice %905 {offsets = [9, 0], sizes = [1, 16], strides = [1, 1]} : vector<18x16xf32> to vector<1x16xf32>
    %1005 = vector.shape_cast %1004 : vector<1x16xf32> to vector<16xf32>
    %1006 = vector.shape_cast %1005 : vector<16xf32> to vector<1x1x16xf32>
    %1007 = vector.broadcast %1006 : vector<1x1x16xf32> to vector<8x8x16xf32>
    %1008 = arith.mulf %1003, %1007 : vector<8x8x16xf32>
    %1009 = arith.addf %1002, %1008 : vector<8x8x16xf32>
    %1010 = vector.extract_strided_slice %996 {offsets = [0, 2, 0], sizes = [8, 8, 16], strides = [1, 1, 1]} : vector<12x12x16xf32> to vector<8x8x16xf32>
    %1011 = vector.extract_strided_slice %905 {offsets = [10, 0], sizes = [1, 16], strides = [1, 1]} : vector<18x16xf32> to vector<1x16xf32>
    %1012 = vector.shape_cast %1011 : vector<1x16xf32> to vector<16xf32>
    %1013 = vector.shape_cast %1012 : vector<16xf32> to vector<1x1x16xf32>
    %1014 = vector.broadcast %1013 : vector<1x1x16xf32> to vector<8x8x16xf32>
    %1015 = arith.mulf %1010, %1014 : vector<8x8x16xf32>
    %1016 = arith.addf %1009, %1015 : vector<8x8x16xf32>
    %1017 = vector.extract_strided_slice %996 {offsets = [0, 4, 0], sizes = [8, 8, 16], strides = [1, 1, 1]} : vector<12x12x16xf32> to vector<8x8x16xf32>
    %1018 = vector.extract_strided_slice %905 {offsets = [11, 0], sizes = [1, 16], strides = [1, 1]} : vector<18x16xf32> to vector<1x16xf32>
    %1019 = vector.shape_cast %1018 : vector<1x16xf32> to vector<16xf32>
    %1020 = vector.shape_cast %1019 : vector<16xf32> to vector<1x1x16xf32>
    %1021 = vector.broadcast %1020 : vector<1x1x16xf32> to vector<8x8x16xf32>
    %1022 = arith.mulf %1017, %1021 : vector<8x8x16xf32>
    %1023 = arith.addf %1016, %1022 : vector<8x8x16xf32>
    %1024 = vector.extract_strided_slice %996 {offsets = [2, 0, 0], sizes = [8, 8, 16], strides = [1, 1, 1]} : vector<12x12x16xf32> to vector<8x8x16xf32>
    %1025 = vector.extract_strided_slice %905 {offsets = [12, 0], sizes = [1, 16], strides = [1, 1]} : vector<18x16xf32> to vector<1x16xf32>
    %1026 = vector.shape_cast %1025 : vector<1x16xf32> to vector<16xf32>
    %1027 = vector.shape_cast %1026 : vector<16xf32> to vector<1x1x16xf32>
    %1028 = vector.broadcast %1027 : vector<1x1x16xf32> to vector<8x8x16xf32>
    %1029 = arith.mulf %1024, %1028 : vector<8x8x16xf32>
    %1030 = arith.addf %1023, %1029 : vector<8x8x16xf32>
    %1031 = vector.extract_strided_slice %996 {offsets = [2, 2, 0], sizes = [8, 8, 16], strides = [1, 1, 1]} : vector<12x12x16xf32> to vector<8x8x16xf32>
    %1032 = vector.extract_strided_slice %905 {offsets = [13, 0], sizes = [1, 16], strides = [1, 1]} : vector<18x16xf32> to vector<1x16xf32>
    %1033 = vector.shape_cast %1032 : vector<1x16xf32> to vector<16xf32>
    %1034 = vector.shape_cast %1033 : vector<16xf32> to vector<1x1x16xf32>
    %1035 = vector.broadcast %1034 : vector<1x1x16xf32> to vector<8x8x16xf32>
    %1036 = arith.mulf %1031, %1035 : vector<8x8x16xf32>
    %1037 = arith.addf %1030, %1036 : vector<8x8x16xf32>
    %1038 = vector.extract_strided_slice %996 {offsets = [2, 4, 0], sizes = [8, 8, 16], strides = [1, 1, 1]} : vector<12x12x16xf32> to vector<8x8x16xf32>
    %1039 = vector.extract_strided_slice %905 {offsets = [14, 0], sizes = [1, 16], strides = [1, 1]} : vector<18x16xf32> to vector<1x16xf32>
    %1040 = vector.shape_cast %1039 : vector<1x16xf32> to vector<16xf32>
    %1041 = vector.shape_cast %1040 : vector<16xf32> to vector<1x1x16xf32>
    %1042 = vector.broadcast %1041 : vector<1x1x16xf32> to vector<8x8x16xf32>
    %1043 = arith.mulf %1038, %1042 : vector<8x8x16xf32>
    %1044 = arith.addf %1037, %1043 : vector<8x8x16xf32>
    %1045 = vector.extract_strided_slice %996 {offsets = [4, 0, 0], sizes = [8, 8, 16], strides = [1, 1, 1]} : vector<12x12x16xf32> to vector<8x8x16xf32>
    %1046 = vector.extract_strided_slice %905 {offsets = [15, 0], sizes = [1, 16], strides = [1, 1]} : vector<18x16xf32> to vector<1x16xf32>
    %1047 = vector.shape_cast %1046 : vector<1x16xf32> to vector<16xf32>
    %1048 = vector.shape_cast %1047 : vector<16xf32> to vector<1x1x16xf32>
    %1049 = vector.broadcast %1048 : vector<1x1x16xf32> to vector<8x8x16xf32>
    %1050 = arith.mulf %1045, %1049 : vector<8x8x16xf32>
    %1051 = arith.addf %1044, %1050 : vector<8x8x16xf32>
    %1052 = vector.extract_strided_slice %996 {offsets = [4, 2, 0], sizes = [8, 8, 16], strides = [1, 1, 1]} : vector<12x12x16xf32> to vector<8x8x16xf32>
    %1053 = vector.extract_strided_slice %905 {offsets = [16, 0], sizes = [1, 16], strides = [1, 1]} : vector<18x16xf32> to vector<1x16xf32>
    %1054 = vector.shape_cast %1053 : vector<1x16xf32> to vector<16xf32>
    %1055 = vector.shape_cast %1054 : vector<16xf32> to vector<1x1x16xf32>
    %1056 = vector.broadcast %1055 : vector<1x1x16xf32> to vector<8x8x16xf32>
    %1057 = arith.mulf %1052, %1056 : vector<8x8x16xf32>
    %1058 = arith.addf %1051, %1057 : vector<8x8x16xf32>
    %1059 = vector.extract_strided_slice %996 {offsets = [4, 4, 0], sizes = [8, 8, 16], strides = [1, 1, 1]} : vector<12x12x16xf32> to vector<8x8x16xf32>
    %1060 = vector.extract_strided_slice %905 {offsets = [17, 0], sizes = [1, 16], strides = [1, 1]} : vector<18x16xf32> to vector<1x16xf32>
    %1061 = vector.shape_cast %1060 : vector<1x16xf32> to vector<16xf32>
    %1062 = vector.shape_cast %1061 : vector<16xf32> to vector<1x1x16xf32>
    %1063 = vector.broadcast %1062 : vector<1x1x16xf32> to vector<8x8x16xf32>
    %1064 = arith.mulf %1059, %1063 : vector<8x8x16xf32>
    %1065 = arith.addf %1058, %1064 : vector<8x8x16xf32>
    %1066 = arith.mulf %1065, %1065 : vector<8x8x16xf32>
    %1067 = arith.mulf %1065, %1066 : vector<8x8x16xf32>
    %cst_287 = arith.constant 4.471500e-02 : f32
    %1068 = vector.broadcast %cst_287 : f32 to vector<8x8x16xf32>
    %1069 = arith.mulf %1068, %1067 : vector<8x8x16xf32>
    %1070 = arith.addf %1065, %1069 : vector<8x8x16xf32>
    %cst_288 = arith.constant 0.797884583 : f32
    %1071 = vector.broadcast %cst_288 : f32 to vector<8x8x16xf32>
    %1072 = arith.mulf %1071, %1070 : vector<8x8x16xf32>
    %1073 = math.tanh %1072 : vector<8x8x16xf32>
    %cst_289 = arith.constant 1.000000e+00 : f32
    %1074 = vector.broadcast %cst_289 : f32 to vector<8x8x16xf32>
    %1075 = arith.addf %1074, %1073 : vector<8x8x16xf32>
    %cst_290 = arith.constant 5.000000e-01 : f32
    %1076 = vector.broadcast %cst_290 : f32 to vector<8x8x16xf32>
    %1077 = arith.mulf %1076, %1075 : vector<8x8x16xf32>
    %1078 = arith.mulf %1065, %1077 : vector<8x8x16xf32>
    %1079 = tpu.concatenate %992, %1078 in 2 : vector<8x8x16xf32>, vector<8x8x16xf32> -> vector<8x8x32xf32>
    %1080 = vector.shape_cast %1079 : vector<8x8x32xf32> to vector<64x32xf32>
    %1081 = vector.broadcast %880 : vector<64x1xf32> to vector<64x32xf32>
    %1082 = arith.mulf %1080, %1081 : vector<64x32xf32>
    %c0_291 = arith.constant 0 : index
    %c0_292 = arith.constant 0 : index
    %1083 = vector.load %arg37[%c0_291, %c0_292] : memref<32x32xf32, #tpu.memory_space<vmem>>, vector<32x32xf32>
    %cst_293 = arith.constant dense<0.000000e+00> : vector<8x32xf32>
    %1084 = tpu.matmul %843, %1083, %cst_293 {dimension_numbers = #tpu.dot_dimension_numbers<[1], [0], [0], [1], [0, 0, 1, 1], [], []>} : vector<8x32xf32>, vector<32x32xf32>, vector<8x32xf32> -> vector<8x32xf32>
    %c0_294 = arith.constant 0 : index
    %c0_295 = arith.constant 0 : index
    %1085 = vector.load %arg38[%c0_294, %c0_295] : memref<1x32xf32, #tpu.memory_space<vmem>>, vector<1x32xf32>
    %1086 = vector.broadcast %1085 : vector<1x32xf32> to vector<8x32xf32>
    %1087 = arith.addf %1084, %1086 : vector<8x32xf32>
    %1088 = arith.mulf %1087, %1087 : vector<8x32xf32>
    %1089 = arith.mulf %1087, %1088 : vector<8x32xf32>
    %cst_296 = arith.constant 4.471500e-02 : f32
    %1090 = vector.broadcast %cst_296 : f32 to vector<8x32xf32>
    %1091 = arith.mulf %1090, %1089 : vector<8x32xf32>
    %1092 = arith.addf %1087, %1091 : vector<8x32xf32>
    %cst_297 = arith.constant 0.797884583 : f32
    %1093 = vector.broadcast %cst_297 : f32 to vector<8x32xf32>
    %1094 = arith.mulf %1093, %1092 : vector<8x32xf32>
    %1095 = math.tanh %1094 : vector<8x32xf32>
    %cst_298 = arith.constant 1.000000e+00 : f32
    %1096 = vector.broadcast %cst_298 : f32 to vector<8x32xf32>
    %1097 = arith.addf %1096, %1095 : vector<8x32xf32>
    %cst_299 = arith.constant 5.000000e-01 : f32
    %1098 = vector.broadcast %cst_299 : f32 to vector<8x32xf32>
    %1099 = arith.mulf %1098, %1097 : vector<8x32xf32>
    %1100 = arith.mulf %1087, %1099 : vector<8x32xf32>
    %cst_300 = arith.constant 1.000000e+00 : f32
    %1101 = vector.broadcast %cst_300 : f32 to vector<8x1xf32>
    %1102 = vector.extract_strided_slice %1100 {offsets = [0, 0], sizes = [8, 16], strides = [1, 1]} : vector<8x32xf32> to vector<8x16xf32>
    %1103 = tpu.concatenate %1102, %1101 in 1 : vector<8x16xf32>, vector<8x1xf32> -> vector<8x17xf32>
    %1104 = vector.extract_strided_slice %1100 {offsets = [0, 16], sizes = [8, 16], strides = [1, 1]} : vector<8x32xf32> to vector<8x16xf32>
    %1105 = tpu.concatenate %1104, %1101 in 1 : vector<8x16xf32>, vector<8x1xf32> -> vector<8x17xf32>
    %c0_301 = arith.constant 0 : index
    %c0_302 = arith.constant 0 : index
    %1106 = vector.load %arg39[%c0_301, %c0_302] : memref<17x68xf32, #tpu.memory_space<vmem>>, vector<17x68xf32>
    %cst_303 = arith.constant dense<0.000000e+00> : vector<8x68xf32>
    %1107 = tpu.matmul %1103, %1106, %cst_303 {dimension_numbers = #tpu.dot_dimension_numbers<[1], [0], [0], [1], [0, 0, 1, 1], [], []>} : vector<8x17xf32>, vector<17x68xf32>, vector<8x68xf32> -> vector<8x68xf32>
    %1108 = vector.extract_strided_slice %1107 {offsets = [0, 0], sizes = [8, 17], strides = [1, 1]} : vector<8x68xf32> to vector<8x17xf32>
    %cst_304 = arith.constant dense<0.000000e+00> : vector<8x8xf32>
    %1109 = tpu.matmul %1108, %1105, %cst_304 {dimension_numbers = #tpu.dot_dimension_numbers<[1], [1], [0], [0], [0, 0, 1, 0], [], []>} : vector<8x17xf32>, vector<8x17xf32>, vector<8x8xf32> -> vector<8x8xf32>
    %1110 = vector.extract_strided_slice %1107 {offsets = [0, 17], sizes = [8, 17], strides = [1, 1]} : vector<8x68xf32> to vector<8x17xf32>
    %cst_305 = arith.constant dense<0.000000e+00> : vector<8x8xf32>
    %1111 = tpu.matmul %1110, %1105, %cst_305 {dimension_numbers = #tpu.dot_dimension_numbers<[1], [1], [0], [0], [0, 0, 1, 0], [], []>} : vector<8x17xf32>, vector<8x17xf32>, vector<8x8xf32> -> vector<8x8xf32>
    %1112 = vector.extract_strided_slice %1107 {offsets = [0, 34], sizes = [8, 17], strides = [1, 1]} : vector<8x68xf32> to vector<8x17xf32>
    %cst_306 = arith.constant dense<0.000000e+00> : vector<8x8xf32>
    %1113 = tpu.matmul %1112, %1105, %cst_306 {dimension_numbers = #tpu.dot_dimension_numbers<[1], [1], [0], [0], [0, 0, 1, 0], [], []>} : vector<8x17xf32>, vector<8x17xf32>, vector<8x8xf32> -> vector<8x8xf32>
    %1114 = vector.extract_strided_slice %1107 {offsets = [0, 51], sizes = [8, 17], strides = [1, 1]} : vector<8x68xf32> to vector<8x17xf32>
    %cst_307 = arith.constant dense<0.000000e+00> : vector<8x8xf32>
    %1115 = tpu.matmul %1114, %1105, %cst_307 {dimension_numbers = #tpu.dot_dimension_numbers<[1], [1], [0], [0], [0, 0, 1, 0], [], []>} : vector<8x17xf32>, vector<8x17xf32>, vector<8x8xf32> -> vector<8x8xf32>
    %1116 = vector.shape_cast %1109 : vector<8x8xf32> to vector<8x8x1xf32>
    %1117 = vector.shape_cast %1111 : vector<8x8xf32> to vector<8x8x1xf32>
    %1118 = vector.shape_cast %1113 : vector<8x8xf32> to vector<8x8x1xf32>
    %1119 = vector.shape_cast %1115 : vector<8x8xf32> to vector<8x8x1xf32>
    %1120 = tpu.concatenate %1116, %1117, %1118, %1119 in 2 : vector<8x8x1xf32>, vector<8x8x1xf32>, vector<8x8x1xf32>, vector<8x8x1xf32> -> vector<8x8x4xf32>
    %c0_308 = arith.constant 0 : index
    %c0_309 = arith.constant 0 : index
    %1121 = vector.load %arg40[%c0_308, %c0_309] : memref<32x16xf32, #tpu.memory_space<vmem>>, vector<32x16xf32>
    %cst_310 = arith.constant dense<0.000000e+00> : vector<64x16xf32>
    %1122 = tpu.matmul %1082, %1121, %cst_310 {dimension_numbers = #tpu.dot_dimension_numbers<[1], [0], [0], [1], [0, 0, 1, 1], [], []>} : vector<64x32xf32>, vector<32x16xf32>, vector<64x16xf32> -> vector<64x16xf32>
    %c0_311 = arith.constant 0 : index
    %c0_312 = arith.constant 0 : index
    %1123 = vector.load %arg41[%c0_311, %c0_312] : memref<1x16xf32, #tpu.memory_space<vmem>>, vector<1x16xf32>
    %1124 = vector.broadcast %1123 : vector<1x16xf32> to vector<64x16xf32>
    %1125 = arith.addf %1122, %1124 : vector<64x16xf32>
    %1126 = arith.mulf %1125, %1125 : vector<64x16xf32>
    %1127 = arith.mulf %1125, %1126 : vector<64x16xf32>
    %cst_313 = arith.constant 4.471500e-02 : f32
    %1128 = vector.broadcast %cst_313 : f32 to vector<64x16xf32>
    %1129 = arith.mulf %1128, %1127 : vector<64x16xf32>
    %1130 = arith.addf %1125, %1129 : vector<64x16xf32>
    %cst_314 = arith.constant 0.797884583 : f32
    %1131 = vector.broadcast %cst_314 : f32 to vector<64x16xf32>
    %1132 = arith.mulf %1131, %1130 : vector<64x16xf32>
    %1133 = math.tanh %1132 : vector<64x16xf32>
    %cst_315 = arith.constant 1.000000e+00 : f32
    %1134 = vector.broadcast %cst_315 : f32 to vector<64x16xf32>
    %1135 = arith.addf %1134, %1133 : vector<64x16xf32>
    %cst_316 = arith.constant 5.000000e-01 : f32
    %1136 = vector.broadcast %cst_316 : f32 to vector<64x16xf32>
    %1137 = arith.mulf %1136, %1135 : vector<64x16xf32>
    %1138 = arith.mulf %1125, %1137 : vector<64x16xf32>
    %c0_317 = arith.constant 0 : index
    %c0_318 = arith.constant 0 : index
    %1139 = vector.load %arg42[%c0_317, %c0_318] : memref<16x4xf32, #tpu.memory_space<vmem>>, vector<16x4xf32>
    %cst_319 = arith.constant dense<0.000000e+00> : vector<64x4xf32>
    %1140 = tpu.matmul %1138, %1139, %cst_319 {dimension_numbers = #tpu.dot_dimension_numbers<[1], [0], [0], [1], [0, 0, 1, 1], [], []>} : vector<64x16xf32>, vector<16x4xf32>, vector<64x4xf32> -> vector<64x4xf32>
    %c0_320 = arith.constant 0 : index
    %c0_321 = arith.constant 0 : index
    %1141 = vector.load %arg43[%c0_320, %c0_321] : memref<1x4xf32, #tpu.memory_space<vmem>>, vector<1x4xf32>
    %1142 = vector.broadcast %1141 : vector<1x4xf32> to vector<64x4xf32>
    %1143 = arith.addf %1140, %1142 : vector<64x4xf32>
    %1144 = vector.shape_cast %1143 : vector<64x4xf32> to vector<8x8x4xf32>
    %1145 = arith.addf %1120, %1144 : vector<8x8x4xf32>
    %c0_322 = arith.constant 0 : index
    %c0_323 = arith.constant 0 : index
    %c0_324 = arith.constant 0 : index
    %c0_325 = arith.constant 0 : index
    %1146 = vector.load %arg44[%c0_322, %c0_323, %c0_324, %c0_325] : memref<1x8x8x4xf32, #tpu.memory_space<vmem>>, vector<1x8x8x4xf32>
    %1147 = vector.shape_cast %1146 : vector<1x8x8x4xf32> to vector<8x8x4xf32>
    %1148 = vector.shape_cast %1145 : vector<8x8x4xf32> to vector<1x8x8x4xf32>
    tpu.vector_store %arg44[%c0_322, %c0_323, %c0_324, %c0_325], %1148 {strides = array<i32>} : memref<1x8x8x4xf32, #tpu.memory_space<vmem>>, vector<1x8x8x4xf32>,
    return
  }
  func.func @transform_0(%arg0: i32) -> (i32, i32, i32) {
    %c0_i32 = arith.constant 0 : i32
    %c0_i32_0 = arith.constant 0 : i32
    %c0_i32_1 = arith.constant 0 : i32
    return %arg0, %c0_i32, %c0_i32_0 : i32, i32, i32
  }
  func.func @transform_1(%arg0: i32) -> (i32, i32, i32) {
    %c0_i32 = arith.constant 0 : i32
    %c0_i32_0 = arith.constant 0 : i32
    %c0_i32_1 = arith.constant 0 : i32
    return %arg0, %c0_i32, %c0_i32_0 : i32, i32, i32
  }
  func.func @transform_2(%arg0: i32) -> (i32, i32, i32) {
    %c0_i32 = arith.constant 0 : i32
    %c0_i32_0 = arith.constant 0 : i32
    %c0_i32_1 = arith.constant 0 : i32
    return %arg0, %c0_i32, %c0_i32_0 : i32, i32, i32
  }
  func.func @transform_3(%arg0: i32) -> (i32, i32, i32) {
    %c0_i32 = arith.constant 0 : i32
    %c0_i32_0 = arith.constant 0 : i32
    %c0_i32_1 = arith.constant 0 : i32
    return %arg0, %c0_i32, %c0_i32_0 : i32, i32, i32
  }
  func.func @transform_4(%arg0: i32) -> (i32, i32, i32) {
    %c0_i32 = arith.constant 0 : i32
    %c0_i32_0 = arith.constant 0 : i32
    %c0_i32_1 = arith.constant 0 : i32
    return %arg0, %c0_i32, %c0_i32_0 : i32, i32, i32
  }
  func.func @transform_5(%arg0: i32) -> i32 {
    %c0_i32 = arith.constant 0 : i32
    %c0_i32_0 = arith.constant 0 : i32
    return %c0_i32 : i32
  }
  func.func @transform_6(%arg0: i32) -> (i32, i32) {
    %c0_i32 = arith.constant 0 : i32
    %c0_i32_0 = arith.constant 0 : i32
    %c0_i32_1 = arith.constant 0 : i32
    return %c0_i32, %c0_i32_0 : i32, i32
  }
  func.func @transform_7(%arg0: i32) -> (i32, i32) {
    %c0_i32 = arith.constant 0 : i32
    %c0_i32_0 = arith.constant 0 : i32
    %c0_i32_1 = arith.constant 0 : i32
    return %c0_i32, %c0_i32_0 : i32, i32
  }
  func.func @transform_8(%arg0: i32) -> (i32, i32) {
    %c0_i32 = arith.constant 0 : i32
    %c0_i32_0 = arith.constant 0 : i32
    %c0_i32_1 = arith.constant 0 : i32
    return %c0_i32, %c0_i32_0 : i32, i32
  }
  func.func @transform_9(%arg0: i32) -> (i32, i32) {
    %c0_i32 = arith.constant 0 : i32
    %c0_i32_0 = arith.constant 0 : i32
    %c0_i32_1 = arith.constant 0 : i32
    return %c0_i32, %c0_i32_0 : i32, i32
  }
  func.func @transform_10(%arg0: i32) -> (i32, i32) {
    %c0_i32 = arith.constant 0 : i32
    %c0_i32_0 = arith.constant 0 : i32
    %c0_i32_1 = arith.constant 0 : i32
    return %c0_i32, %c0_i32_0 : i32, i32
  }
  func.func @transform_11(%arg0: i32) -> (i32, i32) {
    %c0_i32 = arith.constant 0 : i32
    %c0_i32_0 = arith.constant 0 : i32
    %c0_i32_1 = arith.constant 0 : i32
    return %c0_i32, %c0_i32_0 : i32, i32
  }
  func.func @transform_12(%arg0: i32) -> (i32, i32) {
    %c0_i32 = arith.constant 0 : i32
    %c0_i32_0 = arith.constant 0 : i32
    %c0_i32_1 = arith.constant 0 : i32
    return %c0_i32, %c0_i32_0 : i32, i32
  }
  func.func @transform_13(%arg0: i32) -> (i32, i32) {
    %c0_i32 = arith.constant 0 : i32
    %c0_i32_0 = arith.constant 0 : i32
    %c0_i32_1 = arith.constant 0 : i32
    return %c0_i32, %c0_i32_0 : i32, i32
  }
  func.func @transform_14(%arg0: i32) -> (i32, i32) {
    %c0_i32 = arith.constant 0 : i32
    %c0_i32_0 = arith.constant 0 : i32
    %c0_i32_1 = arith.constant 0 : i32
    return %c0_i32, %c0_i32_0 : i32, i32
  }
  func.func @transform_15(%arg0: i32) -> (i32, i32) {
    %c0_i32 = arith.constant 0 : i32
    %c0_i32_0 = arith.constant 0 : i32
    %c0_i32_1 = arith.constant 0 : i32
    return %c0_i32, %c0_i32_0 : i32, i32
  }
  func.func @transform_16(%arg0: i32) -> (i32, i32) {
    %c0_i32 = arith.constant 0 : i32
    %c0_i32_0 = arith.constant 0 : i32
    %c0_i32_1 = arith.constant 0 : i32
    return %c0_i32, %c0_i32_0 : i32, i32
  }
  func.func @transform_17(%arg0: i32) -> (i32, i32) {
    %c0_i32 = arith.constant 0 : i32
    %c0_i32_0 = arith.constant 0 : i32
    %c0_i32_1 = arith.constant 0 : i32
    return %c0_i32, %c0_i32_0 : i32, i32
  }
  func.func @transform_18(%arg0: i32) -> (i32, i32) {
    %c0_i32 = arith.constant 0 : i32
    %c0_i32_0 = arith.constant 0 : i32
    %c0_i32_1 = arith.constant 0 : i32
    return %c0_i32, %c0_i32_0 : i32, i32
  }
  func.func @transform_19(%arg0: i32) -> (i32, i32) {
    %c0_i32 = arith.constant 0 : i32
    %c0_i32_0 = arith.constant 0 : i32
    %c0_i32_1 = arith.constant 0 : i32
    return %c0_i32, %c0_i32_0 : i32, i32
  }
  func.func @transform_20(%arg0: i32) -> (i32, i32) {
    %c0_i32 = arith.constant 0 : i32
    %c0_i32_0 = arith.constant 0 : i32
    %c0_i32_1 = arith.constant 0 : i32
    return %c0_i32, %c0_i32_0 : i32, i32
  }
  func.func @transform_21(%arg0: i32) -> (i32, i32) {
    %c0_i32 = arith.constant 0 : i32
    %c0_i32_0 = arith.constant 0 : i32
    %c0_i32_1 = arith.constant 0 : i32
    return %c0_i32, %c0_i32_0 : i32, i32
  }
  func.func @transform_22(%arg0: i32) -> (i32, i32) {
    %c0_i32 = arith.constant 0 : i32
    %c0_i32_0 = arith.constant 0 : i32
    %c0_i32_1 = arith.constant 0 : i32
    return %c0_i32, %c0_i32_0 : i32, i32
  }
  func.func @transform_23(%arg0: i32) -> (i32, i32) {
    %c0_i32 = arith.constant 0 : i32
    %c0_i32_0 = arith.constant 0 : i32
    %c0_i32_1 = arith.constant 0 : i32
    return %c0_i32, %c0_i32_0 : i32, i32
  }
  func.func @transform_24(%arg0: i32) -> (i32, i32) {
    %c0_i32 = arith.constant 0 : i32
    %c0_i32_0 = arith.constant 0 : i32
    %c0_i32_1 = arith.constant 0 : i32
    return %c0_i32, %c0_i32_0 : i32, i32
  }
  func.func @transform_25(%arg0: i32) -> (i32, i32) {
    %c0_i32 = arith.constant 0 : i32
    %c0_i32_0 = arith.constant 0 : i32
    %c0_i32_1 = arith.constant 0 : i32
    return %c0_i32, %c0_i32_0 : i32, i32
  }
  func.func @transform_26(%arg0: i32) -> (i32, i32) {
    %c0_i32 = arith.constant 0 : i32
    %c0_i32_0 = arith.constant 0 : i32
    %c0_i32_1 = arith.constant 0 : i32
    return %c0_i32, %c0_i32_0 : i32, i32
  }
  func.func @transform_27(%arg0: i32) -> (i32, i32) {
    %c0_i32 = arith.constant 0 : i32
    %c0_i32_0 = arith.constant 0 : i32
    %c0_i32_1 = arith.constant 0 : i32
    return %c0_i32, %c0_i32_0 : i32, i32
  }
  func.func @transform_28(%arg0: i32) -> (i32, i32) {
    %c0_i32 = arith.constant 0 : i32
    %c0_i32_0 = arith.constant 0 : i32
    %c0_i32_1 = arith.constant 0 : i32
    return %c0_i32, %c0_i32_0 : i32, i32
  }
  func.func @transform_29(%arg0: i32) -> (i32, i32) {
    %c0_i32 = arith.constant 0 : i32
    %c0_i32_0 = arith.constant 0 : i32
    %c0_i32_1 = arith.constant 0 : i32
    return %c0_i32, %c0_i32_0 : i32, i32
  }
  func.func @transform_30(%arg0: i32) -> (i32, i32) {
    %c0_i32 = arith.constant 0 : i32
    %c0_i32_0 = arith.constant 0 : i32
    %c0_i32_1 = arith.constant 0 : i32
    return %c0_i32, %c0_i32_0 : i32, i32
  }
  func.func @transform_31(%arg0: i32) -> (i32, i32) {
    %c0_i32 = arith.constant 0 : i32
    %c0_i32_0 = arith.constant 0 : i32
    %c0_i32_1 = arith.constant 0 : i32
    return %c0_i32, %c0_i32_0 : i32, i32
  }
  func.func @transform_32(%arg0: i32) -> (i32, i32) {
    %c0_i32 = arith.constant 0 : i32
    %c0_i32_0 = arith.constant 0 : i32
    %c0_i32_1 = arith.constant 0 : i32
    return %c0_i32, %c0_i32_0 : i32, i32
  }
  func.func @transform_33(%arg0: i32) -> (i32, i32) {
    %c0_i32 = arith.constant 0 : i32
    %c0_i32_0 = arith.constant 0 : i32
    %c0_i32_1 = arith.constant 0 : i32
    return %c0_i32, %c0_i32_0 : i32, i32
  }
  func.func @transform_34(%arg0: i32) -> (i32, i32) {
    %c0_i32 = arith.constant 0 : i32
    %c0_i32_0 = arith.constant 0 : i32
    %c0_i32_1 = arith.constant 0 : i32
    return %c0_i32, %c0_i32_0 : i32, i32
  }
  func.func @transform_35(%arg0: i32) -> (i32, i32) {
    %c0_i32 = arith.constant 0 : i32
    %c0_i32_0 = arith.constant 0 : i32
    %c0_i32_1 = arith.constant 0 : i32
    return %c0_i32, %c0_i32_0 : i32, i32
  }
  func.func @transform_36(%arg0: i32) -> (i32, i32) {
    %c0_i32 = arith.constant 0 : i32
    %c0_i32_0 = arith.constant 0 : i32
    %c0_i32_1 = arith.constant 0 : i32
    return %c0_i32, %c0_i32_0 : i32, i32
  }
  func.func @transform_37(%arg0: i32) -> (i32, i32) {
    %c0_i32 = arith.constant 0 : i32
    %c0_i32_0 = arith.constant 0 : i32
    %c0_i32_1 = arith.constant 0 : i32
    return %c0_i32, %c0_i32_0 : i32, i32
  }
  func.func @transform_38(%arg0: i32) -> (i32, i32) {
    %c0_i32 = arith.constant 0 : i32
    %c0_i32_0 = arith.constant 0 : i32
    %c0_i32_1 = arith.constant 0 : i32
    return %c0_i32, %c0_i32_0 : i32, i32
  }
  func.func @transform_39(%arg0: i32) -> (i32, i32) {
    %c0_i32 = arith.constant 0 : i32
    %c0_i32_0 = arith.constant 0 : i32
    %c0_i32_1 = arith.constant 0 : i32
    return %c0_i32, %c0_i32_0 : i32, i32
  }
  func.func @transform_40(%arg0: i32) -> (i32, i32) {
    %c0_i32 = arith.constant 0 : i32
    %c0_i32_0 = arith.constant 0 : i32
    %c0_i32_1 = arith.constant 0 : i32
    return %c0_i32, %c0_i32_0 : i32, i32
  }
  func.func @transform_41(%arg0: i32) -> (i32, i32) {
    %c0_i32 = arith.constant 0 : i32
    %c0_i32_0 = arith.constant 0 : i32
    %c0_i32_1 = arith.constant 0 : i32
    return %c0_i32, %c0_i32_0 : i32, i32
  }
  func.func @transform_42(%arg0: i32) -> (i32, i32) {
    %c0_i32 = arith.constant 0 : i32
    %c0_i32_0 = arith.constant 0 : i32
    %c0_i32_1 = arith.constant 0 : i32
    return %c0_i32, %c0_i32_0 : i32, i32
  }
  func.func @transform_43(%arg0: i32) -> (i32, i32, i32, i32) {
    %c0_i32 = arith.constant 0 : i32
    %c0_i32_0 = arith.constant 0 : i32
    %c0_i32_1 = arith.constant 0 : i32
    %c0_i32_2 = arith.constant 0 : i32
    return %arg0, %c0_i32, %c0_i32_0, %c0_i32_1 : i32, i32, i32, i32
  }
}

</mosaic_0001>

<llo_original>
// kernel: forward.1
$region0: #{forward.1}
  #allocation0 [shape = 'u32[]', space=smem, size = 0x4, offset = 0x4, fixed_abs, tag = 'smem constant byte address 0x4 - core index']
  #allocation1 [shape = 'u32[144,128]{1,0:T(1,128)}', space=vmem, size = 0x12000, scoped, tag = 'internal scratch']
  %s0 = inlined_call_operand.smem [shape: u32[44], index: -1, kind: input, shape index: {}]
  %s1 = sld [smem:[%s0]]
  %s2 = scalar_lea.smem %s0, 1
  %s3 = sld [smem:[%s2]]
  %s4 = scalar_lea.smem %s0, 2
  %s5 = sld [smem:[%s4]]
  %s6 = scalar_lea.smem %s0, 3
  %s7 = sld [smem:[%s6]]
  %s8 = scalar_lea.smem %s0, 4
  %s9 = sld [smem:[%s8]]
  %s10 = scalar_lea.smem %s0, 5
  %s11 = sld [smem:[%s10]]
  %s12 = scalar_lea.smem %s0, 6
  %s13 = sld [smem:[%s12]]
  %s14 = scalar_lea.smem %s0, 7
  %s15 = sld [smem:[%s14]]
  %s16 = scalar_lea.smem %s0, 8
  %s17 = sld [smem:[%s16]]
  %s18 = scalar_lea.smem %s0, 9
  %s19 = sld [smem:[%s18]]
  %s20 = scalar_lea.smem %s0, 10
  %s21 = sld [smem:[%s20]]
  %s22 = scalar_lea.smem %s0, 11
  %s23 = sld [smem:[%s22]]
  %s24 = scalar_lea.smem %s0, 12
  %s25 = sld [smem:[%s24]]
  %s26 = scalar_lea.smem %s0, 13
  %s27 = sld [smem:[%s26]]
  %s28 = scalar_lea.smem %s0, 14
  %s29 = sld [smem:[%s28]]
  %s30 = scalar_lea.smem %s0, 15
  %s31 = sld [smem:[%s30]]
  %s32 = scalar_lea.smem %s0, 16
  %s33 = sld [smem:[%s32]]
  %s34 = scalar_lea.smem %s0, 17
  %s35 = sld [smem:[%s34]]
  %s36 = scalar_lea.smem %s0, 18
  %s37 = sld [smem:[%s36]]
  %s38 = scalar_lea.smem %s0, 19
  %s39 = sld [smem:[%s38]]
  %s40 = scalar_lea.smem %s0, 20
  %s41 = sld [smem:[%s40]]
  %s42 = scalar_lea.smem %s0, 21
  %s43 = sld [smem:[%s42]]
  %s44 = scalar_lea.smem %s0, 22
  %s45 = sld [smem:[%s44]]
  %s46 = scalar_lea.smem %s0, 23
  %s47 = sld [smem:[%s46]]
  %s48 = scalar_lea.smem %s0, 24
  %s49 = sld [smem:[%s48]]
  %s50 = scalar_lea.smem %s0, 25
  %s51 = sld [smem:[%s50]]
  %s52 = scalar_lea.smem %s0, 26
  %s53 = sld [smem:[%s52]]
  %s54 = scalar_lea.smem %s0, 27
  %s55 = sld [smem:[%s54]]
  %s56 = scalar_lea.smem %s0, 28
  %s57 = sld [smem:[%s56]]
  %s58 = scalar_lea.smem %s0, 29
  %s59 = sld [smem:[%s58]]
  %s60 = scalar_lea.smem %s0, 30
  %s61 = sld [smem:[%s60]]
  %s62 = scalar_lea.smem %s0, 31
  %s63 = sld [smem:[%s62]]
  %s64 = scalar_lea.smem %s0, 32
  %s65 = sld [smem:[%s64]]
  %s66 = scalar_lea.smem %s0, 33
  %s67 = sld [smem:[%s66]]
  %s68 = scalar_lea.smem %s0, 34
  %s69 = sld [smem:[%s68]]
  %s70 = scalar_lea.smem %s0, 35
  %s71 = sld [smem:[%s70]]
  %s72 = scalar_lea.smem %s0, 36
  %s73 = sld [smem:[%s72]]
  %s74 = scalar_lea.smem %s0, 37
  %s75 = sld [smem:[%s74]]
  %s76 = scalar_lea.smem %s0, 38
  %s77 = sld [smem:[%s76]]
  %s78 = scalar_lea.smem %s0, 39
  %s79 = sld [smem:[%s78]]
  %s80 = scalar_lea.smem %s0, 40
  %s81 = sld [smem:[%s80]]
  %s82 = scalar_lea.smem %s0, 41
  %s83 = sld [smem:[%s82]]
  %s84 = scalar_lea.smem %s0, 42
  %s85 = sld [smem:[%s84]]
  %s86 = scalar_lea.smem %s0, 43
  %s87 = sld [smem:[%s86]]
  %s88 = sld [smem:[#allocation0]]
  $region209: #{forward.1} parent=0
    _
  %s90 = ssub.s32 1, %s88
  %s91 = scalar_select 0, %s90, %s88
  $region1: #{forward.1} parent=0
    #allocation2 [shape = 'u8[512]{0}', space=smem, size = 0x200, scoped, tag = 'input window, operand 5, single buffered']
    #allocation3 [shape = 's32[2]{0}', space=sflag, size = 0x8, scoped, tag = 'scoped memory for forward.1']
    %92 = vsyncpa [#allocation3], 0
    loop: start=0, step=1, limit=4
    $region2: #{forward.1} parent=1 // loop_pre_header
      _
    $region3: #{forward.1} parent=1 // loop_header
      %s94 = sphi 0, %s98
      %p95 = scmp.ge.s32.totalorder %s94, 4
      %s104 = sphi 0, %s106
      %s107 = sphi 0, %s104
      %s108 = sphi 0, %s107
      %s124 = sphi 0, %s108
      %s130 = sphi 0, %s132
      %s133 = sphi 0, %s130
      %s134 = sphi 0, %s133
      %s150 = sphi 0, %s134
      %s156 = sphi 0, %s158
      %s159 = sphi 0, %s156
      %s160 = sphi 0, %s159
      %s176 = sphi 0, %s160
      %s182 = sphi 0, %s184
      %s185 = sphi 0, %s182
      %s186 = sphi 0, %s185
      %s202 = sphi 0, %s186
      %s208 = sphi 0, %s210
      %s211 = sphi 0, %s208
      %s212 = sphi 0, %s211
      %s228 = sphi 0, %s212
      %s232 = sphi 0, %s232
      %s234 = sphi 0, %s232
      %s235 = sphi 0, %s234
      %s249 = sphi 0, %s235
      %s253 = sphi 0, %s253
      %s255 = sphi 0, %s253
      %s256 = sphi 0, %s255
      %s270 = sphi 0, %s256
      %s274 = sphi 0, %s274
      %s276 = sphi 0, %s274
      %s277 = sphi 0, %s276
      %s291 = sphi 0, %s277
      %s295 = sphi 0, %s295
      %s297 = sphi 0, %s295
      %s298 = sphi 0, %s297
      %s312 = sphi 0, %s298
      %s316 = sphi 0, %s316
      %s318 = sphi 0, %s316
      %s319 = sphi 0, %s318
      %s333 = sphi 0, %s319
      %s337 = sphi 0, %s337
      %s339 = sphi 0, %s337
      %s340 = sphi 0, %s339
      %s354 = sphi 0, %s340
      %s358 = sphi 0, %s358
      %s360 = sphi 0, %s358
      %s361 = sphi 0, %s360
      %s375 = sphi 0, %s361
      %s379 = sphi 0, %s379
      %s381 = sphi 0, %s379
      %s382 = sphi 0, %s381
      %s396 = sphi 0, %s382
      %s400 = sphi 0, %s400
      %s402 = sphi 0, %s400
      %s403 = sphi 0, %s402
      %s417 = sphi 0, %s403
      %s421 = sphi 0, %s421
      %s423 = sphi 0, %s421
      %s424 = sphi 0, %s423
      %s438 = sphi 0, %s424
      %s442 = sphi 0, %s442
      %s444 = sphi 0, %s442
      %s445 = sphi 0, %s444
      %s459 = sphi 0, %s445
      %s463 = sphi 0, %s463
      %s465 = sphi 0, %s463
      %s466 = sphi 0, %s465
      %s480 = sphi 0, %s466
      %s484 = sphi 0, %s484
      %s486 = sphi 0, %s484
      %s487 = sphi 0, %s486
      %s501 = sphi 0, %s487
      %s505 = sphi 0, %s505
      %s507 = sphi 0, %s505
      %s508 = sphi 0, %s507
      %s522 = sphi 0, %s508
      %s526 = sphi 0, %s526
      %s528 = sphi 0, %s526
      %s529 = sphi 0, %s528
      %s543 = sphi 0, %s529
      %s547 = sphi 0, %s547
      %s549 = sphi 0, %s547
      %s550 = sphi 0, %s549
      %s564 = sphi 0, %s550
      %s568 = sphi 0, %s568
      %s570 = sphi 0, %s568
      %s571 = sphi 0, %s570
      %s585 = sphi 0, %s571
      %s589 = sphi 0, %s589
      %s591 = sphi 0, %s589
      %s592 = sphi 0, %s591
      %s606 = sphi 0, %s592
      %s610 = sphi 0, %s610
      %s612 = sphi 0, %s610
      %s613 = sphi 0, %s612
      %s627 = sphi 0, %s613
      %s631 = sphi 0, %s631
      %s633 = sphi 0, %s631
      %s634 = sphi 0, %s633
      %s648 = sphi 0, %s634
      %s652 = sphi 0, %s652
      %s654 = sphi 0, %s652
      %s655 = sphi 0, %s654
      %s669 = sphi 0, %s655
      %s673 = sphi 0, %s673
      %s675 = sphi 0, %s673
      %s676 = sphi 0, %s675
      %s690 = sphi 0, %s676
      %s694 = sphi 0, %s694
      %s696 = sphi 0, %s694
      %s697 = sphi 0, %s696
      %s711 = sphi 0, %s697
      %s715 = sphi 0, %s715
      %s717 = sphi 0, %s715
      %s718 = sphi 0, %s717
      %s732 = sphi 0, %s718
      %s736 = sphi 0, %s736
      %s738 = sphi 0, %s736
      %s739 = sphi 0, %s738
      %s753 = sphi 0, %s739
      %s757 = sphi 0, %s757
      %s759 = sphi 0, %s757
      %s760 = sphi 0, %s759
      %s774 = sphi 0, %s760
      %s778 = sphi 0, %s778
      %s780 = sphi 0, %s778
      %s781 = sphi 0, %s780
      %s795 = sphi 0, %s781
      %s799 = sphi 0, %s799
      %s801 = sphi 0, %s799
      %s802 = sphi 0, %s801
      %s816 = sphi 0, %s802
      %s820 = sphi 0, %s820
      %s822 = sphi 0, %s820
      %s823 = sphi 0, %s822
      %s837 = sphi 0, %s823
      %s841 = sphi 0, %s841
      %s843 = sphi 0, %s841
      %s844 = sphi 0, %s843
      %s858 = sphi 0, %s844
      %s862 = sphi 0, %s862
      %s864 = sphi 0, %s862
      %s865 = sphi 0, %s864
      %s879 = sphi 0, %s865
      %s883 = sphi 0, %s883
      %s885 = sphi 0, %s883
      %s886 = sphi 0, %s885
      %s900 = sphi 0, %s886
      %s904 = sphi 0, %s904
      %s906 = sphi 0, %s904
      %s907 = sphi 0, %s906
      %s921 = sphi 0, %s907
      %s925 = sphi 0, %s925
      %s927 = sphi 0, %s925
      %s928 = sphi 0, %s927
      %s942 = sphi 0, %s928
      %s946 = sphi 0, %s946
      %s948 = sphi 0, %s946
      %s949 = sphi 0, %s948
      %s963 = sphi 0, %s949
      %s967 = sphi 0, %s967
      %s969 = sphi 0, %s967
      %s970 = sphi 0, %s969
      %s984 = sphi 0, %s970
      %s988 = sphi 0, %s988
      %s990 = sphi 0, %s988
      %s991 = sphi 0, %s990
      %s1005 = sphi 0, %s991
      %s1009 = sphi 0, %s1009
      %s1011 = sphi 0, %s1009
      %s1012 = sphi 0, %s1011
      %s1026 = sphi 0, %s1012
      %s1032 = sphi 0, %s1034
      %s1035 = sphi 0, %s1032
      %s1036 = sphi 0, %s1035
      %s1052 = sphi 0, %s1036
    $region4: #{forward.1} parent=1 // loop_header_branch
      %97 = sbr.rel (%p95) target = $region8
    $region5: #{forward.1} parent=1 // loop_body
      %s99 = ssub.s32 %s94, 1
      %s100 = ssub.s32 %s94, 2
      %s101 = sadd.s32 %s94, 1
      %s102 = ssub.s32 %s94, %s101
      %p103 = scmp.eq.s32.totalorder %s102, 0
      %s105 = sadd.s32 %s104, 1
      %s106 = scalar_select %p103, %s104, %s105
      %p109 = pneg %p103
      %p110 = scmp.eq.s32.totalorder %s94, 1
      %p111 = por %p109, %p110
      %p112 = scmp.ne.s32.totalorder %s104, %s107
      %p113 = scmp.eq.s32.totalorder %s94, 0
      %p114 = por %p112, %p113
      %p115 = scmp.ne.s32.totalorder %s104, %s107
      %p116 = scmp.eq.s32.totalorder %s99, 1
      %p117 = por %p115, %p116
      %p118 = scmp.ne.s32.totalorder %s107, %s108
      %p119 = scmp.eq.s32.totalorder %s99, 0
      %p120 = por %p118, %p119
      %p121 = scmp.ne.s32.totalorder %s107, %s108
      %p122 = scmp.eq.s32.totalorder %s100, 1
      %p123 = por %p121, %p122
      %p125 = scmp.ne.s32.totalorder %s108, %s124
      %p126 = scmp.eq.s32.totalorder %s100, 0
      %p127 = por %p125, %p126
      %s128 = ssub.s32 %s94, %s101
      %p129 = scmp.eq.s32.totalorder %s128, 0
      %s131 = sadd.s32 %s130, 1
      %s132 = scalar_select %p129, %s130, %s131
      %p135 = pneg %p129
      %p136 = scmp.eq.s32.totalorder %s94, 1
      %p137 = por %p135, %p136
      %p138 = scmp.ne.s32.totalorder %s130, %s133
      %p139 = scmp.eq.s32.totalorder %s94, 0
      %p140 = por %p138, %p139
      %p141 = scmp.ne.s32.totalorder %s130, %s133
      %p142 = scmp.eq.s32.totalorder %s99, 1
      %p143 = por %p141, %p142
      %p144 = scmp.ne.s32.totalorder %s133, %s134
      %p145 = scmp.eq.s32.totalorder %s99, 0
      %p146 = por %p144, %p145
      %p147 = scmp.ne.s32.totalorder %s133, %s134
      %p148 = scmp.eq.s32.totalorder %s100, 1
      %p149 = por %p147, %p148
      %p151 = scmp.ne.s32.totalorder %s134, %s150
      %p152 = scmp.eq.s32.totalorder %s100, 0
      %p153 = por %p151, %p152
      %s154 = ssub.s32 %s94, %s101
      %p155 = scmp.eq.s32.totalorder %s154, 0
      %s157 = sadd.s32 %s156, 1
      %s158 = scalar_select %p155, %s156, %s157
      %p161 = pneg %p155
      %p162 = scmp.eq.s32.totalorder %s94, 1
      %p163 = por %p161, %p162
      %p164 = scmp.ne.s32.totalorder %s156, %s159
      %p165 = scmp.eq.s32.totalorder %s94, 0
      %p166 = por %p164, %p165
      %p167 = scmp.ne.s32.totalorder %s156, %s159
      %p168 = scmp.eq.s32.totalorder %s99, 1
      %p169 = por %p167, %p168
      %p170 = scmp.ne.s32.totalorder %s159, %s160
      %p171 = scmp.eq.s32.totalorder %s99, 0
      %p172 = por %p170, %p171
      %p173 = scmp.ne.s32.totalorder %s159, %s160
      %p174 = scmp.eq.s32.totalorder %s100, 1
      %p175 = por %p173, %p174
      %p177 = scmp.ne.s32.totalorder %s160, %s176
      %p178 = scmp.eq.s32.totalorder %s100, 0
      %p179 = por %p177, %p178
      %s180 = ssub.s32 %s94, %s101
      %p181 = scmp.eq.s32.totalorder %s180, 0
      %s183 = sadd.s32 %s182, 1
      %s184 = scalar_select %p181, %s182, %s183
      %p187 = pneg %p181
      %p188 = scmp.eq.s32.totalorder %s94, 1
      %p189 = por %p187, %p188
      %p190 = scmp.ne.s32.totalorder %s182, %s185
      %p191 = scmp.eq.s32.totalorder %s94, 0
      %p192 = por %p190, %p191
      %p193 = scmp.ne.s32.totalorder %s182, %s185
      %p194 = scmp.eq.s32.totalorder %s99, 1
      %p195 = por %p193, %p194
      %p196 = scmp.ne.s32.totalorder %s185, %s186
      %p197 = scmp.eq.s32.totalorder %s99, 0
      %p198 = por %p196, %p197
      %p199 = scmp.ne.s32.totalorder %s185, %s186
      %p200 = scmp.eq.s32.totalorder %s100, 1
      %p201 = por %p199, %p200
      %p203 = scmp.ne.s32.totalorder %s186, %s202
      %p204 = scmp.eq.s32.totalorder %s100, 0
      %p205 = por %p203, %p204
      %s206 = ssub.s32 %s94, %s101
      %p207 = scmp.eq.s32.totalorder %s206, 0
      %s209 = sadd.s32 %s208, 1
      %s210 = scalar_select %p207, %s208, %s209
      %p213 = pneg %p207
      %p214 = scmp.eq.s32.totalorder %s94, 1
      %p215 = por %p213, %p214
      %p216 = scmp.ne.s32.totalorder %s208, %s211
      %p217 = scmp.eq.s32.totalorder %s94, 0
      %p218 = por %p216, %p217
      %p219 = scmp.ne.s32.totalorder %s208, %s211
      %p220 = scmp.eq.s32.totalorder %s99, 1
      %p221 = por %p219, %p220
      %p222 = scmp.ne.s32.totalorder %s211, %s212
      %p223 = scmp.eq.s32.totalorder %s99, 0
      %p224 = por %p222, %p223
      %p225 = scmp.ne.s32.totalorder %s211, %s212
      %p226 = scmp.eq.s32.totalorder %s100, 1
      %p227 = por %p225, %p226
      %p229 = scmp.ne.s32.totalorder %s212, %s228
      %p230 = scmp.eq.s32.totalorder %s100, 0
      %p231 = por %p229, %p230
      %s233 = sadd.s32 %s232, 1
      %p236 = scmp.eq.s32.totalorder %s94, 1
      %p237 = scmp.ne.s32.totalorder %s232, %s234
      %p238 = scmp.eq.s32.totalorder %s94, 0
      %p239 = por %p237, %p238
      %p240 = scmp.ne.s32.totalorder %s232, %s234
      %p241 = scmp.eq.s32.totalorder %s99, 1
      %p242 = por %p240, %p241
      %p243 = scmp.ne.s32.totalorder %s234, %s235
      %p244 = scmp.eq.s32.totalorder %s99, 0
      %p245 = por %p243, %p244
      %p246 = scmp.ne.s32.totalorder %s234, %s235
      %p247 = scmp.eq.s32.totalorder %s100, 1
      %p248 = por %p246, %p247
      %p250 = scmp.ne.s32.totalorder %s235, %s249
      %p251 = scmp.eq.s32.totalorder %s100, 0
      %p252 = por %p250, %p251
      %s254 = sadd.s32 %s253, 1
      %p257 = scmp.eq.s32.totalorder %s94, 1
      %p258 = scmp.ne.s32.totalorder %s253, %s255
      %p259 = scmp.eq.s32.totalorder %s94, 0
      %p260 = por %p258, %p259
      %p261 = scmp.ne.s32.totalorder %s253, %s255
      %p262 = scmp.eq.s32.totalorder %s99, 1
      %p263 = por %p261, %p262
      %p264 = scmp.ne.s32.totalorder %s255, %s256
      %p265 = scmp.eq.s32.totalorder %s99, 0
      %p266 = por %p264, %p265
      %p267 = scmp.ne.s32.totalorder %s255, %s256
      %p268 = scmp.eq.s32.totalorder %s100, 1
      %p269 = por %p267, %p268
      %p271 = scmp.ne.s32.totalorder %s256, %s270
      %p272 = scmp.eq.s32.totalorder %s100, 0
      %p273 = por %p271, %p272
      %s275 = sadd.s32 %s274, 1
      %p278 = scmp.eq.s32.totalorder %s94, 1
      %p279 = scmp.ne.s32.totalorder %s274, %s276
      %p280 = scmp.eq.s32.totalorder %s94, 0
      %p281 = por %p279, %p280
      %p282 = scmp.ne.s32.totalorder %s274, %s276
      %p283 = scmp.eq.s32.totalorder %s99, 1
      %p284 = por %p282, %p283
      %p285 = scmp.ne.s32.totalorder %s276, %s277
      %p286 = scmp.eq.s32.totalorder %s99, 0
      %p287 = por %p285, %p286
      %p288 = scmp.ne.s32.totalorder %s276, %s277
      %p289 = scmp.eq.s32.totalorder %s100, 1
      %p290 = por %p288, %p289
      %p292 = scmp.ne.s32.totalorder %s277, %s291
      %p293 = scmp.eq.s32.totalorder %s100, 0
      %p294 = por %p292, %p293
      %s296 = sadd.s32 %s295, 1
      %p299 = scmp.eq.s32.totalorder %s94, 1
      %p300 = scmp.ne.s32.totalorder %s295, %s297
      %p301 = scmp.eq.s32.totalorder %s94, 0
      %p302 = por %p300, %p301
      %p303 = scmp.ne.s32.totalorder %s295, %s297
      %p304 = scmp.eq.s32.totalorder %s99, 1
      %p305 = por %p303, %p304
      %p306 = scmp.ne.s32.totalorder %s297, %s298
      %p307 = scmp.eq.s32.totalorder %s99, 0
      %p308 = por %p306, %p307
      %p309 = scmp.ne.s32.totalorder %s297, %s298
      %p310 = scmp.eq.s32.totalorder %s100, 1
      %p311 = por %p309, %p310
      %p313 = scmp.ne.s32.totalorder %s298, %s312
      %p314 = scmp.eq.s32.totalorder %s100, 0
      %p315 = por %p313, %p314
      %s317 = sadd.s32 %s316, 1
      %p320 = scmp.eq.s32.totalorder %s94, 1
      %p321 = scmp.ne.s32.totalorder %s316, %s318
      %p322 = scmp.eq.s32.totalorder %s94, 0
      %p323 = por %p321, %p322
      %p324 = scmp.ne.s32.totalorder %s316, %s318
      %p325 = scmp.eq.s32.totalorder %s99, 1
      %p326 = por %p324, %p325
      %p327 = scmp.ne.s32.totalorder %s318, %s319
      %p328 = scmp.eq.s32.totalorder %s99, 0
      %p329 = por %p327, %p328
      %p330 = scmp.ne.s32.totalorder %s318, %s319
      %p331 = scmp.eq.s32.totalorder %s100, 1
      %p332 = por %p330, %p331
      %p334 = scmp.ne.s32.totalorder %s319, %s333
      %p335 = scmp.eq.s32.totalorder %s100, 0
      %p336 = por %p334, %p335
      %s338 = sadd.s32 %s337, 1
      %p341 = scmp.eq.s32.totalorder %s94, 1
      %p342 = scmp.ne.s32.totalorder %s337, %s339
      %p343 = scmp.eq.s32.totalorder %s94, 0
      %p344 = por %p342, %p343
      %p345 = scmp.ne.s32.totalorder %s337, %s339
      %p346 = scmp.eq.s32.totalorder %s99, 1
      %p347 = por %p345, %p346
      %p348 = scmp.ne.s32.totalorder %s339, %s340
      %p349 = scmp.eq.s32.totalorder %s99, 0
      %p350 = por %p348, %p349
      %p351 = scmp.ne.s32.totalorder %s339, %s340
      %p352 = scmp.eq.s32.totalorder %s100, 1
      %p353 = por %p351, %p352
      %p355 = scmp.ne.s32.totalorder %s340, %s354
      %p356 = scmp.eq.s32.totalorder %s100, 0
      %p357 = por %p355, %p356
      %s359 = sadd.s32 %s358, 1
      %p362 = scmp.eq.s32.totalorder %s94, 1
      %p363 = scmp.ne.s32.totalorder %s358, %s360
      %p364 = scmp.eq.s32.totalorder %s94, 0
      %p365 = por %p363, %p364
      %p366 = scmp.ne.s32.totalorder %s358, %s360
      %p367 = scmp.eq.s32.totalorder %s99, 1
      %p368 = por %p366, %p367
      %p369 = scmp.ne.s32.totalorder %s360, %s361
      %p370 = scmp.eq.s32.totalorder %s99, 0
      %p371 = por %p369, %p370
      %p372 = scmp.ne.s32.totalorder %s360, %s361
      %p373 = scmp.eq.s32.totalorder %s100, 1
      %p374 = por %p372, %p373
      %p376 = scmp.ne.s32.totalorder %s361, %s375
      %p377 = scmp.eq.s32.totalorder %s100, 0
      %p378 = por %p376, %p377
      %s380 = sadd.s32 %s379, 1
      %p383 = scmp.eq.s32.totalorder %s94, 1
      %p384 = scmp.ne.s32.totalorder %s379, %s381
      %p385 = scmp.eq.s32.totalorder %s94, 0
      %p386 = por %p384, %p385
      %p387 = scmp.ne.s32.totalorder %s379, %s381
      %p388 = scmp.eq.s32.totalorder %s99, 1
      %p389 = por %p387, %p388
      %p390 = scmp.ne.s32.totalorder %s381, %s382
      %p391 = scmp.eq.s32.totalorder %s99, 0
      %p392 = por %p390, %p391
      %p393 = scmp.ne.s32.totalorder %s381, %s382
      %p394 = scmp.eq.s32.totalorder %s100, 1
      %p395 = por %p393, %p394
      %p397 = scmp.ne.s32.totalorder %s382, %s396
      %p398 = scmp.eq.s32.totalorder %s100, 0
      %p399 = por %p397, %p398
      %s401 = sadd.s32 %s400, 1
      %p404 = scmp.eq.s32.totalorder %s94, 1
      %p405 = scmp.ne.s32.totalorder %s400, %s402
      %p406 = scmp.eq.s32.totalorder %s94, 0
      %p407 = por %p405, %p406
      %p408 = scmp.ne.s32.totalorder %s400, %s402
      %p409 = scmp.eq.s32.totalorder %s99, 1
      %p410 = por %p408, %p409
      %p411 = scmp.ne.s32.totalorder %s402, %s403
      %p412 = scmp.eq.s32.totalorder %s99, 0
      %p413 = por %p411, %p412
      %p414 = scmp.ne.s32.totalorder %s402, %s403
      %p415 = scmp.eq.s32.totalorder %s100, 1
      %p416 = por %p414, %p415
      %p418 = scmp.ne.s32.totalorder %s403, %s417
      %p419 = scmp.eq.s32.totalorder %s100, 0
      %p420 = por %p418, %p419
      %s422 = sadd.s32 %s421, 1
      %p425 = scmp.eq.s32.totalorder %s94, 1
      %p426 = scmp.ne.s32.totalorder %s421, %s423
      %p427 = scmp.eq.s32.totalorder %s94, 0
      %p428 = por %p426, %p427
      %p429 = scmp.ne.s32.totalorder %s421, %s423
      %p430 = scmp.eq.s32.totalorder %s99, 1
      %p431 = por %p429, %p430
      %p432 = scmp.ne.s32.totalorder %s423, %s424
      %p433 = scmp.eq.s32.totalorder %s99, 0
      %p434 = por %p432, %p433
      %p435 = scmp.ne.s32.totalorder %s423, %s424
      %p436 = scmp.eq.s32.totalorder %s100, 1
      %p437 = por %p435, %p436
      %p439 = scmp.ne.s32.totalorder %s424, %s438
      %p440 = scmp.eq.s32.totalorder %s100, 0
      %p441 = por %p439, %p440
      %s443 = sadd.s32 %s442, 1
      %p446 = scmp.eq.s32.totalorder %s94, 1
      %p447 = scmp.ne.s32.totalorder %s442, %s444
      %p448 = scmp.eq.s32.totalorder %s94, 0
      %p449 = por %p447, %p448
      %p450 = scmp.ne.s32.totalorder %s442, %s444
      %p451 = scmp.eq.s32.totalorder %s99, 1
      %p452 = por %p450, %p451
      %p453 = scmp.ne.s32.totalorder %s444, %s445
      %p454 = scmp.eq.s32.totalorder %s99, 0
      %p455 = por %p453, %p454
      %p456 = scmp.ne.s32.totalorder %s444, %s445
      %p457 = scmp.eq.s32.totalorder %s100, 1
      %p458 = por %p456, %p457
      %p460 = scmp.ne.s32.totalorder %s445, %s459
      %p461 = scmp.eq.s32.totalorder %s100, 0
      %p462 = por %p460, %p461
      %s464 = sadd.s32 %s463, 1
      %p467 = scmp.eq.s32.totalorder %s94, 1
      %p468 = scmp.ne.s32.totalorder %s463, %s465
      %p469 = scmp.eq.s32.totalorder %s94, 0
      %p470 = por %p468, %p469
      %p471 = scmp.ne.s32.totalorder %s463, %s465
      %p472 = scmp.eq.s32.totalorder %s99, 1
      %p473 = por %p471, %p472
      %p474 = scmp.ne.s32.totalorder %s465, %s466
      %p475 = scmp.eq.s32.totalorder %s99, 0
      %p476 = por %p474, %p475
      %p477 = scmp.ne.s32.totalorder %s465, %s466
      %p478 = scmp.eq.s32.totalorder %s100, 1
      %p479 = por %p477, %p478
      %p481 = scmp.ne.s32.totalorder %s466, %s480
      %p482 = scmp.eq.s32.totalorder %s100, 0
      %p483 = por %p481, %p482
      %s485 = sadd.s32 %s484, 1
      %p488 = scmp.eq.s32.totalorder %s94, 1
      %p489 = scmp.ne.s32.totalorder %s484, %s486
      %p490 = scmp.eq.s32.totalorder %s94, 0
      %p491 = por %p489, %p490
      %p492 = scmp.ne.s32.totalorder %s484, %s486
      %p493 = scmp.eq.s32.totalorder %s99, 1
      %p494 = por %p492, %p493
      %p495 = scmp.ne.s32.totalorder %s486, %s487
      %p496 = scmp.eq.s32.totalorder %s99, 0
      %p497 = por %p495, %p496
      %p498 = scmp.ne.s32.totalorder %s486, %s487
      %p499 = scmp.eq.s32.totalorder %s100, 1
      %p500 = por %p498, %p499
      %p502 = scmp.ne.s32.totalorder %s487, %s501
      %p503 = scmp.eq.s32.totalorder %s100, 0
      %p504 = por %p502, %p503
      %s506 = sadd.s32 %s505, 1
      %p509 = scmp.eq.s32.totalorder %s94, 1
      %p510 = scmp.ne.s32.totalorder %s505, %s507
      %p511 = scmp.eq.s32.totalorder %s94, 0
      %p512 = por %p510, %p511
      %p513 = scmp.ne.s32.totalorder %s505, %s507
      %p514 = scmp.eq.s32.totalorder %s99, 1
      %p515 = por %p513, %p514
      %p516 = scmp.ne.s32.totalorder %s507, %s508
      %p517 = scmp.eq.s32.totalorder %s99, 0
      %p518 = por %p516, %p517
      %p519 = scmp.ne.s32.totalorder %s507, %s508
      %p520 = scmp.eq.s32.totalorder %s100, 1
      %p521 = por %p519, %p520
      %p523 = scmp.ne.s32.totalorder %s508, %s522
      %p524 = scmp.eq.s32.totalorder %s100, 0
      %p525 = por %p523, %p524
      %s527 = sadd.s32 %s526, 1
      %p530 = scmp.eq.s32.totalorder %s94, 1
      %p531 = scmp.ne.s32.totalorder %s526, %s528
      %p532 = scmp.eq.s32.totalorder %s94, 0
      %p533 = por %p531, %p532
      %p534 = scmp.ne.s32.totalorder %s526, %s528
      %p535 = scmp.eq.s32.totalorder %s99, 1
      %p536 = por %p534, %p535
      %p537 = scmp.ne.s32.totalorder %s528, %s529
      %p538 = scmp.eq.s32.totalorder %s99, 0
      %p539 = por %p537, %p538
      %p540 = scmp.ne.s32.totalorder %s528, %s529
      %p541 = scmp.eq.s32.totalorder %s100, 1
      %p542 = por %p540, %p541
      %p544 = scmp.ne.s32.totalorder %s529, %s543
      %p545 = scmp.eq.s32.totalorder %s100, 0
      %p546 = por %p544, %p545
      %s548 = sadd.s32 %s547, 1
      %p551 = scmp.eq.s32.totalorder %s94, 1
      %p552 = scmp.ne.s32.totalorder %s547, %s549
      %p553 = scmp.eq.s32.totalorder %s94, 0
      %p554 = por %p552, %p553
      %p555 = scmp.ne.s32.totalorder %s547, %s549
      %p556 = scmp.eq.s32.totalorder %s99, 1
      %p557 = por %p555, %p556
      %p558 = scmp.ne.s32.totalorder %s549, %s550
      %p559 = scmp.eq.s32.totalorder %s99, 0
      %p560 = por %p558, %p559
      %p561 = scmp.ne.s32.totalorder %s549, %s550
      %p562 = scmp.eq.s32.totalorder %s100, 1
      %p563 = por %p561, %p562
      %p565 = scmp.ne.s32.totalorder %s550, %s564
      %p566 = scmp.eq.s32.totalorder %s100, 0
      %p567 = por %p565, %p566
      %s569 = sadd.s32 %s568, 1
      %p572 = scmp.eq.s32.totalorder %s94, 1
      %p573 = scmp.ne.s32.totalorder %s568, %s570
      %p574 = scmp.eq.s32.totalorder %s94, 0
      %p575 = por %p573, %p574
      %p576 = scmp.ne.s32.totalorder %s568, %s570
      %p577 = scmp.eq.s32.totalorder %s99, 1
      %p578 = por %p576, %p577
      %p579 = scmp.ne.s32.totalorder %s570, %s571
      %p580 = scmp.eq.s32.totalorder %s99, 0
      %p581 = por %p579, %p580
      %p582 = scmp.ne.s32.totalorder %s570, %s571
      %p583 = scmp.eq.s32.totalorder %s100, 1
      %p584 = por %p582, %p583
      %p586 = scmp.ne.s32.totalorder %s571, %s585
      %p587 = scmp.eq.s32.totalorder %s100, 0
      %p588 = por %p586, %p587
      %s590 = sadd.s32 %s589, 1
      %p593 = scmp.eq.s32.totalorder %s94, 1
      %p594 = scmp.ne.s32.totalorder %s589, %s591
      %p595 = scmp.eq.s32.totalorder %s94, 0
      %p596 = por %p594, %p595
      %p597 = scmp.ne.s32.totalorder %s589, %s591
      %p598 = scmp.eq.s32.totalorder %s99, 1
      %p599 = por %p597, %p598
      %p600 = scmp.ne.s32.totalorder %s591, %s592
      %p601 = scmp.eq.s32.totalorder %s99, 0
      %p602 = por %p600, %p601
      %p603 = scmp.ne.s32.totalorder %s591, %s592
      %p604 = scmp.eq.s32.totalorder %s100, 1
      %p605 = por %p603, %p604
      %p607 = scmp.ne.s32.totalorder %s592, %s606
      %p608 = scmp.eq.s32.totalorder %s100, 0
      %p609 = por %p607, %p608
      %s611 = sadd.s32 %s610, 1
      %p614 = scmp.eq.s32.totalorder %s94, 1
      %p615 = scmp.ne.s32.totalorder %s610, %s612
      %p616 = scmp.eq.s32.totalorder %s94, 0
      %p617 = por %p615, %p616
      %p618 = scmp.ne.s32.totalorder %s610, %s612
      %p619 = scmp.eq.s32.totalorder %s99, 1
      %p620 = por %p618, %p619
      %p621 = scmp.ne.s32.totalorder %s612, %s613
      %p622 = scmp.eq.s32.totalorder %s99, 0
      %p623 = por %p621, %p622
      %p624 = scmp.ne.s32.totalorder %s612, %s613
      %p625 = scmp.eq.s32.totalorder %s100, 1
      %p626 = por %p624, %p625
      %p628 = scmp.ne.s32.totalorder %s613, %s627
      %p629 = scmp.eq.s32.totalorder %s100, 0
      %p630 = por %p628, %p629
      %s632 = sadd.s32 %s631, 1
      %p635 = scmp.eq.s32.totalorder %s94, 1
      %p636 = scmp.ne.s32.totalorder %s631, %s633
      %p637 = scmp.eq.s32.totalorder %s94, 0
      %p638 = por %p636, %p637
      %p639 = scmp.ne.s32.totalorder %s631, %s633
      %p640 = scmp.eq.s32.totalorder %s99, 1
      %p641 = por %p639, %p640
      %p642 = scmp.ne.s32.totalorder %s633, %s634
      %p643 = scmp.eq.s32.totalorder %s99, 0
      %p644 = por %p642, %p643
      %p645 = scmp.ne.s32.totalorder %s633, %s634
      %p646 = scmp.eq.s32.totalorder %s100, 1
      %p647 = por %p645, %p646
      %p649 = scmp.ne.s32.totalorder %s634, %s648
      %p650 = scmp.eq.s32.totalorder %s100, 0
      %p651 = por %p649, %p650
      %s653 = sadd.s32 %s652, 1
      %p656 = scmp.eq.s32.totalorder %s94, 1
      %p657 = scmp.ne.s32.totalorder %s652, %s654
      %p658 = scmp.eq.s32.totalorder %s94, 0
      %p659 = por %p657, %p658
      %p660 = scmp.ne.s32.totalorder %s652, %s654
      %p661 = scmp.eq.s32.totalorder %s99, 1
      %p662 = por %p660, %p661
      %p663 = scmp.ne.s32.totalorder %s654, %s655
      %p664 = scmp.eq.s32.totalorder %s99, 0
      %p665 = por %p663, %p664
      %p666 = scmp.ne.s32.totalorder %s654, %s655
      %p667 = scmp.eq.s32.totalorder %s100, 1
      %p668 = por %p666, %p667
      %p670 = scmp.ne.s32.totalorder %s655, %s669
      %p671 = scmp.eq.s32.totalorder %s100, 0
      %p672 = por %p670, %p671
      %s674 = sadd.s32 %s673, 1
      %p677 = scmp.eq.s32.totalorder %s94, 1
      %p678 = scmp.ne.s32.totalorder %s673, %s675
      %p679 = scmp.eq.s32.totalorder %s94, 0
      %p680 = por %p678, %p679
      %p681 = scmp.ne.s32.totalorder %s673, %s675
      %p682 = scmp.eq.s32.totalorder %s99, 1
      %p683 = por %p681, %p682
      %p684 = scmp.ne.s32.totalorder %s675, %s676
      %p685 = scmp.eq.s32.totalorder %s99, 0
      %p686 = por %p684, %p685
      %p687 = scmp.ne.s32.totalorder %s675, %s676
      %p688 = scmp.eq.s32.totalorder %s100, 1
      %p689 = por %p687, %p688
      %p691 = scmp.ne.s32.totalorder %s676, %s690
      %p692 = scmp.eq.s32.totalorder %s100, 0
      %p693 = por %p691, %p692
      %s695 = sadd.s32 %s694, 1
      %p698 = scmp.eq.s32.totalorder %s94, 1
      %p699 = scmp.ne.s32.totalorder %s694, %s696
      %p700 = scmp.eq.s32.totalorder %s94, 0
      %p701 = por %p699, %p700
      %p702 = scmp.ne.s32.totalorder %s694, %s696
      %p703 = scmp.eq.s32.totalorder %s99, 1
      %p704 = por %p702, %p703
      %p705 = scmp.ne.s32.totalorder %s696, %s697
      %p706 = scmp.eq.s32.totalorder %s99, 0
      %p707 = por %p705, %p706
      %p708 = scmp.ne.s32.totalorder %s696, %s697
      %p709 = scmp.eq.s32.totalorder %s100, 1
      %p710 = por %p708, %p709
      %p712 = scmp.ne.s32.totalorder %s697, %s711
      %p713 = scmp.eq.s32.totalorder %s100, 0
      %p714 = por %p712, %p713
      %s716 = sadd.s32 %s715, 1
      %p719 = scmp.eq.s32.totalorder %s94, 1
      %p720 = scmp.ne.s32.totalorder %s715, %s717
      %p721 = scmp.eq.s32.totalorder %s94, 0
      %p722 = por %p720, %p721
      %p723 = scmp.ne.s32.totalorder %s715, %s717
      %p724 = scmp.eq.s32.totalorder %s99, 1
      %p725 = por %p723, %p724
      %p726 = scmp.ne.s32.totalorder %s717, %s718
      %p727 = scmp.eq.s32.totalorder %s99, 0
      %p728 = por %p726, %p727
      %p729 = scmp.ne.s32.totalorder %s717, %s718
      %p730 = scmp.eq.s32.totalorder %s100, 1
      %p731 = por %p729, %p730
      %p733 = scmp.ne.s32.totalorder %s718, %s732
      %p734 = scmp.eq.s32.totalorder %s100, 0
      %p735 = por %p733, %p734
      %s737 = sadd.s32 %s736, 1
      %p740 = scmp.eq.s32.totalorder %s94, 1
      %p741 = scmp.ne.s32.totalorder %s736, %s738
      %p742 = scmp.eq.s32.totalorder %s94, 0
      %p743 = por %p741, %p742
      %p744 = scmp.ne.s32.totalorder %s736, %s738
      %p745 = scmp.eq.s32.totalorder %s99, 1
      %p746 = por %p744, %p745
      %p747 = scmp.ne.s32.totalorder %s738, %s739
      %p748 = scmp.eq.s32.totalorder %s99, 0
      %p749 = por %p747, %p748
      %p750 = scmp.ne.s32.totalorder %s738, %s739
      %p751 = scmp.eq.s32.totalorder %s100, 1
      %p752 = por %p750, %p751
      %p754 = scmp.ne.s32.totalorder %s739, %s753
      %p755 = scmp.eq.s32.totalorder %s100, 0
      %p756 = por %p754, %p755
      %s758 = sadd.s32 %s757, 1
      %p761 = scmp.eq.s32.totalorder %s94, 1
      %p762 = scmp.ne.s32.totalorder %s757, %s759
      %p763 = scmp.eq.s32.totalorder %s94, 0
      %p764 = por %p762, %p763
      %p765 = scmp.ne.s32.totalorder %s757, %s759
      %p766 = scmp.eq.s32.totalorder %s99, 1
      %p767 = por %p765, %p766
      %p768 = scmp.ne.s32.totalorder %s759, %s760
      %p769 = scmp.eq.s32.totalorder %s99, 0
      %p770 = por %p768, %p769
      %p771 = scmp.ne.s32.totalorder %s759, %s760
      %p772 = scmp.eq.s32.totalorder %s100, 1
      %p773 = por %p771, %p772
      %p775 = scmp.ne.s32.totalorder %s760, %s774
      %p776 = scmp.eq.s32.totalorder %s100, 0
      %p777 = por %p775, %p776
      %s779 = sadd.s32 %s778, 1
      %p782 = scmp.eq.s32.totalorder %s94, 1
      %p783 = scmp.ne.s32.totalorder %s778, %s780
      %p784 = scmp.eq.s32.totalorder %s94, 0
      %p785 = por %p783, %p784
      %p786 = scmp.ne.s32.totalorder %s778, %s780
      %p787 = scmp.eq.s32.totalorder %s99, 1
      %p788 = por %p786, %p787
      %p789 = scmp.ne.s32.totalorder %s780, %s781
      %p790 = scmp.eq.s32.totalorder %s99, 0
      %p791 = por %p789, %p790
      %p792 = scmp.ne.s32.totalorder %s780, %s781
      %p793 = scmp.eq.s32.totalorder %s100, 1
      %p794 = por %p792, %p793
      %p796 = scmp.ne.s32.totalorder %s781, %s795
      %p797 = scmp.eq.s32.totalorder %s100, 0
      %p798 = por %p796, %p797
      %s800 = sadd.s32 %s799, 1
      %p803 = scmp.eq.s32.totalorder %s94, 1
      %p804 = scmp.ne.s32.totalorder %s799, %s801
      %p805 = scmp.eq.s32.totalorder %s94, 0
      %p806 = por %p804, %p805
      %p807 = scmp.ne.s32.totalorder %s799, %s801
      %p808 = scmp.eq.s32.totalorder %s99, 1
      %p809 = por %p807, %p808
      %p810 = scmp.ne.s32.totalorder %s801, %s802
      %p811 = scmp.eq.s32.totalorder %s99, 0
      %p812 = por %p810, %p811
      %p813 = scmp.ne.s32.totalorder %s801, %s802
      %p814 = scmp.eq.s32.totalorder %s100, 1
      %p815 = por %p813, %p814
      %p817 = scmp.ne.s32.totalorder %s802, %s816
      %p818 = scmp.eq.s32.totalorder %s100, 0
      %p819 = por %p817, %p818
      %s821 = sadd.s32 %s820, 1
      %p824 = scmp.eq.s32.totalorder %s94, 1
      %p825 = scmp.ne.s32.totalorder %s820, %s822
      %p826 = scmp.eq.s32.totalorder %s94, 0
      %p827 = por %p825, %p826
      %p828 = scmp.ne.s32.totalorder %s820, %s822
      %p829 = scmp.eq.s32.totalorder %s99, 1
      %p830 = por %p828, %p829
      %p831 = scmp.ne.s32.totalorder %s822, %s823
      %p832 = scmp.eq.s32.totalorder %s99, 0
      %p833 = por %p831, %p832
      %p834 = scmp.ne.s32.totalorder %s822, %s823
      %p835 = scmp.eq.s32.totalorder %s100, 1
      %p836 = por %p834, %p835
      %p838 = scmp.ne.s32.totalorder %s823, %s837
      %p839 = scmp.eq.s32.totalorder %s100, 0
      %p840 = por %p838, %p839
      %s842 = sadd.s32 %s841, 1
      %p845 = scmp.eq.s32.totalorder %s94, 1
      %p846 = scmp.ne.s32.totalorder %s841, %s843
      %p847 = scmp.eq.s32.totalorder %s94, 0
      %p848 = por %p846, %p847
      %p849 = scmp.ne.s32.totalorder %s841, %s843
      %p850 = scmp.eq.s32.totalorder %s99, 1
      %p851 = por %p849, %p850
      %p852 = scmp.ne.s32.totalorder %s843, %s844
      %p853 = scmp.eq.s32.totalorder %s99, 0
      %p854 = por %p852, %p853
      %p855 = scmp.ne.s32.totalorder %s843, %s844
      %p856 = scmp.eq.s32.totalorder %s100, 1
      %p857 = por %p855, %p856
      %p859 = scmp.ne.s32.totalorder %s844, %s858
      %p860 = scmp.eq.s32.totalorder %s100, 0
      %p861 = por %p859, %p860
      %s863 = sadd.s32 %s862, 1
      %p866 = scmp.eq.s32.totalorder %s94, 1
      %p867 = scmp.ne.s32.totalorder %s862, %s864
      %p868 = scmp.eq.s32.totalorder %s94, 0
      %p869 = por %p867, %p868
      %p870 = scmp.ne.s32.totalorder %s862, %s864
      %p871 = scmp.eq.s32.totalorder %s99, 1
      %p872 = por %p870, %p871
      %p873 = scmp.ne.s32.totalorder %s864, %s865
      %p874 = scmp.eq.s32.totalorder %s99, 0
      %p875 = por %p873, %p874
      %p876 = scmp.ne.s32.totalorder %s864, %s865
      %p877 = scmp.eq.s32.totalorder %s100, 1
      %p878 = por %p876, %p877
      %p880 = scmp.ne.s32.totalorder %s865, %s879
      %p881 = scmp.eq.s32.totalorder %s100, 0
      %p882 = por %p880, %p881
      %s884 = sadd.s32 %s883, 1
      %p887 = scmp.eq.s32.totalorder %s94, 1
      %p888 = scmp.ne.s32.totalorder %s883, %s885
      %p889 = scmp.eq.s32.totalorder %s94, 0
      %p890 = por %p888, %p889
      %p891 = scmp.ne.s32.totalorder %s883, %s885
      %p892 = scmp.eq.s32.totalorder %s99, 1
      %p893 = por %p891, %p892
      %p894 = scmp.ne.s32.totalorder %s885, %s886
      %p895 = scmp.eq.s32.totalorder %s99, 0
      %p896 = por %p894, %p895
      %p897 = scmp.ne.s32.totalorder %s885, %s886
      %p898 = scmp.eq.s32.totalorder %s100, 1
      %p899 = por %p897, %p898
      %p901 = scmp.ne.s32.totalorder %s886, %s900
      %p902 = scmp.eq.s32.totalorder %s100, 0
      %p903 = por %p901, %p902
      %s905 = sadd.s32 %s904, 1
      %p908 = scmp.eq.s32.totalorder %s94, 1
      %p909 = scmp.ne.s32.totalorder %s904, %s906
      %p910 = scmp.eq.s32.totalorder %s94, 0
      %p911 = por %p909, %p910
      %p912 = scmp.ne.s32.totalorder %s904, %s906
      %p913 = scmp.eq.s32.totalorder %s99, 1
      %p914 = por %p912, %p913
      %p915 = scmp.ne.s32.totalorder %s906, %s907
      %p916 = scmp.eq.s32.totalorder %s99, 0
      %p917 = por %p915, %p916
      %p918 = scmp.ne.s32.totalorder %s906, %s907
      %p919 = scmp.eq.s32.totalorder %s100, 1
      %p920 = por %p918, %p919
      %p922 = scmp.ne.s32.totalorder %s907, %s921
      %p923 = scmp.eq.s32.totalorder %s100, 0
      %p924 = por %p922, %p923
      %s926 = sadd.s32 %s925, 1
      %p929 = scmp.eq.s32.totalorder %s94, 1
      %p930 = scmp.ne.s32.totalorder %s925, %s927
      %p931 = scmp.eq.s32.totalorder %s94, 0
      %p932 = por %p930, %p931
      %p933 = scmp.ne.s32.totalorder %s925, %s927
      %p934 = scmp.eq.s32.totalorder %s99, 1
      %p935 = por %p933, %p934
      %p936 = scmp.ne.s32.totalorder %s927, %s928
      %p937 = scmp.eq.s32.totalorder %s99, 0
      %p938 = por %p936, %p937
      %p939 = scmp.ne.s32.totalorder %s927, %s928
      %p940 = scmp.eq.s32.totalorder %s100, 1
      %p941 = por %p939, %p940
      %p943 = scmp.ne.s32.totalorder %s928, %s942
      %p944 = scmp.eq.s32.totalorder %s100, 0
      %p945 = por %p943, %p944
      %s947 = sadd.s32 %s946, 1
      %p950 = scmp.eq.s32.totalorder %s94, 1
      %p951 = scmp.ne.s32.totalorder %s946, %s948
      %p952 = scmp.eq.s32.totalorder %s94, 0
      %p953 = por %p951, %p952
      %p954 = scmp.ne.s32.totalorder %s946, %s948
      %p955 = scmp.eq.s32.totalorder %s99, 1
      %p956 = por %p954, %p955
      %p957 = scmp.ne.s32.totalorder %s948, %s949
      %p958 = scmp.eq.s32.totalorder %s99, 0
      %p959 = por %p957, %p958
      %p960 = scmp.ne.s32.totalorder %s948, %s949
      %p961 = scmp.eq.s32.totalorder %s100, 1
      %p962 = por %p960, %p961
      %p964 = scmp.ne.s32.totalorder %s949, %s963
      %p965 = scmp.eq.s32.totalorder %s100, 0
      %p966 = por %p964, %p965
      %s968 = sadd.s32 %s967, 1
      %p971 = scmp.eq.s32.totalorder %s94, 1
      %p972 = scmp.ne.s32.totalorder %s967, %s969
      %p973 = scmp.eq.s32.totalorder %s94, 0
      %p974 = por %p972, %p973
      %p975 = scmp.ne.s32.totalorder %s967, %s969
      %p976 = scmp.eq.s32.totalorder %s99, 1
      %p977 = por %p975, %p976
      %p978 = scmp.ne.s32.totalorder %s969, %s970
      %p979 = scmp.eq.s32.totalorder %s99, 0
      %p980 = por %p978, %p979
      %p981 = scmp.ne.s32.totalorder %s969, %s970
      %p982 = scmp.eq.s32.totalorder %s100, 1
      %p983 = por %p981, %p982
      %p985 = scmp.ne.s32.totalorder %s970, %s984
      %p986 = scmp.eq.s32.totalorder %s100, 0
      %p987 = por %p985, %p986
      %s989 = sadd.s32 %s988, 1
      %p992 = scmp.eq.s32.totalorder %s94, 1
      %p993 = scmp.ne.s32.totalorder %s988, %s990
      %p994 = scmp.eq.s32.totalorder %s94, 0
      %p995 = por %p993, %p994
      %p996 = scmp.ne.s32.totalorder %s988, %s990
      %p997 = scmp.eq.s32.totalorder %s99, 1
      %p998 = por %p996, %p997
      %p999 = scmp.ne.s32.totalorder %s990, %s991
      %p1000 = scmp.eq.s32.totalorder %s99, 0
      %p1001 = por %p999, %p1000
      %p1002 = scmp.ne.s32.totalorder %s990, %s991
      %p1003 = scmp.eq.s32.totalorder %s100, 1
      %p1004 = por %p1002, %p1003
      %p1006 = scmp.ne.s32.totalorder %s991, %s1005
      %p1007 = scmp.eq.s32.totalorder %s100, 0
      %p1008 = por %p1006, %p1007
      %s1010 = sadd.s32 %s1009, 1
      %p1013 = scmp.eq.s32.totalorder %s94, 1
      %p1014 = scmp.ne.s32.totalorder %s1009, %s1011
      %p1015 = scmp.eq.s32.totalorder %s94, 0
      %p1016 = por %p1014, %p1015
      %p1017 = scmp.ne.s32.totalorder %s1009, %s1011
      %p1018 = scmp.eq.s32.totalorder %s99, 1
      %p1019 = por %p1017, %p1018
      %p1020 = scmp.ne.s32.totalorder %s1011, %s1012
      %p1021 = scmp.eq.s32.totalorder %s99, 0
      %p1022 = por %p1020, %p1021
      %p1023 = scmp.ne.s32.totalorder %s1011, %s1012
      %p1024 = scmp.eq.s32.totalorder %s100, 1
      %p1025 = por %p1023, %p1024
      %p1027 = scmp.ne.s32.totalorder %s1012, %s1026
      %p1028 = scmp.eq.s32.totalorder %s100, 0
      %p1029 = por %p1027, %p1028
      %s1030 = ssub.s32 %s94, %s101
      %p1031 = scmp.eq.s32.totalorder %s1030, 0
      %s1033 = sadd.s32 %s1032, 1
      %s1034 = scalar_select %p1031, %s1032, %s1033
      %p1037 = pneg %p1031
      %p1038 = scmp.eq.s32.totalorder %s94, 1
      %p1039 = por %p1037, %p1038
      %p1040 = scmp.ne.s32.totalorder %s1032, %s1035
      %p1041 = scmp.eq.s32.totalorder %s94, 0
      %p1042 = por %p1040, %p1041
      %p1043 = scmp.ne.s32.totalorder %s1032, %s1035
      %p1044 = scmp.eq.s32.totalorder %s99, 1
      %p1045 = por %p1043, %p1044
      %p1046 = scmp.ne.s32.totalorder %s1035, %s1036
      %p1047 = scmp.eq.s32.totalorder %s99, 0
      %p1048 = por %p1046, %p1047
      %p1049 = scmp.ne.s32.totalorder %s1035, %s1036
      %p1050 = scmp.eq.s32.totalorder %s100, 1
      %p1051 = por %p1049, %p1050
      %p1053 = scmp.ne.s32.totalorder %s1036, %s1052
      %p1054 = scmp.eq.s32.totalorder %s100, 0
      %p1055 = por %p1053, %p1054
      %p1056 = scmp.le.s32.totalorder 1, %s94
      %p1057 = scmp.lt.s32.totalorder %s94, 3
      %p1058 = pnand %p1056, %p1057
      %p1059 = pneg %p1058
      // Predicated region
      $region9: #{forward.1} parent=5 // pred_check
        _
      $region10: #{forward.1} parent=5 // pred_check_branch
        %1061 = sbr.rel (%p1058) target = $region12
      $region11: #{forward.1} parent=5 // pred_region
        %s1062 = ssub.s32 %s94, 1
        // Predicated region
        $region13: #{forward.1} parent=11 // pred_check
          %p1063 = pneg %p245
        $region14: #{forward.1} parent=11 // pred_check_branch
          %1065 = sbr.rel (%p1063) target = $region16
        $region15: #{forward.1} parent=11 // pred_region
          %s1067 = ssub.s32 16, 16
          %1068 = vsyncadd [#allocation3], %s1067
          %s1070 = sshll.u32 %s11, 4
          %s1071 = int_to_ptr.vmem [resolvable:$true] %s1070
          %1073 = dma.vmem_to_smem %s1071, 16, [#allocation2], [#allocation3]
        $region16: #{forward.1} parent=11 // pred_fallthru
          _
        // Predicated region
        $region17: #{forward.1} parent=11 // pred_check
          %p1074 = pneg %p266
        $region18: #{forward.1} parent=11 // pred_check_branch
          %1076 = sbr.rel (%p1074) target = $region20
        $region19: #{forward.1} parent=11 // pred_region
          _
        $region20: #{forward.1} parent=11 // pred_fallthru
          _
        // Predicated region
        $region21: #{forward.1} parent=11 // pred_check
          %p1077 = pneg %p287
        $region22: #{forward.1} parent=11 // pred_check_branch
          %1079 = sbr.rel (%p1077) target = $region24
        $region23: #{forward.1} parent=11 // pred_region
          _
        $region24: #{forward.1} parent=11 // pred_fallthru
          _
        // Predicated region
        $region25: #{forward.1} parent=11 // pred_check
          %p1080 = pneg %p308
        $region26: #{forward.1} parent=11 // pred_check_branch
          %1082 = sbr.rel (%p1080) target = $region28
        $region27: #{forward.1} parent=11 // pred_region
          _
        $region28: #{forward.1} parent=11 // pred_fallthru
          _
        // Predicated region
        $region29: #{forward.1} parent=11 // pred_check
          %p1083 = pneg %p329
        $region30: #{forward.1} parent=11 // pred_check_branch
          %1085 = sbr.rel (%p1083) target = $region32
        $region31: #{forward.1} parent=11 // pred_region
          _
        $region32: #{forward.1} parent=11 // pred_fallthru
          _
        // Predicated region
        $region33: #{forward.1} parent=11 // pred_check
          %p1086 = pneg %p350
        $region34: #{forward.1} parent=11 // pred_check_branch
          %1088 = sbr.rel (%p1086) target = $region36
        $region35: #{forward.1} parent=11 // pred_region
          _
        $region36: #{forward.1} parent=11 // pred_fallthru
          _
        // Predicated region
        $region37: #{forward.1} parent=11 // pred_check
          %p1089 = pneg %p371
        $region38: #{forward.1} parent=11 // pred_check_branch
          %1091 = sbr.rel (%p1089) target = $region40
        $region39: #{forward.1} parent=11 // pred_region
          _
        $region40: #{forward.1} parent=11 // pred_fallthru
          _
        // Predicated region
        $region41: #{forward.1} parent=11 // pred_check
          %p1092 = pneg %p392
        $region42: #{forward.1} parent=11 // pred_check_branch
          %1094 = sbr.rel (%p1092) target = $region44
        $region43: #{forward.1} parent=11 // pred_region
          _
        $region44: #{forward.1} parent=11 // pred_fallthru
          _
        // Predicated region
        $region45: #{forward.1} parent=11 // pred_check
          %p1095 = pneg %p413
        $region46: #{forward.1} parent=11 // pred_check_branch
          %1097 = sbr.rel (%p1095) target = $region48
        $region47: #{forward.1} parent=11 // pred_region
          _
        $region48: #{forward.1} parent=11 // pred_fallthru
          _
        // Predicated region
        $region49: #{forward.1} parent=11 // pred_check
          %p1098 = pneg %p434
        $region50: #{forward.1} parent=11 // pred_check_branch
          %1100 = sbr.rel (%p1098) target = $region52
        $region51: #{forward.1} parent=11 // pred_region
          _
        $region52: #{forward.1} parent=11 // pred_fallthru
          _
        // Predicated region
        $region53: #{forward.1} parent=11 // pred_check
          %p1101 = pneg %p455
        $region54: #{forward.1} parent=11 // pred_check_branch
          %1103 = sbr.rel (%p1101) target = $region56
        $region55: #{forward.1} parent=11 // pred_region
          _
        $region56: #{forward.1} parent=11 // pred_fallthru
          _
        // Predicated region
        $region57: #{forward.1} parent=11 // pred_check
          %p1104 = pneg %p476
        $region58: #{forward.1} parent=11 // pred_check_branch
          %1106 = sbr.rel (%p1104) target = $region60
        $region59: #{forward.1} parent=11 // pred_region
          _
        $region60: #{forward.1} parent=11 // pred_fallthru
          _
        // Predicated region
        $region61: #{forward.1} parent=11 // pred_check
          %p1107 = pneg %p497
        $region62: #{forward.1} parent=11 // pred_check_branch
          %1109 = sbr.rel (%p1107) target = $region64
        $region63: #{forward.1} parent=11 // pred_region
          _
        $region64: #{forward.1} parent=11 // pred_fallthru
          _
        // Predicated region
        $region65: #{forward.1} parent=11 // pred_check
          %p1110 = pneg %p518
        $region66: #{forward.1} parent=11 // pred_check_branch
          %1112 = sbr.rel (%p1110) target = $region68
        $region67: #{forward.1} parent=11 // pred_region
          _
        $region68: #{forward.1} parent=11 // pred_fallthru
          _
        // Predicated region
        $region69: #{forward.1} parent=11 // pred_check
          %p1113 = pneg %p539
        $region70: #{forward.1} parent=11 // pred_check_branch
          %1115 = sbr.rel (%p1113) target = $region72
        $region71: #{forward.1} parent=11 // pred_region
          _
        $region72: #{forward.1} parent=11 // pred_fallthru
          _
        // Predicated region
        $region73: #{forward.1} parent=11 // pred_check
          %p1116 = pneg %p560
        $region74: #{forward.1} parent=11 // pred_check_branch
          %1118 = sbr.rel (%p1116) target = $region76
        $region75: #{forward.1} parent=11 // pred_region
          _
        $region76: #{forward.1} parent=11 // pred_fallthru
          _
        // Predicated region
        $region77: #{forward.1} parent=11 // pred_check
          %p1119 = pneg %p581
        $region78: #{forward.1} parent=11 // pred_check_branch
          %1121 = sbr.rel (%p1119) target = $region80
        $region79: #{forward.1} parent=11 // pred_region
          _
        $region80: #{forward.1} parent=11 // pred_fallthru
          _
        // Predicated region
        $region81: #{forward.1} parent=11 // pred_check
          %p1122 = pneg %p602
        $region82: #{forward.1} parent=11 // pred_check_branch
          %1124 = sbr.rel (%p1122) target = $region84
        $region83: #{forward.1} parent=11 // pred_region
          _
        $region84: #{forward.1} parent=11 // pred_fallthru
          _
        // Predicated region
        $region85: #{forward.1} parent=11 // pred_check
          %p1125 = pneg %p623
        $region86: #{forward.1} parent=11 // pred_check_branch
          %1127 = sbr.rel (%p1125) target = $region88
        $region87: #{forward.1} parent=11 // pred_region
          _
        $region88: #{forward.1} parent=11 // pred_fallthru
          _
        // Predicated region
        $region89: #{forward.1} parent=11 // pred_check
          %p1128 = pneg %p644
        $region90: #{forward.1} parent=11 // pred_check_branch
          %1130 = sbr.rel (%p1128) target = $region92
        $region91: #{forward.1} parent=11 // pred_region
          _
        $region92: #{forward.1} parent=11 // pred_fallthru
          _
        // Predicated region
        $region93: #{forward.1} parent=11 // pred_check
          %p1131 = pneg %p665
        $region94: #{forward.1} parent=11 // pred_check_branch
          %1133 = sbr.rel (%p1131) target = $region96
        $region95: #{forward.1} parent=11 // pred_region
          _
        $region96: #{forward.1} parent=11 // pred_fallthru
          _
        // Predicated region
        $region97: #{forward.1} parent=11 // pred_check
          %p1134 = pneg %p686
        $region98: #{forward.1} parent=11 // pred_check_branch
          %1136 = sbr.rel (%p1134) target = $region100
        $region99: #{forward.1} parent=11 // pred_region
          _
        $region100: #{forward.1} parent=11 // pred_fallthru
          _
        // Predicated region
        $region101: #{forward.1} parent=11 // pred_check
          %p1137 = pneg %p707
        $region102: #{forward.1} parent=11 // pred_check_branch
          %1139 = sbr.rel (%p1137) target = $region104
        $region103: #{forward.1} parent=11 // pred_region
          _
        $region104: #{forward.1} parent=11 // pred_fallthru
          _
        // Predicated region
        $region105: #{forward.1} parent=11 // pred_check
          %p1140 = pneg %p728
        $region106: #{forward.1} parent=11 // pred_check_branch
          %1142 = sbr.rel (%p1140) target = $region108
        $region107: #{forward.1} parent=11 // pred_region
          _
        $region108: #{forward.1} parent=11 // pred_fallthru
          _
        // Predicated region
        $region109: #{forward.1} parent=11 // pred_check
          %p1143 = pneg %p749
        $region110: #{forward.1} parent=11 // pred_check_branch
          %1145 = sbr.rel (%p1143) target = $region112
        $region111: #{forward.1} parent=11 // pred_region
          _
        $region112: #{forward.1} parent=11 // pred_fallthru
          _
        // Predicated region
        $region113: #{forward.1} parent=11 // pred_check
          %p1146 = pneg %p770
        $region114: #{forward.1} parent=11 // pred_check_branch
          %1148 = sbr.rel (%p1146) target = $region116
        $region115: #{forward.1} parent=11 // pred_region
          _
        $region116: #{forward.1} parent=11 // pred_fallthru
          _
        // Predicated region
        $region117: #{forward.1} parent=11 // pred_check
          %p1149 = pneg %p791
        $region118: #{forward.1} parent=11 // pred_check_branch
          %1151 = sbr.rel (%p1149) target = $region120
        $region119: #{forward.1} parent=11 // pred_region
          _
        $region120: #{forward.1} parent=11 // pred_fallthru
          _
        // Predicated region
        $region121: #{forward.1} parent=11 // pred_check
          %p1152 = pneg %p812
        $region122: #{forward.1} parent=11 // pred_check_branch
          %1154 = sbr.rel (%p1152) target = $region124
        $region123: #{forward.1} parent=11 // pred_region
          _
        $region124: #{forward.1} parent=11 // pred_fallthru
          _
        // Predicated region
        $region125: #{forward.1} parent=11 // pred_check
          %p1155 = pneg %p833
        $region126: #{forward.1} parent=11 // pred_check_branch
          %1157 = sbr.rel (%p1155) target = $region128
        $region127: #{forward.1} parent=11 // pred_region
          _
        $region128: #{forward.1} parent=11 // pred_fallthru
          _
        // Predicated region
        $region129: #{forward.1} parent=11 // pred_check
          %p1158 = pneg %p854
        $region130: #{forward.1} parent=11 // pred_check_branch
          %1160 = sbr.rel (%p1158) target = $region132
        $region131: #{forward.1} parent=11 // pred_region
          _
        $region132: #{forward.1} parent=11 // pred_fallthru
          _
        // Predicated region
        $region133: #{forward.1} parent=11 // pred_check
          %p1161 = pneg %p875
        $region134: #{forward.1} parent=11 // pred_check_branch
          %1163 = sbr.rel (%p1161) target = $region136
        $region135: #{forward.1} parent=11 // pred_region
          _
        $region136: #{forward.1} parent=11 // pred_fallthru
          _
        // Predicated region
        $region137: #{forward.1} parent=11 // pred_check
          %p1164 = pneg %p896
        $region138: #{forward.1} parent=11 // pred_check_branch
          %1166 = sbr.rel (%p1164) target = $region140
        $region139: #{forward.1} parent=11 // pred_region
          _
        $region140: #{forward.1} parent=11 // pred_fallthru
          _
        // Predicated region
        $region141: #{forward.1} parent=11 // pred_check
          %p1167 = pneg %p917
        $region142: #{forward.1} parent=11 // pred_check_branch
          %1169 = sbr.rel (%p1167) target = $region144
        $region143: #{forward.1} parent=11 // pred_region
          _
        $region144: #{forward.1} parent=11 // pred_fallthru
          _
        // Predicated region
        $region145: #{forward.1} parent=11 // pred_check
          %p1170 = pneg %p938
        $region146: #{forward.1} parent=11 // pred_check_branch
          %1172 = sbr.rel (%p1170) target = $region148
        $region147: #{forward.1} parent=11 // pred_region
          _
        $region148: #{forward.1} parent=11 // pred_fallthru
          _
        // Predicated region
        $region149: #{forward.1} parent=11 // pred_check
          %p1173 = pneg %p959
        $region150: #{forward.1} parent=11 // pred_check_branch
          %1175 = sbr.rel (%p1173) target = $region152
        $region151: #{forward.1} parent=11 // pred_region
          _
        $region152: #{forward.1} parent=11 // pred_fallthru
          _
        // Predicated region
        $region153: #{forward.1} parent=11 // pred_check
          %p1176 = pneg %p980
        $region154: #{forward.1} parent=11 // pred_check_branch
          %1178 = sbr.rel (%p1176) target = $region156
        $region155: #{forward.1} parent=11 // pred_region
          _
        $region156: #{forward.1} parent=11 // pred_fallthru
          _
        // Predicated region
        $region157: #{forward.1} parent=11 // pred_check
          %p1179 = pneg %p1001
        $region158: #{forward.1} parent=11 // pred_check_branch
          %1181 = sbr.rel (%p1179) target = $region160
        $region159: #{forward.1} parent=11 // pred_region
          _
        $region160: #{forward.1} parent=11 // pred_fallthru
          _
        // Predicated region
        $region161: #{forward.1} parent=11 // pred_check
          %p1182 = pneg %p1022
        $region162: #{forward.1} parent=11 // pred_check_branch
          %1184 = sbr.rel (%p1182) target = $region164
        $region163: #{forward.1} parent=11 // pred_region
          _
        $region164: #{forward.1} parent=11 // pred_fallthru
          _
      $region12: #{forward.1} parent=5 // pred_fallthru
        _
      %p1185 = scmp.lt.s32.totalorder %s94, 2
      // Predicated region
      $region165: #{forward.1} parent=5 // pred_check
        %p1186 = pneg %p1185
      $region166: #{forward.1} parent=5 // pred_check_branch
        %1188 = sbr.rel (%p1186) target = $region168
      $region167: #{forward.1} parent=5 // pred_region
        // Predicated region
        $region169: #{forward.1} parent=167 // pred_check
          %p1189 = pneg %p114
        $region170: #{forward.1} parent=167 // pred_check_branch
          %1191 = sbr.rel (%p1189) target = $region172
        $region171: #{forward.1} parent=167 // pred_region
          %p1192 = scmp.lt.s32.totalorder %s94, 1
          %s1193 = scalar_select %p1192, %s94, 1
          %s1194 = smul.addr %s1193, 2
          %s1195 = smul.addr %s1194, 8
          %s1196 = scalar_lea.vmem %s1, %s1195
        $region172: #{forward.1} parent=167 // pred_fallthru
          _
        // Predicated region
        $region173: #{forward.1} parent=167 // pred_check
          %p1197 = pneg %p140
        $region174: #{forward.1} parent=167 // pred_check_branch
          %1199 = sbr.rel (%p1197) target = $region176
        $region175: #{forward.1} parent=167 // pred_region
          %p1200 = scmp.lt.s32.totalorder %s94, 1
          %s1201 = scalar_select %p1200, %s94, 1
          %s1202 = smul.addr %s1201, 2
          %s1203 = smul.addr %s1202, 8
          %s1204 = scalar_lea.vmem %s3, %s1203
        $region176: #{forward.1} parent=167 // pred_fallthru
          _
        // Predicated region
        $region177: #{forward.1} parent=167 // pred_check
          %p1205 = pneg %p166
        $region178: #{forward.1} parent=167 // pred_check_branch
          %1207 = sbr.rel (%p1205) target = $region180
        $region179: #{forward.1} parent=167 // pred_region
          %p1208 = scmp.lt.s32.totalorder %s94, 1
          %s1209 = scalar_select %p1208, %s94, 1
          %s1210 = smul.addr %s1209, 8
          %s1211 = scalar_lea.vmem %s5, %s1210
        $region180: #{forward.1} parent=167 // pred_fallthru
          _
        // Predicated region
        $region181: #{forward.1} parent=167 // pred_check
          %p1212 = pneg %p192
        $region182: #{forward.1} parent=167 // pred_check_branch
          %1214 = sbr.rel (%p1212) target = $region184
        $region183: #{forward.1} parent=167 // pred_region
          %p1215 = scmp.lt.s32.totalorder %s94, 1
          %s1216 = scalar_select %p1215, %s94, 1
          %s1217 = smul.addr %s1216, 8
          %s1218 = smul.addr %s1217, 8
          %s1219 = scalar_lea.vmem %s7, %s1218
        $region184: #{forward.1} parent=167 // pred_fallthru
          _
        // Predicated region
        $region185: #{forward.1} parent=167 // pred_check
          %p1220 = pneg %p218
        $region186: #{forward.1} parent=167 // pred_check_branch
          %1222 = sbr.rel (%p1220) target = $region188
        $region187: #{forward.1} parent=167 // pred_region
          %p1223 = scmp.lt.s32.totalorder %s94, 1
          %s1224 = scalar_select %p1223, %s94, 1
          %s1225 = smul.addr %s1224, 8
          %s1226 = smul.addr %s1225, 8
          %s1227 = scalar_lea.vmem %s9, %s1226
        $region188: #{forward.1} parent=167 // pred_fallthru
          _
      $region168: #{forward.1} parent=5 // pred_fallthru
        _
      %p1228 = scmp.le.s32.totalorder 1, %s94
      %p1229 = scmp.lt.s32.totalorder %s94, 3
      %p1230 = pnand %p1228, %p1229
      %p1231 = pneg %p1230
      // Predicated region
      $region189: #{forward.1} parent=5 // pred_check
        _
      $region190: #{forward.1} parent=5 // pred_check_branch
        %1233 = sbr.rel (%p1230) target = $region192
      $region191: #{forward.1} parent=5 // pred_region
        %s1234 = ssub.s32 %s94, 1
        // Predicated region
        $region193: #{forward.1} parent=191 // pred_check
          %p1235 = pneg %p245
        $region194: #{forward.1} parent=191 // pred_check_branch
          %1237 = sbr.rel (%p1235) target = $region196
        $region195: #{forward.1} parent=191 // pred_region
          %1238 = dma.done [#allocation3], 16
        $region196: #{forward.1} parent=191 // pred_fallthru
          _
        %1239 = sfence
        %p1240 = scmp.lt.s32.totalorder %s99, 1
        %s1241 = scalar_select %p1240, %s99, 1
        %s1242 = smul.addr %s1241, 2
        %s1243 = smul.addr %s1242, 8
        %s1244 = scalar_lea.vmem %s1, %s1243
        %p1245 = pneg %p120
        %p1246 = pneg %p117
        %p1247 = scmp.lt.s32.totalorder %s99, 1
        %s1248 = scalar_select %p1247, %s99, 1
        %s1249 = smul.addr %s1248, 2
        %s1250 = smul.addr %s1249, 8
        %s1251 = scalar_lea.vmem %s3, %s1250
        %p1252 = pneg %p146
        %p1253 = pneg %p143
        %p1254 = scmp.lt.s32.totalorder %s99, 1
        %s1255 = scalar_select %p1254, %s99, 1
        %s1256 = smul.addr %s1255, 8
        %s1257 = scalar_lea.vmem %s5, %s1256
        %p1258 = pneg %p172
        %p1259 = pneg %p169
        %p1260 = scmp.lt.s32.totalorder %s99, 1
        %s1261 = scalar_select %p1260, %s99, 1
        %s1262 = smul.addr %s1261, 8
        %s1263 = smul.addr %s1262, 8
        %s1264 = scalar_lea.vmem %s7, %s1263
        %p1265 = pneg %p198
        %p1266 = pneg %p195
        %p1267 = scmp.lt.s32.totalorder %s99, 1
        %s1268 = scalar_select %p1267, %s99, 1
        %s1269 = smul.addr %s1268, 8
        %s1270 = smul.addr %s1269, 8
        %s1271 = scalar_lea.vmem %s9, %s1270
        %p1272 = pneg %p224
        %p1273 = pneg %p221
        %p1274 = pneg %p245
        %p1275 = pneg %p242
        %p1276 = pneg %p266
        %p1277 = pneg %p263
        %p1278 = pneg %p287
        %p1279 = pneg %p284
        %p1280 = pneg %p308
        %p1281 = pneg %p305
        %p1282 = pneg %p329
        %p1283 = pneg %p326
        %p1284 = pneg %p350
        %p1285 = pneg %p347
        %p1286 = pneg %p371
        %p1287 = pneg %p368
        %p1288 = pneg %p392
        %p1289 = pneg %p389
        %p1290 = pneg %p413
        %p1291 = pneg %p410
        %p1292 = pneg %p434
        %p1293 = pneg %p431
        %p1294 = pneg %p455
        %p1295 = pneg %p452
        %p1296 = pneg %p476
        %p1297 = pneg %p473
        %p1298 = pneg %p497
        %p1299 = pneg %p494
        %p1300 = pneg %p518
        %p1301 = pneg %p515
        %p1302 = pneg %p539
        %p1303 = pneg %p536
        %p1304 = pneg %p560
        %p1305 = pneg %p557
        %p1306 = pneg %p581
        %p1307 = pneg %p578
        %p1308 = pneg %p602
        %p1309 = pneg %p599
        %p1310 = pneg %p623
        %p1311 = pneg %p620
        %p1312 = pneg %p644
        %p1313 = pneg %p641
        %p1314 = pneg %p665
        %p1315 = pneg %p662
        %p1316 = pneg %p686
        %p1317 = pneg %p683
        %p1318 = pneg %p707
        %p1319 = pneg %p704
        %p1320 = pneg %p728
        %p1321 = pneg %p725
        %p1322 = pneg %p749
        %p1323 = pneg %p746
        %p1324 = pneg %p770
        %p1325 = pneg %p767
        %p1326 = pneg %p791
        %p1327 = pneg %p788
        %p1328 = pneg %p812
        %p1329 = pneg %p809
        %p1330 = pneg %p833
        %p1331 = pneg %p830
        %p1332 = pneg %p854
        %p1333 = pneg %p851
        %p1334 = pneg %p875
        %p1335 = pneg %p872
        %p1336 = pneg %p896
        %p1337 = pneg %p893
        %p1338 = pneg %p917
        %p1339 = pneg %p914
        %p1340 = pneg %p938
        %p1341 = pneg %p935
        %p1342 = pneg %p959
        %p1343 = pneg %p956
        %p1344 = pneg %p980
        %p1345 = pneg %p977
        %p1346 = pneg %p1001
        %p1347 = pneg %p998
        %p1348 = pneg %p1022
        %p1349 = pneg %p1019
        %p1350 = pneg %p1048
        %p1351 = pneg %p1045
        %p1352 = scmp.lt.s32.totalorder %s99, 1
        %s1353 = scalar_select %p1352, %s99, 1
        %s1354 = smul.addr %s1353, 8
        %s1355 = smul.addr %s1354, 8
        %s1356 = scalar_lea.vmem %s87, %s1355
        %p1357 = scmp.lt.s32.totalorder %s99, 1
        %s1358 = scalar_select %p1357, %s99, 1
        %s1359 = smul.addr %s1358, 2
        %s1360 = smul.addr %s1359, 8
        %s1361 = scalar_lea.vmem %s1, %s1360
        %p1362 = scmp.lt.s32.totalorder %s99, 1
        %s1363 = scalar_select %p1362, %s99, 1
        %s1364 = smul.addr %s1363, 2
        %s1365 = smul.addr %s1364, 8
        %s1366 = scalar_lea.vmem %s3, %s1365
        %p1367 = scmp.lt.s32.totalorder %s99, 1
        %s1368 = scalar_select %p1367, %s99, 1
        %s1369 = smul.addr %s1368, 8
        %s1370 = scalar_lea.vmem %s5, %s1369
        %p1371 = scmp.lt.s32.totalorder %s99, 1
        %s1372 = scalar_select %p1371, %s99, 1
        %s1373 = smul.addr %s1372, 8
        %s1374 = smul.addr %s1373, 8
        %s1375 = scalar_lea.vmem %s7, %s1374
        %p1376 = scmp.lt.s32.totalorder %s99, 1
        %s1377 = scalar_select %p1376, %s99, 1
        %s1378 = smul.addr %s1377, 8
        %s1379 = smul.addr %s1378, 8
        %s1380 = scalar_lea.vmem %s9, %s1379
        %p1381 = scmp.lt.s32.totalorder %s99, 1
        %s1382 = scalar_select %p1381, %s99, 1
        %s1383 = smul.addr %s1382, 8
        %s1384 = smul.addr %s1383, 8
        %s1385 = scalar_lea.vmem %s87, %s1384
        %v1386 = vld [vmem:[%s1361] sm:$0xff]
        %v1387 = vld [vmem:[%s1361 + $0x8] sm:$0x3]
        %v1388 = vld [vmem:[%s1366] sm:$0xff]
        %v1389 = vld [vmem:[%s1366 + $0x8] sm:$0x3]
        %v1390 = vld [vmem:[%s13] sm:$0xff]
        %v1391 = vld [vmem:[%s13 + $0x8] sm:$0xff]
        %v1392 = vld [vmem:[%s13 + $0x10] sm:$0xff]
        %v1393 = vld [vmem:[%s13 + $0x18] sm:$0xff]
        %v1394 = vld [vmem:[%s13 + $0x20] sm:$0xff]
        %v1395 = vld [vmem:[%s13 + $0x28] sm:$0xff]
        %v1396 = vld [vmem:[%s13 + $0x30] sm:$0xff]
        %v1397 = vld [vmem:[%s13 + $0x38] sm:$0xff]
        %v1398 = vld [vmem:[%s13 + $0x40] sm:$0xff]
        %v1399 = vld [vmem:[%s13 + $0x48] sm:$0xff]
        %v1400 = vld [vmem:[%s13 + $0x50] sm:$0xff]
        %v1401 = vld [vmem:[%s13 + $0x58] sm:$0xff]
        %v1402 = vld [vmem:[%s13 + $0x60] sm:$0xff]
        %v1403 = vld [vmem:[%s13 + $0x68] sm:$0xff]
        %v1404 = vld [vmem:[%s15] sm:$0x1]
        %v1406 = vlaneseq
        %v1407 = vshrl.u32 %v1406, 7
        %v1408 = vsub.s32 0, %v1407
        %v1409 = vrot.slane %v1404, %v1408
        %vm1411 = vcmask 916480
        %v1413 = vsel %vm1411, %v1388, 0
        %v1416 = vsel %vm1411, %v1389, 0
        %1418 = vmatprep.subr.mxu0 0.0
        %1419 = vmatpush1.msra.mxu0 %v1390
        %1420 = vmatprep.subr.mxu0 0.0
        %1421 = vmatpush1.msra.mxu0 %v1391
        %1422 = vmatprep.subr.mxu0 0.0
        %1423 = vmatpush1.msra.mxu0 %v1392
        %1424 = vmatprep.subr.mxu0 0.0
        %1425 = vmatpush1.msra.mxu0 %v1393
        %1426 = vmatprep.subr.mxu0 0.0
        %1427 = vmatpush1.msra.mxu0 %v1394
        %1428 = vmatprep.subr.mxu0 0.0
        %1429 = vmatpush1.msra.mxu0 %v1395
        %1430 = vmatprep.subr.mxu0 0.0
        %1431 = vmatpush1.msra.mxu0 %v1396
        %1432 = vmatprep.subr.mxu0 0.0
        %1433 = vmatpush1.msra.mxu0 %v1397
        %1434 = vmatprep.subr.mxu0 0.0
        %1435 = vmatpush1.msra.mxu0 %v1398
        %1436 = vmatprep.subr.mxu0 0.0
        %1437 = vmatpush1.msra.mxu0 %v1399
        %1438 = vmatprep.subr.mxu0 0.0
        %1439 = vmatpush1.msra.mxu0 %v1400
        %1440 = vmatprep.subr.mxu0 0.0
        %1441 = vmatpush1.msra.mxu0 %v1401
        %1442 = vmatprep.subr.mxu0 0.0
        %1443 = vmatpush1.msra.mxu0 %v1402
        %1444 = vmatprep.subr.mxu0 0.0
        %1445 = vmatpush1.msra.mxu0 %v1403
        %1446 = vmatprep.subr.mxu0 0.0
        %1447 = vmatpush1.msra.mxu0 0.0
        %1448 = vmatprep.subr.mxu0 0.0
        %1449 = vmatpush1.msra.mxu0 0.0
        %1450 = vmatprep.subr.mxu0 0.0
        %1451 = vmatpush1.msra.mxu0 0.0
        %1452 = vmatprep.subr.mxu0 0.0
        %1453 = vmatpush1.msra.mxu0 0.0
        %1454 = vmatprep.subr.mxu0 0.0
        %1455 = vmatpush1.msra.mxu0 0.0
        %1456 = vmatprep.subr.mxu0 0.0
        %1457 = vmatpush1.msra.mxu0 0.0
        %1458 = vmatprep.subr.mxu0 0.0
        %1459 = vmatpush1.msra.mxu0 0.0
        %1460 = vmatprep.subr.mxu0 0.0
        %1461 = vmatpush1.msra.mxu0 0.0
        %1462 = vmatprep.subr.mxu0 0.0
        %1463 = vmatpush1.msra.mxu0 0.0
        %1464 = vmatprep.subr.mxu0 0.0
        %1465 = vmatpush1.msra.mxu0 0.0
        %1466 = vmatprep.subr.mxu0 0.0
        %1467 = vmatpush1.msra.mxu0 0.0
        %1468 = vmatprep.subr.mxu0 0.0
        %1469 = vmatpush1.msra.mxu0 0.0
        %1470 = vmatprep.subr.mxu0 0.0
        %1471 = vmatpush1.msra.mxu0 0.0
        %1472 = vmatprep.subr.mxu0 0.0
        %1473 = vmatpush1.msra.mxu0 0.0
        %1474 = vmatprep.subr.mxu0 0.0
        %1475 = vmatpush1.msra.mxu0 0.0
        %1476 = vmatprep.subr.mxu0 0.0
        %1477 = vmatpush1.msra.mxu0 0.0
        %1478 = vmatprep.subr.mxu0 0.0
        %1479 = vmatpush1.msra.mxu0 0.0
        %1480 = vmatprep.subr.mxu0 0.0
        %1481 = vmatpush1.msra.mxu0 0.0
        %1482 = vmatprep.mubr.f32.mxu0 0.0
        %1483 = vmatmul.mubr.f32.gmra.mrb[0].mxu0 %v1413
        %v1484 = vpop.f32.mrb[0].mxu0
        %v1485 = vadd.f32 %v1409, %v1484
        %v1486 = vpop.f32.mrb[0].mxu0
        %1487 = vmatprep.mubr.f32.mxu0 0.0
        %1488 = vmatmul.mubr.f32.gmra.mrb[0].mxu0 %v1416
        %v1489 = vpop.f32.mrb[0].mxu0
        %v1490 = vadd.f32 %v1409, %v1489
        %v1491 = vpop.f32.mrb[0].mxu0
        %1492 = vdwg.mxu0
        %v1493 = vtanh.pop %v1485
        %v1494 = vtanh.pop %v1490
        %v1495 = vld [vmem:[%s17] sm:$0xff]
        %v1496 = vld [vmem:[%s17 + $0x8] sm:$0xff]
        %v1497 = vld [vmem:[%s17 + $0x10] sm:$0xff]
        %v1498 = vld [vmem:[%s17 + $0x18] sm:$0xff]
        %v1499 = vld [vmem:[%s19] sm:$0x1]
        %v1501 = vlaneseq
        %v1502 = vshrl.u32 %v1501, 7
        %v1503 = vsub.s32 0, %v1502
        %v1504 = vrot.slane %v1499, %v1503
        %vm1506 = vcmask 261120
        %v1508 = vsel %vm1506, %v1386, 0
        %v1511 = vsel %vm1506, %v1387, 0
        %1513 = vmatprep.subr.mxu0 0.0
        %1514 = vmatpush1.msra.mxu0 %v1495
        %1515 = vmatprep.subr.mxu0 0.0
        %1516 = vmatpush1.msra.mxu0 %v1496
        %1517 = vmatprep.subr.mxu0 0.0
        %1518 = vmatpush1.msra.mxu0 %v1497
        %1519 = vmatprep.subr.mxu0 0.0
        %1520 = vmatpush1.msra.mxu0 %v1498
        %1521 = vmatprep.subr.mxu0 0.0
        %1522 = vmatpush1.msra.mxu0 0.0
        %1523 = vmatprep.subr.mxu0 0.0
        %1524 = vmatpush1.msra.mxu0 0.0
        %1525 = vmatprep.subr.mxu0 0.0
        %1526 = vmatpush1.msra.mxu0 0.0
        %1527 = vmatprep.subr.mxu0 0.0
        %1528 = vmatpush1.msra.mxu0 0.0
        %1529 = vmatprep.subr.mxu0 0.0
        %1530 = vmatpush1.msra.mxu0 0.0
        %1531 = vmatprep.subr.mxu0 0.0
        %1532 = vmatpush1.msra.mxu0 0.0
        %1533 = vmatprep.subr.mxu0 0.0
        %1534 = vmatpush1.msra.mxu0 0.0
        %1535 = vmatprep.subr.mxu0 0.0
        %1536 = vmatpush1.msra.mxu0 0.0
        %1537 = vmatprep.subr.mxu0 0.0
        %1538 = vmatpush1.msra.mxu0 0.0
        %1539 = vmatprep.subr.mxu0 0.0
        %1540 = vmatpush1.msra.mxu0 0.0
        %1541 = vmatprep.subr.mxu0 0.0
        %1542 = vmatpush1.msra.mxu0 0.0
        %1543 = vmatprep.subr.mxu0 0.0
        %1544 = vmatpush1.msra.mxu0 0.0
        %1545 = vmatprep.subr.mxu0 0.0
        %1546 = vmatpush1.msra.mxu0 0.0
        %1547 = vmatprep.subr.mxu0 0.0
        %1548 = vmatpush1.msra.mxu0 0.0
        %1549 = vmatprep.subr.mxu0 0.0
        %1550 = vmatpush1.msra.mxu0 0.0
        %1551 = vmatprep.subr.mxu0 0.0
        %1552 = vmatpush1.msra.mxu0 0.0
        %1553 = vmatprep.subr.mxu0 0.0
        %1554 = vmatpush1.msra.mxu0 0.0
        %1555 = vmatprep.subr.mxu0 0.0
        %1556 = vmatpush1.msra.mxu0 0.0
        %1557 = vmatprep.subr.mxu0 0.0
        %1558 = vmatpush1.msra.mxu0 0.0
        %1559 = vmatprep.subr.mxu0 0.0
        %1560 = vmatpush1.msra.mxu0 0.0
        %1561 = vmatprep.subr.mxu0 0.0
        %1562 = vmatpush1.msra.mxu0 0.0
        %1563 = vmatprep.subr.mxu0 0.0
        %1564 = vmatpush1.msra.mxu0 0.0
        %1565 = vmatprep.subr.mxu0 0.0
        %1566 = vmatpush1.msra.mxu0 0.0
        %1567 = vmatprep.subr.mxu0 0.0
        %1568 = vmatpush1.msra.mxu0 0.0
        %1569 = vmatprep.subr.mxu0 0.0
        %1570 = vmatpush1.msra.mxu0 0.0
        %1571 = vmatprep.subr.mxu0 0.0
        %1572 = vmatpush1.msra.mxu0 0.0
        %1573 = vmatprep.subr.mxu0 0.0
        %1574 = vmatpush1.msra.mxu0 0.0
        %1575 = vmatprep.subr.mxu0 0.0
        %1576 = vmatpush1.msra.mxu0 0.0
        %1577 = vmatprep.mubr.f32.mxu0 0.0
        %1578 = vmatmul.mubr.f32.gmra.mrb[0].mxu0 %v1508
        %v1579 = vpop.f32.mrb[0].mxu0
        %v1580 = vadd.f32 %v1504, %v1579
        %v1581 = vpop.f32.mrb[0].mxu0
        %1582 = vmatprep.mubr.f32.mxu0 0.0
        %1583 = vmatmul.mubr.f32.gmra.mrb[0].mxu0 %v1511
        %v1584 = vpop.f32.mrb[0].mxu0
        %v1585 = vadd.f32 %v1504, %v1584
        %v1586 = vpop.f32.mrb[0].mxu0
        %1587 = vdwg.mxu0
        %v1588 = vld [vmem:[%s21] sm:$0xff]
        %v1589 = vld [vmem:[%s21 + $0x8] sm:$0xff]
        %v1590 = vld [vmem:[%s21 + $0x10] sm:$0xff]
        %v1591 = vld [vmem:[%s21 + $0x18] sm:$0xff]
        %v1592 = vld [vmem:[%s23] sm:$0x1]
        %v1594 = vlaneseq
        %v1595 = vshrl.u32 %v1594, 7
        %v1596 = vsub.s32 0, %v1595
        %v1597 = vrot.slane %v1592, %v1596
        %v1600 = vsel %vm1506, %v1493, 0
        %v1603 = vsel %vm1506, %v1494, 0
        %1605 = vmatprep.subr.mxu0 0.0
        %1606 = vmatpush1.msra.mxu0 %v1588
        %1607 = vmatprep.subr.mxu0 0.0
        %1608 = vmatpush1.msra.mxu0 %v1589
        %1609 = vmatprep.subr.mxu0 0.0
        %1610 = vmatpush1.msra.mxu0 %v1590
        %1611 = vmatprep.subr.mxu0 0.0
        %1612 = vmatpush1.msra.mxu0 %v1591
        %1613 = vmatprep.subr.mxu0 0.0
        %1614 = vmatpush1.msra.mxu0 0.0
        %1615 = vmatprep.subr.mxu0 0.0
        %1616 = vmatpush1.msra.mxu0 0.0
        %1617 = vmatprep.subr.mxu0 0.0
        %1618 = vmatpush1.msra.mxu0 0.0
        %1619 = vmatprep.subr.mxu0 0.0
        %1620 = vmatpush1.msra.mxu0 0.0
        %1621 = vmatprep.subr.mxu0 0.0
        %1622 = vmatpush1.msra.mxu0 0.0
        %1623 = vmatprep.subr.mxu0 0.0
        %1624 = vmatpush1.msra.mxu0 0.0
        %1625 = vmatprep.subr.mxu0 0.0
        %1626 = vmatpush1.msra.mxu0 0.0
        %1627 = vmatprep.subr.mxu0 0.0
        %1628 = vmatpush1.msra.mxu0 0.0
        %1629 = vmatprep.subr.mxu0 0.0
        %1630 = vmatpush1.msra.mxu0 0.0
        %1631 = vmatprep.subr.mxu0 0.0
        %1632 = vmatpush1.msra.mxu0 0.0
        %1633 = vmatprep.subr.mxu0 0.0
        %1634 = vmatpush1.msra.mxu0 0.0
        %1635 = vmatprep.subr.mxu0 0.0
        %1636 = vmatpush1.msra.mxu0 0.0
        %1637 = vmatprep.subr.mxu0 0.0
        %1638 = vmatpush1.msra.mxu0 0.0
        %1639 = vmatprep.subr.mxu0 0.0
        %1640 = vmatpush1.msra.mxu0 0.0
        %1641 = vmatprep.subr.mxu0 0.0
        %1642 = vmatpush1.msra.mxu0 0.0
        %1643 = vmatprep.subr.mxu0 0.0
        %1644 = vmatpush1.msra.mxu0 0.0
        %1645 = vmatprep.subr.mxu0 0.0
        %1646 = vmatpush1.msra.mxu0 0.0
        %1647 = vmatprep.subr.mxu0 0.0
        %1648 = vmatpush1.msra.mxu0 0.0
        %1649 = vmatprep.subr.mxu0 0.0
        %1650 = vmatpush1.msra.mxu0 0.0
        %1651 = vmatprep.subr.mxu0 0.0
        %1652 = vmatpush1.msra.mxu0 0.0
        %1653 = vmatprep.subr.mxu0 0.0
        %1654 = vmatpush1.msra.mxu0 0.0
        %1655 = vmatprep.subr.mxu0 0.0
        %1656 = vmatpush1.msra.mxu0 0.0
        %1657 = vmatprep.subr.mxu0 0.0
        %1658 = vmatpush1.msra.mxu0 0.0
        %1659 = vmatprep.subr.mxu0 0.0
        %1660 = vmatpush1.msra.mxu0 0.0
        %1661 = vmatprep.subr.mxu0 0.0
        %1662 = vmatpush1.msra.mxu0 0.0
        %1663 = vmatprep.subr.mxu0 0.0
        %1664 = vmatpush1.msra.mxu0 0.0
        %1665 = vmatprep.subr.mxu0 0.0
        %1666 = vmatpush1.msra.mxu0 0.0
        %1667 = vmatprep.subr.mxu0 0.0
        %1668 = vmatpush1.msra.mxu0 0.0
        %1669 = vmatprep.mubr.f32.mxu0 0.0
        %1670 = vmatmul.mubr.f32.gmra.mrb[0].mxu0 %v1600
        %v1671 = vpop.f32.mrb[0].mxu0
        %v1672 = vadd.f32 %v1597, %v1671
        %v1673 = vpop.f32.mrb[0].mxu0
        %1674 = vmatprep.mubr.f32.mxu0 0.0
        %1675 = vmatmul.mubr.f32.gmra.mrb[0].mxu0 %v1603
        %v1676 = vpop.f32.mrb[0].mxu0
        %v1677 = vadd.f32 %v1597, %v1676
        %v1678 = vpop.f32.mrb[0].mxu0
        %1679 = vdwg.mxu0
        %v1680 = vld [vmem:[%s29] sm:$0xff]
        %v1681 = vld [vmem:[%s29 + $0x8] sm:$0xff]
        %v1682 = vld [vmem:[%s29 + $0x10] sm:$0xff]
        %v1683 = vld [vmem:[%s29 + $0x18] sm:$0xff]
        %v1684 = vld [vmem:[%s31] sm:$0x1]
        %v1686 = vlaneseq
        %v1687 = vshrl.u32 %v1686, 7
        %v1688 = vsub.s32 0, %v1687
        %v1689 = vrot.slane %v1684, %v1688
        %1691 = vrot.lane.b32.xlu0 %v1493, 96
        %v1692 = vpop.permute.xlu0 %1691
        %1693 = vrot.lane.b32.xlu0 %v1494, 96
        %v1694 = vpop.permute.xlu0 %1693
        %v1695 = vsel %vm1506, %v1692, 0
        %v1697 = vsel %vm1506, %v1694, 0
        %1699 = vmatprep.subr.mxu0 0.0
        %1700 = vmatpush1.msra.mxu0 %v1680
        %1701 = vmatprep.subr.mxu0 0.0
        %1702 = vmatpush1.msra.mxu0 %v1681
        %1703 = vmatprep.subr.mxu0 0.0
        %1704 = vmatpush1.msra.mxu0 %v1682
        %1705 = vmatprep.subr.mxu0 0.0
        %1706 = vmatpush1.msra.mxu0 %v1683
        %1707 = vmatprep.subr.mxu0 0.0
        %1708 = vmatpush1.msra.mxu0 0.0
        %1709 = vmatprep.subr.mxu0 0.0
        %1710 = vmatpush1.msra.mxu0 0.0
        %1711 = vmatprep.subr.mxu0 0.0
        %1712 = vmatpush1.msra.mxu0 0.0
        %1713 = vmatprep.subr.mxu0 0.0
        %1714 = vmatpush1.msra.mxu0 0.0
        %1715 = vmatprep.subr.mxu0 0.0
        %1716 = vmatpush1.msra.mxu0 0.0
        %1717 = vmatprep.subr.mxu0 0.0
        %1718 = vmatpush1.msra.mxu0 0.0
        %1719 = vmatprep.subr.mxu0 0.0
        %1720 = vmatpush1.msra.mxu0 0.0
        %1721 = vmatprep.subr.mxu0 0.0
        %1722 = vmatpush1.msra.mxu0 0.0
        %1723 = vmatprep.subr.mxu0 0.0
        %1724 = vmatpush1.msra.mxu0 0.0
        %1725 = vmatprep.subr.mxu0 0.0
        %1726 = vmatpush1.msra.mxu0 0.0
        %1727 = vmatprep.subr.mxu0 0.0
        %1728 = vmatpush1.msra.mxu0 0.0
        %1729 = vmatprep.subr.mxu0 0.0
        %1730 = vmatpush1.msra.mxu0 0.0
        %1731 = vmatprep.subr.mxu0 0.0
        %1732 = vmatpush1.msra.mxu0 0.0
        %1733 = vmatprep.subr.mxu0 0.0
        %1734 = vmatpush1.msra.mxu0 0.0
        %1735 = vmatprep.subr.mxu0 0.0
        %1736 = vmatpush1.msra.mxu0 0.0
        %1737 = vmatprep.subr.mxu0 0.0
        %1738 = vmatpush1.msra.mxu0 0.0
        %1739 = vmatprep.subr.mxu0 0.0
        %1740 = vmatpush1.msra.mxu0 0.0
        %1741 = vmatprep.subr.mxu0 0.0
        %1742 = vmatpush1.msra.mxu0 0.0
        %1743 = vmatprep.subr.mxu0 0.0
        %1744 = vmatpush1.msra.mxu0 0.0
        %1745 = vmatprep.subr.mxu0 0.0
        %1746 = vmatpush1.msra.mxu0 0.0
        %1747 = vmatprep.subr.mxu0 0.0
        %1748 = vmatpush1.msra.mxu0 0.0
        %1749 = vmatprep.subr.mxu0 0.0
        %1750 = vmatpush1.msra.mxu0 0.0
        %1751 = vmatprep.subr.mxu0 0.0
        %1752 = vmatpush1.msra.mxu0 0.0
        %1753 = vmatprep.subr.mxu0 0.0
        %1754 = vmatpush1.msra.mxu0 0.0
        %1755 = vmatprep.subr.mxu0 0.0
        %1756 = vmatpush1.msra.mxu0 0.0
        %1757 = vmatprep.subr.mxu0 0.0
        %1758 = vmatpush1.msra.mxu0 0.0
        %1759 = vmatprep.subr.mxu0 0.0
        %1760 = vmatpush1.msra.mxu0 0.0
        %1761 = vmatprep.subr.mxu0 0.0
        %1762 = vmatpush1.msra.mxu0 0.0
        %1763 = vmatprep.mubr.f32.mxu0 0.0
        %1764 = vmatmul.mubr.f32.gmra.mrb[0].mxu0 %v1695
        %v1765 = vpop.f32.mrb[0].mxu0
        %v1766 = vadd.f32 %v1689, %v1765
        %v1767 = vpop.f32.mrb[0].mxu0
        %1768 = vmatprep.mubr.f32.mxu0 0.0
        %1769 = vmatmul.mubr.f32.gmra.mrb[0].mxu0 %v1697
        %v1770 = vpop.f32.mrb[0].mxu0
        %v1771 = vadd.f32 %v1689, %v1770
        %v1772 = vpop.f32.mrb[0].mxu0
        %1773 = vdwg.mxu0
        %v1775 = vsel %vm1506, %v1580, 0
        %v1778 = vsel %vm1506, %v1585, 0
        %v1781 = vsel %vm1506, %v1672, 0
        %v1784 = vsel %vm1506, %v1677, 0
        %1786 = vmatprep.subr.mxu0 0.0
        %1787 = vmatpush1.xpose.msra.mxu0 %v1781
        %1788 = vmatprep.subr.mxu0 0.0
        %1789 = vmatpush1.xpose.msra.mxu0 %v1784
        %1790 = vmatprep.subr.mxu0 0.0
        %1791 = vmatpush1.xpose.msra.mxu0 0.0
        %1792 = vmatprep.subr.mxu0 0.0
        %1793 = vmatpush1.xpose.msra.mxu0 0.0
        %1794 = vmatprep.subr.mxu0 0.0
        %1795 = vmatpush1.xpose.msra.mxu0 0.0
        %1796 = vmatprep.subr.mxu0 0.0
        %1797 = vmatpush1.xpose.msra.mxu0 0.0
        %1798 = vmatprep.subr.mxu0 0.0
        %1799 = vmatpush1.xpose.msra.mxu0 0.0
        %1800 = vmatprep.subr.mxu0 0.0
        %1801 = vmatpush1.xpose.msra.mxu0 0.0
        %1802 = vmatprep.subr.mxu0 0.0
        %1803 = vmatpush1.xpose.msra.mxu0 0.0
        %1804 = vmatprep.subr.mxu0 0.0
        %1805 = vmatpush1.xpose.msra.mxu0 0.0
        %1806 = vmatprep.subr.mxu0 0.0
        %1807 = vmatpush1.xpose.msra.mxu0 0.0
        %1808 = vmatprep.subr.mxu0 0.0
        %1809 = vmatpush1.xpose.msra.mxu0 0.0
        %1810 = vmatprep.subr.mxu0 0.0
        %1811 = vmatpush1.xpose.msra.mxu0 0.0
        %1812 = vmatprep.subr.mxu0 0.0
        %1813 = vmatpush1.xpose.msra.mxu0 0.0
        %1814 = vmatprep.subr.mxu0 0.0
        %1815 = vmatpush1.xpose.msra.mxu0 0.0
        %1816 = vmatprep.subr.mxu0 0.0
        %1817 = vmatpush1.xpose.msra.mxu0 0.0
        %1818 = vmatprep.subr.mxu0 0.0
        %1819 = vmatpush1.xpose.msra.mxu0 0.0
        %1820 = vmatprep.subr.mxu0 0.0
        %1821 = vmatpush1.xpose.msra.mxu0 0.0
        %1822 = vmatprep.subr.mxu0 0.0
        %1823 = vmatpush1.xpose.msra.mxu0 0.0
        %1824 = vmatprep.subr.mxu0 0.0
        %1825 = vmatpush1.xpose.msra.mxu0 0.0
        %1826 = vmatprep.subr.mxu0 0.0
        %1827 = vmatpush1.xpose.msra.mxu0 0.0
        %1828 = vmatprep.subr.mxu0 0.0
        %1829 = vmatpush1.xpose.msra.mxu0 0.0
        %1830 = vmatprep.subr.mxu0 0.0
        %1831 = vmatpush1.xpose.msra.mxu0 0.0
        %1832 = vmatprep.subr.mxu0 0.0
        %1833 = vmatpush1.xpose.msra.mxu0 0.0
        %1834 = vmatprep.subr.mxu0 0.0
        %1835 = vmatpush1.xpose.msra.mxu0 0.0
        %1836 = vmatprep.subr.mxu0 0.0
        %1837 = vmatpush1.xpose.msra.mxu0 0.0
        %1838 = vmatprep.subr.mxu0 0.0
        %1839 = vmatpush1.xpose.msra.mxu0 0.0
        %1840 = vmatprep.subr.mxu0 0.0
        %1841 = vmatpush1.xpose.msra.mxu0 0.0
        %1842 = vmatprep.subr.mxu0 0.0
        %1843 = vmatpush1.xpose.msra.mxu0 0.0
        %1844 = vmatprep.subr.mxu0 0.0
        %1845 = vmatpush1.xpose.msra.mxu0 0.0
        %1846 = vmatprep.subr.mxu0 0.0
        %1847 = vmatpush1.xpose.msra.mxu0 0.0
        %1848 = vmatprep.subr.mxu0 0.0
        %1849 = vmatpush1.xpose.msra.mxu0 0.0
        %1850 = vmatprep.mubr.f32.mxu0 0.0
        %1851 = vmatmul.mubr.f32.gmra.mrb[0].mxu0 %v1775
        %v1852 = vpop.f32.mrb[0].mxu0
        %v1853 = vadd.f32 0.0, %v1852
        %v1854 = vpop.f32.mrb[0].mxu0
        %1855 = vmatprep.mubr.f32.mxu0 0.0
        %1856 = vmatmul.mubr.f32.gmra.mrb[0].mxu0 %v1778
        %v1857 = vpop.f32.mrb[0].mxu0
        %v1858 = vadd.f32 0.0, %v1857
        %v1859 = vpop.f32.mrb[0].mxu0
        %1860 = vdwg.mxu0
        %v1861 = vmul.f32 %v1853, 0.17677669
        %v1862 = vmul.f32 %v1858, 0.17677669
        %vm1863 = vcmask 80896
        %v1864 = vsel %vm1863, %v1861, -inf
        %1865 = vmax.xlane.f32.xlu0 %v1864
        %v1866 = vpop.xlane.xlu0 %1865
        %vm1867 = vcmask 74752
        %v1868 = vsel %vm1867, %v1862, -inf
        %1869 = vmax.xlane.f32.xlu0 %v1868
        %v1870 = vpop.xlane.xlu0 %1869
        %v1871 = vsub.f32 %v1861, %v1866
        %v1872 = vsub.f32 %v1862, %v1870
        %v1873 = vmul.f32 %v1871, 1.442695
        %v1874 = vpow.pop %v1873
        %v1875 = vmul.f32 %v1872, 1.442695
        %v1876 = vpow.pop %v1875
        %v1877 = vsel %vm1863, %v1874, 0.0
        %1878 = vadd.xlane.f32.xlu0 %v1877
        %v1879 = vpop.xlane.xlu0 %1878
        %v1880 = vsel %vm1867, %v1876, 0.0
        %1881 = vadd.xlane.f32.xlu0 %v1880
        %v1882 = vpop.xlane.xlu0 %1881
        %v1883 = vrcp.pop %v1879
        %v1884 = vmul.f32 %v1874, %v1883
        %v1885 = vrcp.pop %v1882
        %v1886 = vmul.f32 %v1876, %v1885
        %1887 = vrot.lane.b32.xlu0 %v1672, 96
        %v1888 = vpop.permute.xlu0 %1887
        %1889 = vrot.lane.b32.xlu0 %v1677, 96
        %v1890 = vpop.permute.xlu0 %1889
        %v1893 = vsel %vm1863, %v1884, 0
        %v1896 = vsel %vm1863, %v1886, 0
        %vm1898 = vcmask 1041408
        %v1899 = vsel %vm1898, %v1890, 0
        %1901 = vmatprep.subr.mxu0 0.0
        %1902 = vmatpush1.msra.mxu0 %v1888
        %1903 = vmatprep.subr.mxu0 0.0
        %1904 = vmatpush1.msra.mxu0 %v1899
        %1905 = vmatprep.subr.mxu0 0.0
        %1906 = vmatpush1.msra.mxu0 0.0
        %1907 = vmatprep.subr.mxu0 0.0
        %1908 = vmatpush1.msra.mxu0 0.0
        %1909 = vmatprep.subr.mxu0 0.0
        %1910 = vmatpush1.msra.mxu0 0.0
        %1911 = vmatprep.subr.mxu0 0.0
        %1912 = vmatpush1.msra.mxu0 0.0
        %1913 = vmatprep.subr.mxu0 0.0
        %1914 = vmatpush1.msra.mxu0 0.0
        %1915 = vmatprep.subr.mxu0 0.0
        %1916 = vmatpush1.msra.mxu0 0.0
        %1917 = vmatprep.subr.mxu0 0.0
        %1918 = vmatpush1.msra.mxu0 0.0
        %1919 = vmatprep.subr.mxu0 0.0
        %1920 = vmatpush1.msra.mxu0 0.0
        %1921 = vmatprep.subr.mxu0 0.0
        %1922 = vmatpush1.msra.mxu0 0.0
        %1923 = vmatprep.subr.mxu0 0.0
        %1924 = vmatpush1.msra.mxu0 0.0
        %1925 = vmatprep.subr.mxu0 0.0
        %1926 = vmatpush1.msra.mxu0 0.0
        %1927 = vmatprep.subr.mxu0 0.0
        %1928 = vmatpush1.msra.mxu0 0.0
        %1929 = vmatprep.subr.mxu0 0.0
        %1930 = vmatpush1.msra.mxu0 0.0
        %1931 = vmatprep.subr.mxu0 0.0
        %1932 = vmatpush1.msra.mxu0 0.0
        %1933 = vmatprep.subr.mxu0 0.0
        %1934 = vmatpush1.msra.mxu0 0.0
        %1935 = vmatprep.subr.mxu0 0.0
        %1936 = vmatpush1.msra.mxu0 0.0
        %1937 = vmatprep.subr.mxu0 0.0
        %1938 = vmatpush1.msra.mxu0 0.0
        %1939 = vmatprep.subr.mxu0 0.0
        %1940 = vmatpush1.msra.mxu0 0.0
        %1941 = vmatprep.subr.mxu0 0.0
        %1942 = vmatpush1.msra.mxu0 0.0
        %1943 = vmatprep.subr.mxu0 0.0
        %1944 = vmatpush1.msra.mxu0 0.0
        %1945 = vmatprep.subr.mxu0 0.0
        %1946 = vmatpush1.msra.mxu0 0.0
        %1947 = vmatprep.subr.mxu0 0.0
        %1948 = vmatpush1.msra.mxu0 0.0
        %1949 = vmatprep.subr.mxu0 0.0
        %1950 = vmatpush1.msra.mxu0 0.0
        %1951 = vmatprep.subr.mxu0 0.0
        %1952 = vmatpush1.msra.mxu0 0.0
        %1953 = vmatprep.subr.mxu0 0.0
        %1954 = vmatpush1.msra.mxu0 0.0
        %1955 = vmatprep.subr.mxu0 0.0
        %1956 = vmatpush1.msra.mxu0 0.0
        %1957 = vmatprep.subr.mxu0 0.0
        %1958 = vmatpush1.msra.mxu0 0.0
        %1959 = vmatprep.subr.mxu0 0.0
        %1960 = vmatpush1.msra.mxu0 0.0
        %1961 = vmatprep.subr.mxu0 0.0
        %1962 = vmatpush1.msra.mxu0 0.0
        %1963 = vmatprep.subr.mxu0 0.0
        %1964 = vmatpush1.msra.mxu0 0.0
        %1965 = vmatprep.mubr.f32.mxu0 0.0
        %1966 = vmatmul.mubr.f32.gmra.mrb[0].mxu0 %v1893
        %v1967 = vpop.f32.mrb[0].mxu0
        %v1968 = vadd.f32 0.0, %v1967
        %v1969 = vpop.f32.mrb[0].mxu0
        %1970 = vmatprep.mubr.f32.mxu0 0.0
        %1971 = vmatmul.mubr.f32.gmra.mrb[0].mxu0 %v1896
        %v1972 = vpop.f32.mrb[0].mxu0
        %v1973 = vadd.f32 0.0, %v1972
        %v1974 = vpop.f32.mrb[0].mxu0
        %1975 = vdwg.mxu0
        %v1976 = vld [vmem:[%s25] sm:$0xff]
        %v1977 = vld [vmem:[%s25 + $0x8] sm:$0xff]
        %v1978 = vld [vmem:[%s25 + $0x10] sm:$0xff]
        %v1979 = vld [vmem:[%s25 + $0x18] sm:$0xff]
        %v1980 = vld [vmem:[%s27] sm:$0x1]
        %v1982 = vlaneseq
        %v1983 = vshrl.u32 %v1982, 7
        %v1984 = vsub.s32 0, %v1983
        %v1985 = vrot.slane %v1980, %v1984
        %v1988 = vsel %vm1506, %v1968, 0
        %v1991 = vsel %vm1506, %v1973, 0
        %1993 = vmatprep.subr.mxu0 0.0
        %1994 = vmatpush1.msra.mxu0 %v1976
        %1995 = vmatprep.subr.mxu0 0.0
        %1996 = vmatpush1.msra.mxu0 %v1977
        %1997 = vmatprep.subr.mxu0 0.0
        %1998 = vmatpush1.msra.mxu0 %v1978
        %1999 = vmatprep.subr.mxu0 0.0
        %2000 = vmatpush1.msra.mxu0 %v1979
        %2001 = vmatprep.subr.mxu0 0.0
        %2002 = vmatpush1.msra.mxu0 0.0
        %2003 = vmatprep.subr.mxu0 0.0
        %2004 = vmatpush1.msra.mxu0 0.0
        %2005 = vmatprep.subr.mxu0 0.0
        %2006 = vmatpush1.msra.mxu0 0.0
        %2007 = vmatprep.subr.mxu0 0.0
        %2008 = vmatpush1.msra.mxu0 0.0
        %2009 = vmatprep.subr.mxu0 0.0
        %2010 = vmatpush1.msra.mxu0 0.0
        %2011 = vmatprep.subr.mxu0 0.0
        %2012 = vmatpush1.msra.mxu0 0.0
        %2013 = vmatprep.subr.mxu0 0.0
        %2014 = vmatpush1.msra.mxu0 0.0
        %2015 = vmatprep.subr.mxu0 0.0
        %2016 = vmatpush1.msra.mxu0 0.0
        %2017 = vmatprep.subr.mxu0 0.0
        %2018 = vmatpush1.msra.mxu0 0.0
        %2019 = vmatprep.subr.mxu0 0.0
        %2020 = vmatpush1.msra.mxu0 0.0
        %2021 = vmatprep.subr.mxu0 0.0
        %2022 = vmatpush1.msra.mxu0 0.0
        %2023 = vmatprep.subr.mxu0 0.0
        %2024 = vmatpush1.msra.mxu0 0.0
        %2025 = vmatprep.subr.mxu0 0.0
        %2026 = vmatpush1.msra.mxu0 0.0
        %2027 = vmatprep.subr.mxu0 0.0
        %2028 = vmatpush1.msra.mxu0 0.0
        %2029 = vmatprep.subr.mxu0 0.0
        %2030 = vmatpush1.msra.mxu0 0.0
        %2031 = vmatprep.subr.mxu0 0.0
        %2032 = vmatpush1.msra.mxu0 0.0
        %2033 = vmatprep.subr.mxu0 0.0
        %2034 = vmatpush1.msra.mxu0 0.0
        %2035 = vmatprep.subr.mxu0 0.0
        %2036 = vmatpush1.msra.mxu0 0.0
        %2037 = vmatprep.subr.mxu0 0.0
        %2038 = vmatpush1.msra.mxu0 0.0
        %2039 = vmatprep.subr.mxu0 0.0
        %2040 = vmatpush1.msra.mxu0 0.0
        %2041 = vmatprep.subr.mxu0 0.0
        %2042 = vmatpush1.msra.mxu0 0.0
        %2043 = vmatprep.subr.mxu0 0.0
        %2044 = vmatpush1.msra.mxu0 0.0
        %2045 = vmatprep.subr.mxu0 0.0
        %2046 = vmatpush1.msra.mxu0 0.0
        %2047 = vmatprep.subr.mxu0 0.0
        %2048 = vmatpush1.msra.mxu0 0.0
        %2049 = vmatprep.subr.mxu0 0.0
        %2050 = vmatpush1.msra.mxu0 0.0
        %2051 = vmatprep.subr.mxu0 0.0
        %2052 = vmatpush1.msra.mxu0 0.0
        %2053 = vmatprep.subr.mxu0 0.0
        %2054 = vmatpush1.msra.mxu0 0.0
        %2055 = vmatprep.subr.mxu0 0.0
        %2056 = vmatpush1.msra.mxu0 0.0
        %2057 = vmatprep.mubr.f32.mxu0 0.0
        %2058 = vmatmul.mubr.f32.gmra.mrb[0].mxu0 %v1988
        %v2059 = vpop.f32.mrb[0].mxu0
        %v2060 = vadd.f32 %v1985, %v2059
        %v2061 = vpop.f32.mrb[0].mxu0
        %2062 = vmatprep.mubr.f32.mxu0 0.0
        %2063 = vmatmul.mubr.f32.gmra.mrb[0].mxu0 %v1991
        %v2064 = vpop.f32.mrb[0].mxu0
        %v2065 = vadd.f32 %v1985, %v2064
        %v2066 = vpop.f32.mrb[0].mxu0
        %2067 = vdwg.mxu0
        %v2068 = vadd.f32 %v2060, %v1386
        %v2069 = vadd.f32 %v2065, %v1387
        %2070 = vrot.lane.b32.xlu0 %v1580, 96
        %v2071 = vpop.permute.xlu0 %2070
        %2072 = vrot.lane.b32.xlu0 %v1585, 96
        %v2073 = vpop.permute.xlu0 %2072
        %v2074 = vsel %vm1506, %v2071, 0
        %v2076 = vsel %vm1506, %v2073, 0
        %v2079 = vsel %vm1506, %v1766, 0
        %v2082 = vsel %vm1506, %v1771, 0
        %2084 = vmatprep.subr.mxu0 0.0
        %2085 = vmatpush1.xpose.msra.mxu0 %v2079
        %2086 = vmatprep.subr.mxu0 0.0
        %2087 = vmatpush1.xpose.msra.mxu0 %v2082
        %2088 = vmatprep.subr.mxu0 0.0
        %2089 = vmatpush1.xpose.msra.mxu0 0.0
        %2090 = vmatprep.subr.mxu0 0.0
        %2091 = vmatpush1.xpose.msra.mxu0 0.0
        %2092 = vmatprep.subr.mxu0 0.0
        %2093 = vmatpush1.xpose.msra.mxu0 0.0
        %2094 = vmatprep.subr.mxu0 0.0
        %2095 = vmatpush1.xpose.msra.mxu0 0.0
        %2096 = vmatprep.subr.mxu0 0.0
        %2097 = vmatpush1.xpose.msra.mxu0 0.0
        %2098 = vmatprep.subr.mxu0 0.0
        %2099 = vmatpush1.xpose.msra.mxu0 0.0
        %2100 = vmatprep.subr.mxu0 0.0
        %2101 = vmatpush1.xpose.msra.mxu0 0.0
        %2102 = vmatprep.subr.mxu0 0.0
        %2103 = vmatpush1.xpose.msra.mxu0 0.0
        %2104 = vmatprep.subr.mxu0 0.0
        %2105 = vmatpush1.xpose.msra.mxu0 0.0
        %2106 = vmatprep.subr.mxu0 0.0
        %2107 = vmatpush1.xpose.msra.mxu0 0.0
        %2108 = vmatprep.subr.mxu0 0.0
        %2109 = vmatpush1.xpose.msra.mxu0 0.0
        %2110 = vmatprep.subr.mxu0 0.0
        %2111 = vmatpush1.xpose.msra.mxu0 0.0
        %2112 = vmatprep.subr.mxu0 0.0
        %2113 = vmatpush1.xpose.msra.mxu0 0.0
        %2114 = vmatprep.subr.mxu0 0.0
        %2115 = vmatpush1.xpose.msra.mxu0 0.0
        %2116 = vmatprep.subr.mxu0 0.0
        %2117 = vmatpush1.xpose.msra.mxu0 0.0
        %2118 = vmatprep.subr.mxu0 0.0
        %2119 = vmatpush1.xpose.msra.mxu0 0.0
        %2120 = vmatprep.subr.mxu0 0.0
        %2121 = vmatpush1.xpose.msra.mxu0 0.0
        %2122 = vmatprep.subr.mxu0 0.0
        %2123 = vmatpush1.xpose.msra.mxu0 0.0
        %2124 = vmatprep.subr.mxu0 0.0
        %2125 = vmatpush1.xpose.msra.mxu0 0.0
        %2126 = vmatprep.subr.mxu0 0.0
        %2127 = vmatpush1.xpose.msra.mxu0 0.0
        %2128 = vmatprep.subr.mxu0 0.0
        %2129 = vmatpush1.xpose.msra.mxu0 0.0
        %2130 = vmatprep.subr.mxu0 0.0
        %2131 = vmatpush1.xpose.msra.mxu0 0.0
        %2132 = vmatprep.subr.mxu0 0.0
        %2133 = vmatpush1.xpose.msra.mxu0 0.0
        %2134 = vmatprep.subr.mxu0 0.0
        %2135 = vmatpush1.xpose.msra.mxu0 0.0
        %2136 = vmatprep.subr.mxu0 0.0
        %2137 = vmatpush1.xpose.msra.mxu0 0.0
        %2138 = vmatprep.subr.mxu0 0.0
        %2139 = vmatpush1.xpose.msra.mxu0 0.0
        %2140 = vmatprep.subr.mxu0 0.0
        %2141 = vmatpush1.xpose.msra.mxu0 0.0
        %2142 = vmatprep.subr.mxu0 0.0
        %2143 = vmatpush1.xpose.msra.mxu0 0.0
        %2144 = vmatprep.subr.mxu0 0.0
        %2145 = vmatpush1.xpose.msra.mxu0 0.0
        %2146 = vmatprep.subr.mxu0 0.0
        %2147 = vmatpush1.xpose.msra.mxu0 0.0
        %2148 = vmatprep.mubr.f32.mxu0 0.0
        %2149 = vmatmul.mubr.f32.gmra.mrb[0].mxu0 %v2074
        %v2150 = vpop.f32.mrb[0].mxu0
        %v2151 = vadd.f32 0.0, %v2150
        %v2152 = vpop.f32.mrb[0].mxu0
        %2153 = vmatprep.mubr.f32.mxu0 0.0
        %2154 = vmatmul.mubr.f32.gmra.mrb[0].mxu0 %v2076
        %v2155 = vpop.f32.mrb[0].mxu0
        %v2156 = vadd.f32 0.0, %v2155
        %v2157 = vpop.f32.mrb[0].mxu0
        %2158 = vdwg.mxu0
        %v2159 = vmul.f32 %v2151, 0.17677669
        %v2160 = vmul.f32 %v2156, 0.17677669
        %v2161 = vsel %vm1863, %v2159, -inf
        %2162 = vmax.xlane.f32.xlu0 %v2161
        %v2163 = vpop.xlane.xlu0 %2162
        %v2164 = vsel %vm1867, %v2160, -inf
        %2165 = vmax.xlane.f32.xlu0 %v2164
        %v2166 = vpop.xlane.xlu0 %2165
        %v2167 = vsub.f32 %v2159, %v2163
        %v2168 = vsub.f32 %v2160, %v2166
        %v2169 = vmul.f32 %v2167, 1.442695
        %v2170 = vpow.pop %v2169
        %v2171 = vmul.f32 %v2168, 1.442695
        %v2172 = vpow.pop %v2171
        %v2173 = vsel %vm1863, %v2170, 0.0
        %2174 = vadd.xlane.f32.xlu0 %v2173
        %v2175 = vpop.xlane.xlu0 %2174
        %v2176 = vsel %vm1867, %v2172, 0.0
        %2177 = vadd.xlane.f32.xlu0 %v2176
        %v2178 = vpop.xlane.xlu0 %2177
        %v2179 = vrcp.pop %v2175
        %v2180 = vmul.f32 %v2170, %v2179
        %v2181 = vrcp.pop %v2178
        %v2182 = vmul.f32 %v2172, %v2181
        %2183 = vrot.lane.b32.xlu0 %v1766, 96
        %v2184 = vpop.permute.xlu0 %2183
        %2185 = vrot.lane.b32.xlu0 %v1771, 96
        %v2186 = vpop.permute.xlu0 %2185
        %v2189 = vsel %vm1863, %v2180, 0
        %v2192 = vsel %vm1863, %v2182, 0
        %v2194 = vsel %vm1898, %v2186, 0
        %2196 = vmatprep.subr.mxu0 0.0
        %2197 = vmatpush1.msra.mxu0 %v2184
        %2198 = vmatprep.subr.mxu0 0.0
        %2199 = vmatpush1.msra.mxu0 %v2194
        %2200 = vmatprep.subr.mxu0 0.0
        %2201 = vmatpush1.msra.mxu0 0.0
        %2202 = vmatprep.subr.mxu0 0.0
        %2203 = vmatpush1.msra.mxu0 0.0
        %2204 = vmatprep.subr.mxu0 0.0
        %2205 = vmatpush1.msra.mxu0 0.0
        %2206 = vmatprep.subr.mxu0 0.0
        %2207 = vmatpush1.msra.mxu0 0.0
        %2208 = vmatprep.subr.mxu0 0.0
        %2209 = vmatpush1.msra.mxu0 0.0
        %2210 = vmatprep.subr.mxu0 0.0
        %2211 = vmatpush1.msra.mxu0 0.0
        %2212 = vmatprep.subr.mxu0 0.0
        %2213 = vmatpush1.msra.mxu0 0.0
        %2214 = vmatprep.subr.mxu0 0.0
        %2215 = vmatpush1.msra.mxu0 0.0
        %2216 = vmatprep.subr.mxu0 0.0
        %2217 = vmatpush1.msra.mxu0 0.0
        %2218 = vmatprep.subr.mxu0 0.0
        %2219 = vmatpush1.msra.mxu0 0.0
        %2220 = vmatprep.subr.mxu0 0.0
        %2221 = vmatpush1.msra.mxu0 0.0
        %2222 = vmatprep.subr.mxu0 0.0
        %2223 = vmatpush1.msra.mxu0 0.0
        %2224 = vmatprep.subr.mxu0 0.0
        %2225 = vmatpush1.msra.mxu0 0.0
        %2226 = vmatprep.subr.mxu0 0.0
        %2227 = vmatpush1.msra.mxu0 0.0
        %2228 = vmatprep.subr.mxu0 0.0
        %2229 = vmatpush1.msra.mxu0 0.0
        %2230 = vmatprep.subr.mxu0 0.0
        %2231 = vmatpush1.msra.mxu0 0.0
        %2232 = vmatprep.subr.mxu0 0.0
        %2233 = vmatpush1.msra.mxu0 0.0
        %2234 = vmatprep.subr.mxu0 0.0
        %2235 = vmatpush1.msra.mxu0 0.0
        %2236 = vmatprep.subr.mxu0 0.0
        %2237 = vmatpush1.msra.mxu0 0.0
        %2238 = vmatprep.subr.mxu0 0.0
        %2239 = vmatpush1.msra.mxu0 0.0
        %2240 = vmatprep.subr.mxu0 0.0
        %2241 = vmatpush1.msra.mxu0 0.0
        %2242 = vmatprep.subr.mxu0 0.0
        %2243 = vmatpush1.msra.mxu0 0.0
        %2244 = vmatprep.subr.mxu0 0.0
        %2245 = vmatpush1.msra.mxu0 0.0
        %2246 = vmatprep.subr.mxu0 0.0
        %2247 = vmatpush1.msra.mxu0 0.0
        %2248 = vmatprep.subr.mxu0 0.0
        %2249 = vmatpush1.msra.mxu0 0.0
        %2250 = vmatprep.subr.mxu0 0.0
        %2251 = vmatpush1.msra.mxu0 0.0
        %2252 = vmatprep.subr.mxu0 0.0
        %2253 = vmatpush1.msra.mxu0 0.0
        %2254 = vmatprep.subr.mxu0 0.0
        %2255 = vmatpush1.msra.mxu0 0.0
        %2256 = vmatprep.subr.mxu0 0.0
        %2257 = vmatpush1.msra.mxu0 0.0
        %2258 = vmatprep.subr.mxu0 0.0
        %2259 = vmatpush1.msra.mxu0 0.0
        %2260 = vmatprep.mubr.f32.mxu0 0.0
        %2261 = vmatmul.mubr.f32.gmra.mrb[0].mxu0 %v2189
        %v2262 = vpop.f32.mrb[0].mxu0
        %v2263 = vadd.f32 0.0, %v2262
        %v2264 = vpop.f32.mrb[0].mxu0
        %2265 = vmatprep.mubr.f32.mxu0 0.0
        %2266 = vmatmul.mubr.f32.gmra.mrb[0].mxu0 %v2192
        %v2267 = vpop.f32.mrb[0].mxu0
        %v2268 = vadd.f32 0.0, %v2267
        %v2269 = vpop.f32.mrb[0].mxu0
        %2270 = vdwg.mxu0
        %v2271 = vld [vmem:[%s33] sm:$0xff]
        %v2272 = vld [vmem:[%s33 + $0x8] sm:$0xff]
        %v2273 = vld [vmem:[%s33 + $0x10] sm:$0xff]
        %v2274 = vld [vmem:[%s33 + $0x18] sm:$0xff]
        %v2275 = vld [vmem:[%s35] sm:$0x1]
        %v2277 = vlaneseq
        %v2278 = vshrl.u32 %v2277, 7
        %v2279 = vsub.s32 0, %v2278
        %v2280 = vrot.slane %v2275, %v2279
        %v2283 = vsel %vm1506, %v2263, 0
        %v2286 = vsel %vm1506, %v2268, 0
        %2288 = vmatprep.subr.mxu0 0.0
        %2289 = vmatpush1.msra.mxu0 %v2271
        %2290 = vmatprep.subr.mxu0 0.0
        %2291 = vmatpush1.msra.mxu0 %v2272
        %2292 = vmatprep.subr.mxu0 0.0
        %2293 = vmatpush1.msra.mxu0 %v2273
        %2294 = vmatprep.subr.mxu0 0.0
        %2295 = vmatpush1.msra.mxu0 %v2274
        %2296 = vmatprep.subr.mxu0 0.0
        %2297 = vmatpush1.msra.mxu0 0.0
        %2298 = vmatprep.subr.mxu0 0.0
        %2299 = vmatpush1.msra.mxu0 0.0
        %2300 = vmatprep.subr.mxu0 0.0
        %2301 = vmatpush1.msra.mxu0 0.0
        %2302 = vmatprep.subr.mxu0 0.0
        %2303 = vmatpush1.msra.mxu0 0.0
        %2304 = vmatprep.subr.mxu0 0.0
        %2305 = vmatpush1.msra.mxu0 0.0
        %2306 = vmatprep.subr.mxu0 0.0
        %2307 = vmatpush1.msra.mxu0 0.0
        %2308 = vmatprep.subr.mxu0 0.0
        %2309 = vmatpush1.msra.mxu0 0.0
        %2310 = vmatprep.subr.mxu0 0.0
        %2311 = vmatpush1.msra.mxu0 0.0
        %2312 = vmatprep.subr.mxu0 0.0
        %2313 = vmatpush1.msra.mxu0 0.0
        %2314 = vmatprep.subr.mxu0 0.0
        %2315 = vmatpush1.msra.mxu0 0.0
        %2316 = vmatprep.subr.mxu0 0.0
        %2317 = vmatpush1.msra.mxu0 0.0
        %2318 = vmatprep.subr.mxu0 0.0
        %2319 = vmatpush1.msra.mxu0 0.0
        %2320 = vmatprep.subr.mxu0 0.0
        %2321 = vmatpush1.msra.mxu0 0.0
        %2322 = vmatprep.subr.mxu0 0.0
        %2323 = vmatpush1.msra.mxu0 0.0
        %2324 = vmatprep.subr.mxu0 0.0
        %2325 = vmatpush1.msra.mxu0 0.0
        %2326 = vmatprep.subr.mxu0 0.0
        %2327 = vmatpush1.msra.mxu0 0.0
        %2328 = vmatprep.subr.mxu0 0.0
        %2329 = vmatpush1.msra.mxu0 0.0
        %2330 = vmatprep.subr.mxu0 0.0
        %2331 = vmatpush1.msra.mxu0 0.0
        %2332 = vmatprep.subr.mxu0 0.0
        %2333 = vmatpush1.msra.mxu0 0.0
        %2334 = vmatprep.subr.mxu0 0.0
        %2335 = vmatpush1.msra.mxu0 0.0
        %2336 = vmatprep.subr.mxu0 0.0
        %2337 = vmatpush1.msra.mxu0 0.0
        %2338 = vmatprep.subr.mxu0 0.0
        %2339 = vmatpush1.msra.mxu0 0.0
        %2340 = vmatprep.subr.mxu0 0.0
        %2341 = vmatpush1.msra.mxu0 0.0
        %2342 = vmatprep.subr.mxu0 0.0
        %2343 = vmatpush1.msra.mxu0 0.0
        %2344 = vmatprep.subr.mxu0 0.0
        %2345 = vmatpush1.msra.mxu0 0.0
        %2346 = vmatprep.subr.mxu0 0.0
        %2347 = vmatpush1.msra.mxu0 0.0
        %2348 = vmatprep.subr.mxu0 0.0
        %2349 = vmatpush1.msra.mxu0 0.0
        %2350 = vmatprep.subr.mxu0 0.0
        %2351 = vmatpush1.msra.mxu0 0.0
        %2352 = vmatprep.mubr.f32.mxu0 0.0
        %2353 = vmatmul.mubr.f32.gmra.mrb[0].mxu0 %v2283
        %v2354 = vpop.f32.mrb[0].mxu0
        %v2355 = vadd.f32 %v2280, %v2354
        %v2356 = vpop.f32.mrb[0].mxu0
        %2357 = vmatprep.mubr.f32.mxu0 0.0
        %2358 = vmatmul.mubr.f32.gmra.mrb[0].mxu0 %v2286
        %v2359 = vpop.f32.mrb[0].mxu0
        %v2360 = vadd.f32 %v2280, %v2359
        %v2361 = vpop.f32.mrb[0].mxu0
        %2362 = vdwg.mxu0
        %v2363 = vadd.f32 %v2355, %v1386
        %v2364 = vadd.f32 %v2360, %v1387
        %2367 = vrot.lane.b32.xlu0 %v2068, 32
        %v2368 = vpop.permute.xlu0 %2367
        %2369 = vrot.lane.b32.xlu0 %v2069, 32
        %v2370 = vpop.permute.xlu0 %2369
        %2375 = vrot.lane.b32.xlu0 %v2363, 64
        %v2376 = vpop.permute.xlu0 %2375
        %2377 = vrot.lane.b32.xlu0 %v2364, 64
        %v2378 = vpop.permute.xlu0 %2377
        %v2381 = vsel %vm1506, %v1386, %v2368
        %v2382 = vsel %vm1506, %v1387, %v2370
        %vm2383 = vcmask 523264
        %v2384 = vsel %vm2383, %v2381, %v2376
        %v2385 = vsel %vm2383, %v2382, %v2378
        %v2386 = vld [vmem:[%s37] sm:$0xff]
        %v2387 = vld [vmem:[%s37 + $0x8] sm:$0xff]
        %v2388 = vld [vmem:[%s37 + $0x10] sm:$0xff]
        %v2389 = vld [vmem:[%s37 + $0x18] sm:$0xff]
        %v2390 = vld [vmem:[%s37 + $0x20] sm:$0xff]
        %v2391 = vld [vmem:[%s37 + $0x28] sm:$0xff]
        %v2392 = vld [vmem:[%s37 + $0x30] sm:$0xff]
        %v2393 = vld [vmem:[%s37 + $0x38] sm:$0xff]
        %v2394 = vld [vmem:[%s37 + $0x40] sm:$0xff]
        %v2395 = vld [vmem:[%s37 + $0x48] sm:$0xff]
        %v2396 = vld [vmem:[%s37 + $0x50] sm:$0xff]
        %v2397 = vld [vmem:[%s37 + $0x58] sm:$0xff]
        %v2398 = vld [vmem:[%s39] sm:$0x1]
        %v2400 = vlaneseq
        %v2401 = vshrl.u32 %v2400, 7
        %v2402 = vsub.s32 0, %v2401
        %v2403 = vrot.slane %v2398, %v2402
        %vm2405 = vcmask 785408
        %v2407 = vsel %vm2405, %v2384, 0
        %v2410 = vsel %vm2405, %v2385, 0
        %2412 = vmatprep.subr.mxu0 0.0
        %2413 = vmatpush1.msra.mxu0 %v2386
        %2414 = vmatprep.subr.mxu0 0.0
        %2415 = vmatpush1.msra.mxu0 %v2387
        %2416 = vmatprep.subr.mxu0 0.0
        %2417 = vmatpush1.msra.mxu0 %v2388
        %2418 = vmatprep.subr.mxu0 0.0
        %2419 = vmatpush1.msra.mxu0 %v2389
        %2420 = vmatprep.subr.mxu0 0.0
        %2421 = vmatpush1.msra.mxu0 %v2390
        %2422 = vmatprep.subr.mxu0 0.0
        %2423 = vmatpush1.msra.mxu0 %v2391
        %2424 = vmatprep.subr.mxu0 0.0
        %2425 = vmatpush1.msra.mxu0 %v2392
        %2426 = vmatprep.subr.mxu0 0.0
        %2427 = vmatpush1.msra.mxu0 %v2393
        %2428 = vmatprep.subr.mxu0 0.0
        %2429 = vmatpush1.msra.mxu0 %v2394
        %2430 = vmatprep.subr.mxu0 0.0
        %2431 = vmatpush1.msra.mxu0 %v2395
        %2432 = vmatprep.subr.mxu0 0.0
        %2433 = vmatpush1.msra.mxu0 %v2396
        %2434 = vmatprep.subr.mxu0 0.0
        %2435 = vmatpush1.msra.mxu0 %v2397
        %2436 = vmatprep.subr.mxu0 0.0
        %2437 = vmatpush1.msra.mxu0 0.0
        %2438 = vmatprep.subr.mxu0 0.0
        %2439 = vmatpush1.msra.mxu0 0.0
        %2440 = vmatprep.subr.mxu0 0.0
        %2441 = vmatpush1.msra.mxu0 0.0
        %2442 = vmatprep.subr.mxu0 0.0
        %2443 = vmatpush1.msra.mxu0 0.0
        %2444 = vmatprep.subr.mxu0 0.0
        %2445 = vmatpush1.msra.mxu0 0.0
        %2446 = vmatprep.subr.mxu0 0.0
        %2447 = vmatpush1.msra.mxu0 0.0
        %2448 = vmatprep.subr.mxu0 0.0
        %2449 = vmatpush1.msra.mxu0 0.0
        %2450 = vmatprep.subr.mxu0 0.0
        %2451 = vmatpush1.msra.mxu0 0.0
        %2452 = vmatprep.subr.mxu0 0.0
        %2453 = vmatpush1.msra.mxu0 0.0
        %2454 = vmatprep.subr.mxu0 0.0
        %2455 = vmatpush1.msra.mxu0 0.0
        %2456 = vmatprep.subr.mxu0 0.0
        %2457 = vmatpush1.msra.mxu0 0.0
        %2458 = vmatprep.subr.mxu0 0.0
        %2459 = vmatpush1.msra.mxu0 0.0
        %2460 = vmatprep.subr.mxu0 0.0
        %2461 = vmatpush1.msra.mxu0 0.0
        %2462 = vmatprep.subr.mxu0 0.0
        %2463 = vmatpush1.msra.mxu0 0.0
        %2464 = vmatprep.subr.mxu0 0.0
        %2465 = vmatpush1.msra.mxu0 0.0
        %2466 = vmatprep.subr.mxu0 0.0
        %2467 = vmatpush1.msra.mxu0 0.0
        %2468 = vmatprep.subr.mxu0 0.0
        %2469 = vmatpush1.msra.mxu0 0.0
        %2470 = vmatprep.subr.mxu0 0.0
        %2471 = vmatpush1.msra.mxu0 0.0
        %2472 = vmatprep.subr.mxu0 0.0
        %2473 = vmatpush1.msra.mxu0 0.0
        %2474 = vmatprep.subr.mxu0 0.0
        %2475 = vmatpush1.msra.mxu0 0.0
        %2476 = vmatprep.mubr.f32.mxu0 0.0
        %2477 = vmatmul.mubr.f32.gmra.mrb[0].mxu0 %v2407
        %v2478 = vpop.f32.mrb[0].mxu0
        %v2479 = vadd.f32 %v2403, %v2478
        %v2480 = vpop.f32.mrb[0].mxu0
        %2481 = vmatprep.mubr.f32.mxu0 0.0
        %2482 = vmatmul.mubr.f32.gmra.mrb[0].mxu0 %v2410
        %v2483 = vpop.f32.mrb[0].mxu0
        %v2484 = vadd.f32 %v2403, %v2483
        %v2485 = vpop.f32.mrb[0].mxu0
        %2486 = vdwg.mxu0
        %v2487 = vtanh.pop %v2479
        %v2488 = vtanh.pop %v2484
        %v2489 = vld [vmem:[%s41] sm:$0xff]
        %v2490 = vld [vmem:[%s41 + $0x8] sm:$0xff]
        %v2491 = vld [vmem:[%s41 + $0x10] sm:$0xff]
        %v2492 = vld [vmem:[%s41 + $0x18] sm:$0xff]
        %v2493 = vld [vmem:[%s41 + $0x20] sm:$0xff]
        %v2494 = vld [vmem:[%s41 + $0x28] sm:$0xff]
        %v2495 = vld [vmem:[%s41 + $0x30] sm:$0xff]
        %v2496 = vld [vmem:[%s41 + $0x38] sm:$0xff]
        %v2497 = vld [vmem:[%s41 + $0x40] sm:$0xff]
        %v2498 = vld [vmem:[%s41 + $0x48] sm:$0xff]
        %v2499 = vld [vmem:[%s41 + $0x50] sm:$0xff]
        %v2500 = vld [vmem:[%s41 + $0x58] sm:$0xff]
        %v2501 = vld [vmem:[%s43] sm:$0x1]
        %v2503 = vlaneseq
        %v2504 = vshrl.u32 %v2503, 7
        %v2505 = vsub.s32 0, %v2504
        %v2506 = vrot.slane %v2501, %v2505
        %2508 = vmatprep.subr.mxu0 0.0
        %2509 = vmatpush1.msra.mxu0 %v2489
        %2510 = vmatprep.subr.mxu0 0.0
        %2511 = vmatpush1.msra.mxu0 %v2490
        %2512 = vmatprep.subr.mxu0 0.0
        %2513 = vmatpush1.msra.mxu0 %v2491
        %2514 = vmatprep.subr.mxu0 0.0
        %2515 = vmatpush1.msra.mxu0 %v2492
        %2516 = vmatprep.subr.mxu0 0.0
        %2517 = vmatpush1.msra.mxu0 %v2493
        %2518 = vmatprep.subr.mxu0 0.0
        %2519 = vmatpush1.msra.mxu0 %v2494
        %2520 = vmatprep.subr.mxu0 0.0
        %2521 = vmatpush1.msra.mxu0 %v2495
        %2522 = vmatprep.subr.mxu0 0.0
        %2523 = vmatpush1.msra.mxu0 %v2496
        %2524 = vmatprep.subr.mxu0 0.0
        %2525 = vmatpush1.msra.mxu0 %v2497
        %2526 = vmatprep.subr.mxu0 0.0
        %2527 = vmatpush1.msra.mxu0 %v2498
        %2528 = vmatprep.subr.mxu0 0.0
        %2529 = vmatpush1.msra.mxu0 %v2499
        %2530 = vmatprep.subr.mxu0 0.0
        %2531 = vmatpush1.msra.mxu0 %v2500
        %2532 = vmatprep.subr.mxu0 0.0
        %2533 = vmatpush1.msra.mxu0 0.0
        %2534 = vmatprep.subr.mxu0 0.0
        %2535 = vmatpush1.msra.mxu0 0.0
        %2536 = vmatprep.subr.mxu0 0.0
        %2537 = vmatpush1.msra.mxu0 0.0
        %2538 = vmatprep.subr.mxu0 0.0
        %2539 = vmatpush1.msra.mxu0 0.0
        %2540 = vmatprep.subr.mxu0 0.0
        %2541 = vmatpush1.msra.mxu0 0.0
        %2542 = vmatprep.subr.mxu0 0.0
        %2543 = vmatpush1.msra.mxu0 0.0
        %2544 = vmatprep.subr.mxu0 0.0
        %2545 = vmatpush1.msra.mxu0 0.0
        %2546 = vmatprep.subr.mxu0 0.0
        %2547 = vmatpush1.msra.mxu0 0.0
        %2548 = vmatprep.subr.mxu0 0.0
        %2549 = vmatpush1.msra.mxu0 0.0
        %2550 = vmatprep.subr.mxu0 0.0
        %2551 = vmatpush1.msra.mxu0 0.0
        %2552 = vmatprep.subr.mxu0 0.0
        %2553 = vmatpush1.msra.mxu0 0.0
        %2554 = vmatprep.subr.mxu0 0.0
        %2555 = vmatpush1.msra.mxu0 0.0
        %2556 = vmatprep.subr.mxu0 0.0
        %2557 = vmatpush1.msra.mxu0 0.0
        %2558 = vmatprep.subr.mxu0 0.0
        %2559 = vmatpush1.msra.mxu0 0.0
        %2560 = vmatprep.subr.mxu0 0.0
        %2561 = vmatpush1.msra.mxu0 0.0
        %2562 = vmatprep.subr.mxu0 0.0
        %2563 = vmatpush1.msra.mxu0 0.0
        %2564 = vmatprep.subr.mxu0 0.0
        %2565 = vmatpush1.msra.mxu0 0.0
        %2566 = vmatprep.subr.mxu0 0.0
        %2567 = vmatpush1.msra.mxu0 0.0
        %2568 = vmatprep.subr.mxu0 0.0
        %2569 = vmatpush1.msra.mxu0 0.0
        %2570 = vmatprep.subr.mxu0 0.0
        %2571 = vmatpush1.msra.mxu0 0.0
        %2572 = vmatprep.mubr.f32.mxu0 0.0
        %2573 = vmatmul.mubr.f32.gmra.mrb[0].mxu0 %v2407
        %v2574 = vpop.f32.mrb[0].mxu0
        %v2575 = vadd.f32 %v2506, %v2574
        %v2576 = vpop.f32.mrb[0].mxu0
        %2577 = vmatprep.mubr.f32.mxu0 0.0
        %2578 = vmatmul.mubr.f32.gmra.mrb[0].mxu0 %v2410
        %v2579 = vpop.f32.mrb[0].mxu0
        %v2580 = vadd.f32 %v2506, %v2579
        %v2581 = vpop.f32.mrb[0].mxu0
        %2582 = vdwg.mxu0
        %vm2583 = vcmask 23552
        %v2584 = vsel %vm2583, %v2575, -inf
        %2585 = vmax.xlane.f32.xlu0 %v2584
        %v2586 = vpop.xlane.xlu0 %2585
        %vm2587 = vcmask 17408
        %v2588 = vsel %vm2587, %v2580, -inf
        %2589 = vmax.xlane.f32.xlu0 %v2588
        %v2590 = vpop.xlane.xlu0 %2589
        %v2591 = vsub.f32 %v2575, %v2586
        %v2592 = vsub.f32 %v2580, %v2590
        %v2593 = vmul.f32 %v2591, 1.442695
        %v2594 = vpow.pop %v2593
        %v2595 = vmul.f32 %v2592, 1.442695
        %v2596 = vpow.pop %v2595
        %v2597 = vsel %vm2583, %v2594, 0.0
        %2598 = vadd.xlane.f32.xlu0 %v2597
        %v2599 = vpop.xlane.xlu0 %2598
        %v2600 = vsel %vm2587, %v2596, 0.0
        %2601 = vadd.xlane.f32.xlu0 %v2600
        %v2602 = vpop.xlane.xlu0 %2601
        %v2603 = vrcp.pop %v2599
        %v2604 = vmul.f32 %v2594, %v2603
        %v2605 = vrcp.pop %v2602
        %v2606 = vmul.f32 %v2596, %v2605
        %2608 = vset.pattern.permute.xlu0 0
        %2609 = vperm.xlu0 %2608, %v2604
        %v2610 = vpop.permute.xlu0 %2609
        %2613 = vset.pattern.permute.xlu0 0
        %2614 = vperm.xlu0 %2613, %v2606
        %v2615 = vpop.permute.xlu0 %2614
        %v2617 = vmul.f32 %v2610, %v2487
        %v2618 = vmul.f32 %v2615, %v2488
        %2619 = vset.pattern.permute.xlu0 1
        %2620 = vperm.xlu0 %2619, %v2604
        %v2621 = vpop.permute.xlu0 %2620
        %2623 = vset.pattern.permute.xlu0 1
        %2624 = vperm.xlu0 %2623, %v2606
        %v2625 = vpop.permute.xlu0 %2624
        %v2627 = vmul.f32 %v2621, %v2487
        %v2628 = vmul.f32 %v2625, %v2488
        %2631 = vrot.lane.b32.xlu0 %v2627, 96
        %v2632 = vpop.permute.xlu0 %2631
        %2633 = vrot.lane.b32.xlu0 %v2628, 96
        %v2634 = vpop.permute.xlu0 %2633
        %v2637 = vadd.f32 %v2617, %v2632
        %v2638 = vadd.f32 %v2618, %v2634
        %2639 = vset.pattern.permute.xlu0 2
        %2640 = vperm.xlu0 %2639, %v2604
        %v2641 = vpop.permute.xlu0 %2640
        %2643 = vset.pattern.permute.xlu0 2
        %2644 = vperm.xlu0 %2643, %v2606
        %v2645 = vpop.permute.xlu0 %2644
        %v2647 = vmul.f32 %v2641, %v2487
        %v2648 = vmul.f32 %v2645, %v2488
        %2651 = vrot.lane.b32.xlu0 %v2647, 64
        %v2652 = vpop.permute.xlu0 %2651
        %2653 = vrot.lane.b32.xlu0 %v2648, 64
        %v2654 = vpop.permute.xlu0 %2653
        %v2657 = vadd.f32 %v2637, %v2652
        %v2658 = vadd.f32 %v2638, %v2654
        %v2659 = vsel %vm1506, %v2657, inf
        %vm2660 = vcmask 254976
        %v2661 = vsel %vm2660, %v2658, inf
        %v2662 = vmin.f32 %v2659, %v2661
        %2663 = vmin.xlane.f32.xlu0 %v2662
        %v2664 = vpop.xlane.xlu0 %2663
        %v2665 = vrot.slane %v2664, 4
        %v2666 = vmin.f32 %v2664, %v2665
        %v2667 = vrot.slane %v2666, 2
        %v2668 = vmin.f32 %v2666, %v2667
        %v2669 = vrot.slane %v2668, 1
        %v2670 = vmin.f32 %v2668, %v2669
        %s2671 = vtos %v2670
        %v2672 = vld [vmem:[%s1370] sm:$0xff]
        %v2673 = vlaneseq
        %v2674 = vshrl.u32 %v2673, 7
        %v2675 = vsub.s32 0, %v2674
        %v2676 = vrot.slane %v2672, %v2675
        %2678 = vbcast.lane.b32.xlu0 %v2676, 256
        %v2679 = vpop.permute.xlu0 %2678
        %s2681 = sor.u32 256, 8
        %2682 = vbcast.lane.b32.xlu0 %v2676, %s2681
        %v2683 = vpop.permute.xlu0 %2682
        %v2684 = vlaneseq
        %v2685 = vshrl.u32 %v2684, 7
        %v2686 = vsub.s32 1, %v2685
        %v2687 = vrot.slane %v2672, %v2686
        %2689 = vbcast.lane.b32.xlu0 %v2687, 256
        %v2690 = vpop.permute.xlu0 %2689
        %s2692 = sor.u32 256, 8
        %2693 = vbcast.lane.b32.xlu0 %v2687, %s2692
        %v2694 = vpop.permute.xlu0 %2693
        %v2695 = vlaneseq
        %v2696 = vshrl.u32 %v2695, 7
        %v2697 = vsub.s32 2, %v2696
        %v2698 = vrot.slane %v2672, %v2697
        %2700 = vbcast.lane.b32.xlu0 %v2698, 256
        %v2701 = vpop.permute.xlu0 %2700
        %s2703 = sor.u32 256, 8
        %2704 = vbcast.lane.b32.xlu0 %v2698, %s2703
        %v2705 = vpop.permute.xlu0 %2704
        %v2706 = vlaneseq
        %v2707 = vshrl.u32 %v2706, 7
        %v2708 = vsub.s32 3, %v2707
        %v2709 = vrot.slane %v2672, %v2708
        %2711 = vbcast.lane.b32.xlu0 %v2709, 256
        %v2712 = vpop.permute.xlu0 %2711
        %s2714 = sor.u32 256, 8
        %2715 = vbcast.lane.b32.xlu0 %v2709, %s2714
        %v2716 = vpop.permute.xlu0 %2715
        %v2717 = vlaneseq
        %v2718 = vshrl.u32 %v2717, 7
        %v2719 = vsub.s32 4, %v2718
        %v2720 = vrot.slane %v2672, %v2719
        %2722 = vbcast.lane.b32.xlu0 %v2720, 256
        %v2723 = vpop.permute.xlu0 %2722
        %s2725 = sor.u32 256, 8
        %2726 = vbcast.lane.b32.xlu0 %v2720, %s2725
        %v2727 = vpop.permute.xlu0 %2726
        %v2728 = vlaneseq
        %v2729 = vshrl.u32 %v2728, 7
        %v2730 = vsub.s32 5, %v2729
        %v2731 = vrot.slane %v2672, %v2730
        %2733 = vbcast.lane.b32.xlu0 %v2731, 256
        %v2734 = vpop.permute.xlu0 %2733
        %s2736 = sor.u32 256, 8
        %2737 = vbcast.lane.b32.xlu0 %v2731, %s2736
        %v2738 = vpop.permute.xlu0 %2737
        %v2739 = vlaneseq
        %v2740 = vshrl.u32 %v2739, 7
        %v2741 = vsub.s32 6, %v2740
        %v2742 = vrot.slane %v2672, %v2741
        %2744 = vbcast.lane.b32.xlu0 %v2742, 256
        %v2745 = vpop.permute.xlu0 %2744
        %s2747 = sor.u32 256, 8
        %2748 = vbcast.lane.b32.xlu0 %v2742, %s2747
        %v2749 = vpop.permute.xlu0 %2748
        %v2750 = vlaneseq
        %v2751 = vshrl.u32 %v2750, 7
        %v2752 = vsub.s32 7, %v2751
        %v2753 = vrot.slane %v2672, %v2752
        %2755 = vbcast.lane.b32.xlu0 %v2753, 256
        %v2756 = vpop.permute.xlu0 %2755
        %s2758 = sor.u32 256, 8
        %2759 = vbcast.lane.b32.xlu0 %v2753, %s2758
        %v2760 = vpop.permute.xlu0 %2759
        %vm2761 = vcmp.ne.s32.totalorder %v2679, 0
        %vm2762 = vcmp.ne.s32.totalorder %v2683, 0
        %vm2763 = vcmp.ne.s32.totalorder %v2690, 0
        %vm2764 = vcmp.ne.s32.totalorder %v2694, 0
        %vm2765 = vcmp.ne.s32.totalorder %v2701, 0
        %vm2766 = vcmp.ne.s32.totalorder %v2705, 0
        %vm2767 = vcmp.ne.s32.totalorder %v2712, 0
        %vm2768 = vcmp.ne.s32.totalorder %v2716, 0
        %vm2769 = vcmp.ne.s32.totalorder %v2723, 0
        %vm2770 = vcmp.ne.s32.totalorder %v2727, 0
        %vm2771 = vcmp.ne.s32.totalorder %v2734, 0
        %vm2772 = vcmp.ne.s32.totalorder %v2738, 0
        %vm2773 = vcmp.ne.s32.totalorder %v2745, 0
        %vm2774 = vcmp.ne.s32.totalorder %v2749, 0
        %vm2775 = vcmp.ne.s32.totalorder %v2756, 0
        %vm2776 = vcmp.ne.s32.totalorder %v2760, 0
        %v2777 = vsel %vm2761, 1, 0
        %v2778 = vsel %vm2762, 1, 0
        %v2779 = vsel %vm2763, 1, 0
        %v2780 = vsel %vm2764, 1, 0
        %v2781 = vsel %vm2765, 1, 0
        %v2782 = vsel %vm2766, 1, 0
        %v2783 = vsel %vm2767, 1, 0
        %v2784 = vsel %vm2768, 1, 0
        %v2785 = vsel %vm2769, 1, 0
        %v2786 = vsel %vm2770, 1, 0
        %v2787 = vsel %vm2771, 1, 0
        %v2788 = vsel %vm2772, 1, 0
        %v2789 = vsel %vm2773, 1, 0
        %v2790 = vsel %vm2774, 1, 0
        %v2791 = vsel %vm2775, 1, 0
        %v2792 = vsel %vm2776, 1, 0
        %vm2793 = vcmp.eq.s32.totalorder %v2777, 1
        %vm2794 = vcmp.eq.s32.totalorder %v2778, 1
        %vm2795 = vcmp.eq.s32.totalorder %v2779, 1
        %vm2796 = vcmp.eq.s32.totalorder %v2780, 1
        %vm2797 = vcmp.eq.s32.totalorder %v2781, 1
        %vm2798 = vcmp.eq.s32.totalorder %v2782, 1
        %vm2799 = vcmp.eq.s32.totalorder %v2783, 1
        %vm2800 = vcmp.eq.s32.totalorder %v2784, 1
        %vm2801 = vcmp.eq.s32.totalorder %v2785, 1
        %vm2802 = vcmp.eq.s32.totalorder %v2786, 1
        %vm2803 = vcmp.eq.s32.totalorder %v2787, 1
        %vm2804 = vcmp.eq.s32.totalorder %v2788, 1
        %vm2805 = vcmp.eq.s32.totalorder %v2789, 1
        %vm2806 = vcmp.eq.s32.totalorder %v2790, 1
        %vm2807 = vcmp.eq.s32.totalorder %v2791, 1
        %vm2808 = vcmp.eq.s32.totalorder %v2792, 1
        %v2809 = vstv %s2671
        %v2810 = vsel %vm2793, %v2657, %v2809
        %v2811 = vsel %vm2794, %v2658, %v2809
        %v2812 = vsel %vm2795, %v2657, %v2809
        %v2813 = vsel %vm2796, %v2658, %v2809
        %v2814 = vsel %vm2797, %v2657, %v2809
        %v2815 = vsel %vm2798, %v2658, %v2809
        %v2816 = vsel %vm2799, %v2657, %v2809
        %v2817 = vsel %vm2800, %v2658, %v2809
        %v2818 = vsel %vm2801, %v2657, %v2809
        %v2819 = vsel %vm2802, %v2658, %v2809
        %v2820 = vsel %vm2803, %v2657, %v2809
        %v2821 = vsel %vm2804, %v2658, %v2809
        %v2822 = vsel %vm2805, %v2657, %v2809
        %v2823 = vsel %vm2806, %v2658, %v2809
        %v2824 = vsel %vm2807, %v2657, %v2809
        %v2825 = vsel %vm2808, %v2658, %v2809
        %v2826 = vsel %vm1506, %v2810, -inf
        %v2827 = vsel %vm2660, %v2811, -inf
        %v2828 = vmax.f32 %v2826, %v2827
        %v2829 = vrot.slane %v2828, 4
        %v2830 = vmax.f32 %v2828, %v2829
        %v2831 = vrot.slane %v2830, 2
        %v2832 = vmax.f32 %v2830, %v2831
        %v2833 = vrot.slane %v2832, 1
        %v2834 = vmax.f32 %v2832, %v2833
        %v2835 = vsel %vm1506, %v2812, -inf
        %v2836 = vsel %vm2660, %v2813, -inf
        %v2837 = vmax.f32 %v2835, %v2836
        %v2838 = vrot.slane %v2837, 4
        %v2839 = vmax.f32 %v2837, %v2838
        %v2840 = vrot.slane %v2839, 2
        %v2841 = vmax.f32 %v2839, %v2840
        %v2842 = vrot.slane %v2841, 1
        %v2843 = vmax.f32 %v2841, %v2842
        %v2844 = vsel %vm1506, %v2814, -inf
        %v2845 = vsel %vm2660, %v2815, -inf
        %v2846 = vmax.f32 %v2844, %v2845
        %v2847 = vrot.slane %v2846, 4
        %v2848 = vmax.f32 %v2846, %v2847
        %v2849 = vrot.slane %v2848, 2
        %v2850 = vmax.f32 %v2848, %v2849
        %v2851 = vrot.slane %v2850, 1
        %v2852 = vmax.f32 %v2850, %v2851
        %v2853 = vsel %vm1506, %v2816, -inf
        %v2854 = vsel %vm2660, %v2817, -inf
        %v2855 = vmax.f32 %v2853, %v2854
        %v2856 = vrot.slane %v2855, 4
        %v2857 = vmax.f32 %v2855, %v2856
        %v2858 = vrot.slane %v2857, 2
        %v2859 = vmax.f32 %v2857, %v2858
        %v2860 = vrot.slane %v2859, 1
        %v2861 = vmax.f32 %v2859, %v2860
        %v2862 = vsel %vm1506, %v2818, -inf
        %v2863 = vsel %vm2660, %v2819, -inf
        %v2864 = vmax.f32 %v2862, %v2863
        %v2865 = vrot.slane %v2864, 4
        %v2866 = vmax.f32 %v2864, %v2865
        %v2867 = vrot.slane %v2866, 2
        %v2868 = vmax.f32 %v2866, %v2867
        %v2869 = vrot.slane %v2868, 1
        %v2870 = vmax.f32 %v2868, %v2869
        %v2871 = vsel %vm1506, %v2820, -inf
        %v2872 = vsel %vm2660, %v2821, -inf
        %v2873 = vmax.f32 %v2871, %v2872
        %v2874 = vrot.slane %v2873, 4
        %v2875 = vmax.f32 %v2873, %v2874
        %v2876 = vrot.slane %v2875, 2
        %v2877 = vmax.f32 %v2875, %v2876
        %v2878 = vrot.slane %v2877, 1
        %v2879 = vmax.f32 %v2877, %v2878
        %v2880 = vsel %vm1506, %v2822, -inf
        %v2881 = vsel %vm2660, %v2823, -inf
        %v2882 = vmax.f32 %v2880, %v2881
        %v2883 = vrot.slane %v2882, 4
        %v2884 = vmax.f32 %v2882, %v2883
        %v2885 = vrot.slane %v2884, 2
        %v2886 = vmax.f32 %v2884, %v2885
        %v2887 = vrot.slane %v2886, 1
        %v2888 = vmax.f32 %v2886, %v2887
        %v2889 = vsel %vm1506, %v2824, -inf
        %v2890 = vsel %vm2660, %v2825, -inf
        %v2891 = vmax.f32 %v2889, %v2890
        %v2892 = vrot.slane %v2891, 4
        %v2893 = vmax.f32 %v2891, %v2892
        %v2894 = vrot.slane %v2893, 2
        %v2895 = vmax.f32 %v2893, %v2894
        %v2896 = vrot.slane %v2895, 1
        %v2897 = vmax.f32 %v2895, %v2896
        %s2898 = sld [smem:[#allocation2 + %s99]]
        %v2899 = vld [vmem:[%s45] sm:$0xff]
        %v2900 = vld [vmem:[%s45 + $0x8] sm:$0xff]
        %v2901 = vld [vmem:[%s45 + $0x10] sm:$0xff]
        %v2902 = vld [vmem:[%s45 + $0x18] sm:$0xff]
        %v2903 = vld [vmem:[%s49] sm:$0x1]
        %v2905 = vlaneseq
        %v2906 = vshrl.u32 %v2905, 7
        %v2907 = vsub.s32 0, %v2906
        %v2908 = vrot.slane %v2903, %v2907
        %vm2918 = vcmask 1041409
        %v2919 = vsel %vm2918, %v2843, %v2834
        %vm2920 = vcmask 1042434
        %v2921 = vsel %vm2920, %v2852, %v2919
        %vm2922 = vcmask 1043459
        %v2923 = vsel %vm2922, %v2861, %v2921
        %vm2924 = vcmask 1044484
        %v2925 = vsel %vm2924, %v2870, %v2923
        %vm2926 = vcmask 1045509
        %v2927 = vsel %vm2926, %v2879, %v2925
        %vm2928 = vcmask 1046534
        %v2929 = vsel %vm2928, %v2888, %v2927
        %vm2930 = vcmask 1047559
        %v2931 = vsel %vm2930, %v2897, %v2929
        %v2932 = vsel %vm1506, %v2931, 0
        %2934 = vmatprep.subr.mxu0 0.0
        %2935 = vmatpush1.msra.mxu0 %v2899
        %2936 = vmatprep.subr.mxu0 0.0
        %2937 = vmatpush1.msra.mxu0 %v2900
        %2938 = vmatprep.subr.mxu0 0.0
        %2939 = vmatpush1.msra.mxu0 %v2901
        %2940 = vmatprep.subr.mxu0 0.0
        %2941 = vmatpush1.msra.mxu0 %v2902
        %2942 = vmatprep.subr.mxu0 0.0
        %2943 = vmatpush1.msra.mxu0 0.0
        %2944 = vmatprep.subr.mxu0 0.0
        %2945 = vmatpush1.msra.mxu0 0.0
        %2946 = vmatprep.subr.mxu0 0.0
        %2947 = vmatpush1.msra.mxu0 0.0
        %2948 = vmatprep.subr.mxu0 0.0
        %2949 = vmatpush1.msra.mxu0 0.0
        %2950 = vmatprep.subr.mxu0 0.0
        %2951 = vmatpush1.msra.mxu0 0.0
        %2952 = vmatprep.subr.mxu0 0.0
        %2953 = vmatpush1.msra.mxu0 0.0
        %2954 = vmatprep.subr.mxu0 0.0
        %2955 = vmatpush1.msra.mxu0 0.0
        %2956 = vmatprep.subr.mxu0 0.0
        %2957 = vmatpush1.msra.mxu0 0.0
        %2958 = vmatprep.subr.mxu0 0.0
        %2959 = vmatpush1.msra.mxu0 0.0
        %2960 = vmatprep.subr.mxu0 0.0
        %2961 = vmatpush1.msra.mxu0 0.0
        %2962 = vmatprep.subr.mxu0 0.0
        %2963 = vmatpush1.msra.mxu0 0.0
        %2964 = vmatprep.subr.mxu0 0.0
        %2965 = vmatpush1.msra.mxu0 0.0
        %2966 = vmatprep.subr.mxu0 0.0
        %2967 = vmatpush1.msra.mxu0 0.0
        %2968 = vmatprep.subr.mxu0 0.0
        %2969 = vmatpush1.msra.mxu0 0.0
        %2970 = vmatprep.subr.mxu0 0.0
        %2971 = vmatpush1.msra.mxu0 0.0
        %2972 = vmatprep.subr.mxu0 0.0
        %2973 = vmatpush1.msra.mxu0 0.0
        %2974 = vmatprep.subr.mxu0 0.0
        %2975 = vmatpush1.msra.mxu0 0.0
        %2976 = vmatprep.subr.mxu0 0.0
        %2977 = vmatpush1.msra.mxu0 0.0
        %2978 = vmatprep.subr.mxu0 0.0
        %2979 = vmatpush1.msra.mxu0 0.0
        %2980 = vmatprep.subr.mxu0 0.0
        %2981 = vmatpush1.msra.mxu0 0.0
        %2982 = vmatprep.subr.mxu0 0.0
        %2983 = vmatpush1.msra.mxu0 0.0
        %2984 = vmatprep.subr.mxu0 0.0
        %2985 = vmatpush1.msra.mxu0 0.0
        %2986 = vmatprep.subr.mxu0 0.0
        %2987 = vmatpush1.msra.mxu0 0.0
        %2988 = vmatprep.subr.mxu0 0.0
        %2989 = vmatpush1.msra.mxu0 0.0
        %2990 = vmatprep.subr.mxu0 0.0
        %2991 = vmatpush1.msra.mxu0 0.0
        %2992 = vmatprep.subr.mxu0 0.0
        %2993 = vmatpush1.msra.mxu0 0.0
        %2994 = vmatprep.subr.mxu0 0.0
        %2995 = vmatpush1.msra.mxu0 0.0
        %2996 = vmatprep.subr.mxu0 0.0
        %2997 = vmatpush1.msra.mxu0 0.0
        %2998 = vmatprep.mubr.f32.mxu0 0.0
        %2999 = vmatmul.mubr.f32.gmra.mrb[0].mxu0 %v2932
        %v3000 = vpop.f32.mrb[0].mxu0
        %v3001 = vadd.f32 %v2908, %v3000
        %v3002 = vpop.f32.mrb[0].mxu0
        %3003 = vdwg.mxu0
        %v3004 = vld [vmem:[%s47] sm:$0xff]
        %v3005 = vld [vmem:[%s47 + $0x8] sm:$0xff]
        %vm3006 = vcmask 130048
        %v3008 = vsel %vm3006, 0.0, 0
        %3010 = vmatprep.subr.mxu0 0.0
        %3011 = vmatpush1.msra.mxu0 %v3004
        %3012 = vmatprep.subr.mxu0 0.0
        %3013 = vmatpush1.msra.mxu0 %v3005
        %3014 = vmatprep.subr.mxu0 0.0
        %3015 = vmatpush1.msra.mxu0 0.0
        %3016 = vmatprep.subr.mxu0 0.0
        %3017 = vmatpush1.msra.mxu0 0.0
        %3018 = vmatprep.subr.mxu0 0.0
        %3019 = vmatpush1.msra.mxu0 0.0
        %3020 = vmatprep.subr.mxu0 0.0
        %3021 = vmatpush1.msra.mxu0 0.0
        %3022 = vmatprep.subr.mxu0 0.0
        %3023 = vmatpush1.msra.mxu0 0.0
        %3024 = vmatprep.subr.mxu0 0.0
        %3025 = vmatpush1.msra.mxu0 0.0
        %3026 = vmatprep.subr.mxu0 0.0
        %3027 = vmatpush1.msra.mxu0 0.0
        %3028 = vmatprep.subr.mxu0 0.0
        %3029 = vmatpush1.msra.mxu0 0.0
        %3030 = vmatprep.subr.mxu0 0.0
        %3031 = vmatpush1.msra.mxu0 0.0
        %3032 = vmatprep.subr.mxu0 0.0
        %3033 = vmatpush1.msra.mxu0 0.0
        %3034 = vmatprep.subr.mxu0 0.0
        %3035 = vmatpush1.msra.mxu0 0.0
        %3036 = vmatprep.subr.mxu0 0.0
        %3037 = vmatpush1.msra.mxu0 0.0
        %3038 = vmatprep.subr.mxu0 0.0
        %3039 = vmatpush1.msra.mxu0 0.0
        %3040 = vmatprep.subr.mxu0 0.0
        %3041 = vmatpush1.msra.mxu0 0.0
        %3042 = vmatprep.subr.mxu0 0.0
        %3043 = vmatpush1.msra.mxu0 0.0
        %3044 = vmatprep.subr.mxu0 0.0
        %3045 = vmatpush1.msra.mxu0 0.0
        %3046 = vmatprep.subr.mxu0 0.0
        %3047 = vmatpush1.msra.mxu0 0.0
        %3048 = vmatprep.subr.mxu0 0.0
        %3049 = vmatpush1.msra.mxu0 0.0
        %3050 = vmatprep.subr.mxu0 0.0
        %3051 = vmatpush1.msra.mxu0 0.0
        %3052 = vmatprep.subr.mxu0 0.0
        %3053 = vmatpush1.msra.mxu0 0.0
        %3054 = vmatprep.subr.mxu0 0.0
        %3055 = vmatpush1.msra.mxu0 0.0
        %3056 = vmatprep.subr.mxu0 0.0
        %3057 = vmatpush1.msra.mxu0 0.0
        %3058 = vmatprep.subr.mxu0 0.0
        %3059 = vmatpush1.msra.mxu0 0.0
        %3060 = vmatprep.subr.mxu0 0.0
        %3061 = vmatpush1.msra.mxu0 0.0
        %3062 = vmatprep.subr.mxu0 0.0
        %3063 = vmatpush1.msra.mxu0 0.0
        %3064 = vmatprep.subr.mxu0 0.0
        %3065 = vmatpush1.msra.mxu0 0.0
        %3066 = vmatprep.subr.mxu0 0.0
        %3067 = vmatpush1.msra.mxu0 0.0
        %3068 = vmatprep.subr.mxu0 0.0
        %3069 = vmatpush1.msra.mxu0 0.0
        %3070 = vmatprep.subr.mxu0 0.0
        %3071 = vmatpush1.msra.mxu0 0.0
        %3072 = vmatprep.subr.mxu0 0.0
        %3073 = vmatpush1.msra.mxu0 0.0
        %3074 = vmatprep.mubr.f32.mxu0 0.0
        %3075 = vmatmul.mubr.f32.gmra.mrb[0].mxu0 %v3008
        %v3076 = vpop.f32.mrb[0].mxu0
        %v3077 = vadd.f32 0.0, %v3076
        %v3078 = vpop.f32.mrb[0].mxu0
        %3079 = vdwg.mxu0
        %v3080 = vadd.f32 %v3001, %v3077
        %v3081 = vxor.u32 %v3080, 2147483648
        %v3082 = vmul.f32 %v3081, 1.442695
        %v3083 = vpow.pop %v3082
        %v3084 = vadd.f32 %v3083, 1.0
        %v3085 = vrcp.pop %v3084
        %v3086 = vmul.f32 1.0, %v3085
        %v3087 = vtanh.pop %v3080
        %v3088 = vmul.f32 %v3086, 0.0
        %3090 = vrot.lane.b32.xlu0 %v3087, 96
        %v3091 = vpop.permute.xlu0 %3090
        %v3093 = vmul.f32 %v3086, %v3091
        %3095 = vrot.lane.b32.xlu0 %v3093, 16
        %v3096 = vpop.permute.xlu0 %3095
        %v3098 = vadd.f32 %v3088, %v3096
        %v3099 = vtanh.pop %v3098
        %3101 = vrot.lane.b32.xlu0 %v3099, 32
        %v3102 = vpop.permute.xlu0 %3101
        %v3104 = vmul.f32 %v3086, %v3102
        %p3105 = scmp.gt.s32.totalorder %s2898, 0
        %s3106 = scalar_select %p3105, 1.0, 0.0
        %v3107 = vstv %s3106
        %v3108 = vmul.f32 %v3107, %v3104
        %s3109 = ssub.f32 1.0, %s3106
        %v3110 = vstv %s3109
        %v3111 = vmul.f32 %v3110, 0.0
        %v3112 = vadd.f32 %v3108, %v3111
        %v3113 = vmul.f32 %v3107, %v3098
        %v3114 = vadd.f32 %v3113, %v3111
        %3116 = vrot.lane.b32.xlu0 %v3112, 80
        %v3117 = vpop.permute.xlu0 %3116
        %v3118 = vsel %vm3006, %v3117, 0
        %3120 = vmatprep.subr.mxu0 0.0
        %3121 = vmatpush1.msra.mxu0 %v3004
        %3122 = vmatprep.subr.mxu0 0.0
        %3123 = vmatpush1.msra.mxu0 %v3005
        %3124 = vmatprep.subr.mxu0 0.0
        %3125 = vmatpush1.msra.mxu0 0.0
        %3126 = vmatprep.subr.mxu0 0.0
        %3127 = vmatpush1.msra.mxu0 0.0
        %3128 = vmatprep.subr.mxu0 0.0
        %3129 = vmatpush1.msra.mxu0 0.0
        %3130 = vmatprep.subr.mxu0 0.0
        %3131 = vmatpush1.msra.mxu0 0.0
        %3132 = vmatprep.subr.mxu0 0.0
        %3133 = vmatpush1.msra.mxu0 0.0
        %3134 = vmatprep.subr.mxu0 0.0
        %3135 = vmatpush1.msra.mxu0 0.0
        %3136 = vmatprep.subr.mxu0 0.0
        %3137 = vmatpush1.msra.mxu0 0.0
        %3138 = vmatprep.subr.mxu0 0.0
        %3139 = vmatpush1.msra.mxu0 0.0
        %3140 = vmatprep.subr.mxu0 0.0
        %3141 = vmatpush1.msra.mxu0 0.0
        %3142 = vmatprep.subr.mxu0 0.0
        %3143 = vmatpush1.msra.mxu0 0.0
        %3144 = vmatprep.subr.mxu0 0.0
        %3145 = vmatpush1.msra.mxu0 0.0
        %3146 = vmatprep.subr.mxu0 0.0
        %3147 = vmatpush1.msra.mxu0 0.0
        %3148 = vmatprep.subr.mxu0 0.0
        %3149 = vmatpush1.msra.mxu0 0.0
        %3150 = vmatprep.subr.mxu0 0.0
        %3151 = vmatpush1.msra.mxu0 0.0
        %3152 = vmatprep.subr.mxu0 0.0
        %3153 = vmatpush1.msra.mxu0 0.0
        %3154 = vmatprep.subr.mxu0 0.0
        %3155 = vmatpush1.msra.mxu0 0.0
        %3156 = vmatprep.subr.mxu0 0.0
        %3157 = vmatpush1.msra.mxu0 0.0
        %3158 = vmatprep.subr.mxu0 0.0
        %3159 = vmatpush1.msra.mxu0 0.0
        %3160 = vmatprep.subr.mxu0 0.0
        %3161 = vmatpush1.msra.mxu0 0.0
        %3162 = vmatprep.subr.mxu0 0.0
        %3163 = vmatpush1.msra.mxu0 0.0
        %3164 = vmatprep.subr.mxu0 0.0
        %3165 = vmatpush1.msra.mxu0 0.0
        %3166 = vmatprep.subr.mxu0 0.0
        %3167 = vmatpush1.msra.mxu0 0.0
        %3168 = vmatprep.subr.mxu0 0.0
        %3169 = vmatpush1.msra.mxu0 0.0
        %3170 = vmatprep.subr.mxu0 0.0
        %3171 = vmatpush1.msra.mxu0 0.0
        %3172 = vmatprep.subr.mxu0 0.0
        %3173 = vmatpush1.msra.mxu0 0.0
        %3174 = vmatprep.subr.mxu0 0.0
        %3175 = vmatpush1.msra.mxu0 0.0
        %3176 = vmatprep.subr.mxu0 0.0
        %3177 = vmatpush1.msra.mxu0 0.0
        %3178 = vmatprep.subr.mxu0 0.0
        %3179 = vmatpush1.msra.mxu0 0.0
        %3180 = vmatprep.subr.mxu0 0.0
        %3181 = vmatpush1.msra.mxu0 0.0
        %3182 = vmatprep.subr.mxu0 0.0
        %3183 = vmatpush1.msra.mxu0 0.0
        %3184 = vmatprep.mubr.f32.mxu0 0.0
        %3185 = vmatmul.mubr.f32.gmra.mrb[0].mxu0 %v3118
        %v3186 = vpop.f32.mrb[0].mxu0
        %v3187 = vadd.f32 0.0, %v3186
        %v3188 = vpop.f32.mrb[0].mxu0
        %3189 = vdwg.mxu0
        %v3191 = vrot.slane %v3187, 7
        %v3193 = vadd.f32 %v3001, %v3191
        %v3194 = vxor.u32 %v3193, 2147483648
        %v3195 = vmul.f32 %v3194, 1.442695
        %v3196 = vpow.pop %v3195
        %v3197 = vadd.f32 %v3196, 1.0
        %v3198 = vrcp.pop %v3197
        %v3199 = vmul.f32 1.0, %v3198
        %v3200 = vtanh.pop %v3193
        %v3202 = vrot.slane %v3114, 7
        %v3204 = vmul.f32 %v3199, %v3202
        %3206 = vrot.lane.b32.xlu0 %v3200, 96
        %v3207 = vpop.permute.xlu0 %3206
        %v3209 = vmul.f32 %v3199, %v3207
        %3211 = vrot.lane.b32.xlu0 %v3209, 16
        %v3212 = vpop.permute.xlu0 %3211
        %v3214 = vadd.f32 %v3204, %v3212
        %v3215 = vtanh.pop %v3214
        %3217 = vrot.lane.b32.xlu0 %v3215, 32
        %v3218 = vpop.permute.xlu0 %3217
        %v3220 = vmul.f32 %v3199, %v3218
        %p3221 = scmp.gt.s32.totalorder %s2898, 1
        %s3222 = scalar_select %p3221, 1.0, 0.0
        %v3223 = vstv %s3222
        %v3224 = vmul.f32 %v3223, %v3220
        %s3225 = ssub.f32 1.0, %s3222
        %v3226 = vstv %s3225
        %v3227 = vmul.f32 %v3226, %v3112
        %v3229 = vrot.slane %v3227, 7
        %v3231 = vadd.f32 %v3224, %v3229
        %v3232 = vmul.f32 %v3223, %v3214
        %v3233 = vmul.f32 %v3226, %v3114
        %v3235 = vrot.slane %v3233, 7
        %v3237 = vadd.f32 %v3232, %v3235
        %v3239 = vrot.slane %v3231, 1
        %3240 = vrot.lane.b32.xlu0 %v3239, 80
        %v3241 = vpop.permute.xlu0 %3240
        %v3242 = vsel %vm3006, %v3241, 0
        %3244 = vmatprep.subr.mxu0 0.0
        %3245 = vmatpush1.msra.mxu0 %v3004
        %3246 = vmatprep.subr.mxu0 0.0
        %3247 = vmatpush1.msra.mxu0 %v3005
        %3248 = vmatprep.subr.mxu0 0.0
        %3249 = vmatpush1.msra.mxu0 0.0
        %3250 = vmatprep.subr.mxu0 0.0
        %3251 = vmatpush1.msra.mxu0 0.0
        %3252 = vmatprep.subr.mxu0 0.0
        %3253 = vmatpush1.msra.mxu0 0.0
        %3254 = vmatprep.subr.mxu0 0.0
        %3255 = vmatpush1.msra.mxu0 0.0
        %3256 = vmatprep.subr.mxu0 0.0
        %3257 = vmatpush1.msra.mxu0 0.0
        %3258 = vmatprep.subr.mxu0 0.0
        %3259 = vmatpush1.msra.mxu0 0.0
        %3260 = vmatprep.subr.mxu0 0.0
        %3261 = vmatpush1.msra.mxu0 0.0
        %3262 = vmatprep.subr.mxu0 0.0
        %3263 = vmatpush1.msra.mxu0 0.0
        %3264 = vmatprep.subr.mxu0 0.0
        %3265 = vmatpush1.msra.mxu0 0.0
        %3266 = vmatprep.subr.mxu0 0.0
        %3267 = vmatpush1.msra.mxu0 0.0
        %3268 = vmatprep.subr.mxu0 0.0
        %3269 = vmatpush1.msra.mxu0 0.0
        %3270 = vmatprep.subr.mxu0 0.0
        %3271 = vmatpush1.msra.mxu0 0.0
        %3272 = vmatprep.subr.mxu0 0.0
        %3273 = vmatpush1.msra.mxu0 0.0
        %3274 = vmatprep.subr.mxu0 0.0
        %3275 = vmatpush1.msra.mxu0 0.0
        %3276 = vmatprep.subr.mxu0 0.0
        %3277 = vmatpush1.msra.mxu0 0.0
        %3278 = vmatprep.subr.mxu0 0.0
        %3279 = vmatpush1.msra.mxu0 0.0
        %3280 = vmatprep.subr.mxu0 0.0
        %3281 = vmatpush1.msra.mxu0 0.0
        %3282 = vmatprep.subr.mxu0 0.0
        %3283 = vmatpush1.msra.mxu0 0.0
        %3284 = vmatprep.subr.mxu0 0.0
        %3285 = vmatpush1.msra.mxu0 0.0
        %3286 = vmatprep.subr.mxu0 0.0
        %3287 = vmatpush1.msra.mxu0 0.0
        %3288 = vmatprep.subr.mxu0 0.0
        %3289 = vmatpush1.msra.mxu0 0.0
        %3290 = vmatprep.subr.mxu0 0.0
        %3291 = vmatpush1.msra.mxu0 0.0
        %3292 = vmatprep.subr.mxu0 0.0
        %3293 = vmatpush1.msra.mxu0 0.0
        %3294 = vmatprep.subr.mxu0 0.0
        %3295 = vmatpush1.msra.mxu0 0.0
        %3296 = vmatprep.subr.mxu0 0.0
        %3297 = vmatpush1.msra.mxu0 0.0
        %3298 = vmatprep.subr.mxu0 0.0
        %3299 = vmatpush1.msra.mxu0 0.0
        %3300 = vmatprep.subr.mxu0 0.0
        %3301 = vmatpush1.msra.mxu0 0.0
        %3302 = vmatprep.subr.mxu0 0.0
        %3303 = vmatpush1.msra.mxu0 0.0
        %3304 = vmatprep.subr.mxu0 0.0
        %3305 = vmatpush1.msra.mxu0 0.0
        %3306 = vmatprep.subr.mxu0 0.0
        %3307 = vmatpush1.msra.mxu0 0.0
        %3308 = vmatprep.mubr.f32.mxu0 0.0
        %3309 = vmatmul.mubr.f32.gmra.mrb[0].mxu0 %v3242
        %v3310 = vpop.f32.mrb[0].mxu0
        %v3311 = vadd.f32 0.0, %v3310
        %v3312 = vpop.f32.mrb[0].mxu0
        %3313 = vdwg.mxu0
        %v3315 = vrot.slane %v3311, 6
        %v3317 = vadd.f32 %v3001, %v3315
        %v3318 = vxor.u32 %v3317, 2147483648
        %v3319 = vmul.f32 %v3318, 1.442695
        %v3320 = vpow.pop %v3319
        %v3321 = vadd.f32 %v3320, 1.0
        %v3322 = vrcp.pop %v3321
        %v3323 = vmul.f32 1.0, %v3322
        %v3324 = vtanh.pop %v3317
        %v3326 = vrot.slane %v3237, 7
        %v3328 = vmul.f32 %v3323, %v3326
        %3330 = vrot.lane.b32.xlu0 %v3324, 96
        %v3331 = vpop.permute.xlu0 %3330
        %v3333 = vmul.f32 %v3323, %v3331
        %3335 = vrot.lane.b32.xlu0 %v3333, 16
        %v3336 = vpop.permute.xlu0 %3335
        %v3338 = vadd.f32 %v3328, %v3336
        %v3339 = vtanh.pop %v3338
        %3341 = vrot.lane.b32.xlu0 %v3339, 32
        %v3342 = vpop.permute.xlu0 %3341
        %v3344 = vmul.f32 %v3323, %v3342
        %p3345 = scmp.gt.s32.totalorder %s2898, 2
        %s3346 = scalar_select %p3345, 1.0, 0.0
        %v3347 = vstv %s3346
        %v3348 = vmul.f32 %v3347, %v3344
        %s3349 = ssub.f32 1.0, %s3346
        %v3350 = vstv %s3349
        %v3351 = vmul.f32 %v3350, %v3231
        %v3353 = vrot.slane %v3351, 7
        %v3355 = vadd.f32 %v3348, %v3353
        %v3356 = vmul.f32 %v3347, %v3338
        %v3357 = vmul.f32 %v3350, %v3237
        %v3359 = vrot.slane %v3357, 7
        %v3361 = vadd.f32 %v3356, %v3359
        %v3363 = vrot.slane %v3355, 2
        %3364 = vrot.lane.b32.xlu0 %v3363, 80
        %v3365 = vpop.permute.xlu0 %3364
        %v3366 = vsel %vm3006, %v3365, 0
        %3368 = vmatprep.subr.mxu0 0.0
        %3369 = vmatpush1.msra.mxu0 %v3004
        %3370 = vmatprep.subr.mxu0 0.0
        %3371 = vmatpush1.msra.mxu0 %v3005
        %3372 = vmatprep.subr.mxu0 0.0
        %3373 = vmatpush1.msra.mxu0 0.0
        %3374 = vmatprep.subr.mxu0 0.0
        %3375 = vmatpush1.msra.mxu0 0.0
        %3376 = vmatprep.subr.mxu0 0.0
        %3377 = vmatpush1.msra.mxu0 0.0
        %3378 = vmatprep.subr.mxu0 0.0
        %3379 = vmatpush1.msra.mxu0 0.0
        %3380 = vmatprep.subr.mxu0 0.0
        %3381 = vmatpush1.msra.mxu0 0.0
        %3382 = vmatprep.subr.mxu0 0.0
        %3383 = vmatpush1.msra.mxu0 0.0
        %3384 = vmatprep.subr.mxu0 0.0
        %3385 = vmatpush1.msra.mxu0 0.0
        %3386 = vmatprep.subr.mxu0 0.0
        %3387 = vmatpush1.msra.mxu0 0.0
        %3388 = vmatprep.subr.mxu0 0.0
        %3389 = vmatpush1.msra.mxu0 0.0
        %3390 = vmatprep.subr.mxu0 0.0
        %3391 = vmatpush1.msra.mxu0 0.0
        %3392 = vmatprep.subr.mxu0 0.0
        %3393 = vmatpush1.msra.mxu0 0.0
        %3394 = vmatprep.subr.mxu0 0.0
        %3395 = vmatpush1.msra.mxu0 0.0
        %3396 = vmatprep.subr.mxu0 0.0
        %3397 = vmatpush1.msra.mxu0 0.0
        %3398 = vmatprep.subr.mxu0 0.0
        %3399 = vmatpush1.msra.mxu0 0.0
        %3400 = vmatprep.subr.mxu0 0.0
        %3401 = vmatpush1.msra.mxu0 0.0
        %3402 = vmatprep.subr.mxu0 0.0
        %3403 = vmatpush1.msra.mxu0 0.0
        %3404 = vmatprep.subr.mxu0 0.0
        %3405 = vmatpush1.msra.mxu0 0.0
        %3406 = vmatprep.subr.mxu0 0.0
        %3407 = vmatpush1.msra.mxu0 0.0
        %3408 = vmatprep.subr.mxu0 0.0
        %3409 = vmatpush1.msra.mxu0 0.0
        %3410 = vmatprep.subr.mxu0 0.0
        %3411 = vmatpush1.msra.mxu0 0.0
        %3412 = vmatprep.subr.mxu0 0.0
        %3413 = vmatpush1.msra.mxu0 0.0
        %3414 = vmatprep.subr.mxu0 0.0
        %3415 = vmatpush1.msra.mxu0 0.0
        %3416 = vmatprep.subr.mxu0 0.0
        %3417 = vmatpush1.msra.mxu0 0.0
        %3418 = vmatprep.subr.mxu0 0.0
        %3419 = vmatpush1.msra.mxu0 0.0
        %3420 = vmatprep.subr.mxu0 0.0
        %3421 = vmatpush1.msra.mxu0 0.0
        %3422 = vmatprep.subr.mxu0 0.0
        %3423 = vmatpush1.msra.mxu0 0.0
        %3424 = vmatprep.subr.mxu0 0.0
        %3425 = vmatpush1.msra.mxu0 0.0
        %3426 = vmatprep.subr.mxu0 0.0
        %3427 = vmatpush1.msra.mxu0 0.0
        %3428 = vmatprep.subr.mxu0 0.0
        %3429 = vmatpush1.msra.mxu0 0.0
        %3430 = vmatprep.subr.mxu0 0.0
        %3431 = vmatpush1.msra.mxu0 0.0
        %3432 = vmatprep.mubr.f32.mxu0 0.0
        %3433 = vmatmul.mubr.f32.gmra.mrb[0].mxu0 %v3366
        %v3434 = vpop.f32.mrb[0].mxu0
        %v3435 = vadd.f32 0.0, %v3434
        %v3436 = vpop.f32.mrb[0].mxu0
        %3437 = vdwg.mxu0
        %v3439 = vrot.slane %v3435, 5
        %v3441 = vadd.f32 %v3001, %v3439
        %v3442 = vxor.u32 %v3441, 2147483648
        %v3443 = vmul.f32 %v3442, 1.442695
        %v3444 = vpow.pop %v3443
        %v3445 = vadd.f32 %v3444, 1.0
        %v3446 = vrcp.pop %v3445
        %v3447 = vmul.f32 1.0, %v3446
        %v3448 = vtanh.pop %v3441
        %v3450 = vrot.slane %v3361, 7
        %v3452 = vmul.f32 %v3447, %v3450
        %3454 = vrot.lane.b32.xlu0 %v3448, 96
        %v3455 = vpop.permute.xlu0 %3454
        %v3457 = vmul.f32 %v3447, %v3455
        %3459 = vrot.lane.b32.xlu0 %v3457, 16
        %v3460 = vpop.permute.xlu0 %3459
        %v3462 = vadd.f32 %v3452, %v3460
        %v3463 = vtanh.pop %v3462
        %3465 = vrot.lane.b32.xlu0 %v3463, 32
        %v3466 = vpop.permute.xlu0 %3465
        %v3468 = vmul.f32 %v3447, %v3466
        %p3469 = scmp.gt.s32.totalorder %s2898, 3
        %s3470 = scalar_select %p3469, 1.0, 0.0
        %v3471 = vstv %s3470
        %v3472 = vmul.f32 %v3471, %v3468
        %s3473 = ssub.f32 1.0, %s3470
        %v3474 = vstv %s3473
        %v3475 = vmul.f32 %v3474, %v3355
        %v3477 = vrot.slane %v3475, 7
        %v3479 = vadd.f32 %v3472, %v3477
        %v3480 = vmul.f32 %v3471, %v3462
        %v3481 = vmul.f32 %v3474, %v3361
        %v3483 = vrot.slane %v3481, 7
        %v3485 = vadd.f32 %v3480, %v3483
        %v3487 = vrot.slane %v3479, 3
        %3488 = vrot.lane.b32.xlu0 %v3487, 80
        %v3489 = vpop.permute.xlu0 %3488
        %v3490 = vsel %vm3006, %v3489, 0
        %3492 = vmatprep.subr.mxu0 0.0
        %3493 = vmatpush1.msra.mxu0 %v3004
        %3494 = vmatprep.subr.mxu0 0.0
        %3495 = vmatpush1.msra.mxu0 %v3005
        %3496 = vmatprep.subr.mxu0 0.0
        %3497 = vmatpush1.msra.mxu0 0.0
        %3498 = vmatprep.subr.mxu0 0.0
        %3499 = vmatpush1.msra.mxu0 0.0
        %3500 = vmatprep.subr.mxu0 0.0
        %3501 = vmatpush1.msra.mxu0 0.0
        %3502 = vmatprep.subr.mxu0 0.0
        %3503 = vmatpush1.msra.mxu0 0.0
        %3504 = vmatprep.subr.mxu0 0.0
        %3505 = vmatpush1.msra.mxu0 0.0
        %3506 = vmatprep.subr.mxu0 0.0
        %3507 = vmatpush1.msra.mxu0 0.0
        %3508 = vmatprep.subr.mxu0 0.0
        %3509 = vmatpush1.msra.mxu0 0.0
        %3510 = vmatprep.subr.mxu0 0.0
        %3511 = vmatpush1.msra.mxu0 0.0
        %3512 = vmatprep.subr.mxu0 0.0
        %3513 = vmatpush1.msra.mxu0 0.0
        %3514 = vmatprep.subr.mxu0 0.0
        %3515 = vmatpush1.msra.mxu0 0.0
        %3516 = vmatprep.subr.mxu0 0.0
        %3517 = vmatpush1.msra.mxu0 0.0
        %3518 = vmatprep.subr.mxu0 0.0
        %3519 = vmatpush1.msra.mxu0 0.0
        %3520 = vmatprep.subr.mxu0 0.0
        %3521 = vmatpush1.msra.mxu0 0.0
        %3522 = vmatprep.subr.mxu0 0.0
        %3523 = vmatpush1.msra.mxu0 0.0
        %3524 = vmatprep.subr.mxu0 0.0
        %3525 = vmatpush1.msra.mxu0 0.0
        %3526 = vmatprep.subr.mxu0 0.0
        %3527 = vmatpush1.msra.mxu0 0.0
        %3528 = vmatprep.subr.mxu0 0.0
        %3529 = vmatpush1.msra.mxu0 0.0
        %3530 = vmatprep.subr.mxu0 0.0
        %3531 = vmatpush1.msra.mxu0 0.0
        %3532 = vmatprep.subr.mxu0 0.0
        %3533 = vmatpush1.msra.mxu0 0.0
        %3534 = vmatprep.subr.mxu0 0.0
        %3535 = vmatpush1.msra.mxu0 0.0
        %3536 = vmatprep.subr.mxu0 0.0
        %3537 = vmatpush1.msra.mxu0 0.0
        %3538 = vmatprep.subr.mxu0 0.0
        %3539 = vmatpush1.msra.mxu0 0.0
        %3540 = vmatprep.subr.mxu0 0.0
        %3541 = vmatpush1.msra.mxu0 0.0
        %3542 = vmatprep.subr.mxu0 0.0
        %3543 = vmatpush1.msra.mxu0 0.0
        %3544 = vmatprep.subr.mxu0 0.0
        %3545 = vmatpush1.msra.mxu0 0.0
        %3546 = vmatprep.subr.mxu0 0.0
        %3547 = vmatpush1.msra.mxu0 0.0
        %3548 = vmatprep.subr.mxu0 0.0
        %3549 = vmatpush1.msra.mxu0 0.0
        %3550 = vmatprep.subr.mxu0 0.0
        %3551 = vmatpush1.msra.mxu0 0.0
        %3552 = vmatprep.subr.mxu0 0.0
        %3553 = vmatpush1.msra.mxu0 0.0
        %3554 = vmatprep.subr.mxu0 0.0
        %3555 = vmatpush1.msra.mxu0 0.0
        %3556 = vmatprep.mubr.f32.mxu0 0.0
        %3557 = vmatmul.mubr.f32.gmra.mrb[0].mxu0 %v3490
        %v3558 = vpop.f32.mrb[0].mxu0
        %v3559 = vadd.f32 0.0, %v3558
        %v3560 = vpop.f32.mrb[0].mxu0
        %3561 = vdwg.mxu0
        %v3563 = vrot.slane %v3559, 4
        %v3565 = vadd.f32 %v3001, %v3563
        %v3566 = vxor.u32 %v3565, 2147483648
        %v3567 = vmul.f32 %v3566, 1.442695
        %v3568 = vpow.pop %v3567
        %v3569 = vadd.f32 %v3568, 1.0
        %v3570 = vrcp.pop %v3569
        %v3571 = vmul.f32 1.0, %v3570
        %v3572 = vtanh.pop %v3565
        %v3574 = vrot.slane %v3485, 7
        %v3576 = vmul.f32 %v3571, %v3574
        %3578 = vrot.lane.b32.xlu0 %v3572, 96
        %v3579 = vpop.permute.xlu0 %3578
        %v3581 = vmul.f32 %v3571, %v3579
        %3583 = vrot.lane.b32.xlu0 %v3581, 16
        %v3584 = vpop.permute.xlu0 %3583
        %v3586 = vadd.f32 %v3576, %v3584
        %v3587 = vtanh.pop %v3586
        %3589 = vrot.lane.b32.xlu0 %v3587, 32
        %v3590 = vpop.permute.xlu0 %3589
        %v3592 = vmul.f32 %v3571, %v3590
        %p3593 = scmp.gt.s32.totalorder %s2898, 4
        %s3594 = scalar_select %p3593, 1.0, 0.0
        %v3595 = vstv %s3594
        %v3596 = vmul.f32 %v3595, %v3592
        %s3597 = ssub.f32 1.0, %s3594
        %v3598 = vstv %s3597
        %v3599 = vmul.f32 %v3598, %v3479
        %v3601 = vrot.slane %v3599, 7
        %v3603 = vadd.f32 %v3596, %v3601
        %v3604 = vmul.f32 %v3595, %v3586
        %v3605 = vmul.f32 %v3598, %v3485
        %v3607 = vrot.slane %v3605, 7
        %v3609 = vadd.f32 %v3604, %v3607
        %v3611 = vrot.slane %v3603, 4
        %3612 = vrot.lane.b32.xlu0 %v3611, 80
        %v3613 = vpop.permute.xlu0 %3612
        %v3614 = vsel %vm3006, %v3613, 0
        %3616 = vmatprep.subr.mxu0 0.0
        %3617 = vmatpush1.msra.mxu0 %v3004
        %3618 = vmatprep.subr.mxu0 0.0
        %3619 = vmatpush1.msra.mxu0 %v3005
        %3620 = vmatprep.subr.mxu0 0.0
        %3621 = vmatpush1.msra.mxu0 0.0
        %3622 = vmatprep.subr.mxu0 0.0
        %3623 = vmatpush1.msra.mxu0 0.0
        %3624 = vmatprep.subr.mxu0 0.0
        %3625 = vmatpush1.msra.mxu0 0.0
        %3626 = vmatprep.subr.mxu0 0.0
        %3627 = vmatpush1.msra.mxu0 0.0
        %3628 = vmatprep.subr.mxu0 0.0
        %3629 = vmatpush1.msra.mxu0 0.0
        %3630 = vmatprep.subr.mxu0 0.0
        %3631 = vmatpush1.msra.mxu0 0.0
        %3632 = vmatprep.subr.mxu0 0.0
        %3633 = vmatpush1.msra.mxu0 0.0
        %3634 = vmatprep.subr.mxu0 0.0
        %3635 = vmatpush1.msra.mxu0 0.0
        %3636 = vmatprep.subr.mxu0 0.0
        %3637 = vmatpush1.msra.mxu0 0.0
        %3638 = vmatprep.subr.mxu0 0.0
        %3639 = vmatpush1.msra.mxu0 0.0
        %3640 = vmatprep.subr.mxu0 0.0
        %3641 = vmatpush1.msra.mxu0 0.0
        %3642 = vmatprep.subr.mxu0 0.0
        %3643 = vmatpush1.msra.mxu0 0.0
        %3644 = vmatprep.subr.mxu0 0.0
        %3645 = vmatpush1.msra.mxu0 0.0
        %3646 = vmatprep.subr.mxu0 0.0
        %3647 = vmatpush1.msra.mxu0 0.0
        %3648 = vmatprep.subr.mxu0 0.0
        %3649 = vmatpush1.msra.mxu0 0.0
        %3650 = vmatprep.subr.mxu0 0.0
        %3651 = vmatpush1.msra.mxu0 0.0
        %3652 = vmatprep.subr.mxu0 0.0
        %3653 = vmatpush1.msra.mxu0 0.0
        %3654 = vmatprep.subr.mxu0 0.0
        %3655 = vmatpush1.msra.mxu0 0.0
        %3656 = vmatprep.subr.mxu0 0.0
        %3657 = vmatpush1.msra.mxu0 0.0
        %3658 = vmatprep.subr.mxu0 0.0
        %3659 = vmatpush1.msra.mxu0 0.0
        %3660 = vmatprep.subr.mxu0 0.0
        %3661 = vmatpush1.msra.mxu0 0.0
        %3662 = vmatprep.subr.mxu0 0.0
        %3663 = vmatpush1.msra.mxu0 0.0
        %3664 = vmatprep.subr.mxu0 0.0
        %3665 = vmatpush1.msra.mxu0 0.0
        %3666 = vmatprep.subr.mxu0 0.0
        %3667 = vmatpush1.msra.mxu0 0.0
        %3668 = vmatprep.subr.mxu0 0.0
        %3669 = vmatpush1.msra.mxu0 0.0
        %3670 = vmatprep.subr.mxu0 0.0
        %3671 = vmatpush1.msra.mxu0 0.0
        %3672 = vmatprep.subr.mxu0 0.0
        %3673 = vmatpush1.msra.mxu0 0.0
        %3674 = vmatprep.subr.mxu0 0.0
        %3675 = vmatpush1.msra.mxu0 0.0
        %3676 = vmatprep.subr.mxu0 0.0
        %3677 = vmatpush1.msra.mxu0 0.0
        %3678 = vmatprep.subr.mxu0 0.0
        %3679 = vmatpush1.msra.mxu0 0.0
        %3680 = vmatprep.mubr.f32.mxu0 0.0
        %3681 = vmatmul.mubr.f32.gmra.mrb[0].mxu0 %v3614
        %v3682 = vpop.f32.mrb[0].mxu0
        %v3683 = vadd.f32 0.0, %v3682
        %v3684 = vpop.f32.mrb[0].mxu0
        %3685 = vdwg.mxu0
        %v3687 = vrot.slane %v3683, 3
        %v3689 = vadd.f32 %v3001, %v3687
        %v3690 = vxor.u32 %v3689, 2147483648
        %v3691 = vmul.f32 %v3690, 1.442695
        %v3692 = vpow.pop %v3691
        %v3693 = vadd.f32 %v3692, 1.0
        %v3694 = vrcp.pop %v3693
        %v3695 = vmul.f32 1.0, %v3694
        %v3696 = vtanh.pop %v3689
        %v3698 = vrot.slane %v3609, 7
        %v3700 = vmul.f32 %v3695, %v3698
        %3702 = vrot.lane.b32.xlu0 %v3696, 96
        %v3703 = vpop.permute.xlu0 %3702
        %v3705 = vmul.f32 %v3695, %v3703
        %3707 = vrot.lane.b32.xlu0 %v3705, 16
        %v3708 = vpop.permute.xlu0 %3707
        %v3710 = vadd.f32 %v3700, %v3708
        %v3711 = vtanh.pop %v3710
        %3713 = vrot.lane.b32.xlu0 %v3711, 32
        %v3714 = vpop.permute.xlu0 %3713
        %v3716 = vmul.f32 %v3695, %v3714
        %p3717 = scmp.gt.s32.totalorder %s2898, 5
        %s3718 = scalar_select %p3717, 1.0, 0.0
        %v3719 = vstv %s3718
        %v3720 = vmul.f32 %v3719, %v3716
        %s3721 = ssub.f32 1.0, %s3718
        %v3722 = vstv %s3721
        %v3723 = vmul.f32 %v3722, %v3603
        %v3725 = vrot.slane %v3723, 7
        %v3727 = vadd.f32 %v3720, %v3725
        %v3728 = vmul.f32 %v3719, %v3710
        %v3729 = vmul.f32 %v3722, %v3609
        %v3731 = vrot.slane %v3729, 7
        %v3733 = vadd.f32 %v3728, %v3731
        %v3735 = vrot.slane %v3727, 5
        %3736 = vrot.lane.b32.xlu0 %v3735, 80
        %v3737 = vpop.permute.xlu0 %3736
        %v3738 = vsel %vm3006, %v3737, 0
        %3740 = vmatprep.subr.mxu0 0.0
        %3741 = vmatpush1.msra.mxu0 %v3004
        %3742 = vmatprep.subr.mxu0 0.0
        %3743 = vmatpush1.msra.mxu0 %v3005
        %3744 = vmatprep.subr.mxu0 0.0
        %3745 = vmatpush1.msra.mxu0 0.0
        %3746 = vmatprep.subr.mxu0 0.0
        %3747 = vmatpush1.msra.mxu0 0.0
        %3748 = vmatprep.subr.mxu0 0.0
        %3749 = vmatpush1.msra.mxu0 0.0
        %3750 = vmatprep.subr.mxu0 0.0
        %3751 = vmatpush1.msra.mxu0 0.0
        %3752 = vmatprep.subr.mxu0 0.0
        %3753 = vmatpush1.msra.mxu0 0.0
        %3754 = vmatprep.subr.mxu0 0.0
        %3755 = vmatpush1.msra.mxu0 0.0
        %3756 = vmatprep.subr.mxu0 0.0
        %3757 = vmatpush1.msra.mxu0 0.0
        %3758 = vmatprep.subr.mxu0 0.0
        %3759 = vmatpush1.msra.mxu0 0.0
        %3760 = vmatprep.subr.mxu0 0.0
        %3761 = vmatpush1.msra.mxu0 0.0
        %3762 = vmatprep.subr.mxu0 0.0
        %3763 = vmatpush1.msra.mxu0 0.0
        %3764 = vmatprep.subr.mxu0 0.0
        %3765 = vmatpush1.msra.mxu0 0.0
        %3766 = vmatprep.subr.mxu0 0.0
        %3767 = vmatpush1.msra.mxu0 0.0
        %3768 = vmatprep.subr.mxu0 0.0
        %3769 = vmatpush1.msra.mxu0 0.0
        %3770 = vmatprep.subr.mxu0 0.0
        %3771 = vmatpush1.msra.mxu0 0.0
        %3772 = vmatprep.subr.mxu0 0.0
        %3773 = vmatpush1.msra.mxu0 0.0
        %3774 = vmatprep.subr.mxu0 0.0
        %3775 = vmatpush1.msra.mxu0 0.0
        %3776 = vmatprep.subr.mxu0 0.0
        %3777 = vmatpush1.msra.mxu0 0.0
        %3778 = vmatprep.subr.mxu0 0.0
        %3779 = vmatpush1.msra.mxu0 0.0
        %3780 = vmatprep.subr.mxu0 0.0
        %3781 = vmatpush1.msra.mxu0 0.0
        %3782 = vmatprep.subr.mxu0 0.0
        %3783 = vmatpush1.msra.mxu0 0.0
        %3784 = vmatprep.subr.mxu0 0.0
        %3785 = vmatpush1.msra.mxu0 0.0
        %3786 = vmatprep.subr.mxu0 0.0
        %3787 = vmatpush1.msra.mxu0 0.0
        %3788 = vmatprep.subr.mxu0 0.0
        %3789 = vmatpush1.msra.mxu0 0.0
        %3790 = vmatprep.subr.mxu0 0.0
        %3791 = vmatpush1.msra.mxu0 0.0
        %3792 = vmatprep.subr.mxu0 0.0
        %3793 = vmatpush1.msra.mxu0 0.0
        %3794 = vmatprep.subr.mxu0 0.0
        %3795 = vmatpush1.msra.mxu0 0.0
        %3796 = vmatprep.subr.mxu0 0.0
        %3797 = vmatpush1.msra.mxu0 0.0
        %3798 = vmatprep.subr.mxu0 0.0
        %3799 = vmatpush1.msra.mxu0 0.0
        %3800 = vmatprep.subr.mxu0 0.0
        %3801 = vmatpush1.msra.mxu0 0.0
        %3802 = vmatprep.subr.mxu0 0.0
        %3803 = vmatpush1.msra.mxu0 0.0
        %3804 = vmatprep.mubr.f32.mxu0 0.0
        %3805 = vmatmul.mubr.f32.gmra.mrb[0].mxu0 %v3738
        %v3806 = vpop.f32.mrb[0].mxu0
        %v3807 = vadd.f32 0.0, %v3806
        %v3808 = vpop.f32.mrb[0].mxu0
        %3809 = vdwg.mxu0
        %v3811 = vrot.slane %v3807, 2
        %v3813 = vadd.f32 %v3001, %v3811
        %v3814 = vxor.u32 %v3813, 2147483648
        %v3815 = vmul.f32 %v3814, 1.442695
        %v3816 = vpow.pop %v3815
        %v3817 = vadd.f32 %v3816, 1.0
        %v3818 = vrcp.pop %v3817
        %v3819 = vmul.f32 1.0, %v3818
        %v3820 = vtanh.pop %v3813
        %v3822 = vrot.slane %v3733, 7
        %v3824 = vmul.f32 %v3819, %v3822
        %3826 = vrot.lane.b32.xlu0 %v3820, 96
        %v3827 = vpop.permute.xlu0 %3826
        %v3829 = vmul.f32 %v3819, %v3827
        %3831 = vrot.lane.b32.xlu0 %v3829, 16
        %v3832 = vpop.permute.xlu0 %3831
        %v3834 = vadd.f32 %v3824, %v3832
        %v3835 = vtanh.pop %v3834
        %3837 = vrot.lane.b32.xlu0 %v3835, 32
        %v3838 = vpop.permute.xlu0 %3837
        %v3840 = vmul.f32 %v3819, %v3838
        %p3841 = scmp.gt.s32.totalorder %s2898, 6
        %s3842 = scalar_select %p3841, 1.0, 0.0
        %v3843 = vstv %s3842
        %v3844 = vmul.f32 %v3843, %v3840
        %s3845 = ssub.f32 1.0, %s3842
        %v3846 = vstv %s3845
        %v3847 = vmul.f32 %v3846, %v3727
        %v3849 = vrot.slane %v3847, 7
        %v3851 = vadd.f32 %v3844, %v3849
        %v3852 = vmul.f32 %v3843, %v3834
        %v3853 = vmul.f32 %v3846, %v3733
        %v3855 = vrot.slane %v3853, 7
        %v3857 = vadd.f32 %v3852, %v3855
        %v3859 = vrot.slane %v3851, 6
        %3860 = vrot.lane.b32.xlu0 %v3859, 80
        %v3861 = vpop.permute.xlu0 %3860
        %v3862 = vsel %vm3006, %v3861, 0
        %3864 = vmatprep.subr.mxu0 0.0
        %3865 = vmatpush1.msra.mxu0 %v3004
        %3866 = vmatprep.subr.mxu0 0.0
        %3867 = vmatpush1.msra.mxu0 %v3005
        %3868 = vmatprep.subr.mxu0 0.0
        %3869 = vmatpush1.msra.mxu0 0.0
        %3870 = vmatprep.subr.mxu0 0.0
        %3871 = vmatpush1.msra.mxu0 0.0
        %3872 = vmatprep.subr.mxu0 0.0
        %3873 = vmatpush1.msra.mxu0 0.0
        %3874 = vmatprep.subr.mxu0 0.0
        %3875 = vmatpush1.msra.mxu0 0.0
        %3876 = vmatprep.subr.mxu0 0.0
        %3877 = vmatpush1.msra.mxu0 0.0
        %3878 = vmatprep.subr.mxu0 0.0
        %3879 = vmatpush1.msra.mxu0 0.0
        %3880 = vmatprep.subr.mxu0 0.0
        %3881 = vmatpush1.msra.mxu0 0.0
        %3882 = vmatprep.subr.mxu0 0.0
        %3883 = vmatpush1.msra.mxu0 0.0
        %3884 = vmatprep.subr.mxu0 0.0
        %3885 = vmatpush1.msra.mxu0 0.0
        %3886 = vmatprep.subr.mxu0 0.0
        %3887 = vmatpush1.msra.mxu0 0.0
        %3888 = vmatprep.subr.mxu0 0.0
        %3889 = vmatpush1.msra.mxu0 0.0
        %3890 = vmatprep.subr.mxu0 0.0
        %3891 = vmatpush1.msra.mxu0 0.0
        %3892 = vmatprep.subr.mxu0 0.0
        %3893 = vmatpush1.msra.mxu0 0.0
        %3894 = vmatprep.subr.mxu0 0.0
        %3895 = vmatpush1.msra.mxu0 0.0
        %3896 = vmatprep.subr.mxu0 0.0
        %3897 = vmatpush1.msra.mxu0 0.0
        %3898 = vmatprep.subr.mxu0 0.0
        %3899 = vmatpush1.msra.mxu0 0.0
        %3900 = vmatprep.subr.mxu0 0.0
        %3901 = vmatpush1.msra.mxu0 0.0
        %3902 = vmatprep.subr.mxu0 0.0
        %3903 = vmatpush1.msra.mxu0 0.0
        %3904 = vmatprep.subr.mxu0 0.0
        %3905 = vmatpush1.msra.mxu0 0.0
        %3906 = vmatprep.subr.mxu0 0.0
        %3907 = vmatpush1.msra.mxu0 0.0
        %3908 = vmatprep.subr.mxu0 0.0
        %3909 = vmatpush1.msra.mxu0 0.0
        %3910 = vmatprep.subr.mxu0 0.0
        %3911 = vmatpush1.msra.mxu0 0.0
        %3912 = vmatprep.subr.mxu0 0.0
        %3913 = vmatpush1.msra.mxu0 0.0
        %3914 = vmatprep.subr.mxu0 0.0
        %3915 = vmatpush1.msra.mxu0 0.0
        %3916 = vmatprep.subr.mxu0 0.0
        %3917 = vmatpush1.msra.mxu0 0.0
        %3918 = vmatprep.subr.mxu0 0.0
        %3919 = vmatpush1.msra.mxu0 0.0
        %3920 = vmatprep.subr.mxu0 0.0
        %3921 = vmatpush1.msra.mxu0 0.0
        %3922 = vmatprep.subr.mxu0 0.0
        %3923 = vmatpush1.msra.mxu0 0.0
        %3924 = vmatprep.subr.mxu0 0.0
        %3925 = vmatpush1.msra.mxu0 0.0
        %3926 = vmatprep.subr.mxu0 0.0
        %3927 = vmatpush1.msra.mxu0 0.0
        %3928 = vmatprep.mubr.f32.mxu0 0.0
        %3929 = vmatmul.mubr.f32.gmra.mrb[0].mxu0 %v3862
        %v3930 = vpop.f32.mrb[0].mxu0
        %v3931 = vadd.f32 0.0, %v3930
        %v3932 = vpop.f32.mrb[0].mxu0
        %3933 = vdwg.mxu0
        %v3935 = vrot.slane %v3931, 1
        %v3937 = vadd.f32 %v3001, %v3935
        %v3938 = vxor.u32 %v3937, 2147483648
        %v3939 = vmul.f32 %v3938, 1.442695
        %v3940 = vpow.pop %v3939
        %v3941 = vadd.f32 %v3940, 1.0
        %v3942 = vrcp.pop %v3941
        %v3943 = vmul.f32 1.0, %v3942
        %v3944 = vtanh.pop %v3937
        %v3946 = vrot.slane %v3857, 7
        %v3948 = vmul.f32 %v3943, %v3946
        %3950 = vrot.lane.b32.xlu0 %v3944, 96
        %v3951 = vpop.permute.xlu0 %3950
        %v3953 = vmul.f32 %v3943, %v3951
        %3955 = vrot.lane.b32.xlu0 %v3953, 16
        %v3956 = vpop.permute.xlu0 %3955
        %v3958 = vadd.f32 %v3948, %v3956
        %v3959 = vtanh.pop %v3958
        %3961 = vrot.lane.b32.xlu0 %v3959, 32
        %v3962 = vpop.permute.xlu0 %3961
        %v3964 = vmul.f32 %v3943, %v3962
        %p3965 = scmp.gt.s32.totalorder %s2898, 7
        %s3966 = scalar_select %p3965, 1.0, 0.0
        %v3967 = vstv %s3966
        %v3968 = vmul.f32 %v3967, %v3964
        %vm3969 = vcmask 1040384
        %v3970 = vsel %vm3969, %v3108, %v3224
        %v3971 = vsel %vm1898, %v3970, %v3348
        %vm3972 = vcmask 1042432
        %v3973 = vsel %vm3972, %v3971, %v3472
        %vm3974 = vcmask 1043456
        %v3975 = vsel %vm3974, %v3973, %v3596
        %vm3976 = vcmask 1044480
        %v3977 = vsel %vm3976, %v3975, %v3720
        %vm3978 = vcmask 1045504
        %v3979 = vsel %vm3978, %v3977, %v3844
        %vm3980 = vcmask 1046528
        %v3981 = vsel %vm3980, %v3979, %v3968
        %v3982 = vld [vmem:[%s51] sm:$0xff]
        %v3983 = vld [vmem:[%s51 + $0x8] sm:$0xff]
        %v3984 = vld [vmem:[%s51 + $0x10] sm:$0xff]
        %v3985 = vld [vmem:[%s51 + $0x18] sm:$0xff]
        %v3986 = vld [vmem:[%s55] sm:$0x1]
        %v3988 = vlaneseq
        %v3989 = vshrl.u32 %v3988, 7
        %v3990 = vsub.s32 0, %v3989
        %v3991 = vrot.slane %v3986, %v3990
        %3993 = vmatprep.subr.mxu0 0.0
        %3994 = vmatpush1.msra.mxu0 %v3982
        %3995 = vmatprep.subr.mxu0 0.0
        %3996 = vmatpush1.msra.mxu0 %v3983
        %3997 = vmatprep.subr.mxu0 0.0
        %3998 = vmatpush1.msra.mxu0 %v3984
        %3999 = vmatprep.subr.mxu0 0.0
        %4000 = vmatpush1.msra.mxu0 %v3985
        %4001 = vmatprep.subr.mxu0 0.0
        %4002 = vmatpush1.msra.mxu0 0.0
        %4003 = vmatprep.subr.mxu0 0.0
        %4004 = vmatpush1.msra.mxu0 0.0
        %4005 = vmatprep.subr.mxu0 0.0
        %4006 = vmatpush1.msra.mxu0 0.0
        %4007 = vmatprep.subr.mxu0 0.0
        %4008 = vmatpush1.msra.mxu0 0.0
        %4009 = vmatprep.subr.mxu0 0.0
        %4010 = vmatpush1.msra.mxu0 0.0
        %4011 = vmatprep.subr.mxu0 0.0
        %4012 = vmatpush1.msra.mxu0 0.0
        %4013 = vmatprep.subr.mxu0 0.0
        %4014 = vmatpush1.msra.mxu0 0.0
        %4015 = vmatprep.subr.mxu0 0.0
        %4016 = vmatpush1.msra.mxu0 0.0
        %4017 = vmatprep.subr.mxu0 0.0
        %4018 = vmatpush1.msra.mxu0 0.0
        %4019 = vmatprep.subr.mxu0 0.0
        %4020 = vmatpush1.msra.mxu0 0.0
        %4021 = vmatprep.subr.mxu0 0.0
        %4022 = vmatpush1.msra.mxu0 0.0
        %4023 = vmatprep.subr.mxu0 0.0
        %4024 = vmatpush1.msra.mxu0 0.0
        %4025 = vmatprep.subr.mxu0 0.0
        %4026 = vmatpush1.msra.mxu0 0.0
        %4027 = vmatprep.subr.mxu0 0.0
        %4028 = vmatpush1.msra.mxu0 0.0
        %4029 = vmatprep.subr.mxu0 0.0
        %4030 = vmatpush1.msra.mxu0 0.0
        %4031 = vmatprep.subr.mxu0 0.0
        %4032 = vmatpush1.msra.mxu0 0.0
        %4033 = vmatprep.subr.mxu0 0.0
        %4034 = vmatpush1.msra.mxu0 0.0
        %4035 = vmatprep.subr.mxu0 0.0
        %4036 = vmatpush1.msra.mxu0 0.0
        %4037 = vmatprep.subr.mxu0 0.0
        %4038 = vmatpush1.msra.mxu0 0.0
        %4039 = vmatprep.subr.mxu0 0.0
        %4040 = vmatpush1.msra.mxu0 0.0
        %4041 = vmatprep.subr.mxu0 0.0
        %4042 = vmatpush1.msra.mxu0 0.0
        %4043 = vmatprep.subr.mxu0 0.0
        %4044 = vmatpush1.msra.mxu0 0.0
        %4045 = vmatprep.subr.mxu0 0.0
        %4046 = vmatpush1.msra.mxu0 0.0
        %4047 = vmatprep.subr.mxu0 0.0
        %4048 = vmatpush1.msra.mxu0 0.0
        %4049 = vmatprep.subr.mxu0 0.0
        %4050 = vmatpush1.msra.mxu0 0.0
        %4051 = vmatprep.subr.mxu0 0.0
        %4052 = vmatpush1.msra.mxu0 0.0
        %4053 = vmatprep.subr.mxu0 0.0
        %4054 = vmatpush1.msra.mxu0 0.0
        %4055 = vmatprep.subr.mxu0 0.0
        %4056 = vmatpush1.msra.mxu0 0.0
        %4057 = vmatprep.mubr.f32.mxu0 0.0
        %4058 = vmatmul.mubr.f32.gmra.mrb[0].mxu0 %v2932
        %v4059 = vpop.f32.mrb[0].mxu0
        %v4060 = vadd.f32 %v3991, %v4059
        %v4061 = vpop.f32.mrb[0].mxu0
        %4062 = vdwg.mxu0
        %v4063 = vld [vmem:[%s53] sm:$0xff]
        %v4064 = vld [vmem:[%s53 + $0x8] sm:$0xff]
        %4065 = vmatprep.subr.mxu0 0.0
        %4066 = vmatpush1.msra.mxu0 %v4063
        %4067 = vmatprep.subr.mxu0 0.0
        %4068 = vmatpush1.msra.mxu0 %v4064
        %4069 = vmatprep.subr.mxu0 0.0
        %4070 = vmatpush1.msra.mxu0 0.0
        %4071 = vmatprep.subr.mxu0 0.0
        %4072 = vmatpush1.msra.mxu0 0.0
        %4073 = vmatprep.subr.mxu0 0.0
        %4074 = vmatpush1.msra.mxu0 0.0
        %4075 = vmatprep.subr.mxu0 0.0
        %4076 = vmatpush1.msra.mxu0 0.0
        %4077 = vmatprep.subr.mxu0 0.0
        %4078 = vmatpush1.msra.mxu0 0.0
        %4079 = vmatprep.subr.mxu0 0.0
        %4080 = vmatpush1.msra.mxu0 0.0
        %4081 = vmatprep.subr.mxu0 0.0
        %4082 = vmatpush1.msra.mxu0 0.0
        %4083 = vmatprep.subr.mxu0 0.0
        %4084 = vmatpush1.msra.mxu0 0.0
        %4085 = vmatprep.subr.mxu0 0.0
        %4086 = vmatpush1.msra.mxu0 0.0
        %4087 = vmatprep.subr.mxu0 0.0
        %4088 = vmatpush1.msra.mxu0 0.0
        %4089 = vmatprep.subr.mxu0 0.0
        %4090 = vmatpush1.msra.mxu0 0.0
        %4091 = vmatprep.subr.mxu0 0.0
        %4092 = vmatpush1.msra.mxu0 0.0
        %4093 = vmatprep.subr.mxu0 0.0
        %4094 = vmatpush1.msra.mxu0 0.0
        %4095 = vmatprep.subr.mxu0 0.0
        %4096 = vmatpush1.msra.mxu0 0.0
        %4097 = vmatprep.subr.mxu0 0.0
        %4098 = vmatpush1.msra.mxu0 0.0
        %4099 = vmatprep.subr.mxu0 0.0
        %4100 = vmatpush1.msra.mxu0 0.0
        %4101 = vmatprep.subr.mxu0 0.0
        %4102 = vmatpush1.msra.mxu0 0.0
        %4103 = vmatprep.subr.mxu0 0.0
        %4104 = vmatpush1.msra.mxu0 0.0
        %4105 = vmatprep.subr.mxu0 0.0
        %4106 = vmatpush1.msra.mxu0 0.0
        %4107 = vmatprep.subr.mxu0 0.0
        %4108 = vmatpush1.msra.mxu0 0.0
        %4109 = vmatprep.subr.mxu0 0.0
        %4110 = vmatpush1.msra.mxu0 0.0
        %4111 = vmatprep.subr.mxu0 0.0
        %4112 = vmatpush1.msra.mxu0 0.0
        %4113 = vmatprep.subr.mxu0 0.0
        %4114 = vmatpush1.msra.mxu0 0.0
        %4115 = vmatprep.subr.mxu0 0.0
        %4116 = vmatpush1.msra.mxu0 0.0
        %4117 = vmatprep.subr.mxu0 0.0
        %4118 = vmatpush1.msra.mxu0 0.0
        %4119 = vmatprep.subr.mxu0 0.0
        %4120 = vmatpush1.msra.mxu0 0.0
        %4121 = vmatprep.subr.mxu0 0.0
        %4122 = vmatpush1.msra.mxu0 0.0
        %4123 = vmatprep.subr.mxu0 0.0
        %4124 = vmatpush1.msra.mxu0 0.0
        %4125 = vmatprep.subr.mxu0 0.0
        %4126 = vmatpush1.msra.mxu0 0.0
        %4127 = vmatprep.subr.mxu0 0.0
        %4128 = vmatpush1.msra.mxu0 0.0
        %4129 = vmatprep.mubr.f32.mxu0 0.0
        %4130 = vmatmul.mubr.f32.gmra.mrb[0].mxu0 %v3008
        %v4131 = vpop.f32.mrb[0].mxu0
        %v4132 = vadd.f32 0.0, %v4131
        %v4133 = vpop.f32.mrb[0].mxu0
        %4134 = vdwg.mxu0
        %v4136 = vrot.slane %v4132, 1
        %v4138 = vadd.f32 %v4060, %v4136
        %v4139 = vxor.u32 %v4138, 2147483648
        %v4140 = vmul.f32 %v4139, 1.442695
        %v4141 = vpow.pop %v4140
        %v4142 = vadd.f32 %v4141, 1.0
        %v4143 = vrcp.pop %v4142
        %v4144 = vmul.f32 1.0, %v4143
        %v4145 = vtanh.pop %v4138
        %v4146 = vmul.f32 %v4144, 0.0
        %4148 = vrot.lane.b32.xlu0 %v4145, 96
        %v4149 = vpop.permute.xlu0 %4148
        %v4151 = vmul.f32 %v4144, %v4149
        %4153 = vrot.lane.b32.xlu0 %v4151, 16
        %v4154 = vpop.permute.xlu0 %4153
        %v4156 = vadd.f32 %v4146, %v4154
        %v4157 = vtanh.pop %v4156
        %4159 = vrot.lane.b32.xlu0 %v4157, 32
        %v4160 = vpop.permute.xlu0 %4159
        %v4162 = vmul.f32 %v4144, %v4160
        %v4163 = vmul.f32 %v3967, %v4162
        %s4164 = ssub.f32 1.0, %s3966
        %v4165 = vstv %s4164
        %v4166 = vmul.f32 %v4165, 0.0
        %v4167 = vadd.f32 %v4163, %v4166
        %v4168 = vmul.f32 %v3967, %v4156
        %v4169 = vadd.f32 %v4168, %v4166
        %v4171 = vrot.slane %v4167, 7
        %4172 = vrot.lane.b32.xlu0 %v4171, 80
        %v4173 = vpop.permute.xlu0 %4172
        %v4174 = vsel %vm3006, %v4173, 0
        %4176 = vmatprep.subr.mxu0 0.0
        %4177 = vmatpush1.msra.mxu0 %v4063
        %4178 = vmatprep.subr.mxu0 0.0
        %4179 = vmatpush1.msra.mxu0 %v4064
        %4180 = vmatprep.subr.mxu0 0.0
        %4181 = vmatpush1.msra.mxu0 0.0
        %4182 = vmatprep.subr.mxu0 0.0
        %4183 = vmatpush1.msra.mxu0 0.0
        %4184 = vmatprep.subr.mxu0 0.0
        %4185 = vmatpush1.msra.mxu0 0.0
        %4186 = vmatprep.subr.mxu0 0.0
        %4187 = vmatpush1.msra.mxu0 0.0
        %4188 = vmatprep.subr.mxu0 0.0
        %4189 = vmatpush1.msra.mxu0 0.0
        %4190 = vmatprep.subr.mxu0 0.0
        %4191 = vmatpush1.msra.mxu0 0.0
        %4192 = vmatprep.subr.mxu0 0.0
        %4193 = vmatpush1.msra.mxu0 0.0
        %4194 = vmatprep.subr.mxu0 0.0
        %4195 = vmatpush1.msra.mxu0 0.0
        %4196 = vmatprep.subr.mxu0 0.0
        %4197 = vmatpush1.msra.mxu0 0.0
        %4198 = vmatprep.subr.mxu0 0.0
        %4199 = vmatpush1.msra.mxu0 0.0
        %4200 = vmatprep.subr.mxu0 0.0
        %4201 = vmatpush1.msra.mxu0 0.0
        %4202 = vmatprep.subr.mxu0 0.0
        %4203 = vmatpush1.msra.mxu0 0.0
        %4204 = vmatprep.subr.mxu0 0.0
        %4205 = vmatpush1.msra.mxu0 0.0
        %4206 = vmatprep.subr.mxu0 0.0
        %4207 = vmatpush1.msra.mxu0 0.0
        %4208 = vmatprep.subr.mxu0 0.0
        %4209 = vmatpush1.msra.mxu0 0.0
        %4210 = vmatprep.subr.mxu0 0.0
        %4211 = vmatpush1.msra.mxu0 0.0
        %4212 = vmatprep.subr.mxu0 0.0
        %4213 = vmatpush1.msra.mxu0 0.0
        %4214 = vmatprep.subr.mxu0 0.0
        %4215 = vmatpush1.msra.mxu0 0.0
        %4216 = vmatprep.subr.mxu0 0.0
        %4217 = vmatpush1.msra.mxu0 0.0
        %4218 = vmatprep.subr.mxu0 0.0
        %4219 = vmatpush1.msra.mxu0 0.0
        %4220 = vmatprep.subr.mxu0 0.0
        %4221 = vmatpush1.msra.mxu0 0.0
        %4222 = vmatprep.subr.mxu0 0.0
        %4223 = vmatpush1.msra.mxu0 0.0
        %4224 = vmatprep.subr.mxu0 0.0
        %4225 = vmatpush1.msra.mxu0 0.0
        %4226 = vmatprep.subr.mxu0 0.0
        %4227 = vmatpush1.msra.mxu0 0.0
        %4228 = vmatprep.subr.mxu0 0.0
        %4229 = vmatpush1.msra.mxu0 0.0
        %4230 = vmatprep.subr.mxu0 0.0
        %4231 = vmatpush1.msra.mxu0 0.0
        %4232 = vmatprep.subr.mxu0 0.0
        %4233 = vmatpush1.msra.mxu0 0.0
        %4234 = vmatprep.subr.mxu0 0.0
        %4235 = vmatpush1.msra.mxu0 0.0
        %4236 = vmatprep.subr.mxu0 0.0
        %4237 = vmatpush1.msra.mxu0 0.0
        %4238 = vmatprep.subr.mxu0 0.0
        %4239 = vmatpush1.msra.mxu0 0.0
        %4240 = vmatprep.mubr.f32.mxu0 0.0
        %4241 = vmatmul.mubr.f32.gmra.mrb[0].mxu0 %v4174
        %v4242 = vpop.f32.mrb[0].mxu0
        %v4243 = vadd.f32 0.0, %v4242
        %v4244 = vpop.f32.mrb[0].mxu0
        %4245 = vdwg.mxu0
        %v4247 = vrot.slane %v4243, 2
        %v4249 = vadd.f32 %v4060, %v4247
        %v4250 = vxor.u32 %v4249, 2147483648
        %v4251 = vmul.f32 %v4250, 1.442695
        %v4252 = vpow.pop %v4251
        %v4253 = vadd.f32 %v4252, 1.0
        %v4254 = vrcp.pop %v4253
        %v4255 = vmul.f32 1.0, %v4254
        %v4256 = vtanh.pop %v4249
        %v4258 = vrot.slane %v4169, 1
        %v4260 = vmul.f32 %v4255, %v4258
        %4262 = vrot.lane.b32.xlu0 %v4256, 96
        %v4263 = vpop.permute.xlu0 %4262
        %v4265 = vmul.f32 %v4255, %v4263
        %4267 = vrot.lane.b32.xlu0 %v4265, 16
        %v4268 = vpop.permute.xlu0 %4267
        %v4270 = vadd.f32 %v4260, %v4268
        %v4271 = vtanh.pop %v4270
        %4273 = vrot.lane.b32.xlu0 %v4271, 32
        %v4274 = vpop.permute.xlu0 %4273
        %v4276 = vmul.f32 %v4255, %v4274
        %v4277 = vmul.f32 %v3843, %v4276
        %v4278 = vmul.f32 %v3846, %v4167
        %v4280 = vrot.slane %v4278, 1
        %v4282 = vadd.f32 %v4277, %v4280
        %v4283 = vmul.f32 %v3843, %v4270
        %v4284 = vmul.f32 %v3846, %v4169
        %v4286 = vrot.slane %v4284, 1
        %v4288 = vadd.f32 %v4283, %v4286
        %v4290 = vrot.slane %v4282, 6
        %4291 = vrot.lane.b32.xlu0 %v4290, 80
        %v4292 = vpop.permute.xlu0 %4291
        %v4293 = vsel %vm3006, %v4292, 0
        %4295 = vmatprep.subr.mxu0 0.0
        %4296 = vmatpush1.msra.mxu0 %v4063
        %4297 = vmatprep.subr.mxu0 0.0
        %4298 = vmatpush1.msra.mxu0 %v4064
        %4299 = vmatprep.subr.mxu0 0.0
        %4300 = vmatpush1.msra.mxu0 0.0
        %4301 = vmatprep.subr.mxu0 0.0
        %4302 = vmatpush1.msra.mxu0 0.0
        %4303 = vmatprep.subr.mxu0 0.0
        %4304 = vmatpush1.msra.mxu0 0.0
        %4305 = vmatprep.subr.mxu0 0.0
        %4306 = vmatpush1.msra.mxu0 0.0
        %4307 = vmatprep.subr.mxu0 0.0
        %4308 = vmatpush1.msra.mxu0 0.0
        %4309 = vmatprep.subr.mxu0 0.0
        %4310 = vmatpush1.msra.mxu0 0.0
        %4311 = vmatprep.subr.mxu0 0.0
        %4312 = vmatpush1.msra.mxu0 0.0
        %4313 = vmatprep.subr.mxu0 0.0
        %4314 = vmatpush1.msra.mxu0 0.0
        %4315 = vmatprep.subr.mxu0 0.0
        %4316 = vmatpush1.msra.mxu0 0.0
        %4317 = vmatprep.subr.mxu0 0.0
        %4318 = vmatpush1.msra.mxu0 0.0
        %4319 = vmatprep.subr.mxu0 0.0
        %4320 = vmatpush1.msra.mxu0 0.0
        %4321 = vmatprep.subr.mxu0 0.0
        %4322 = vmatpush1.msra.mxu0 0.0
        %4323 = vmatprep.subr.mxu0 0.0
        %4324 = vmatpush1.msra.mxu0 0.0
        %4325 = vmatprep.subr.mxu0 0.0
        %4326 = vmatpush1.msra.mxu0 0.0
        %4327 = vmatprep.subr.mxu0 0.0
        %4328 = vmatpush1.msra.mxu0 0.0
        %4329 = vmatprep.subr.mxu0 0.0
        %4330 = vmatpush1.msra.mxu0 0.0
        %4331 = vmatprep.subr.mxu0 0.0
        %4332 = vmatpush1.msra.mxu0 0.0
        %4333 = vmatprep.subr.mxu0 0.0
        %4334 = vmatpush1.msra.mxu0 0.0
        %4335 = vmatprep.subr.mxu0 0.0
        %4336 = vmatpush1.msra.mxu0 0.0
        %4337 = vmatprep.subr.mxu0 0.0
        %4338 = vmatpush1.msra.mxu0 0.0
        %4339 = vmatprep.subr.mxu0 0.0
        %4340 = vmatpush1.msra.mxu0 0.0
        %4341 = vmatprep.subr.mxu0 0.0
        %4342 = vmatpush1.msra.mxu0 0.0
        %4343 = vmatprep.subr.mxu0 0.0
        %4344 = vmatpush1.msra.mxu0 0.0
        %4345 = vmatprep.subr.mxu0 0.0
        %4346 = vmatpush1.msra.mxu0 0.0
        %4347 = vmatprep.subr.mxu0 0.0
        %4348 = vmatpush1.msra.mxu0 0.0
        %4349 = vmatprep.subr.mxu0 0.0
        %4350 = vmatpush1.msra.mxu0 0.0
        %4351 = vmatprep.subr.mxu0 0.0
        %4352 = vmatpush1.msra.mxu0 0.0
        %4353 = vmatprep.subr.mxu0 0.0
        %4354 = vmatpush1.msra.mxu0 0.0
        %4355 = vmatprep.subr.mxu0 0.0
        %4356 = vmatpush1.msra.mxu0 0.0
        %4357 = vmatprep.subr.mxu0 0.0
        %4358 = vmatpush1.msra.mxu0 0.0
        %4359 = vmatprep.mubr.f32.mxu0 0.0
        %4360 = vmatmul.mubr.f32.gmra.mrb[0].mxu0 %v4293
        %v4361 = vpop.f32.mrb[0].mxu0
        %v4362 = vadd.f32 0.0, %v4361
        %v4363 = vpop.f32.mrb[0].mxu0
        %4364 = vdwg.mxu0
        %v4366 = vrot.slane %v4362, 3
        %v4368 = vadd.f32 %v4060, %v4366
        %v4369 = vxor.u32 %v4368, 2147483648
        %v4370 = vmul.f32 %v4369, 1.442695
        %v4371 = vpow.pop %v4370
        %v4372 = vadd.f32 %v4371, 1.0
        %v4373 = vrcp.pop %v4372
        %v4374 = vmul.f32 1.0, %v4373
        %v4375 = vtanh.pop %v4368
        %v4377 = vrot.slane %v4288, 1
        %v4379 = vmul.f32 %v4374, %v4377
        %4381 = vrot.lane.b32.xlu0 %v4375, 96
        %v4382 = vpop.permute.xlu0 %4381
        %v4384 = vmul.f32 %v4374, %v4382
        %4386 = vrot.lane.b32.xlu0 %v4384, 16
        %v4387 = vpop.permute.xlu0 %4386
        %v4389 = vadd.f32 %v4379, %v4387
        %v4390 = vtanh.pop %v4389
        %4392 = vrot.lane.b32.xlu0 %v4390, 32
        %v4393 = vpop.permute.xlu0 %4392
        %v4395 = vmul.f32 %v4374, %v4393
        %v4396 = vmul.f32 %v3719, %v4395
        %v4397 = vmul.f32 %v3722, %v4282
        %v4399 = vrot.slane %v4397, 1
        %v4401 = vadd.f32 %v4396, %v4399
        %v4402 = vmul.f32 %v3719, %v4389
        %v4403 = vmul.f32 %v3722, %v4288
        %v4405 = vrot.slane %v4403, 1
        %v4407 = vadd.f32 %v4402, %v4405
        %v4409 = vrot.slane %v4401, 5
        %4410 = vrot.lane.b32.xlu0 %v4409, 80
        %v4411 = vpop.permute.xlu0 %4410
        %v4412 = vsel %vm3006, %v4411, 0
        %4414 = vmatprep.subr.mxu0 0.0
        %4415 = vmatpush1.msra.mxu0 %v4063
        %4416 = vmatprep.subr.mxu0 0.0
        %4417 = vmatpush1.msra.mxu0 %v4064
        %4418 = vmatprep.subr.mxu0 0.0
        %4419 = vmatpush1.msra.mxu0 0.0
        %4420 = vmatprep.subr.mxu0 0.0
        %4421 = vmatpush1.msra.mxu0 0.0
        %4422 = vmatprep.subr.mxu0 0.0
        %4423 = vmatpush1.msra.mxu0 0.0
        %4424 = vmatprep.subr.mxu0 0.0
        %4425 = vmatpush1.msra.mxu0 0.0
        %4426 = vmatprep.subr.mxu0 0.0
        %4427 = vmatpush1.msra.mxu0 0.0
        %4428 = vmatprep.subr.mxu0 0.0
        %4429 = vmatpush1.msra.mxu0 0.0
        %4430 = vmatprep.subr.mxu0 0.0
        %4431 = vmatpush1.msra.mxu0 0.0
        %4432 = vmatprep.subr.mxu0 0.0
        %4433 = vmatpush1.msra.mxu0 0.0
        %4434 = vmatprep.subr.mxu0 0.0
        %4435 = vmatpush1.msra.mxu0 0.0
        %4436 = vmatprep.subr.mxu0 0.0
        %4437 = vmatpush1.msra.mxu0 0.0
        %4438 = vmatprep.subr.mxu0 0.0
        %4439 = vmatpush1.msra.mxu0 0.0
        %4440 = vmatprep.subr.mxu0 0.0
        %4441 = vmatpush1.msra.mxu0 0.0
        %4442 = vmatprep.subr.mxu0 0.0
        %4443 = vmatpush1.msra.mxu0 0.0
        %4444 = vmatprep.subr.mxu0 0.0
        %4445 = vmatpush1.msra.mxu0 0.0
        %4446 = vmatprep.subr.mxu0 0.0
        %4447 = vmatpush1.msra.mxu0 0.0
        %4448 = vmatprep.subr.mxu0 0.0
        %4449 = vmatpush1.msra.mxu0 0.0
        %4450 = vmatprep.subr.mxu0 0.0
        %4451 = vmatpush1.msra.mxu0 0.0
        %4452 = vmatprep.subr.mxu0 0.0
        %4453 = vmatpush1.msra.mxu0 0.0
        %4454 = vmatprep.subr.mxu0 0.0
        %4455 = vmatpush1.msra.mxu0 0.0
        %4456 = vmatprep.subr.mxu0 0.0
        %4457 = vmatpush1.msra.mxu0 0.0
        %4458 = vmatprep.subr.mxu0 0.0
        %4459 = vmatpush1.msra.mxu0 0.0
        %4460 = vmatprep.subr.mxu0 0.0
        %4461 = vmatpush1.msra.mxu0 0.0
        %4462 = vmatprep.subr.mxu0 0.0
        %4463 = vmatpush1.msra.mxu0 0.0
        %4464 = vmatprep.subr.mxu0 0.0
        %4465 = vmatpush1.msra.mxu0 0.0
        %4466 = vmatprep.subr.mxu0 0.0
        %4467 = vmatpush1.msra.mxu0 0.0
        %4468 = vmatprep.subr.mxu0 0.0
        %4469 = vmatpush1.msra.mxu0 0.0
        %4470 = vmatprep.subr.mxu0 0.0
        %4471 = vmatpush1.msra.mxu0 0.0
        %4472 = vmatprep.subr.mxu0 0.0
        %4473 = vmatpush1.msra.mxu0 0.0
        %4474 = vmatprep.subr.mxu0 0.0
        %4475 = vmatpush1.msra.mxu0 0.0
        %4476 = vmatprep.subr.mxu0 0.0
        %4477 = vmatpush1.msra.mxu0 0.0
        %4478 = vmatprep.mubr.f32.mxu0 0.0
        %4479 = vmatmul.mubr.f32.gmra.mrb[0].mxu0 %v4412
        %v4480 = vpop.f32.mrb[0].mxu0
        %v4481 = vadd.f32 0.0, %v4480
        %v4482 = vpop.f32.mrb[0].mxu0
        %4483 = vdwg.mxu0
        %v4485 = vrot.slane %v4481, 4
        %v4487 = vadd.f32 %v4060, %v4485
        %v4488 = vxor.u32 %v4487, 2147483648
        %v4489 = vmul.f32 %v4488, 1.442695
        %v4490 = vpow.pop %v4489
        %v4491 = vadd.f32 %v4490, 1.0
        %v4492 = vrcp.pop %v4491
        %v4493 = vmul.f32 1.0, %v4492
        %v4494 = vtanh.pop %v4487
        %v4496 = vrot.slane %v4407, 1
        %v4498 = vmul.f32 %v4493, %v4496
        %4500 = vrot.lane.b32.xlu0 %v4494, 96
        %v4501 = vpop.permute.xlu0 %4500
        %v4503 = vmul.f32 %v4493, %v4501
        %4505 = vrot.lane.b32.xlu0 %v4503, 16
        %v4506 = vpop.permute.xlu0 %4505
        %v4508 = vadd.f32 %v4498, %v4506
        %v4509 = vtanh.pop %v4508
        %4511 = vrot.lane.b32.xlu0 %v4509, 32
        %v4512 = vpop.permute.xlu0 %4511
        %v4514 = vmul.f32 %v4493, %v4512
        %v4515 = vmul.f32 %v3595, %v4514
        %v4516 = vmul.f32 %v3598, %v4401
        %v4518 = vrot.slane %v4516, 1
        %v4520 = vadd.f32 %v4515, %v4518
        %v4521 = vmul.f32 %v3595, %v4508
        %v4522 = vmul.f32 %v3598, %v4407
        %v4524 = vrot.slane %v4522, 1
        %v4526 = vadd.f32 %v4521, %v4524
        %v4528 = vrot.slane %v4520, 4
        %4529 = vrot.lane.b32.xlu0 %v4528, 80
        %v4530 = vpop.permute.xlu0 %4529
        %v4531 = vsel %vm3006, %v4530, 0
        %4533 = vmatprep.subr.mxu0 0.0
        %4534 = vmatpush1.msra.mxu0 %v4063
        %4535 = vmatprep.subr.mxu0 0.0
        %4536 = vmatpush1.msra.mxu0 %v4064
        %4537 = vmatprep.subr.mxu0 0.0
        %4538 = vmatpush1.msra.mxu0 0.0
        %4539 = vmatprep.subr.mxu0 0.0
        %4540 = vmatpush1.msra.mxu0 0.0
        %4541 = vmatprep.subr.mxu0 0.0
        %4542 = vmatpush1.msra.mxu0 0.0
        %4543 = vmatprep.subr.mxu0 0.0
        %4544 = vmatpush1.msra.mxu0 0.0
        %4545 = vmatprep.subr.mxu0 0.0
        %4546 = vmatpush1.msra.mxu0 0.0
        %4547 = vmatprep.subr.mxu0 0.0
        %4548 = vmatpush1.msra.mxu0 0.0
        %4549 = vmatprep.subr.mxu0 0.0
        %4550 = vmatpush1.msra.mxu0 0.0
        %4551 = vmatprep.subr.mxu0 0.0
        %4552 = vmatpush1.msra.mxu0 0.0
        %4553 = vmatprep.subr.mxu0 0.0
        %4554 = vmatpush1.msra.mxu0 0.0
        %4555 = vmatprep.subr.mxu0 0.0
        %4556 = vmatpush1.msra.mxu0 0.0
        %4557 = vmatprep.subr.mxu0 0.0
        %4558 = vmatpush1.msra.mxu0 0.0
        %4559 = vmatprep.subr.mxu0 0.0
        %4560 = vmatpush1.msra.mxu0 0.0
        %4561 = vmatprep.subr.mxu0 0.0
        %4562 = vmatpush1.msra.mxu0 0.0
        %4563 = vmatprep.subr.mxu0 0.0
        %4564 = vmatpush1.msra.mxu0 0.0
        %4565 = vmatprep.subr.mxu0 0.0
        %4566 = vmatpush1.msra.mxu0 0.0
        %4567 = vmatprep.subr.mxu0 0.0
        %4568 = vmatpush1.msra.mxu0 0.0
        %4569 = vmatprep.subr.mxu0 0.0
        %4570 = vmatpush1.msra.mxu0 0.0
        %4571 = vmatprep.subr.mxu0 0.0
        %4572 = vmatpush1.msra.mxu0 0.0
        %4573 = vmatprep.subr.mxu0 0.0
        %4574 = vmatpush1.msra.mxu0 0.0
        %4575 = vmatprep.subr.mxu0 0.0
        %4576 = vmatpush1.msra.mxu0 0.0
        %4577 = vmatprep.subr.mxu0 0.0
        %4578 = vmatpush1.msra.mxu0 0.0
        %4579 = vmatprep.subr.mxu0 0.0
        %4580 = vmatpush1.msra.mxu0 0.0
        %4581 = vmatprep.subr.mxu0 0.0
        %4582 = vmatpush1.msra.mxu0 0.0
        %4583 = vmatprep.subr.mxu0 0.0
        %4584 = vmatpush1.msra.mxu0 0.0
        %4585 = vmatprep.subr.mxu0 0.0
        %4586 = vmatpush1.msra.mxu0 0.0
        %4587 = vmatprep.subr.mxu0 0.0
        %4588 = vmatpush1.msra.mxu0 0.0
        %4589 = vmatprep.subr.mxu0 0.0
        %4590 = vmatpush1.msra.mxu0 0.0
        %4591 = vmatprep.subr.mxu0 0.0
        %4592 = vmatpush1.msra.mxu0 0.0
        %4593 = vmatprep.subr.mxu0 0.0
        %4594 = vmatpush1.msra.mxu0 0.0
        %4595 = vmatprep.subr.mxu0 0.0
        %4596 = vmatpush1.msra.mxu0 0.0
        %4597 = vmatprep.mubr.f32.mxu0 0.0
        %4598 = vmatmul.mubr.f32.gmra.mrb[0].mxu0 %v4531
        %v4599 = vpop.f32.mrb[0].mxu0
        %v4600 = vadd.f32 0.0, %v4599
        %v4601 = vpop.f32.mrb[0].mxu0
        %4602 = vdwg.mxu0
        %v4604 = vrot.slane %v4600, 5
        %v4606 = vadd.f32 %v4060, %v4604
        %v4607 = vxor.u32 %v4606, 2147483648
        %v4608 = vmul.f32 %v4607, 1.442695
        %v4609 = vpow.pop %v4608
        %v4610 = vadd.f32 %v4609, 1.0
        %v4611 = vrcp.pop %v4610
        %v4612 = vmul.f32 1.0, %v4611
        %v4613 = vtanh.pop %v4606
        %v4615 = vrot.slane %v4526, 1
        %v4617 = vmul.f32 %v4612, %v4615
        %4619 = vrot.lane.b32.xlu0 %v4613, 96
        %v4620 = vpop.permute.xlu0 %4619
        %v4622 = vmul.f32 %v4612, %v4620
        %4624 = vrot.lane.b32.xlu0 %v4622, 16
        %v4625 = vpop.permute.xlu0 %4624
        %v4627 = vadd.f32 %v4617, %v4625
        %v4628 = vtanh.pop %v4627
        %4630 = vrot.lane.b32.xlu0 %v4628, 32
        %v4631 = vpop.permute.xlu0 %4630
        %v4633 = vmul.f32 %v4612, %v4631
        %v4634 = vmul.f32 %v3471, %v4633
        %v4635 = vmul.f32 %v3474, %v4520
        %v4637 = vrot.slane %v4635, 1
        %v4639 = vadd.f32 %v4634, %v4637
        %v4640 = vmul.f32 %v3471, %v4627
        %v4641 = vmul.f32 %v3474, %v4526
        %v4643 = vrot.slane %v4641, 1
        %v4645 = vadd.f32 %v4640, %v4643
        %v4647 = vrot.slane %v4639, 3
        %4648 = vrot.lane.b32.xlu0 %v4647, 80
        %v4649 = vpop.permute.xlu0 %4648
        %v4650 = vsel %vm3006, %v4649, 0
        %4652 = vmatprep.subr.mxu0 0.0
        %4653 = vmatpush1.msra.mxu0 %v4063
        %4654 = vmatprep.subr.mxu0 0.0
        %4655 = vmatpush1.msra.mxu0 %v4064
        %4656 = vmatprep.subr.mxu0 0.0
        %4657 = vmatpush1.msra.mxu0 0.0
        %4658 = vmatprep.subr.mxu0 0.0
        %4659 = vmatpush1.msra.mxu0 0.0
        %4660 = vmatprep.subr.mxu0 0.0
        %4661 = vmatpush1.msra.mxu0 0.0
        %4662 = vmatprep.subr.mxu0 0.0
        %4663 = vmatpush1.msra.mxu0 0.0
        %4664 = vmatprep.subr.mxu0 0.0
        %4665 = vmatpush1.msra.mxu0 0.0
        %4666 = vmatprep.subr.mxu0 0.0
        %4667 = vmatpush1.msra.mxu0 0.0
        %4668 = vmatprep.subr.mxu0 0.0
        %4669 = vmatpush1.msra.mxu0 0.0
        %4670 = vmatprep.subr.mxu0 0.0
        %4671 = vmatpush1.msra.mxu0 0.0
        %4672 = vmatprep.subr.mxu0 0.0
        %4673 = vmatpush1.msra.mxu0 0.0
        %4674 = vmatprep.subr.mxu0 0.0
        %4675 = vmatpush1.msra.mxu0 0.0
        %4676 = vmatprep.subr.mxu0 0.0
        %4677 = vmatpush1.msra.mxu0 0.0
        %4678 = vmatprep.subr.mxu0 0.0
        %4679 = vmatpush1.msra.mxu0 0.0
        %4680 = vmatprep.subr.mxu0 0.0
        %4681 = vmatpush1.msra.mxu0 0.0
        %4682 = vmatprep.subr.mxu0 0.0
        %4683 = vmatpush1.msra.mxu0 0.0
        %4684 = vmatprep.subr.mxu0 0.0
        %4685 = vmatpush1.msra.mxu0 0.0
        %4686 = vmatprep.subr.mxu0 0.0
        %4687 = vmatpush1.msra.mxu0 0.0
        %4688 = vmatprep.subr.mxu0 0.0
        %4689 = vmatpush1.msra.mxu0 0.0
        %4690 = vmatprep.subr.mxu0 0.0
        %4691 = vmatpush1.msra.mxu0 0.0
        %4692 = vmatprep.subr.mxu0 0.0
        %4693 = vmatpush1.msra.mxu0 0.0
        %4694 = vmatprep.subr.mxu0 0.0
        %4695 = vmatpush1.msra.mxu0 0.0
        %4696 = vmatprep.subr.mxu0 0.0
        %4697 = vmatpush1.msra.mxu0 0.0
        %4698 = vmatprep.subr.mxu0 0.0
        %4699 = vmatpush1.msra.mxu0 0.0
        %4700 = vmatprep.subr.mxu0 0.0
        %4701 = vmatpush1.msra.mxu0 0.0
        %4702 = vmatprep.subr.mxu0 0.0
        %4703 = vmatpush1.msra.mxu0 0.0
        %4704 = vmatprep.subr.mxu0 0.0
        %4705 = vmatpush1.msra.mxu0 0.0
        %4706 = vmatprep.subr.mxu0 0.0
        %4707 = vmatpush1.msra.mxu0 0.0
        %4708 = vmatprep.subr.mxu0 0.0
        %4709 = vmatpush1.msra.mxu0 0.0
        %4710 = vmatprep.subr.mxu0 0.0
        %4711 = vmatpush1.msra.mxu0 0.0
        %4712 = vmatprep.subr.mxu0 0.0
        %4713 = vmatpush1.msra.mxu0 0.0
        %4714 = vmatprep.subr.mxu0 0.0
        %4715 = vmatpush1.msra.mxu0 0.0
        %4716 = vmatprep.mubr.f32.mxu0 0.0
        %4717 = vmatmul.mubr.f32.gmra.mrb[0].mxu0 %v4650
        %v4718 = vpop.f32.mrb[0].mxu0
        %v4719 = vadd.f32 0.0, %v4718
        %v4720 = vpop.f32.mrb[0].mxu0
        %4721 = vdwg.mxu0
        %v4723 = vrot.slane %v4719, 6
        %v4725 = vadd.f32 %v4060, %v4723
        %v4726 = vxor.u32 %v4725, 2147483648
        %v4727 = vmul.f32 %v4726, 1.442695
        %v4728 = vpow.pop %v4727
        %v4729 = vadd.f32 %v4728, 1.0
        %v4730 = vrcp.pop %v4729
        %v4731 = vmul.f32 1.0, %v4730
        %v4732 = vtanh.pop %v4725
        %v4734 = vrot.slane %v4645, 1
        %v4736 = vmul.f32 %v4731, %v4734
        %4738 = vrot.lane.b32.xlu0 %v4732, 96
        %v4739 = vpop.permute.xlu0 %4738
        %v4741 = vmul.f32 %v4731, %v4739
        %4743 = vrot.lane.b32.xlu0 %v4741, 16
        %v4744 = vpop.permute.xlu0 %4743
        %v4746 = vadd.f32 %v4736, %v4744
        %v4747 = vtanh.pop %v4746
        %4749 = vrot.lane.b32.xlu0 %v4747, 32
        %v4750 = vpop.permute.xlu0 %4749
        %v4752 = vmul.f32 %v4731, %v4750
        %v4753 = vmul.f32 %v3347, %v4752
        %v4754 = vmul.f32 %v3350, %v4639
        %v4756 = vrot.slane %v4754, 1
        %v4758 = vadd.f32 %v4753, %v4756
        %v4759 = vmul.f32 %v3347, %v4746
        %v4760 = vmul.f32 %v3350, %v4645
        %v4762 = vrot.slane %v4760, 1
        %v4764 = vadd.f32 %v4759, %v4762
        %v4766 = vrot.slane %v4758, 2
        %4767 = vrot.lane.b32.xlu0 %v4766, 80
        %v4768 = vpop.permute.xlu0 %4767
        %v4769 = vsel %vm3006, %v4768, 0
        %4771 = vmatprep.subr.mxu0 0.0
        %4772 = vmatpush1.msra.mxu0 %v4063
        %4773 = vmatprep.subr.mxu0 0.0
        %4774 = vmatpush1.msra.mxu0 %v4064
        %4775 = vmatprep.subr.mxu0 0.0
        %4776 = vmatpush1.msra.mxu0 0.0
        %4777 = vmatprep.subr.mxu0 0.0
        %4778 = vmatpush1.msra.mxu0 0.0
        %4779 = vmatprep.subr.mxu0 0.0
        %4780 = vmatpush1.msra.mxu0 0.0
        %4781 = vmatprep.subr.mxu0 0.0
        %4782 = vmatpush1.msra.mxu0 0.0
        %4783 = vmatprep.subr.mxu0 0.0
        %4784 = vmatpush1.msra.mxu0 0.0
        %4785 = vmatprep.subr.mxu0 0.0
        %4786 = vmatpush1.msra.mxu0 0.0
        %4787 = vmatprep.subr.mxu0 0.0
        %4788 = vmatpush1.msra.mxu0 0.0
        %4789 = vmatprep.subr.mxu0 0.0
        %4790 = vmatpush1.msra.mxu0 0.0
        %4791 = vmatprep.subr.mxu0 0.0
        %4792 = vmatpush1.msra.mxu0 0.0
        %4793 = vmatprep.subr.mxu0 0.0
        %4794 = vmatpush1.msra.mxu0 0.0
        %4795 = vmatprep.subr.mxu0 0.0
        %4796 = vmatpush1.msra.mxu0 0.0
        %4797 = vmatprep.subr.mxu0 0.0
        %4798 = vmatpush1.msra.mxu0 0.0
        %4799 = vmatprep.subr.mxu0 0.0
        %4800 = vmatpush1.msra.mxu0 0.0
        %4801 = vmatprep.subr.mxu0 0.0
        %4802 = vmatpush1.msra.mxu0 0.0
        %4803 = vmatprep.subr.mxu0 0.0
        %4804 = vmatpush1.msra.mxu0 0.0
        %4805 = vmatprep.subr.mxu0 0.0
        %4806 = vmatpush1.msra.mxu0 0.0
        %4807 = vmatprep.subr.mxu0 0.0
        %4808 = vmatpush1.msra.mxu0 0.0
        %4809 = vmatprep.subr.mxu0 0.0
        %4810 = vmatpush1.msra.mxu0 0.0
        %4811 = vmatprep.subr.mxu0 0.0
        %4812 = vmatpush1.msra.mxu0 0.0
        %4813 = vmatprep.subr.mxu0 0.0
        %4814 = vmatpush1.msra.mxu0 0.0
        %4815 = vmatprep.subr.mxu0 0.0
        %4816 = vmatpush1.msra.mxu0 0.0
        %4817 = vmatprep.subr.mxu0 0.0
        %4818 = vmatpush1.msra.mxu0 0.0
        %4819 = vmatprep.subr.mxu0 0.0
        %4820 = vmatpush1.msra.mxu0 0.0
        %4821 = vmatprep.subr.mxu0 0.0
        %4822 = vmatpush1.msra.mxu0 0.0
        %4823 = vmatprep.subr.mxu0 0.0
        %4824 = vmatpush1.msra.mxu0 0.0
        %4825 = vmatprep.subr.mxu0 0.0
        %4826 = vmatpush1.msra.mxu0 0.0
        %4827 = vmatprep.subr.mxu0 0.0
        %4828 = vmatpush1.msra.mxu0 0.0
        %4829 = vmatprep.subr.mxu0 0.0
        %4830 = vmatpush1.msra.mxu0 0.0
        %4831 = vmatprep.subr.mxu0 0.0
        %4832 = vmatpush1.msra.mxu0 0.0
        %4833 = vmatprep.subr.mxu0 0.0
        %4834 = vmatpush1.msra.mxu0 0.0
        %4835 = vmatprep.mubr.f32.mxu0 0.0
        %4836 = vmatmul.mubr.f32.gmra.mrb[0].mxu0 %v4769
        %v4837 = vpop.f32.mrb[0].mxu0
        %v4838 = vadd.f32 0.0, %v4837
        %v4839 = vpop.f32.mrb[0].mxu0
        %4840 = vdwg.mxu0
        %v4842 = vrot.slane %v4838, 7
        %v4844 = vadd.f32 %v4060, %v4842
        %v4845 = vxor.u32 %v4844, 2147483648
        %v4846 = vmul.f32 %v4845, 1.442695
        %v4847 = vpow.pop %v4846
        %v4848 = vadd.f32 %v4847, 1.0
        %v4849 = vrcp.pop %v4848
        %v4850 = vmul.f32 1.0, %v4849
        %v4851 = vtanh.pop %v4844
        %v4853 = vrot.slane %v4764, 1
        %v4855 = vmul.f32 %v4850, %v4853
        %4857 = vrot.lane.b32.xlu0 %v4851, 96
        %v4858 = vpop.permute.xlu0 %4857
        %v4860 = vmul.f32 %v4850, %v4858
        %4862 = vrot.lane.b32.xlu0 %v4860, 16
        %v4863 = vpop.permute.xlu0 %4862
        %v4865 = vadd.f32 %v4855, %v4863
        %v4866 = vtanh.pop %v4865
        %4868 = vrot.lane.b32.xlu0 %v4866, 32
        %v4869 = vpop.permute.xlu0 %4868
        %v4871 = vmul.f32 %v4850, %v4869
        %v4872 = vmul.f32 %v3223, %v4871
        %v4873 = vmul.f32 %v3226, %v4758
        %v4875 = vrot.slane %v4873, 1
        %v4877 = vadd.f32 %v4872, %v4875
        %v4878 = vmul.f32 %v3223, %v4865
        %v4879 = vmul.f32 %v3226, %v4764
        %v4881 = vrot.slane %v4879, 1
        %v4883 = vadd.f32 %v4878, %v4881
        %v4885 = vrot.slane %v4877, 1
        %4886 = vrot.lane.b32.xlu0 %v4885, 80
        %v4887 = vpop.permute.xlu0 %4886
        %v4888 = vsel %vm3006, %v4887, 0
        %4890 = vmatprep.subr.mxu0 0.0
        %4891 = vmatpush1.msra.mxu0 %v4063
        %4892 = vmatprep.subr.mxu0 0.0
        %4893 = vmatpush1.msra.mxu0 %v4064
        %4894 = vmatprep.subr.mxu0 0.0
        %4895 = vmatpush1.msra.mxu0 0.0
        %4896 = vmatprep.subr.mxu0 0.0
        %4897 = vmatpush1.msra.mxu0 0.0
        %4898 = vmatprep.subr.mxu0 0.0
        %4899 = vmatpush1.msra.mxu0 0.0
        %4900 = vmatprep.subr.mxu0 0.0
        %4901 = vmatpush1.msra.mxu0 0.0
        %4902 = vmatprep.subr.mxu0 0.0
        %4903 = vmatpush1.msra.mxu0 0.0
        %4904 = vmatprep.subr.mxu0 0.0
        %4905 = vmatpush1.msra.mxu0 0.0
        %4906 = vmatprep.subr.mxu0 0.0
        %4907 = vmatpush1.msra.mxu0 0.0
        %4908 = vmatprep.subr.mxu0 0.0
        %4909 = vmatpush1.msra.mxu0 0.0
        %4910 = vmatprep.subr.mxu0 0.0
        %4911 = vmatpush1.msra.mxu0 0.0
        %4912 = vmatprep.subr.mxu0 0.0
        %4913 = vmatpush1.msra.mxu0 0.0
        %4914 = vmatprep.subr.mxu0 0.0
        %4915 = vmatpush1.msra.mxu0 0.0
        %4916 = vmatprep.subr.mxu0 0.0
        %4917 = vmatpush1.msra.mxu0 0.0
        %4918 = vmatprep.subr.mxu0 0.0
        %4919 = vmatpush1.msra.mxu0 0.0
        %4920 = vmatprep.subr.mxu0 0.0
        %4921 = vmatpush1.msra.mxu0 0.0
        %4922 = vmatprep.subr.mxu0 0.0
        %4923 = vmatpush1.msra.mxu0 0.0
        %4924 = vmatprep.subr.mxu0 0.0
        %4925 = vmatpush1.msra.mxu0 0.0
        %4926 = vmatprep.subr.mxu0 0.0
        %4927 = vmatpush1.msra.mxu0 0.0
        %4928 = vmatprep.subr.mxu0 0.0
        %4929 = vmatpush1.msra.mxu0 0.0
        %4930 = vmatprep.subr.mxu0 0.0
        %4931 = vmatpush1.msra.mxu0 0.0
        %4932 = vmatprep.subr.mxu0 0.0
        %4933 = vmatpush1.msra.mxu0 0.0
        %4934 = vmatprep.subr.mxu0 0.0
        %4935 = vmatpush1.msra.mxu0 0.0
        %4936 = vmatprep.subr.mxu0 0.0
        %4937 = vmatpush1.msra.mxu0 0.0
        %4938 = vmatprep.subr.mxu0 0.0
        %4939 = vmatpush1.msra.mxu0 0.0
        %4940 = vmatprep.subr.mxu0 0.0
        %4941 = vmatpush1.msra.mxu0 0.0
        %4942 = vmatprep.subr.mxu0 0.0
        %4943 = vmatpush1.msra.mxu0 0.0
        %4944 = vmatprep.subr.mxu0 0.0
        %4945 = vmatpush1.msra.mxu0 0.0
        %4946 = vmatprep.subr.mxu0 0.0
        %4947 = vmatpush1.msra.mxu0 0.0
        %4948 = vmatprep.subr.mxu0 0.0
        %4949 = vmatpush1.msra.mxu0 0.0
        %4950 = vmatprep.subr.mxu0 0.0
        %4951 = vmatpush1.msra.mxu0 0.0
        %4952 = vmatprep.subr.mxu0 0.0
        %4953 = vmatpush1.msra.mxu0 0.0
        %4954 = vmatprep.mubr.f32.mxu0 0.0
        %4955 = vmatmul.mubr.f32.gmra.mrb[0].mxu0 %v4888
        %v4956 = vpop.f32.mrb[0].mxu0
        %v4957 = vadd.f32 0.0, %v4956
        %v4958 = vpop.f32.mrb[0].mxu0
        %4959 = vdwg.mxu0
        %v4960 = vadd.f32 %v4060, %v4957
        %v4961 = vxor.u32 %v4960, 2147483648
        %v4962 = vmul.f32 %v4961, 1.442695
        %v4963 = vpow.pop %v4962
        %v4964 = vadd.f32 %v4963, 1.0
        %v4965 = vrcp.pop %v4964
        %v4966 = vmul.f32 1.0, %v4965
        %v4967 = vtanh.pop %v4960
        %v4969 = vrot.slane %v4883, 1
        %v4971 = vmul.f32 %v4966, %v4969
        %4973 = vrot.lane.b32.xlu0 %v4967, 96
        %v4974 = vpop.permute.xlu0 %4973
        %v4976 = vmul.f32 %v4966, %v4974
        %4978 = vrot.lane.b32.xlu0 %v4976, 16
        %v4979 = vpop.permute.xlu0 %4978
        %v4981 = vadd.f32 %v4971, %v4979
        %v4982 = vtanh.pop %v4981
        %4984 = vrot.lane.b32.xlu0 %v4982, 32
        %v4985 = vpop.permute.xlu0 %4984
        %v4987 = vmul.f32 %v4966, %v4985
        %v4988 = vmul.f32 %v3107, %v4987
        %v4989 = vsel %vm3969, %v4988, %v4872
        %v4990 = vsel %vm1898, %v4989, %v4753
        %v4991 = vsel %vm3972, %v4990, %v4634
        %v4992 = vsel %vm3974, %v4991, %v4515
        %v4993 = vsel %vm3976, %v4992, %v4396
        %v4994 = vsel %vm3978, %v4993, %v4277
        %v4995 = vsel %vm3980, %v4994, %v4163
        %4997 = vrot.lane.b32.xlu0 %v3981, 80
        %v4998 = vpop.permute.xlu0 %4997
        %5001 = vrot.lane.b32.xlu0 %v4995, 96
        %v5002 = vpop.permute.xlu0 %5001
        %v5004 = vsel %vm3006, %v4998, %v5002
        %v5005 = vsel %vm1506, %v5004, 0.0
        %5006 = vadd.xlane.f32.xlu0 %v5005
        %v5007 = vpop.xlane.xlu0 %5006
        %v5008 = vrcp.pop 32.0
        %v5009 = vmul.f32 %v5007, %v5008
        %v5010 = vsub.f32 %v5004, %v5009
        %v5011 = vmul.f32 %v5010, %v5010
        %v5012 = vsel %vm1506, %v5011, 0.0
        %5013 = vadd.xlane.f32.xlu0 %v5012
        %v5014 = vpop.xlane.xlu0 %5013
        %v5015 = vmul.f32 %v5014, %v5008
        %v5016 = vadd.f32 %v5015, 1e-12
        %v5017 = vrsqrt.pop %v5016
        %v5018 = vmul.f32 %v5010, %v5017
        %v5019 = vld [vmem:[%s57] sm:$0xff]
        %v5020 = vld [vmem:[%s57 + $0x8] sm:$0xff]
        %v5021 = vld [vmem:[%s57 + $0x10] sm:$0xff]
        %v5022 = vld [vmem:[%s57 + $0x18] sm:$0xff]
        %v5023 = vld [vmem:[%s61] sm:$0x1]
        %v5025 = vlaneseq
        %v5026 = vshrl.u32 %v5025, 7
        %v5027 = vsub.s32 0, %v5026
        %v5028 = vrot.slane %v5023, %v5027
        %v5031 = vsel %vm1506, %v5004, 0
        %5033 = vmatprep.subr.mxu0 0.0
        %5034 = vmatpush1.msra.mxu0 %v5019
        %5035 = vmatprep.subr.mxu0 0.0
        %5036 = vmatpush1.msra.mxu0 %v5020
        %5037 = vmatprep.subr.mxu0 0.0
        %5038 = vmatpush1.msra.mxu0 %v5021
        %5039 = vmatprep.subr.mxu0 0.0
        %5040 = vmatpush1.msra.mxu0 %v5022
        %5041 = vmatprep.subr.mxu0 0.0
        %5042 = vmatpush1.msra.mxu0 0.0
        %5043 = vmatprep.subr.mxu0 0.0
        %5044 = vmatpush1.msra.mxu0 0.0
        %5045 = vmatprep.subr.mxu0 0.0
        %5046 = vmatpush1.msra.mxu0 0.0
        %5047 = vmatprep.subr.mxu0 0.0
        %5048 = vmatpush1.msra.mxu0 0.0
        %5049 = vmatprep.subr.mxu0 0.0
        %5050 = vmatpush1.msra.mxu0 0.0
        %5051 = vmatprep.subr.mxu0 0.0
        %5052 = vmatpush1.msra.mxu0 0.0
        %5053 = vmatprep.subr.mxu0 0.0
        %5054 = vmatpush1.msra.mxu0 0.0
        %5055 = vmatprep.subr.mxu0 0.0
        %5056 = vmatpush1.msra.mxu0 0.0
        %5057 = vmatprep.subr.mxu0 0.0
        %5058 = vmatpush1.msra.mxu0 0.0
        %5059 = vmatprep.subr.mxu0 0.0
        %5060 = vmatpush1.msra.mxu0 0.0
        %5061 = vmatprep.subr.mxu0 0.0
        %5062 = vmatpush1.msra.mxu0 0.0
        %5063 = vmatprep.subr.mxu0 0.0
        %5064 = vmatpush1.msra.mxu0 0.0
        %5065 = vmatprep.subr.mxu0 0.0
        %5066 = vmatpush1.msra.mxu0 0.0
        %5067 = vmatprep.subr.mxu0 0.0
        %5068 = vmatpush1.msra.mxu0 0.0
        %5069 = vmatprep.subr.mxu0 0.0
        %5070 = vmatpush1.msra.mxu0 0.0
        %5071 = vmatprep.subr.mxu0 0.0
        %5072 = vmatpush1.msra.mxu0 0.0
        %5073 = vmatprep.subr.mxu0 0.0
        %5074 = vmatpush1.msra.mxu0 0.0
        %5075 = vmatprep.subr.mxu0 0.0
        %5076 = vmatpush1.msra.mxu0 0.0
        %5077 = vmatprep.subr.mxu0 0.0
        %5078 = vmatpush1.msra.mxu0 0.0
        %5079 = vmatprep.subr.mxu0 0.0
        %5080 = vmatpush1.msra.mxu0 0.0
        %5081 = vmatprep.subr.mxu0 0.0
        %5082 = vmatpush1.msra.mxu0 0.0
        %5083 = vmatprep.subr.mxu0 0.0
        %5084 = vmatpush1.msra.mxu0 0.0
        %5085 = vmatprep.subr.mxu0 0.0
        %5086 = vmatpush1.msra.mxu0 0.0
        %5087 = vmatprep.subr.mxu0 0.0
        %5088 = vmatpush1.msra.mxu0 0.0
        %5089 = vmatprep.subr.mxu0 0.0
        %5090 = vmatpush1.msra.mxu0 0.0
        %5091 = vmatprep.subr.mxu0 0.0
        %5092 = vmatpush1.msra.mxu0 0.0
        %5093 = vmatprep.subr.mxu0 0.0
        %5094 = vmatpush1.msra.mxu0 0.0
        %5095 = vmatprep.subr.mxu0 0.0
        %5096 = vmatpush1.msra.mxu0 0.0
        %5097 = vmatprep.mubr.f32.mxu0 0.0
        %5098 = vmatmul.mubr.f32.gmra.mrb[0].mxu0 %v5031
        %v5099 = vpop.f32.mrb[0].mxu0
        %v5100 = vadd.f32 %v5028, %v5099
        %v5101 = vpop.f32.mrb[0].mxu0
        %5102 = vdwg.mxu0
        %v5103 = vld [vmem:[%s59] sm:$0xff]
        %v5104 = vld [vmem:[%s59 + $0x8] sm:$0xff]
        %v5105 = vld [vmem:[%s59 + $0x10] sm:$0xff]
        %v5106 = vld [vmem:[%s59 + $0x18] sm:$0xff]
        %v5107 = vld [vmem:[%s63] sm:$0x1]
        %v5109 = vlaneseq
        %v5110 = vshrl.u32 %v5109, 7
        %v5111 = vsub.s32 0, %v5110
        %v5112 = vrot.slane %v5107, %v5111
        %5114 = vmatprep.subr.mxu0 0.0
        %5115 = vmatpush1.msra.mxu0 %v5103
        %5116 = vmatprep.subr.mxu0 0.0
        %5117 = vmatpush1.msra.mxu0 %v5104
        %5118 = vmatprep.subr.mxu0 0.0
        %5119 = vmatpush1.msra.mxu0 %v5105
        %5120 = vmatprep.subr.mxu0 0.0
        %5121 = vmatpush1.msra.mxu0 %v5106
        %5122 = vmatprep.subr.mxu0 0.0
        %5123 = vmatpush1.msra.mxu0 0.0
        %5124 = vmatprep.subr.mxu0 0.0
        %5125 = vmatpush1.msra.mxu0 0.0
        %5126 = vmatprep.subr.mxu0 0.0
        %5127 = vmatpush1.msra.mxu0 0.0
        %5128 = vmatprep.subr.mxu0 0.0
        %5129 = vmatpush1.msra.mxu0 0.0
        %5130 = vmatprep.subr.mxu0 0.0
        %5131 = vmatpush1.msra.mxu0 0.0
        %5132 = vmatprep.subr.mxu0 0.0
        %5133 = vmatpush1.msra.mxu0 0.0
        %5134 = vmatprep.subr.mxu0 0.0
        %5135 = vmatpush1.msra.mxu0 0.0
        %5136 = vmatprep.subr.mxu0 0.0
        %5137 = vmatpush1.msra.mxu0 0.0
        %5138 = vmatprep.subr.mxu0 0.0
        %5139 = vmatpush1.msra.mxu0 0.0
        %5140 = vmatprep.subr.mxu0 0.0
        %5141 = vmatpush1.msra.mxu0 0.0
        %5142 = vmatprep.subr.mxu0 0.0
        %5143 = vmatpush1.msra.mxu0 0.0
        %5144 = vmatprep.subr.mxu0 0.0
        %5145 = vmatpush1.msra.mxu0 0.0
        %5146 = vmatprep.subr.mxu0 0.0
        %5147 = vmatpush1.msra.mxu0 0.0
        %5148 = vmatprep.subr.mxu0 0.0
        %5149 = vmatpush1.msra.mxu0 0.0
        %5150 = vmatprep.subr.mxu0 0.0
        %5151 = vmatpush1.msra.mxu0 0.0
        %5152 = vmatprep.subr.mxu0 0.0
        %5153 = vmatpush1.msra.mxu0 0.0
        %5154 = vmatprep.subr.mxu0 0.0
        %5155 = vmatpush1.msra.mxu0 0.0
        %5156 = vmatprep.subr.mxu0 0.0
        %5157 = vmatpush1.msra.mxu0 0.0
        %5158 = vmatprep.subr.mxu0 0.0
        %5159 = vmatpush1.msra.mxu0 0.0
        %5160 = vmatprep.subr.mxu0 0.0
        %5161 = vmatpush1.msra.mxu0 0.0
        %5162 = vmatprep.subr.mxu0 0.0
        %5163 = vmatpush1.msra.mxu0 0.0
        %5164 = vmatprep.subr.mxu0 0.0
        %5165 = vmatpush1.msra.mxu0 0.0
        %5166 = vmatprep.subr.mxu0 0.0
        %5167 = vmatpush1.msra.mxu0 0.0
        %5168 = vmatprep.subr.mxu0 0.0
        %5169 = vmatpush1.msra.mxu0 0.0
        %5170 = vmatprep.subr.mxu0 0.0
        %5171 = vmatpush1.msra.mxu0 0.0
        %5172 = vmatprep.subr.mxu0 0.0
        %5173 = vmatpush1.msra.mxu0 0.0
        %5174 = vmatprep.subr.mxu0 0.0
        %5175 = vmatpush1.msra.mxu0 0.0
        %5176 = vmatprep.subr.mxu0 0.0
        %5177 = vmatpush1.msra.mxu0 0.0
        %5178 = vmatprep.mubr.f32.mxu0 0.0
        %5179 = vmatmul.mubr.f32.gmra.mrb[0].mxu0 %v5031
        %v5180 = vpop.f32.mrb[0].mxu0
        %v5181 = vadd.f32 %v5112, %v5180
        %v5182 = vpop.f32.mrb[0].mxu0
        %5183 = vdwg.mxu0
        %v5185 = vcombine.high %v5018, %v5018
        %v5187 = vunpack.c.l.s4 1966171168
        %v5188 = vunpack.c.0.s8 %v5187
        %v5189 = vlaneseq
        %v5190 = vshrl.u32 %v5189, 7
        %v5191 = vsub.s32 %v5188, %v5190
        %v5192 = vrot.slane %v5018, %v5191
        %v5194 = vunpack.c.l.s4 1966171168
        %v5195 = vunpack.c.0.s8 %v5194
        %v5196 = vlaneseq
        %v5197 = vshrl.u32 %v5196, 7
        %v5198 = vsub.s32 %v5195, %v5197
        %v5199 = vrot.slane %v5185, %v5198
        %v5200 = vcombine.high %v5192, %v5192
        %v5201 = vcombine.high %v5199, %v5199
        %v5203 = vunpack.c.l.s4 1966171168
        %v5204 = vunpack.c.0.s8 %v5203
        %v5205 = vlaneseq
        %v5206 = vshrl.u32 %v5205, 7
        %v5207 = vsub.s32 %v5204, %v5206
        %v5208 = vrot.slane %v5192, %v5207
        %v5210 = vunpack.c.l.s4 1966171168
        %v5211 = vunpack.c.0.s8 %v5210
        %v5212 = vlaneseq
        %v5213 = vshrl.u32 %v5212, 7
        %v5214 = vsub.s32 %v5211, %v5213
        %v5215 = vrot.slane %v5199, %v5214
        %v5217 = vunpack.c.l.s4 1966171168
        %v5218 = vunpack.c.0.s8 %v5217
        %v5219 = vlaneseq
        %v5220 = vshrl.u32 %v5219, 7
        %v5221 = vsub.s32 %v5218, %v5220
        %v5222 = vrot.slane %v5200, %v5221
        %v5224 = vunpack.c.l.s4 1966171168
        %v5225 = vunpack.c.0.s8 %v5224
        %v5226 = vlaneseq
        %v5227 = vshrl.u32 %v5226, 7
        %v5228 = vsub.s32 %v5225, %v5227
        %v5229 = vrot.slane %v5201, %v5228
        %v5230 = vcombine.high %v5208, %v5208
        %v5231 = vcombine.high %v5215, %v5215
        %v5232 = vcombine.high %v5222, %v5222
        %v5233 = vcombine.high %v5229, %v5229
        %v5234 = vlaneseq
        %v5235 = vshrl.u32 %v5234, 7
        %v5236 = vsub.s32 0, %v5235
        %v5237 = vrot.slane %v5208, %v5236
        %v5238 = vlaneseq
        %v5239 = vshrl.u32 %v5238, 7
        %v5240 = vsub.s32 0, %v5239
        %v5241 = vrot.slane %v5222, %v5240
        %v5242 = vlaneseq
        %v5243 = vshrl.u32 %v5242, 7
        %v5244 = vsub.s32 0, %v5243
        %v5245 = vrot.slane %v5230, %v5244
        %v5246 = vlaneseq
        %v5247 = vshrl.u32 %v5246, 7
        %v5248 = vsub.s32 0, %v5247
        %v5249 = vrot.slane %v5232, %v5248
        %v5250 = vlaneseq
        %v5251 = vshrl.u32 %v5250, 7
        %v5252 = vsub.s32 0, %v5251
        %v5253 = vrot.slane %v5215, %v5252
        %v5254 = vlaneseq
        %v5255 = vshrl.u32 %v5254, 7
        %v5256 = vsub.s32 0, %v5255
        %v5257 = vrot.slane %v5229, %v5256
        %v5258 = vlaneseq
        %v5259 = vshrl.u32 %v5258, 7
        %v5260 = vsub.s32 0, %v5259
        %v5261 = vrot.slane %v5231, %v5260
        %v5262 = vlaneseq
        %v5263 = vshrl.u32 %v5262, 7
        %v5264 = vsub.s32 0, %v5263
        %v5265 = vrot.slane %v5233, %v5264
        %v5274 = vmul.f32 %v5237, %v5100
        %v5275 = vmul.f32 %v5241, %v5100
        %v5276 = vmul.f32 %v5245, %v5100
        %v5277 = vmul.f32 %v5249, %v5100
        %v5278 = vmul.f32 %v5253, %v5100
        %v5279 = vmul.f32 %v5257, %v5100
        %v5280 = vmul.f32 %v5261, %v5100
        %v5281 = vmul.f32 %v5265, %v5100
        %v5282 = vadd.f32 %v5274, %v5181
        %v5283 = vadd.f32 %v5275, %v5181
        %v5284 = vadd.f32 %v5276, %v5181
        %v5285 = vadd.f32 %v5277, %v5181
        %v5286 = vadd.f32 %v5278, %v5181
        %v5287 = vadd.f32 %v5279, %v5181
        %v5288 = vadd.f32 %v5280, %v5181
        %v5289 = vadd.f32 %v5281, %v5181
        %v5290 = vld [vmem:[%s1380] sm:$0xff]
        %v5291 = vld [vmem:[%s1380 + $0x8] sm:$0xff]
        %v5292 = vld [vmem:[%s1380 + $0x10] sm:$0xff]
        %v5293 = vld [vmem:[%s1380 + $0x18] sm:$0xff]
        %v5294 = vld [vmem:[%s1380 + $0x20] sm:$0xff]
        %v5295 = vld [vmem:[%s1380 + $0x28] sm:$0xff]
        %v5296 = vld [vmem:[%s1380 + $0x30] sm:$0xff]
        %v5297 = vld [vmem:[%s1380 + $0x38] sm:$0xff]
        %v5298 = vld [vmem:[%s65] sm:$0xff]
        %v5299 = vld [vmem:[%s65 + $0x8] sm:$0xff]
        %v5300 = vld [vmem:[%s65 + $0x10] sm:$0xff]
        %v5301 = vld [vmem:[%s65 + $0x18] sm:$0xff]
        %v5302 = vld [vmem:[%s1375] sm:$0xff]
        %v5303 = vld [vmem:[%s1375 + $0x8] sm:$0xff]
        %v5304 = vld [vmem:[%s1375 + $0x10] sm:$0xff]
        %v5305 = vld [vmem:[%s1375 + $0x18] sm:$0xff]
        %v5306 = vld [vmem:[%s1375 + $0x20] sm:$0xff]
        %v5307 = vld [vmem:[%s1375 + $0x28] sm:$0xff]
        %v5308 = vld [vmem:[%s1375 + $0x30] sm:$0xff]
        %v5309 = vld [vmem:[%s1375 + $0x38] sm:$0xff]
        %v5311 = vsel %vm1506, %v5282, 0
        %v5314 = vsel %vm1506, %v5283, 0
        %v5317 = vsel %vm1506, %v5284, 0
        %v5320 = vsel %vm1506, %v5285, 0
        %v5323 = vsel %vm1506, %v5286, 0
        %v5326 = vsel %vm1506, %v5287, 0
        %v5329 = vsel %vm1506, %v5288, 0
        %v5332 = vsel %vm1506, %v5289, 0
        %5334 = vmatprep.subr.mxu0 0.0
        %5335 = vmatpush1.msra.mxu0 %v5298
        %5336 = vmatprep.subr.mxu0 0.0
        %5337 = vmatpush1.msra.mxu0 %v5299
        %5338 = vmatprep.subr.mxu0 0.0
        %5339 = vmatpush1.msra.mxu0 %v5300
        %5340 = vmatprep.subr.mxu0 0.0
        %5341 = vmatpush1.msra.mxu0 %v5301
        %5342 = vmatprep.subr.mxu0 0.0
        %5343 = vmatpush1.msra.mxu0 0.0
        %5344 = vmatprep.subr.mxu0 0.0
        %5345 = vmatpush1.msra.mxu0 0.0
        %5346 = vmatprep.subr.mxu0 0.0
        %5347 = vmatpush1.msra.mxu0 0.0
        %5348 = vmatprep.subr.mxu0 0.0
        %5349 = vmatpush1.msra.mxu0 0.0
        %5350 = vmatprep.subr.mxu0 0.0
        %5351 = vmatpush1.msra.mxu0 0.0
        %5352 = vmatprep.subr.mxu0 0.0
        %5353 = vmatpush1.msra.mxu0 0.0
        %5354 = vmatprep.subr.mxu0 0.0
        %5355 = vmatpush1.msra.mxu0 0.0
        %5356 = vmatprep.subr.mxu0 0.0
        %5357 = vmatpush1.msra.mxu0 0.0
        %5358 = vmatprep.subr.mxu0 0.0
        %5359 = vmatpush1.msra.mxu0 0.0
        %5360 = vmatprep.subr.mxu0 0.0
        %5361 = vmatpush1.msra.mxu0 0.0
        %5362 = vmatprep.subr.mxu0 0.0
        %5363 = vmatpush1.msra.mxu0 0.0
        %5364 = vmatprep.subr.mxu0 0.0
        %5365 = vmatpush1.msra.mxu0 0.0
        %5366 = vmatprep.subr.mxu0 0.0
        %5367 = vmatpush1.msra.mxu0 0.0
        %5368 = vmatprep.subr.mxu0 0.0
        %5369 = vmatpush1.msra.mxu0 0.0
        %5370 = vmatprep.subr.mxu0 0.0
        %5371 = vmatpush1.msra.mxu0 0.0
        %5372 = vmatprep.subr.mxu0 0.0
        %5373 = vmatpush1.msra.mxu0 0.0
        %5374 = vmatprep.subr.mxu0 0.0
        %5375 = vmatpush1.msra.mxu0 0.0
        %5376 = vmatprep.subr.mxu0 0.0
        %5377 = vmatpush1.msra.mxu0 0.0
        %5378 = vmatprep.subr.mxu0 0.0
        %5379 = vmatpush1.msra.mxu0 0.0
        %5380 = vmatprep.subr.mxu0 0.0
        %5381 = vmatpush1.msra.mxu0 0.0
        %5382 = vmatprep.subr.mxu0 0.0
        %5383 = vmatpush1.msra.mxu0 0.0
        %5384 = vmatprep.subr.mxu0 0.0
        %5385 = vmatpush1.msra.mxu0 0.0
        %5386 = vmatprep.subr.mxu0 0.0
        %5387 = vmatpush1.msra.mxu0 0.0
        %5388 = vmatprep.subr.mxu0 0.0
        %5389 = vmatpush1.msra.mxu0 0.0
        %5390 = vmatprep.subr.mxu0 0.0
        %5391 = vmatpush1.msra.mxu0 0.0
        %5392 = vmatprep.subr.mxu0 0.0
        %5393 = vmatpush1.msra.mxu0 0.0
        %5394 = vmatprep.subr.mxu0 0.0
        %5395 = vmatpush1.msra.mxu0 0.0
        %5396 = vmatprep.subr.mxu0 0.0
        %5397 = vmatpush1.msra.mxu0 0.0
        %5398 = vmatprep.mubr.f32.mxu0 0.0
        %5399 = vmatmul.mubr.f32.gmra.mrb[0].mxu0 %v5311
        %v5400 = vpop.f32.mrb[0].mxu0
        %v5401 = vadd.f32 %v5302, %v5400
        %v5402 = vpop.f32.mrb[0].mxu0
        %5403 = vmatprep.mubr.f32.mxu0 0.0
        %5404 = vmatmul.mubr.f32.gmra.mrb[0].mxu0 %v5314
        %v5405 = vpop.f32.mrb[0].mxu0
        %v5406 = vadd.f32 %v5303, %v5405
        %v5407 = vpop.f32.mrb[0].mxu0
        %5408 = vmatprep.mubr.f32.mxu0 0.0
        %5409 = vmatmul.mubr.f32.gmra.mrb[0].mxu0 %v5317
        %v5410 = vpop.f32.mrb[0].mxu0
        %v5411 = vadd.f32 %v5304, %v5410
        %v5412 = vpop.f32.mrb[0].mxu0
        %5413 = vmatprep.mubr.f32.mxu0 0.0
        %5414 = vmatmul.mubr.f32.gmra.mrb[0].mxu0 %v5320
        %v5415 = vpop.f32.mrb[0].mxu0
        %v5416 = vadd.f32 %v5305, %v5415
        %v5417 = vpop.f32.mrb[0].mxu0
        %5418 = vmatprep.mubr.f32.mxu0 0.0
        %5419 = vmatmul.mubr.f32.gmra.mrb[0].mxu0 %v5323
        %v5420 = vpop.f32.mrb[0].mxu0
        %v5421 = vadd.f32 %v5306, %v5420
        %v5422 = vpop.f32.mrb[0].mxu0
        %5423 = vmatprep.mubr.f32.mxu0 0.0
        %5424 = vmatmul.mubr.f32.gmra.mrb[0].mxu0 %v5326
        %v5425 = vpop.f32.mrb[0].mxu0
        %v5426 = vadd.f32 %v5307, %v5425
        %v5427 = vpop.f32.mrb[0].mxu0
        %5428 = vmatprep.mubr.f32.mxu0 0.0
        %5429 = vmatmul.mubr.f32.gmra.mrb[0].mxu0 %v5329
        %v5430 = vpop.f32.mrb[0].mxu0
        %v5431 = vadd.f32 %v5308, %v5430
        %v5432 = vpop.f32.mrb[0].mxu0
        %5433 = vmatprep.mubr.f32.mxu0 0.0
        %5434 = vmatmul.mubr.f32.gmra.mrb[0].mxu0 %v5332
        %v5435 = vpop.f32.mrb[0].mxu0
        %v5436 = vadd.f32 %v5309, %v5435
        %v5437 = vpop.f32.mrb[0].mxu0
        %5438 = vdwg.mxu0
        %5440 = vset.pattern.permute.xlu0 0
        %5441 = vperm.xlu0 %5440, %v5290
        %v5442 = vpop.permute.xlu0 %5441
        %5445 = vset.pattern.permute.xlu0 0
        %5446 = vperm.xlu0 %5445, %v5291
        %v5447 = vpop.permute.xlu0 %5446
        %5450 = vset.pattern.permute.xlu0 0
        %5451 = vperm.xlu0 %5450, %v5292
        %v5452 = vpop.permute.xlu0 %5451
        %5455 = vset.pattern.permute.xlu0 0
        %5456 = vperm.xlu0 %5455, %v5293
        %v5457 = vpop.permute.xlu0 %5456
        %5460 = vset.pattern.permute.xlu0 0
        %5461 = vperm.xlu0 %5460, %v5294
        %v5462 = vpop.permute.xlu0 %5461
        %5465 = vset.pattern.permute.xlu0 0
        %5466 = vperm.xlu0 %5465, %v5295
        %v5467 = vpop.permute.xlu0 %5466
        %5470 = vset.pattern.permute.xlu0 0
        %5471 = vperm.xlu0 %5470, %v5296
        %v5472 = vpop.permute.xlu0 %5471
        %5475 = vset.pattern.permute.xlu0 0
        %5476 = vperm.xlu0 %5475, %v5297
        %v5477 = vpop.permute.xlu0 %5476
        %v5479 = vmul.f32 %v5401, %v5442
        %v5480 = vmul.f32 %v5406, %v5447
        %v5481 = vmul.f32 %v5411, %v5452
        %v5482 = vmul.f32 %v5416, %v5457
        %v5483 = vmul.f32 %v5421, %v5462
        %v5484 = vmul.f32 %v5426, %v5467
        %v5485 = vmul.f32 %v5431, %v5472
        %v5486 = vmul.f32 %v5436, %v5477
        %v5487 = vld [vmem:[%s67] sm:$0x1]
        %v5489 = vlaneseq
        %v5490 = vshrl.u32 %v5489, 7
        %v5491 = vsub.s32 0, %v5490
        %v5492 = vrot.slane %v5487, %v5491
        %v5494 = vadd.f32 %v5479, %v5492
        %v5495 = vadd.f32 %v5480, %v5492
        %v5496 = vadd.f32 %v5481, %v5492
        %v5497 = vadd.f32 %v5482, %v5492
        %v5498 = vadd.f32 %v5483, %v5492
        %v5499 = vadd.f32 %v5484, %v5492
        %v5500 = vadd.f32 %v5485, %v5492
        %v5501 = vadd.f32 %v5486, %v5492
        %v5502 = vmul.f32 %v5494, %v5494
        %v5503 = vmul.f32 %v5495, %v5495
        %v5504 = vmul.f32 %v5496, %v5496
        %v5505 = vmul.f32 %v5497, %v5497
        %v5506 = vmul.f32 %v5498, %v5498
        %v5507 = vmul.f32 %v5499, %v5499
        %v5508 = vmul.f32 %v5500, %v5500
        %v5509 = vmul.f32 %v5501, %v5501
        %v5510 = vmul.f32 %v5494, %v5502
        %v5511 = vmul.f32 %v5495, %v5503
        %v5512 = vmul.f32 %v5496, %v5504
        %v5513 = vmul.f32 %v5497, %v5505
        %v5514 = vmul.f32 %v5498, %v5506
        %v5515 = vmul.f32 %v5499, %v5507
        %v5516 = vmul.f32 %v5500, %v5508
        %v5517 = vmul.f32 %v5501, %v5509
        %v5518 = vmul.f32 %v5510, 0.044715
        %v5519 = vmul.f32 %v5511, 0.044715
        %v5520 = vmul.f32 %v5512, 0.044715
        %v5521 = vmul.f32 %v5513, 0.044715
        %v5522 = vmul.f32 %v5514, 0.044715
        %v5523 = vmul.f32 %v5515, 0.044715
        %v5524 = vmul.f32 %v5516, 0.044715
        %v5525 = vmul.f32 %v5517, 0.044715
        %v5526 = vadd.f32 %v5494, %v5518
        %v5527 = vadd.f32 %v5495, %v5519
        %v5528 = vadd.f32 %v5496, %v5520
        %v5529 = vadd.f32 %v5497, %v5521
        %v5530 = vadd.f32 %v5498, %v5522
        %v5531 = vadd.f32 %v5499, %v5523
        %v5532 = vadd.f32 %v5500, %v5524
        %v5533 = vadd.f32 %v5501, %v5525
        %v5534 = vmul.f32 %v5526, 0.7978846
        %v5535 = vmul.f32 %v5527, 0.7978846
        %v5536 = vmul.f32 %v5528, 0.7978846
        %v5537 = vmul.f32 %v5529, 0.7978846
        %v5538 = vmul.f32 %v5530, 0.7978846
        %v5539 = vmul.f32 %v5531, 0.7978846
        %v5540 = vmul.f32 %v5532, 0.7978846
        %v5541 = vmul.f32 %v5533, 0.7978846
        %v5542 = vtanh.pop %v5534
        %v5543 = vtanh.pop %v5535
        %v5544 = vtanh.pop %v5536
        %v5545 = vtanh.pop %v5537
        %v5546 = vtanh.pop %v5538
        %v5547 = vtanh.pop %v5539
        %v5548 = vtanh.pop %v5540
        %v5549 = vtanh.pop %v5541
        %v5550 = vadd.f32 %v5542, 1.0
        %v5551 = vadd.f32 %v5543, 1.0
        %v5552 = vadd.f32 %v5544, 1.0
        %v5553 = vadd.f32 %v5545, 1.0
        %v5554 = vadd.f32 %v5546, 1.0
        %v5555 = vadd.f32 %v5547, 1.0
        %v5556 = vadd.f32 %v5548, 1.0
        %v5557 = vadd.f32 %v5549, 1.0
        %v5558 = vmul.f32 %v5550, 0.5
        %v5559 = vmul.f32 %v5551, 0.5
        %v5560 = vmul.f32 %v5552, 0.5
        %v5561 = vmul.f32 %v5553, 0.5
        %v5562 = vmul.f32 %v5554, 0.5
        %v5563 = vmul.f32 %v5555, 0.5
        %v5564 = vmul.f32 %v5556, 0.5
        %v5565 = vmul.f32 %v5557, 0.5
        %v5566 = vmul.f32 %v5494, %v5558
        %v5567 = vmul.f32 %v5495, %v5559
        %v5568 = vmul.f32 %v5496, %v5560
        %v5569 = vmul.f32 %v5497, %v5561
        %v5570 = vmul.f32 %v5498, %v5562
        %v5571 = vmul.f32 %v5499, %v5563
        %v5572 = vmul.f32 %v5500, %v5564
        %v5573 = vmul.f32 %v5501, %v5565
        %v5574 = vld [vmem:[%s69] sm:$0xff]
        %v5575 = vld [vmem:[%s69 + $0x8] sm:$0xff]
        %v5576 = vld [vmem:[%s69 + $0x10] sm:$0x3]
        %v5577 = vld [vmem:[%s71] sm:$0x3]
        %v5586 = vrot.slane 0.0, 7
        %v5587 = vrot.slane %v5566, 7
        %v5588 = vrot.slane %v5567, 7
        %v5589 = vrot.slane %v5568, 7
        %v5590 = vrot.slane %v5569, 7
        %v5591 = vrot.slane %v5570, 7
        %v5592 = vrot.slane %v5571, 7
        %v5593 = vrot.slane %v5572, 7
        %v5594 = vrot.slane %v5573, 7
        %v5604 = vsel %vm3969, 0.0, %v5586
        %v5605 = vsel %vm3969, 0.0, %v5587
        %v5606 = vsel %vm3969, 0.0, %v5588
        %v5607 = vsel %vm3969, 0.0, %v5589
        %v5608 = vsel %vm3969, 0.0, %v5590
        %v5609 = vsel %vm3969, 0.0, %v5591
        %v5610 = vsel %vm3969, 0.0, %v5592
        %v5611 = vsel %vm3969, 0.0, %v5593
        %v5612 = vsel %vm3969, 0.0, %v5594
        %v5613 = vsel %vm3969, %v5586, 0.0
        %v5614 = vsel %vm3969, %v5587, 0.0
        %v5615 = vsel %vm3969, %v5588, 0.0
        %v5616 = vsel %vm3969, %v5589, 0.0
        %v5617 = vsel %vm3969, %v5590, 0.0
        %v5618 = vsel %vm3969, %v5591, 0.0
        %v5619 = vsel %vm3969, %v5592, 0.0
        %v5620 = vsel %vm3969, %v5593, 0.0
        %v5621 = vsel %vm3969, %v5594, 0.0
        %v5622 = vlaneseq
        %v5623 = vshrl.u32 %v5622, 7
        %v5624 = vsub.s32 0, %v5623
        %v5625 = vrot.slane %v5577, %v5624
        %v5626 = vadd.f32 %v5625, 0.0
        %v5627 = vlaneseq
        %v5628 = vshrl.u32 %v5627, 7
        %v5629 = vsub.s32 0, %v5628
        %v5630 = vrot.slane %v5574, %v5629
        %v5631 = vmul.f32 %v5604, %v5630
        %v5632 = vmul.f32 %v5605, %v5630
        %v5633 = vmul.f32 %v5606, %v5630
        %v5634 = vmul.f32 %v5607, %v5630
        %v5635 = vmul.f32 %v5608, %v5630
        %v5636 = vmul.f32 %v5609, %v5630
        %v5637 = vmul.f32 %v5610, %v5630
        %v5638 = vmul.f32 %v5611, %v5630
        %v5639 = vadd.f32 %v5626, %v5631
        %v5640 = vadd.f32 %v5626, %v5632
        %v5641 = vadd.f32 %v5626, %v5633
        %v5642 = vadd.f32 %v5626, %v5634
        %v5643 = vadd.f32 %v5626, %v5635
        %v5644 = vadd.f32 %v5626, %v5636
        %v5645 = vadd.f32 %v5626, %v5637
        %v5646 = vadd.f32 %v5626, %v5638
        %v5647 = vlaneseq
        %v5648 = vshrl.u32 %v5647, 7
        %v5649 = vsub.s32 1, %v5648
        %v5650 = vrot.slane %v5574, %v5649
        %v5651 = vmul.f32 %v5604, %v5650
        %v5652 = vmul.f32 %v5613, %v5650
        %v5653 = vmul.f32 %v5605, %v5650
        %v5654 = vmul.f32 %v5614, %v5650
        %v5655 = vmul.f32 %v5606, %v5650
        %v5656 = vmul.f32 %v5615, %v5650
        %v5657 = vmul.f32 %v5607, %v5650
        %v5658 = vmul.f32 %v5616, %v5650
        %v5659 = vmul.f32 %v5608, %v5650
        %v5660 = vmul.f32 %v5617, %v5650
        %v5661 = vmul.f32 %v5609, %v5650
        %v5662 = vmul.f32 %v5618, %v5650
        %v5663 = vmul.f32 %v5610, %v5650
        %v5664 = vmul.f32 %v5619, %v5650
        %v5665 = vmul.f32 %v5611, %v5650
        %v5666 = vmul.f32 %v5620, %v5650
        %v5683 = vrot.slane %v5651, 1
        %v5684 = vrot.slane %v5652, 1
        %v5685 = vsel %vm3980, %v5683, %v5684
        %v5686 = vrot.slane %v5653, 1
        %v5687 = vrot.slane %v5654, 1
        %v5688 = vsel %vm3980, %v5686, %v5687
        %v5689 = vrot.slane %v5655, 1
        %v5690 = vrot.slane %v5656, 1
        %v5691 = vsel %vm3980, %v5689, %v5690
        %v5692 = vrot.slane %v5657, 1
        %v5693 = vrot.slane %v5658, 1
        %v5694 = vsel %vm3980, %v5692, %v5693
        %v5695 = vrot.slane %v5659, 1
        %v5696 = vrot.slane %v5660, 1
        %v5697 = vsel %vm3980, %v5695, %v5696
        %v5698 = vrot.slane %v5661, 1
        %v5699 = vrot.slane %v5662, 1
        %v5700 = vsel %vm3980, %v5698, %v5699
        %v5701 = vrot.slane %v5663, 1
        %v5702 = vrot.slane %v5664, 1
        %v5703 = vsel %vm3980, %v5701, %v5702
        %v5704 = vrot.slane %v5665, 1
        %v5705 = vrot.slane %v5666, 1
        %v5706 = vsel %vm3980, %v5704, %v5705
        %v5715 = vadd.f32 %v5639, %v5685
        %v5716 = vadd.f32 %v5640, %v5688
        %v5717 = vadd.f32 %v5641, %v5691
        %v5718 = vadd.f32 %v5642, %v5694
        %v5719 = vadd.f32 %v5643, %v5697
        %v5720 = vadd.f32 %v5644, %v5700
        %v5721 = vadd.f32 %v5645, %v5703
        %v5722 = vadd.f32 %v5646, %v5706
        %v5723 = vlaneseq
        %v5724 = vshrl.u32 %v5723, 7
        %v5725 = vsub.s32 2, %v5724
        %v5726 = vrot.slane %v5574, %v5725
        %v5727 = vmul.f32 %v5604, %v5726
        %v5728 = vmul.f32 %v5613, %v5726
        %v5729 = vmul.f32 %v5605, %v5726
        %v5730 = vmul.f32 %v5614, %v5726
        %v5731 = vmul.f32 %v5606, %v5726
        %v5732 = vmul.f32 %v5615, %v5726
        %v5733 = vmul.f32 %v5607, %v5726
        %v5734 = vmul.f32 %v5616, %v5726
        %v5735 = vmul.f32 %v5608, %v5726
        %v5736 = vmul.f32 %v5617, %v5726
        %v5737 = vmul.f32 %v5609, %v5726
        %v5738 = vmul.f32 %v5618, %v5726
        %v5739 = vmul.f32 %v5610, %v5726
        %v5740 = vmul.f32 %v5619, %v5726
        %v5741 = vmul.f32 %v5611, %v5726
        %v5742 = vmul.f32 %v5620, %v5726
        %v5759 = vrot.slane %v5727, 2
        %v5760 = vrot.slane %v5728, 2
        %v5761 = vsel %vm3978, %v5759, %v5760
        %v5762 = vrot.slane %v5729, 2
        %v5763 = vrot.slane %v5730, 2
        %v5764 = vsel %vm3978, %v5762, %v5763
        %v5765 = vrot.slane %v5731, 2
        %v5766 = vrot.slane %v5732, 2
        %v5767 = vsel %vm3978, %v5765, %v5766
        %v5768 = vrot.slane %v5733, 2
        %v5769 = vrot.slane %v5734, 2
        %v5770 = vsel %vm3978, %v5768, %v5769
        %v5771 = vrot.slane %v5735, 2
        %v5772 = vrot.slane %v5736, 2
        %v5773 = vsel %vm3978, %v5771, %v5772
        %v5774 = vrot.slane %v5737, 2
        %v5775 = vrot.slane %v5738, 2
        %v5776 = vsel %vm3978, %v5774, %v5775
        %v5777 = vrot.slane %v5739, 2
        %v5778 = vrot.slane %v5740, 2
        %v5779 = vsel %vm3978, %v5777, %v5778
        %v5780 = vrot.slane %v5741, 2
        %v5781 = vrot.slane %v5742, 2
        %v5782 = vsel %vm3978, %v5780, %v5781
        %v5791 = vadd.f32 %v5715, %v5761
        %v5792 = vadd.f32 %v5716, %v5764
        %v5793 = vadd.f32 %v5717, %v5767
        %v5794 = vadd.f32 %v5718, %v5770
        %v5795 = vadd.f32 %v5719, %v5773
        %v5796 = vadd.f32 %v5720, %v5776
        %v5797 = vadd.f32 %v5721, %v5779
        %v5798 = vadd.f32 %v5722, %v5782
        %v5799 = vlaneseq
        %v5800 = vshrl.u32 %v5799, 7
        %v5801 = vsub.s32 3, %v5800
        %v5802 = vrot.slane %v5574, %v5801
        %v5803 = vmul.f32 %v5605, %v5802
        %v5804 = vmul.f32 %v5606, %v5802
        %v5805 = vmul.f32 %v5607, %v5802
        %v5806 = vmul.f32 %v5608, %v5802
        %v5807 = vmul.f32 %v5609, %v5802
        %v5808 = vmul.f32 %v5610, %v5802
        %v5809 = vmul.f32 %v5611, %v5802
        %v5810 = vmul.f32 %v5612, %v5802
        %v5811 = vadd.f32 %v5791, %v5803
        %v5812 = vadd.f32 %v5792, %v5804
        %v5813 = vadd.f32 %v5793, %v5805
        %v5814 = vadd.f32 %v5794, %v5806
        %v5815 = vadd.f32 %v5795, %v5807
        %v5816 = vadd.f32 %v5796, %v5808
        %v5817 = vadd.f32 %v5797, %v5809
        %v5818 = vadd.f32 %v5798, %v5810
        %v5819 = vlaneseq
        %v5820 = vshrl.u32 %v5819, 7
        %v5821 = vsub.s32 4, %v5820
        %v5822 = vrot.slane %v5574, %v5821
        %v5823 = vmul.f32 %v5605, %v5822
        %v5824 = vmul.f32 %v5614, %v5822
        %v5825 = vmul.f32 %v5606, %v5822
        %v5826 = vmul.f32 %v5615, %v5822
        %v5827 = vmul.f32 %v5607, %v5822
        %v5828 = vmul.f32 %v5616, %v5822
        %v5829 = vmul.f32 %v5608, %v5822
        %v5830 = vmul.f32 %v5617, %v5822
        %v5831 = vmul.f32 %v5609, %v5822
        %v5832 = vmul.f32 %v5618, %v5822
        %v5833 = vmul.f32 %v5610, %v5822
        %v5834 = vmul.f32 %v5619, %v5822
        %v5835 = vmul.f32 %v5611, %v5822
        %v5836 = vmul.f32 %v5620, %v5822
        %v5837 = vmul.f32 %v5612, %v5822
        %v5838 = vmul.f32 %v5621, %v5822
        %v5855 = vrot.slane %v5823, 1
        %v5856 = vrot.slane %v5824, 1
        %v5857 = vsel %vm3980, %v5855, %v5856
        %v5858 = vrot.slane %v5825, 1
        %v5859 = vrot.slane %v5826, 1
        %v5860 = vsel %vm3980, %v5858, %v5859
        %v5861 = vrot.slane %v5827, 1
        %v5862 = vrot.slane %v5828, 1
        %v5863 = vsel %vm3980, %v5861, %v5862
        %v5864 = vrot.slane %v5829, 1
        %v5865 = vrot.slane %v5830, 1
        %v5866 = vsel %vm3980, %v5864, %v5865
        %v5867 = vrot.slane %v5831, 1
        %v5868 = vrot.slane %v5832, 1
        %v5869 = vsel %vm3980, %v5867, %v5868
        %v5870 = vrot.slane %v5833, 1
        %v5871 = vrot.slane %v5834, 1
        %v5872 = vsel %vm3980, %v5870, %v5871
        %v5873 = vrot.slane %v5835, 1
        %v5874 = vrot.slane %v5836, 1
        %v5875 = vsel %vm3980, %v5873, %v5874
        %v5876 = vrot.slane %v5837, 1
        %v5877 = vrot.slane %v5838, 1
        %v5878 = vsel %vm3980, %v5876, %v5877
        %v5887 = vadd.f32 %v5811, %v5857
        %v5888 = vadd.f32 %v5812, %v5860
        %v5889 = vadd.f32 %v5813, %v5863
        %v5890 = vadd.f32 %v5814, %v5866
        %v5891 = vadd.f32 %v5815, %v5869
        %v5892 = vadd.f32 %v5816, %v5872
        %v5893 = vadd.f32 %v5817, %v5875
        %v5894 = vadd.f32 %v5818, %v5878
        %v5895 = vlaneseq
        %v5896 = vshrl.u32 %v5895, 7
        %v5897 = vsub.s32 5, %v5896
        %v5898 = vrot.slane %v5574, %v5897
        %v5899 = vmul.f32 %v5605, %v5898
        %v5900 = vmul.f32 %v5614, %v5898
        %v5901 = vmul.f32 %v5606, %v5898
        %v5902 = vmul.f32 %v5615, %v5898
        %v5903 = vmul.f32 %v5607, %v5898
        %v5904 = vmul.f32 %v5616, %v5898
        %v5905 = vmul.f32 %v5608, %v5898
        %v5906 = vmul.f32 %v5617, %v5898
        %v5907 = vmul.f32 %v5609, %v5898
        %v5908 = vmul.f32 %v5618, %v5898
        %v5909 = vmul.f32 %v5610, %v5898
        %v5910 = vmul.f32 %v5619, %v5898
        %v5911 = vmul.f32 %v5611, %v5898
        %v5912 = vmul.f32 %v5620, %v5898
        %v5913 = vmul.f32 %v5612, %v5898
        %v5914 = vmul.f32 %v5621, %v5898
        %v5931 = vrot.slane %v5899, 2
        %v5932 = vrot.slane %v5900, 2
        %v5933 = vsel %vm3978, %v5931, %v5932
        %v5934 = vrot.slane %v5901, 2
        %v5935 = vrot.slane %v5902, 2
        %v5936 = vsel %vm3978, %v5934, %v5935
        %v5937 = vrot.slane %v5903, 2
        %v5938 = vrot.slane %v5904, 2
        %v5939 = vsel %vm3978, %v5937, %v5938
        %v5940 = vrot.slane %v5905, 2
        %v5941 = vrot.slane %v5906, 2
        %v5942 = vsel %vm3978, %v5940, %v5941
        %v5943 = vrot.slane %v5907, 2
        %v5944 = vrot.slane %v5908, 2
        %v5945 = vsel %vm3978, %v5943, %v5944
        %v5946 = vrot.slane %v5909, 2
        %v5947 = vrot.slane %v5910, 2
        %v5948 = vsel %vm3978, %v5946, %v5947
        %v5949 = vrot.slane %v5911, 2
        %v5950 = vrot.slane %v5912, 2
        %v5951 = vsel %vm3978, %v5949, %v5950
        %v5952 = vrot.slane %v5913, 2
        %v5953 = vrot.slane %v5914, 2
        %v5954 = vsel %vm3978, %v5952, %v5953
        %v5963 = vadd.f32 %v5887, %v5933
        %v5964 = vadd.f32 %v5888, %v5936
        %v5965 = vadd.f32 %v5889, %v5939
        %v5966 = vadd.f32 %v5890, %v5942
        %v5967 = vadd.f32 %v5891, %v5945
        %v5968 = vadd.f32 %v5892, %v5948
        %v5969 = vadd.f32 %v5893, %v5951
        %v5970 = vadd.f32 %v5894, %v5954
        %v5971 = vlaneseq
        %v5972 = vshrl.u32 %v5971, 7
        %v5973 = vsub.s32 6, %v5972
        %v5974 = vrot.slane %v5574, %v5973
        %v5975 = vmul.f32 %v5606, %v5974
        %v5976 = vmul.f32 %v5607, %v5974
        %v5977 = vmul.f32 %v5608, %v5974
        %v5978 = vmul.f32 %v5609, %v5974
        %v5979 = vmul.f32 %v5610, %v5974
        %v5980 = vmul.f32 %v5611, %v5974
        %v5981 = vmul.f32 %v5612, %v5974
        %v5982 = vmul.f32 %v5604, %v5974
        %v5983 = vadd.f32 %v5963, %v5975
        %v5984 = vadd.f32 %v5964, %v5976
        %v5985 = vadd.f32 %v5965, %v5977
        %v5986 = vadd.f32 %v5966, %v5978
        %v5987 = vadd.f32 %v5967, %v5979
        %v5988 = vadd.f32 %v5968, %v5980
        %v5989 = vadd.f32 %v5969, %v5981
        %v5990 = vadd.f32 %v5970, %v5982
        %v5991 = vlaneseq
        %v5992 = vshrl.u32 %v5991, 7
        %v5993 = vsub.s32 7, %v5992
        %v5994 = vrot.slane %v5574, %v5993
        %v5995 = vmul.f32 %v5606, %v5994
        %v5996 = vmul.f32 %v5615, %v5994
        %v5997 = vmul.f32 %v5607, %v5994
        %v5998 = vmul.f32 %v5616, %v5994
        %v5999 = vmul.f32 %v5608, %v5994
        %v6000 = vmul.f32 %v5617, %v5994
        %v6001 = vmul.f32 %v5609, %v5994
        %v6002 = vmul.f32 %v5618, %v5994
        %v6003 = vmul.f32 %v5610, %v5994
        %v6004 = vmul.f32 %v5619, %v5994
        %v6005 = vmul.f32 %v5611, %v5994
        %v6006 = vmul.f32 %v5620, %v5994
        %v6007 = vmul.f32 %v5612, %v5994
        %v6008 = vmul.f32 %v5621, %v5994
        %v6009 = vmul.f32 %v5604, %v5994
        %v6010 = vmul.f32 %v5613, %v5994
        %v6027 = vrot.slane %v5995, 1
        %v6028 = vrot.slane %v5996, 1
        %v6029 = vsel %vm3980, %v6027, %v6028
        %v6030 = vrot.slane %v5997, 1
        %v6031 = vrot.slane %v5998, 1
        %v6032 = vsel %vm3980, %v6030, %v6031
        %v6033 = vrot.slane %v5999, 1
        %v6034 = vrot.slane %v6000, 1
        %v6035 = vsel %vm3980, %v6033, %v6034
        %v6036 = vrot.slane %v6001, 1
        %v6037 = vrot.slane %v6002, 1
        %v6038 = vsel %vm3980, %v6036, %v6037
        %v6039 = vrot.slane %v6003, 1
        %v6040 = vrot.slane %v6004, 1
        %v6041 = vsel %vm3980, %v6039, %v6040
        %v6042 = vrot.slane %v6005, 1
        %v6043 = vrot.slane %v6006, 1
        %v6044 = vsel %vm3980, %v6042, %v6043
        %v6045 = vrot.slane %v6007, 1
        %v6046 = vrot.slane %v6008, 1
        %v6047 = vsel %vm3980, %v6045, %v6046
        %v6048 = vrot.slane %v6009, 1
        %v6049 = vrot.slane %v6010, 1
        %v6050 = vsel %vm3980, %v6048, %v6049
        %v6059 = vadd.f32 %v5983, %v6029
        %v6060 = vadd.f32 %v5984, %v6032
        %v6061 = vadd.f32 %v5985, %v6035
        %v6062 = vadd.f32 %v5986, %v6038
        %v6063 = vadd.f32 %v5987, %v6041
        %v6064 = vadd.f32 %v5988, %v6044
        %v6065 = vadd.f32 %v5989, %v6047
        %v6066 = vadd.f32 %v5990, %v6050
        %v6067 = vlaneseq
        %v6068 = vshrl.u32 %v6067, 7
        %v6069 = vsub.s32 0, %v6068
        %v6070 = vrot.slane %v5575, %v6069
        %v6071 = vmul.f32 %v5606, %v6070
        %v6072 = vmul.f32 %v5615, %v6070
        %v6073 = vmul.f32 %v5607, %v6070
        %v6074 = vmul.f32 %v5616, %v6070
        %v6075 = vmul.f32 %v5608, %v6070
        %v6076 = vmul.f32 %v5617, %v6070
        %v6077 = vmul.f32 %v5609, %v6070
        %v6078 = vmul.f32 %v5618, %v6070
        %v6079 = vmul.f32 %v5610, %v6070
        %v6080 = vmul.f32 %v5619, %v6070
        %v6081 = vmul.f32 %v5611, %v6070
        %v6082 = vmul.f32 %v5620, %v6070
        %v6083 = vmul.f32 %v5612, %v6070
        %v6084 = vmul.f32 %v5621, %v6070
        %v6085 = vmul.f32 %v5604, %v6070
        %v6086 = vmul.f32 %v5613, %v6070
        %v6103 = vrot.slane %v6071, 2
        %v6104 = vrot.slane %v6072, 2
        %v6105 = vsel %vm3978, %v6103, %v6104
        %v6106 = vrot.slane %v6073, 2
        %v6107 = vrot.slane %v6074, 2
        %v6108 = vsel %vm3978, %v6106, %v6107
        %v6109 = vrot.slane %v6075, 2
        %v6110 = vrot.slane %v6076, 2
        %v6111 = vsel %vm3978, %v6109, %v6110
        %v6112 = vrot.slane %v6077, 2
        %v6113 = vrot.slane %v6078, 2
        %v6114 = vsel %vm3978, %v6112, %v6113
        %v6115 = vrot.slane %v6079, 2
        %v6116 = vrot.slane %v6080, 2
        %v6117 = vsel %vm3978, %v6115, %v6116
        %v6118 = vrot.slane %v6081, 2
        %v6119 = vrot.slane %v6082, 2
        %v6120 = vsel %vm3978, %v6118, %v6119
        %v6121 = vrot.slane %v6083, 2
        %v6122 = vrot.slane %v6084, 2
        %v6123 = vsel %vm3978, %v6121, %v6122
        %v6124 = vrot.slane %v6085, 2
        %v6125 = vrot.slane %v6086, 2
        %v6126 = vsel %vm3978, %v6124, %v6125
        %v6135 = vadd.f32 %v6059, %v6105
        %v6136 = vadd.f32 %v6060, %v6108
        %v6137 = vadd.f32 %v6061, %v6111
        %v6138 = vadd.f32 %v6062, %v6114
        %v6139 = vadd.f32 %v6063, %v6117
        %v6140 = vadd.f32 %v6064, %v6120
        %v6141 = vadd.f32 %v6065, %v6123
        %v6142 = vadd.f32 %v6066, %v6126
        %v6143 = vmul.f32 %v6135, %v6135
        %v6144 = vmul.f32 %v6136, %v6136
        %v6145 = vmul.f32 %v6137, %v6137
        %v6146 = vmul.f32 %v6138, %v6138
        %v6147 = vmul.f32 %v6139, %v6139
        %v6148 = vmul.f32 %v6140, %v6140
        %v6149 = vmul.f32 %v6141, %v6141
        %v6150 = vmul.f32 %v6142, %v6142
        %v6151 = vmul.f32 %v6135, %v6143
        %v6152 = vmul.f32 %v6136, %v6144
        %v6153 = vmul.f32 %v6137, %v6145
        %v6154 = vmul.f32 %v6138, %v6146
        %v6155 = vmul.f32 %v6139, %v6147
        %v6156 = vmul.f32 %v6140, %v6148
        %v6157 = vmul.f32 %v6141, %v6149
        %v6158 = vmul.f32 %v6142, %v6150
        %v6159 = vmul.f32 %v6151, 0.044715
        %v6160 = vmul.f32 %v6152, 0.044715
        %v6161 = vmul.f32 %v6153, 0.044715
        %v6162 = vmul.f32 %v6154, 0.044715
        %v6163 = vmul.f32 %v6155, 0.044715
        %v6164 = vmul.f32 %v6156, 0.044715
        %v6165 = vmul.f32 %v6157, 0.044715
        %v6166 = vmul.f32 %v6158, 0.044715
        %v6167 = vadd.f32 %v6135, %v6159
        %v6168 = vadd.f32 %v6136, %v6160
        %v6169 = vadd.f32 %v6137, %v6161
        %v6170 = vadd.f32 %v6138, %v6162
        %v6171 = vadd.f32 %v6139, %v6163
        %v6172 = vadd.f32 %v6140, %v6164
        %v6173 = vadd.f32 %v6141, %v6165
        %v6174 = vadd.f32 %v6142, %v6166
        %v6175 = vmul.f32 %v6167, 0.7978846
        %v6176 = vmul.f32 %v6168, 0.7978846
        %v6177 = vmul.f32 %v6169, 0.7978846
        %v6178 = vmul.f32 %v6170, 0.7978846
        %v6179 = vmul.f32 %v6171, 0.7978846
        %v6180 = vmul.f32 %v6172, 0.7978846
        %v6181 = vmul.f32 %v6173, 0.7978846
        %v6182 = vmul.f32 %v6174, 0.7978846
        %v6183 = vtanh.pop %v6175
        %v6184 = vtanh.pop %v6176
        %v6185 = vtanh.pop %v6177
        %v6186 = vtanh.pop %v6178
        %v6187 = vtanh.pop %v6179
        %v6188 = vtanh.pop %v6180
        %v6189 = vtanh.pop %v6181
        %v6190 = vtanh.pop %v6182
        %v6191 = vadd.f32 %v6183, 1.0
        %v6192 = vadd.f32 %v6184, 1.0
        %v6193 = vadd.f32 %v6185, 1.0
        %v6194 = vadd.f32 %v6186, 1.0
        %v6195 = vadd.f32 %v6187, 1.0
        %v6196 = vadd.f32 %v6188, 1.0
        %v6197 = vadd.f32 %v6189, 1.0
        %v6198 = vadd.f32 %v6190, 1.0
        %v6199 = vmul.f32 %v6191, 0.5
        %v6200 = vmul.f32 %v6192, 0.5
        %v6201 = vmul.f32 %v6193, 0.5
        %v6202 = vmul.f32 %v6194, 0.5
        %v6203 = vmul.f32 %v6195, 0.5
        %v6204 = vmul.f32 %v6196, 0.5
        %v6205 = vmul.f32 %v6197, 0.5
        %v6206 = vmul.f32 %v6198, 0.5
        %v6207 = vmul.f32 %v6135, %v6199
        %v6208 = vmul.f32 %v6136, %v6200
        %v6209 = vmul.f32 %v6137, %v6201
        %v6210 = vmul.f32 %v6138, %v6202
        %v6211 = vmul.f32 %v6139, %v6203
        %v6212 = vmul.f32 %v6140, %v6204
        %v6213 = vmul.f32 %v6141, %v6205
        %v6214 = vmul.f32 %v6142, %v6206
        %v6223 = vrot.slane 0.0, 6
        %v6224 = vrot.slane %v6207, 6
        %v6225 = vrot.slane %v6208, 6
        %v6226 = vrot.slane %v6209, 6
        %v6227 = vrot.slane %v6210, 6
        %v6228 = vrot.slane %v6211, 6
        %v6229 = vrot.slane %v6212, 6
        %v6230 = vrot.slane %v6213, 6
        %v6231 = vrot.slane %v6214, 6
        %v6241 = vsel %vm1898, 0.0, %v6223
        %v6242 = vsel %vm1898, 0.0, %v6224
        %v6243 = vsel %vm1898, 0.0, %v6225
        %v6244 = vsel %vm1898, 0.0, %v6226
        %v6245 = vsel %vm1898, 0.0, %v6227
        %v6246 = vsel %vm1898, 0.0, %v6228
        %v6247 = vsel %vm1898, 0.0, %v6229
        %v6248 = vsel %vm1898, 0.0, %v6230
        %v6249 = vsel %vm1898, 0.0, %v6231
        %v6250 = vsel %vm1898, %v6223, 0.0
        %v6251 = vsel %vm1898, %v6224, 0.0
        %v6252 = vsel %vm1898, %v6225, 0.0
        %v6253 = vsel %vm1898, %v6226, 0.0
        %v6254 = vsel %vm1898, %v6227, 0.0
        %v6255 = vsel %vm1898, %v6228, 0.0
        %v6256 = vsel %vm1898, %v6229, 0.0
        %v6257 = vsel %vm1898, %v6230, 0.0
        %v6258 = vsel %vm1898, %v6231, 0.0
        %v6259 = vlaneseq
        %v6260 = vshrl.u32 %v6259, 7
        %v6261 = vsub.s32 1, %v6260
        %v6262 = vrot.slane %v5577, %v6261
        %v6263 = vadd.f32 %v6262, 0.0
        %v6264 = vlaneseq
        %v6265 = vshrl.u32 %v6264, 7
        %v6266 = vsub.s32 1, %v6265
        %v6267 = vrot.slane %v5575, %v6266
        %v6268 = vmul.f32 %v6241, %v6267
        %v6269 = vmul.f32 %v6242, %v6267
        %v6270 = vmul.f32 %v6243, %v6267
        %v6271 = vmul.f32 %v6244, %v6267
        %v6272 = vmul.f32 %v6245, %v6267
        %v6273 = vmul.f32 %v6246, %v6267
        %v6274 = vmul.f32 %v6247, %v6267
        %v6275 = vadd.f32 %v6263, %v6268
        %v6276 = vadd.f32 %v6263, %v6269
        %v6277 = vadd.f32 %v6263, %v6270
        %v6278 = vadd.f32 %v6263, %v6271
        %v6279 = vadd.f32 %v6263, %v6272
        %v6280 = vadd.f32 %v6263, %v6273
        %v6281 = vadd.f32 %v6263, %v6274
        %v6282 = vlaneseq
        %v6283 = vshrl.u32 %v6282, 7
        %v6284 = vsub.s32 2, %v6283
        %v6285 = vrot.slane %v5575, %v6284
        %v6286 = vmul.f32 %v6241, %v6285
        %v6287 = vmul.f32 %v6250, %v6285
        %v6288 = vmul.f32 %v6242, %v6285
        %v6289 = vmul.f32 %v6251, %v6285
        %v6290 = vmul.f32 %v6243, %v6285
        %v6291 = vmul.f32 %v6252, %v6285
        %v6292 = vmul.f32 %v6244, %v6285
        %v6293 = vmul.f32 %v6253, %v6285
        %v6294 = vmul.f32 %v6245, %v6285
        %v6295 = vmul.f32 %v6254, %v6285
        %v6296 = vmul.f32 %v6246, %v6285
        %v6297 = vmul.f32 %v6255, %v6285
        %v6298 = vmul.f32 %v6247, %v6285
        %v6299 = vmul.f32 %v6256, %v6285
        %v6314 = vrot.slane %v6286, 2
        %v6315 = vrot.slane %v6287, 2
        %v6316 = vsel %vm3978, %v6314, %v6315
        %v6317 = vrot.slane %v6288, 2
        %v6318 = vrot.slane %v6289, 2
        %v6319 = vsel %vm3978, %v6317, %v6318
        %v6320 = vrot.slane %v6290, 2
        %v6321 = vrot.slane %v6291, 2
        %v6322 = vsel %vm3978, %v6320, %v6321
        %v6323 = vrot.slane %v6292, 2
        %v6324 = vrot.slane %v6293, 2
        %v6325 = vsel %vm3978, %v6323, %v6324
        %v6326 = vrot.slane %v6294, 2
        %v6327 = vrot.slane %v6295, 2
        %v6328 = vsel %vm3978, %v6326, %v6327
        %v6329 = vrot.slane %v6296, 2
        %v6330 = vrot.slane %v6297, 2
        %v6331 = vsel %vm3978, %v6329, %v6330
        %v6332 = vrot.slane %v6298, 2
        %v6333 = vrot.slane %v6299, 2
        %v6334 = vsel %vm3978, %v6332, %v6333
        %v6342 = vadd.f32 %v6275, %v6316
        %v6343 = vadd.f32 %v6276, %v6319
        %v6344 = vadd.f32 %v6277, %v6322
        %v6345 = vadd.f32 %v6278, %v6325
        %v6346 = vadd.f32 %v6279, %v6328
        %v6347 = vadd.f32 %v6280, %v6331
        %v6348 = vadd.f32 %v6281, %v6334
        %v6349 = vlaneseq
        %v6350 = vshrl.u32 %v6349, 7
        %v6351 = vsub.s32 3, %v6350
        %v6352 = vrot.slane %v5575, %v6351
        %v6353 = vmul.f32 %v6241, %v6352
        %v6354 = vmul.f32 %v6250, %v6352
        %v6355 = vmul.f32 %v6242, %v6352
        %v6356 = vmul.f32 %v6251, %v6352
        %v6357 = vmul.f32 %v6243, %v6352
        %v6358 = vmul.f32 %v6252, %v6352
        %v6359 = vmul.f32 %v6244, %v6352
        %v6360 = vmul.f32 %v6253, %v6352
        %v6361 = vmul.f32 %v6245, %v6352
        %v6362 = vmul.f32 %v6254, %v6352
        %v6363 = vmul.f32 %v6246, %v6352
        %v6364 = vmul.f32 %v6255, %v6352
        %v6365 = vmul.f32 %v6247, %v6352
        %v6366 = vmul.f32 %v6256, %v6352
        %v6381 = vrot.slane %v6353, 4
        %v6382 = vrot.slane %v6354, 4
        %v6383 = vsel %vm3974, %v6381, %v6382
        %v6384 = vrot.slane %v6355, 4
        %v6385 = vrot.slane %v6356, 4
        %v6386 = vsel %vm3974, %v6384, %v6385
        %v6387 = vrot.slane %v6357, 4
        %v6388 = vrot.slane %v6358, 4
        %v6389 = vsel %vm3974, %v6387, %v6388
        %v6390 = vrot.slane %v6359, 4
        %v6391 = vrot.slane %v6360, 4
        %v6392 = vsel %vm3974, %v6390, %v6391
        %v6393 = vrot.slane %v6361, 4
        %v6394 = vrot.slane %v6362, 4
        %v6395 = vsel %vm3974, %v6393, %v6394
        %v6396 = vrot.slane %v6363, 4
        %v6397 = vrot.slane %v6364, 4
        %v6398 = vsel %vm3974, %v6396, %v6397
        %v6399 = vrot.slane %v6365, 4
        %v6400 = vrot.slane %v6366, 4
        %v6401 = vsel %vm3974, %v6399, %v6400
        %v6409 = vadd.f32 %v6342, %v6383
        %v6410 = vadd.f32 %v6343, %v6386
        %v6411 = vadd.f32 %v6344, %v6389
        %v6412 = vadd.f32 %v6345, %v6392
        %v6413 = vadd.f32 %v6346, %v6395
        %v6414 = vadd.f32 %v6347, %v6398
        %v6415 = vadd.f32 %v6348, %v6401
        %v6416 = vlaneseq
        %v6417 = vshrl.u32 %v6416, 7
        %v6418 = vsub.s32 4, %v6417
        %v6419 = vrot.slane %v5575, %v6418
        %v6420 = vmul.f32 %v6242, %v6419
        %v6421 = vmul.f32 %v6243, %v6419
        %v6422 = vmul.f32 %v6244, %v6419
        %v6423 = vmul.f32 %v6245, %v6419
        %v6424 = vmul.f32 %v6246, %v6419
        %v6425 = vmul.f32 %v6247, %v6419
        %v6426 = vmul.f32 %v6248, %v6419
        %v6427 = vmul.f32 %v6249, %v6419
        %v6428 = vadd.f32 %v6409, %v6420
        %v6429 = vadd.f32 %v6409, %v6421
        %v6430 = vadd.f32 %v6410, %v6422
        %v6431 = vadd.f32 %v6411, %v6423
        %v6432 = vadd.f32 %v6412, %v6424
        %v6433 = vadd.f32 %v6413, %v6425
        %v6434 = vadd.f32 %v6414, %v6426
        %v6435 = vadd.f32 %v6415, %v6427
        %v6436 = vlaneseq
        %v6437 = vshrl.u32 %v6436, 7
        %v6438 = vsub.s32 5, %v6437
        %v6439 = vrot.slane %v5575, %v6438
        %v6440 = vmul.f32 %v6242, %v6439
        %v6441 = vmul.f32 %v6251, %v6439
        %v6442 = vmul.f32 %v6243, %v6439
        %v6443 = vmul.f32 %v6252, %v6439
        %v6444 = vmul.f32 %v6244, %v6439
        %v6445 = vmul.f32 %v6253, %v6439
        %v6446 = vmul.f32 %v6245, %v6439
        %v6447 = vmul.f32 %v6254, %v6439
        %v6448 = vmul.f32 %v6246, %v6439
        %v6449 = vmul.f32 %v6255, %v6439
        %v6450 = vmul.f32 %v6247, %v6439
        %v6451 = vmul.f32 %v6256, %v6439
        %v6452 = vmul.f32 %v6248, %v6439
        %v6453 = vmul.f32 %v6257, %v6439
        %v6454 = vmul.f32 %v6249, %v6439
        %v6455 = vmul.f32 %v6258, %v6439
        %v6472 = vrot.slane %v6440, 2
        %v6473 = vrot.slane %v6441, 2
        %v6474 = vsel %vm3978, %v6472, %v6473
        %v6475 = vrot.slane %v6442, 2
        %v6476 = vrot.slane %v6443, 2
        %v6477 = vsel %vm3978, %v6475, %v6476
        %v6478 = vrot.slane %v6444, 2
        %v6479 = vrot.slane %v6445, 2
        %v6480 = vsel %vm3978, %v6478, %v6479
        %v6481 = vrot.slane %v6446, 2
        %v6482 = vrot.slane %v6447, 2
        %v6483 = vsel %vm3978, %v6481, %v6482
        %v6484 = vrot.slane %v6448, 2
        %v6485 = vrot.slane %v6449, 2
        %v6486 = vsel %vm3978, %v6484, %v6485
        %v6487 = vrot.slane %v6450, 2
        %v6488 = vrot.slane %v6451, 2
        %v6489 = vsel %vm3978, %v6487, %v6488
        %v6490 = vrot.slane %v6452, 2
        %v6491 = vrot.slane %v6453, 2
        %v6492 = vsel %vm3978, %v6490, %v6491
        %v6493 = vrot.slane %v6454, 2
        %v6494 = vrot.slane %v6455, 2
        %v6495 = vsel %vm3978, %v6493, %v6494
        %v6504 = vadd.f32 %v6428, %v6474
        %v6505 = vadd.f32 %v6429, %v6477
        %v6506 = vadd.f32 %v6430, %v6480
        %v6507 = vadd.f32 %v6431, %v6483
        %v6508 = vadd.f32 %v6432, %v6486
        %v6509 = vadd.f32 %v6433, %v6489
        %v6510 = vadd.f32 %v6434, %v6492
        %v6511 = vadd.f32 %v6435, %v6495
        %v6512 = vlaneseq
        %v6513 = vshrl.u32 %v6512, 7
        %v6514 = vsub.s32 6, %v6513
        %v6515 = vrot.slane %v5575, %v6514
        %v6516 = vmul.f32 %v6242, %v6515
        %v6517 = vmul.f32 %v6251, %v6515
        %v6518 = vmul.f32 %v6243, %v6515
        %v6519 = vmul.f32 %v6252, %v6515
        %v6520 = vmul.f32 %v6244, %v6515
        %v6521 = vmul.f32 %v6253, %v6515
        %v6522 = vmul.f32 %v6245, %v6515
        %v6523 = vmul.f32 %v6254, %v6515
        %v6524 = vmul.f32 %v6246, %v6515
        %v6525 = vmul.f32 %v6255, %v6515
        %v6526 = vmul.f32 %v6247, %v6515
        %v6527 = vmul.f32 %v6256, %v6515
        %v6528 = vmul.f32 %v6248, %v6515
        %v6529 = vmul.f32 %v6257, %v6515
        %v6530 = vmul.f32 %v6249, %v6515
        %v6531 = vmul.f32 %v6258, %v6515
        %v6548 = vrot.slane %v6516, 4
        %v6549 = vrot.slane %v6517, 4
        %v6550 = vsel %vm3974, %v6548, %v6549
        %v6551 = vrot.slane %v6518, 4
        %v6552 = vrot.slane %v6519, 4
        %v6553 = vsel %vm3974, %v6551, %v6552
        %v6554 = vrot.slane %v6520, 4
        %v6555 = vrot.slane %v6521, 4
        %v6556 = vsel %vm3974, %v6554, %v6555
        %v6557 = vrot.slane %v6522, 4
        %v6558 = vrot.slane %v6523, 4
        %v6559 = vsel %vm3974, %v6557, %v6558
        %v6560 = vrot.slane %v6524, 4
        %v6561 = vrot.slane %v6525, 4
        %v6562 = vsel %vm3974, %v6560, %v6561
        %v6563 = vrot.slane %v6526, 4
        %v6564 = vrot.slane %v6527, 4
        %v6565 = vsel %vm3974, %v6563, %v6564
        %v6566 = vrot.slane %v6528, 4
        %v6567 = vrot.slane %v6529, 4
        %v6568 = vsel %vm3974, %v6566, %v6567
        %v6569 = vrot.slane %v6530, 4
        %v6570 = vrot.slane %v6531, 4
        %v6571 = vsel %vm3974, %v6569, %v6570
        %v6580 = vadd.f32 %v6504, %v6550
        %v6581 = vadd.f32 %v6505, %v6553
        %v6582 = vadd.f32 %v6506, %v6556
        %v6583 = vadd.f32 %v6507, %v6559
        %v6584 = vadd.f32 %v6508, %v6562
        %v6585 = vadd.f32 %v6509, %v6565
        %v6586 = vadd.f32 %v6510, %v6568
        %v6587 = vadd.f32 %v6511, %v6571
        %v6588 = vlaneseq
        %v6589 = vshrl.u32 %v6588, 7
        %v6590 = vsub.s32 7, %v6589
        %v6591 = vrot.slane %v5575, %v6590
        %v6592 = vmul.f32 %v6244, %v6591
        %v6593 = vmul.f32 %v6245, %v6591
        %v6594 = vmul.f32 %v6246, %v6591
        %v6595 = vmul.f32 %v6247, %v6591
        %v6596 = vmul.f32 %v6248, %v6591
        %v6597 = vmul.f32 %v6249, %v6591
        %v6598 = vmul.f32 %v6241, %v6591
        %v6599 = vadd.f32 %v6580, %v6592
        %v6600 = vadd.f32 %v6581, %v6593
        %v6601 = vadd.f32 %v6582, %v6594
        %v6602 = vadd.f32 %v6583, %v6595
        %v6603 = vadd.f32 %v6584, %v6596
        %v6604 = vadd.f32 %v6585, %v6597
        %v6605 = vadd.f32 %v6586, %v6598
        %v6606 = vadd.f32 %v6587, %v6598
        %v6607 = vlaneseq
        %v6608 = vshrl.u32 %v6607, 7
        %v6609 = vsub.s32 0, %v6608
        %v6610 = vrot.slane %v5576, %v6609
        %v6611 = vmul.f32 %v6244, %v6610
        %v6612 = vmul.f32 %v6253, %v6610
        %v6613 = vmul.f32 %v6245, %v6610
        %v6614 = vmul.f32 %v6254, %v6610
        %v6615 = vmul.f32 %v6246, %v6610
        %v6616 = vmul.f32 %v6255, %v6610
        %v6617 = vmul.f32 %v6247, %v6610
        %v6618 = vmul.f32 %v6256, %v6610
        %v6619 = vmul.f32 %v6248, %v6610
        %v6620 = vmul.f32 %v6257, %v6610
        %v6621 = vmul.f32 %v6249, %v6610
        %v6622 = vmul.f32 %v6258, %v6610
        %v6623 = vmul.f32 %v6241, %v6610
        %v6624 = vmul.f32 %v6250, %v6610
        %v6639 = vrot.slane %v6611, 2
        %v6640 = vrot.slane %v6612, 2
        %v6641 = vsel %vm3978, %v6639, %v6640
        %v6642 = vrot.slane %v6613, 2
        %v6643 = vrot.slane %v6614, 2
        %v6644 = vsel %vm3978, %v6642, %v6643
        %v6645 = vrot.slane %v6615, 2
        %v6646 = vrot.slane %v6616, 2
        %v6647 = vsel %vm3978, %v6645, %v6646
        %v6648 = vrot.slane %v6617, 2
        %v6649 = vrot.slane %v6618, 2
        %v6650 = vsel %vm3978, %v6648, %v6649
        %v6651 = vrot.slane %v6619, 2
        %v6652 = vrot.slane %v6620, 2
        %v6653 = vsel %vm3978, %v6651, %v6652
        %v6654 = vrot.slane %v6621, 2
        %v6655 = vrot.slane %v6622, 2
        %v6656 = vsel %vm3978, %v6654, %v6655
        %v6657 = vrot.slane %v6623, 2
        %v6658 = vrot.slane %v6624, 2
        %v6659 = vsel %vm3978, %v6657, %v6658
        %v6667 = vadd.f32 %v6599, %v6641
        %v6668 = vadd.f32 %v6600, %v6644
        %v6669 = vadd.f32 %v6601, %v6647
        %v6670 = vadd.f32 %v6602, %v6650
        %v6671 = vadd.f32 %v6603, %v6653
        %v6672 = vadd.f32 %v6604, %v6656
        %v6673 = vadd.f32 %v6605, %v6659
        %v6674 = vadd.f32 %v6606, %v6659
        %v6675 = vlaneseq
        %v6676 = vshrl.u32 %v6675, 7
        %v6677 = vsub.s32 1, %v6676
        %v6678 = vrot.slane %v5576, %v6677
        %v6679 = vmul.f32 %v6244, %v6678
        %v6680 = vmul.f32 %v6253, %v6678
        %v6681 = vmul.f32 %v6245, %v6678
        %v6682 = vmul.f32 %v6254, %v6678
        %v6683 = vmul.f32 %v6246, %v6678
        %v6684 = vmul.f32 %v6255, %v6678
        %v6685 = vmul.f32 %v6247, %v6678
        %v6686 = vmul.f32 %v6256, %v6678
        %v6687 = vmul.f32 %v6248, %v6678
        %v6688 = vmul.f32 %v6257, %v6678
        %v6689 = vmul.f32 %v6249, %v6678
        %v6690 = vmul.f32 %v6258, %v6678
        %v6691 = vmul.f32 %v6241, %v6678
        %v6692 = vmul.f32 %v6250, %v6678
        %v6707 = vrot.slane %v6679, 4
        %v6708 = vrot.slane %v6680, 4
        %v6709 = vsel %vm3974, %v6707, %v6708
        %v6710 = vrot.slane %v6681, 4
        %v6711 = vrot.slane %v6682, 4
        %v6712 = vsel %vm3974, %v6710, %v6711
        %v6713 = vrot.slane %v6683, 4
        %v6714 = vrot.slane %v6684, 4
        %v6715 = vsel %vm3974, %v6713, %v6714
        %v6716 = vrot.slane %v6685, 4
        %v6717 = vrot.slane %v6686, 4
        %v6718 = vsel %vm3974, %v6716, %v6717
        %v6719 = vrot.slane %v6687, 4
        %v6720 = vrot.slane %v6688, 4
        %v6721 = vsel %vm3974, %v6719, %v6720
        %v6722 = vrot.slane %v6689, 4
        %v6723 = vrot.slane %v6690, 4
        %v6724 = vsel %vm3974, %v6722, %v6723
        %v6725 = vrot.slane %v6691, 4
        %v6726 = vrot.slane %v6692, 4
        %v6727 = vsel %vm3974, %v6725, %v6726
        %v6735 = vadd.f32 %v6667, %v6709
        %v6736 = vadd.f32 %v6668, %v6712
        %v6737 = vadd.f32 %v6669, %v6715
        %v6738 = vadd.f32 %v6670, %v6718
        %v6739 = vadd.f32 %v6671, %v6721
        %v6740 = vadd.f32 %v6672, %v6724
        %v6741 = vadd.f32 %v6673, %v6727
        %v6742 = vadd.f32 %v6674, %v6727
        %v6743 = vmul.f32 %v6735, %v6735
        %v6744 = vmul.f32 %v6736, %v6736
        %v6745 = vmul.f32 %v6737, %v6737
        %v6746 = vmul.f32 %v6738, %v6738
        %v6747 = vmul.f32 %v6739, %v6739
        %v6748 = vmul.f32 %v6740, %v6740
        %v6749 = vmul.f32 %v6741, %v6741
        %v6750 = vmul.f32 %v6742, %v6742
        %v6751 = vmul.f32 %v6735, %v6743
        %v6752 = vmul.f32 %v6736, %v6744
        %v6753 = vmul.f32 %v6737, %v6745
        %v6754 = vmul.f32 %v6738, %v6746
        %v6755 = vmul.f32 %v6739, %v6747
        %v6756 = vmul.f32 %v6740, %v6748
        %v6757 = vmul.f32 %v6741, %v6749
        %v6758 = vmul.f32 %v6742, %v6750
        %v6759 = vmul.f32 %v6751, 0.044715
        %v6760 = vmul.f32 %v6752, 0.044715
        %v6761 = vmul.f32 %v6753, 0.044715
        %v6762 = vmul.f32 %v6754, 0.044715
        %v6763 = vmul.f32 %v6755, 0.044715
        %v6764 = vmul.f32 %v6756, 0.044715
        %v6765 = vmul.f32 %v6757, 0.044715
        %v6766 = vmul.f32 %v6758, 0.044715
        %v6767 = vadd.f32 %v6735, %v6759
        %v6768 = vadd.f32 %v6736, %v6760
        %v6769 = vadd.f32 %v6737, %v6761
        %v6770 = vadd.f32 %v6738, %v6762
        %v6771 = vadd.f32 %v6739, %v6763
        %v6772 = vadd.f32 %v6740, %v6764
        %v6773 = vadd.f32 %v6741, %v6765
        %v6774 = vadd.f32 %v6742, %v6766
        %v6775 = vmul.f32 %v6767, 0.7978846
        %v6776 = vmul.f32 %v6768, 0.7978846
        %v6777 = vmul.f32 %v6769, 0.7978846
        %v6778 = vmul.f32 %v6770, 0.7978846
        %v6779 = vmul.f32 %v6771, 0.7978846
        %v6780 = vmul.f32 %v6772, 0.7978846
        %v6781 = vmul.f32 %v6773, 0.7978846
        %v6782 = vmul.f32 %v6774, 0.7978846
        %v6783 = vtanh.pop %v6775
        %v6784 = vtanh.pop %v6776
        %v6785 = vtanh.pop %v6777
        %v6786 = vtanh.pop %v6778
        %v6787 = vtanh.pop %v6779
        %v6788 = vtanh.pop %v6780
        %v6789 = vtanh.pop %v6781
        %v6790 = vtanh.pop %v6782
        %v6791 = vadd.f32 %v6783, 1.0
        %v6792 = vadd.f32 %v6784, 1.0
        %v6793 = vadd.f32 %v6785, 1.0
        %v6794 = vadd.f32 %v6786, 1.0
        %v6795 = vadd.f32 %v6787, 1.0
        %v6796 = vadd.f32 %v6788, 1.0
        %v6797 = vadd.f32 %v6789, 1.0
        %v6798 = vadd.f32 %v6790, 1.0
        %v6799 = vmul.f32 %v6791, 0.5
        %v6800 = vmul.f32 %v6792, 0.5
        %v6801 = vmul.f32 %v6793, 0.5
        %v6802 = vmul.f32 %v6794, 0.5
        %v6803 = vmul.f32 %v6795, 0.5
        %v6804 = vmul.f32 %v6796, 0.5
        %v6805 = vmul.f32 %v6797, 0.5
        %v6806 = vmul.f32 %v6798, 0.5
        %v6807 = vmul.f32 %v6735, %v6799
        %v6808 = vmul.f32 %v6736, %v6800
        %v6809 = vmul.f32 %v6737, %v6801
        %v6810 = vmul.f32 %v6738, %v6802
        %v6811 = vmul.f32 %v6739, %v6803
        %v6812 = vmul.f32 %v6740, %v6804
        %v6813 = vmul.f32 %v6741, %v6805
        %v6814 = vmul.f32 %v6742, %v6806
        %6823 = vrot.lane.b32.xlu0 %v6807, 16
        %v6824 = vpop.permute.xlu0 %6823
        %6825 = vrot.lane.b32.xlu0 %v6808, 16
        %v6826 = vpop.permute.xlu0 %6825
        %6827 = vrot.lane.b32.xlu0 %v6809, 16
        %v6828 = vpop.permute.xlu0 %6827
        %6829 = vrot.lane.b32.xlu0 %v6810, 16
        %v6830 = vpop.permute.xlu0 %6829
        %6831 = vrot.lane.b32.xlu0 %v6811, 16
        %v6832 = vpop.permute.xlu0 %6831
        %6833 = vrot.lane.b32.xlu0 %v6812, 16
        %v6834 = vpop.permute.xlu0 %6833
        %6835 = vrot.lane.b32.xlu0 %v6813, 16
        %v6836 = vpop.permute.xlu0 %6835
        %6837 = vrot.lane.b32.xlu0 %v6814, 16
        %v6838 = vpop.permute.xlu0 %6837
        %v6847 = vsel %vm3006, %v6207, %v6824
        %v6848 = vsel %vm3006, %v6208, %v6826
        %v6849 = vsel %vm3006, %v6209, %v6828
        %v6850 = vsel %vm3006, %v6210, %v6830
        %v6851 = vsel %vm3006, %v6211, %v6832
        %v6852 = vsel %vm3006, %v6212, %v6834
        %v6853 = vsel %vm3006, %v6213, %v6836
        %v6854 = vsel %vm3006, %v6214, %v6838
        %v6855 = vmul.f32 %v6847, %v5442
        %v6856 = vmul.f32 %v6848, %v5447
        %v6857 = vmul.f32 %v6849, %v5452
        %v6858 = vmul.f32 %v6850, %v5457
        %v6859 = vmul.f32 %v6851, %v5462
        %v6860 = vmul.f32 %v6852, %v5467
        %v6861 = vmul.f32 %v6853, %v5472
        %v6862 = vmul.f32 %v6854, %v5477
        %v6863 = vld [vmem:[%s73] sm:$0xff]
        %v6864 = vld [vmem:[%s73 + $0x8] sm:$0xff]
        %v6865 = vld [vmem:[%s73 + $0x10] sm:$0xff]
        %v6866 = vld [vmem:[%s73 + $0x18] sm:$0xff]
        %v6867 = vld [vmem:[%s75] sm:$0x1]
        %v6869 = vlaneseq
        %v6870 = vshrl.u32 %v6869, 7
        %v6871 = vsub.s32 0, %v6870
        %v6872 = vrot.slane %v6867, %v6871
        %6874 = vmatprep.subr.mxu0 0.0
        %6875 = vmatpush1.msra.mxu0 %v6863
        %6876 = vmatprep.subr.mxu0 0.0
        %6877 = vmatpush1.msra.mxu0 %v6864
        %6878 = vmatprep.subr.mxu0 0.0
        %6879 = vmatpush1.msra.mxu0 %v6865
        %6880 = vmatprep.subr.mxu0 0.0
        %6881 = vmatpush1.msra.mxu0 %v6866
        %6882 = vmatprep.subr.mxu0 0.0
        %6883 = vmatpush1.msra.mxu0 0.0
        %6884 = vmatprep.subr.mxu0 0.0
        %6885 = vmatpush1.msra.mxu0 0.0
        %6886 = vmatprep.subr.mxu0 0.0
        %6887 = vmatpush1.msra.mxu0 0.0
        %6888 = vmatprep.subr.mxu0 0.0
        %6889 = vmatpush1.msra.mxu0 0.0
        %6890 = vmatprep.subr.mxu0 0.0
        %6891 = vmatpush1.msra.mxu0 0.0
        %6892 = vmatprep.subr.mxu0 0.0
        %6893 = vmatpush1.msra.mxu0 0.0
        %6894 = vmatprep.subr.mxu0 0.0
        %6895 = vmatpush1.msra.mxu0 0.0
        %6896 = vmatprep.subr.mxu0 0.0
        %6897 = vmatpush1.msra.mxu0 0.0
        %6898 = vmatprep.subr.mxu0 0.0
        %6899 = vmatpush1.msra.mxu0 0.0
        %6900 = vmatprep.subr.mxu0 0.0
        %6901 = vmatpush1.msra.mxu0 0.0
        %6902 = vmatprep.subr.mxu0 0.0
        %6903 = vmatpush1.msra.mxu0 0.0
        %6904 = vmatprep.subr.mxu0 0.0
        %6905 = vmatpush1.msra.mxu0 0.0
        %6906 = vmatprep.subr.mxu0 0.0
        %6907 = vmatpush1.msra.mxu0 0.0
        %6908 = vmatprep.subr.mxu0 0.0
        %6909 = vmatpush1.msra.mxu0 0.0
        %6910 = vmatprep.subr.mxu0 0.0
        %6911 = vmatpush1.msra.mxu0 0.0
        %6912 = vmatprep.subr.mxu0 0.0
        %6913 = vmatpush1.msra.mxu0 0.0
        %6914 = vmatprep.subr.mxu0 0.0
        %6915 = vmatpush1.msra.mxu0 0.0
        %6916 = vmatprep.subr.mxu0 0.0
        %6917 = vmatpush1.msra.mxu0 0.0
        %6918 = vmatprep.subr.mxu0 0.0
        %6919 = vmatpush1.msra.mxu0 0.0
        %6920 = vmatprep.subr.mxu0 0.0
        %6921 = vmatpush1.msra.mxu0 0.0
        %6922 = vmatprep.subr.mxu0 0.0
        %6923 = vmatpush1.msra.mxu0 0.0
        %6924 = vmatprep.subr.mxu0 0.0
        %6925 = vmatpush1.msra.mxu0 0.0
        %6926 = vmatprep.subr.mxu0 0.0
        %6927 = vmatpush1.msra.mxu0 0.0
        %6928 = vmatprep.subr.mxu0 0.0
        %6929 = vmatpush1.msra.mxu0 0.0
        %6930 = vmatprep.subr.mxu0 0.0
        %6931 = vmatpush1.msra.mxu0 0.0
        %6932 = vmatprep.subr.mxu0 0.0
        %6933 = vmatpush1.msra.mxu0 0.0
        %6934 = vmatprep.subr.mxu0 0.0
        %6935 = vmatpush1.msra.mxu0 0.0
        %6936 = vmatprep.subr.mxu0 0.0
        %6937 = vmatpush1.msra.mxu0 0.0
        %6938 = vmatprep.mubr.f32.mxu0 0.0
        %6939 = vmatmul.mubr.f32.gmra.mrb[0].mxu0 %v5031
        %v6940 = vpop.f32.mrb[0].mxu0
        %v6941 = vadd.f32 %v6872, %v6940
        %v6942 = vpop.f32.mrb[0].mxu0
        %6943 = vdwg.mxu0
        %v6944 = vmul.f32 %v6941, %v6941
        %v6945 = vmul.f32 %v6941, %v6944
        %v6946 = vmul.f32 %v6945, 0.044715
        %v6947 = vadd.f32 %v6941, %v6946
        %v6948 = vmul.f32 %v6947, 0.7978846
        %v6949 = vtanh.pop %v6948
        %v6950 = vadd.f32 %v6949, 1.0
        %v6951 = vmul.f32 %v6950, 0.5
        %v6952 = vmul.f32 %v6941, %v6951
        %v6953 = vsel %vm3006, %v6952, 1.0
        %6955 = vrot.lane.b32.xlu0 %v6952, 112
        %v6956 = vpop.permute.xlu0 %6955
        %v6958 = vsel %vm3006, %v6956, 1.0
        %v6959 = vld [vmem:[%s77] sm:$0xff]
        %v6960 = vld [vmem:[%s77 + $0x8] sm:$0xff]
        %v6961 = vld [vmem:[%s77 + $0x10] sm:$0x1]
        %vm6962 = vcmask 138240
        %v6964 = vsel %vm6962, %v6953, 0
        %v6967 = vsel %vm3969, %v6961, 0
        %6969 = vmatprep.subr.mxu0 0.0
        %6970 = vmatpush1.msra.mxu0 %v6959
        %6971 = vmatprep.subr.mxu0 0.0
        %6972 = vmatpush1.msra.mxu0 %v6960
        %6973 = vmatprep.subr.mxu0 0.0
        %6974 = vmatpush1.msra.mxu0 %v6967
        %6975 = vmatprep.subr.mxu0 0.0
        %6976 = vmatpush1.msra.mxu0 0.0
        %6977 = vmatprep.subr.mxu0 0.0
        %6978 = vmatpush1.msra.mxu0 0.0
        %6979 = vmatprep.subr.mxu0 0.0
        %6980 = vmatpush1.msra.mxu0 0.0
        %6981 = vmatprep.subr.mxu0 0.0
        %6982 = vmatpush1.msra.mxu0 0.0
        %6983 = vmatprep.subr.mxu0 0.0
        %6984 = vmatpush1.msra.mxu0 0.0
        %6985 = vmatprep.subr.mxu0 0.0
        %6986 = vmatpush1.msra.mxu0 0.0
        %6987 = vmatprep.subr.mxu0 0.0
        %6988 = vmatpush1.msra.mxu0 0.0
        %6989 = vmatprep.subr.mxu0 0.0
        %6990 = vmatpush1.msra.mxu0 0.0
        %6991 = vmatprep.subr.mxu0 0.0
        %6992 = vmatpush1.msra.mxu0 0.0
        %6993 = vmatprep.subr.mxu0 0.0
        %6994 = vmatpush1.msra.mxu0 0.0
        %6995 = vmatprep.subr.mxu0 0.0
        %6996 = vmatpush1.msra.mxu0 0.0
        %6997 = vmatprep.subr.mxu0 0.0
        %6998 = vmatpush1.msra.mxu0 0.0
        %6999 = vmatprep.subr.mxu0 0.0
        %7000 = vmatpush1.msra.mxu0 0.0
        %7001 = vmatprep.subr.mxu0 0.0
        %7002 = vmatpush1.msra.mxu0 0.0
        %7003 = vmatprep.subr.mxu0 0.0
        %7004 = vmatpush1.msra.mxu0 0.0
        %7005 = vmatprep.subr.mxu0 0.0
        %7006 = vmatpush1.msra.mxu0 0.0
        %7007 = vmatprep.subr.mxu0 0.0
        %7008 = vmatpush1.msra.mxu0 0.0
        %7009 = vmatprep.subr.mxu0 0.0
        %7010 = vmatpush1.msra.mxu0 0.0
        %7011 = vmatprep.subr.mxu0 0.0
        %7012 = vmatpush1.msra.mxu0 0.0
        %7013 = vmatprep.subr.mxu0 0.0
        %7014 = vmatpush1.msra.mxu0 0.0
        %7015 = vmatprep.subr.mxu0 0.0
        %7016 = vmatpush1.msra.mxu0 0.0
        %7017 = vmatprep.subr.mxu0 0.0
        %7018 = vmatpush1.msra.mxu0 0.0
        %7019 = vmatprep.subr.mxu0 0.0
        %7020 = vmatpush1.msra.mxu0 0.0
        %7021 = vmatprep.subr.mxu0 0.0
        %7022 = vmatpush1.msra.mxu0 0.0
        %7023 = vmatprep.subr.mxu0 0.0
        %7024 = vmatpush1.msra.mxu0 0.0
        %7025 = vmatprep.subr.mxu0 0.0
        %7026 = vmatpush1.msra.mxu0 0.0
        %7027 = vmatprep.subr.mxu0 0.0
        %7028 = vmatpush1.msra.mxu0 0.0
        %7029 = vmatprep.subr.mxu0 0.0
        %7030 = vmatpush1.msra.mxu0 0.0
        %7031 = vmatprep.subr.mxu0 0.0
        %7032 = vmatpush1.msra.mxu0 0.0
        %7033 = vmatprep.mubr.f32.mxu0 0.0
        %7034 = vmatmul.mubr.f32.gmra.mrb[0].mxu0 %v6964
        %v7035 = vpop.f32.mrb[0].mxu0
        %v7036 = vadd.f32 0.0, %v7035
        %v7037 = vpop.f32.mrb[0].mxu0
        %7038 = vdwg.mxu0
        %v7040 = vsel %vm6962, %v7036, 0
        %v7043 = vsel %vm6962, %v6958, 0
        %7045 = vmatprep.subr.mxu0 0.0
        %7046 = vmatpush1.xpose.msra.mxu0 %v7043
        %7047 = vmatprep.subr.mxu0 0.0
        %7048 = vmatpush1.xpose.msra.mxu0 0.0
        %7049 = vmatprep.subr.mxu0 0.0
        %7050 = vmatpush1.xpose.msra.mxu0 0.0
        %7051 = vmatprep.subr.mxu0 0.0
        %7052 = vmatpush1.xpose.msra.mxu0 0.0
        %7053 = vmatprep.subr.mxu0 0.0
        %7054 = vmatpush1.xpose.msra.mxu0 0.0
        %7055 = vmatprep.subr.mxu0 0.0
        %7056 = vmatpush1.xpose.msra.mxu0 0.0
        %7057 = vmatprep.subr.mxu0 0.0
        %7058 = vmatpush1.xpose.msra.mxu0 0.0
        %7059 = vmatprep.subr.mxu0 0.0
        %7060 = vmatpush1.xpose.msra.mxu0 0.0
        %7061 = vmatprep.subr.mxu0 0.0
        %7062 = vmatpush1.xpose.msra.mxu0 0.0
        %7063 = vmatprep.subr.mxu0 0.0
        %7064 = vmatpush1.xpose.msra.mxu0 0.0
        %7065 = vmatprep.subr.mxu0 0.0
        %7066 = vmatpush1.xpose.msra.mxu0 0.0
        %7067 = vmatprep.subr.mxu0 0.0
        %7068 = vmatpush1.xpose.msra.mxu0 0.0
        %7069 = vmatprep.subr.mxu0 0.0
        %7070 = vmatpush1.xpose.msra.mxu0 0.0
        %7071 = vmatprep.subr.mxu0 0.0
        %7072 = vmatpush1.xpose.msra.mxu0 0.0
        %7073 = vmatprep.subr.mxu0 0.0
        %7074 = vmatpush1.xpose.msra.mxu0 0.0
        %7075 = vmatprep.subr.mxu0 0.0
        %7076 = vmatpush1.xpose.msra.mxu0 0.0
        %7077 = vmatprep.subr.mxu0 0.0
        %7078 = vmatpush1.xpose.msra.mxu0 0.0
        %7079 = vmatprep.subr.mxu0 0.0
        %7080 = vmatpush1.xpose.msra.mxu0 0.0
        %7081 = vmatprep.subr.mxu0 0.0
        %7082 = vmatpush1.xpose.msra.mxu0 0.0
        %7083 = vmatprep.subr.mxu0 0.0
        %7084 = vmatpush1.xpose.msra.mxu0 0.0
        %7085 = vmatprep.subr.mxu0 0.0
        %7086 = vmatpush1.xpose.msra.mxu0 0.0
        %7087 = vmatprep.subr.mxu0 0.0
        %7088 = vmatpush1.xpose.msra.mxu0 0.0
        %7089 = vmatprep.subr.mxu0 0.0
        %7090 = vmatpush1.xpose.msra.mxu0 0.0
        %7091 = vmatprep.subr.mxu0 0.0
        %7092 = vmatpush1.xpose.msra.mxu0 0.0
        %7093 = vmatprep.subr.mxu0 0.0
        %7094 = vmatpush1.xpose.msra.mxu0 0.0
        %7095 = vmatprep.subr.mxu0 0.0
        %7096 = vmatpush1.xpose.msra.mxu0 0.0
        %7097 = vmatprep.subr.mxu0 0.0
        %7098 = vmatpush1.xpose.msra.mxu0 0.0
        %7099 = vmatprep.subr.mxu0 0.0
        %7100 = vmatpush1.xpose.msra.mxu0 0.0
        %7101 = vmatprep.subr.mxu0 0.0
        %7102 = vmatpush1.xpose.msra.mxu0 0.0
        %7103 = vmatprep.subr.mxu0 0.0
        %7104 = vmatpush1.xpose.msra.mxu0 0.0
        %7105 = vmatprep.subr.mxu0 0.0
        %7106 = vmatpush1.xpose.msra.mxu0 0.0
        %7107 = vmatprep.subr.mxu0 0.0
        %7108 = vmatpush1.xpose.msra.mxu0 0.0
        %7109 = vmatprep.mubr.f32.mxu0 0.0
        %7110 = vmatmul.mubr.f32.gmra.mrb[0].mxu0 %v7040
        %v7111 = vpop.f32.mrb[0].mxu0
        %v7112 = vadd.f32 0.0, %v7111
        %v7113 = vpop.f32.mrb[0].mxu0
        %7114 = vdwg.mxu0
        %7115 = vrot.lane.b32.xlu0 %v7036, 111
        %v7116 = vpop.permute.xlu0 %7115
        %v7117 = vsel %vm6962, %v7116, 0
        %7119 = vmatprep.subr.mxu0 0.0
        %7120 = vmatpush1.xpose.msra.mxu0 %v7043
        %7121 = vmatprep.subr.mxu0 0.0
        %7122 = vmatpush1.xpose.msra.mxu0 0.0
        %7123 = vmatprep.subr.mxu0 0.0
        %7124 = vmatpush1.xpose.msra.mxu0 0.0
        %7125 = vmatprep.subr.mxu0 0.0
        %7126 = vmatpush1.xpose.msra.mxu0 0.0
        %7127 = vmatprep.subr.mxu0 0.0
        %7128 = vmatpush1.xpose.msra.mxu0 0.0
        %7129 = vmatprep.subr.mxu0 0.0
        %7130 = vmatpush1.xpose.msra.mxu0 0.0
        %7131 = vmatprep.subr.mxu0 0.0
        %7132 = vmatpush1.xpose.msra.mxu0 0.0
        %7133 = vmatprep.subr.mxu0 0.0
        %7134 = vmatpush1.xpose.msra.mxu0 0.0
        %7135 = vmatprep.subr.mxu0 0.0
        %7136 = vmatpush1.xpose.msra.mxu0 0.0
        %7137 = vmatprep.subr.mxu0 0.0
        %7138 = vmatpush1.xpose.msra.mxu0 0.0
        %7139 = vmatprep.subr.mxu0 0.0
        %7140 = vmatpush1.xpose.msra.mxu0 0.0
        %7141 = vmatprep.subr.mxu0 0.0
        %7142 = vmatpush1.xpose.msra.mxu0 0.0
        %7143 = vmatprep.subr.mxu0 0.0
        %7144 = vmatpush1.xpose.msra.mxu0 0.0
        %7145 = vmatprep.subr.mxu0 0.0
        %7146 = vmatpush1.xpose.msra.mxu0 0.0
        %7147 = vmatprep.subr.mxu0 0.0
        %7148 = vmatpush1.xpose.msra.mxu0 0.0
        %7149 = vmatprep.subr.mxu0 0.0
        %7150 = vmatpush1.xpose.msra.mxu0 0.0
        %7151 = vmatprep.subr.mxu0 0.0
        %7152 = vmatpush1.xpose.msra.mxu0 0.0
        %7153 = vmatprep.subr.mxu0 0.0
        %7154 = vmatpush1.xpose.msra.mxu0 0.0
        %7155 = vmatprep.subr.mxu0 0.0
        %7156 = vmatpush1.xpose.msra.mxu0 0.0
        %7157 = vmatprep.subr.mxu0 0.0
        %7158 = vmatpush1.xpose.msra.mxu0 0.0
        %7159 = vmatprep.subr.mxu0 0.0
        %7160 = vmatpush1.xpose.msra.mxu0 0.0
        %7161 = vmatprep.subr.mxu0 0.0
        %7162 = vmatpush1.xpose.msra.mxu0 0.0
        %7163 = vmatprep.subr.mxu0 0.0
        %7164 = vmatpush1.xpose.msra.mxu0 0.0
        %7165 = vmatprep.subr.mxu0 0.0
        %7166 = vmatpush1.xpose.msra.mxu0 0.0
        %7167 = vmatprep.subr.mxu0 0.0
        %7168 = vmatpush1.xpose.msra.mxu0 0.0
        %7169 = vmatprep.subr.mxu0 0.0
        %7170 = vmatpush1.xpose.msra.mxu0 0.0
        %7171 = vmatprep.subr.mxu0 0.0
        %7172 = vmatpush1.xpose.msra.mxu0 0.0
        %7173 = vmatprep.subr.mxu0 0.0
        %7174 = vmatpush1.xpose.msra.mxu0 0.0
        %7175 = vmatprep.subr.mxu0 0.0
        %7176 = vmatpush1.xpose.msra.mxu0 0.0
        %7177 = vmatprep.subr.mxu0 0.0
        %7178 = vmatpush1.xpose.msra.mxu0 0.0
        %7179 = vmatprep.subr.mxu0 0.0
        %7180 = vmatpush1.xpose.msra.mxu0 0.0
        %7181 = vmatprep.subr.mxu0 0.0
        %7182 = vmatpush1.xpose.msra.mxu0 0.0
        %7183 = vmatprep.mubr.f32.mxu0 0.0
        %7184 = vmatmul.mubr.f32.gmra.mrb[0].mxu0 %v7117
        %v7185 = vpop.f32.mrb[0].mxu0
        %v7186 = vadd.f32 0.0, %v7185
        %v7187 = vpop.f32.mrb[0].mxu0
        %7188 = vdwg.mxu0
        %7189 = vrot.lane.b32.xlu0 %v7036, 94
        %v7190 = vpop.permute.xlu0 %7189
        %v7191 = vsel %vm6962, %v7190, 0
        %7193 = vmatprep.subr.mxu0 0.0
        %7194 = vmatpush1.xpose.msra.mxu0 %v7043
        %7195 = vmatprep.subr.mxu0 0.0
        %7196 = vmatpush1.xpose.msra.mxu0 0.0
        %7197 = vmatprep.subr.mxu0 0.0
        %7198 = vmatpush1.xpose.msra.mxu0 0.0
        %7199 = vmatprep.subr.mxu0 0.0
        %7200 = vmatpush1.xpose.msra.mxu0 0.0
        %7201 = vmatprep.subr.mxu0 0.0
        %7202 = vmatpush1.xpose.msra.mxu0 0.0
        %7203 = vmatprep.subr.mxu0 0.0
        %7204 = vmatpush1.xpose.msra.mxu0 0.0
        %7205 = vmatprep.subr.mxu0 0.0
        %7206 = vmatpush1.xpose.msra.mxu0 0.0
        %7207 = vmatprep.subr.mxu0 0.0
        %7208 = vmatpush1.xpose.msra.mxu0 0.0
        %7209 = vmatprep.subr.mxu0 0.0
        %7210 = vmatpush1.xpose.msra.mxu0 0.0
        %7211 = vmatprep.subr.mxu0 0.0
        %7212 = vmatpush1.xpose.msra.mxu0 0.0
        %7213 = vmatprep.subr.mxu0 0.0
        %7214 = vmatpush1.xpose.msra.mxu0 0.0
        %7215 = vmatprep.subr.mxu0 0.0
        %7216 = vmatpush1.xpose.msra.mxu0 0.0
        %7217 = vmatprep.subr.mxu0 0.0
        %7218 = vmatpush1.xpose.msra.mxu0 0.0
        %7219 = vmatprep.subr.mxu0 0.0
        %7220 = vmatpush1.xpose.msra.mxu0 0.0
        %7221 = vmatprep.subr.mxu0 0.0
        %7222 = vmatpush1.xpose.msra.mxu0 0.0
        %7223 = vmatprep.subr.mxu0 0.0
        %7224 = vmatpush1.xpose.msra.mxu0 0.0
        %7225 = vmatprep.subr.mxu0 0.0
        %7226 = vmatpush1.xpose.msra.mxu0 0.0
        %7227 = vmatprep.subr.mxu0 0.0
        %7228 = vmatpush1.xpose.msra.mxu0 0.0
        %7229 = vmatprep.subr.mxu0 0.0
        %7230 = vmatpush1.xpose.msra.mxu0 0.0
        %7231 = vmatprep.subr.mxu0 0.0
        %7232 = vmatpush1.xpose.msra.mxu0 0.0
        %7233 = vmatprep.subr.mxu0 0.0
        %7234 = vmatpush1.xpose.msra.mxu0 0.0
        %7235 = vmatprep.subr.mxu0 0.0
        %7236 = vmatpush1.xpose.msra.mxu0 0.0
        %7237 = vmatprep.subr.mxu0 0.0
        %7238 = vmatpush1.xpose.msra.mxu0 0.0
        %7239 = vmatprep.subr.mxu0 0.0
        %7240 = vmatpush1.xpose.msra.mxu0 0.0
        %7241 = vmatprep.subr.mxu0 0.0
        %7242 = vmatpush1.xpose.msra.mxu0 0.0
        %7243 = vmatprep.subr.mxu0 0.0
        %7244 = vmatpush1.xpose.msra.mxu0 0.0
        %7245 = vmatprep.subr.mxu0 0.0
        %7246 = vmatpush1.xpose.msra.mxu0 0.0
        %7247 = vmatprep.subr.mxu0 0.0
        %7248 = vmatpush1.xpose.msra.mxu0 0.0
        %7249 = vmatprep.subr.mxu0 0.0
        %7250 = vmatpush1.xpose.msra.mxu0 0.0
        %7251 = vmatprep.subr.mxu0 0.0
        %7252 = vmatpush1.xpose.msra.mxu0 0.0
        %7253 = vmatprep.subr.mxu0 0.0
        %7254 = vmatpush1.xpose.msra.mxu0 0.0
        %7255 = vmatprep.subr.mxu0 0.0
        %7256 = vmatpush1.xpose.msra.mxu0 0.0
        %7257 = vmatprep.mubr.f32.mxu0 0.0
        %7258 = vmatmul.mubr.f32.gmra.mrb[0].mxu0 %v7191
        %v7259 = vpop.f32.mrb[0].mxu0
        %v7260 = vadd.f32 0.0, %v7259
        %v7261 = vpop.f32.mrb[0].mxu0
        %7262 = vdwg.mxu0
        %7263 = vrot.lane.b32.xlu0 %v7036, 77
        %v7264 = vpop.permute.xlu0 %7263
        %v7265 = vsel %vm6962, %v7264, 0
        %7267 = vmatprep.subr.mxu0 0.0
        %7268 = vmatpush1.xpose.msra.mxu0 %v7043
        %7269 = vmatprep.subr.mxu0 0.0
        %7270 = vmatpush1.xpose.msra.mxu0 0.0
        %7271 = vmatprep.subr.mxu0 0.0
        %7272 = vmatpush1.xpose.msra.mxu0 0.0
        %7273 = vmatprep.subr.mxu0 0.0
        %7274 = vmatpush1.xpose.msra.mxu0 0.0
        %7275 = vmatprep.subr.mxu0 0.0
        %7276 = vmatpush1.xpose.msra.mxu0 0.0
        %7277 = vmatprep.subr.mxu0 0.0
        %7278 = vmatpush1.xpose.msra.mxu0 0.0
        %7279 = vmatprep.subr.mxu0 0.0
        %7280 = vmatpush1.xpose.msra.mxu0 0.0
        %7281 = vmatprep.subr.mxu0 0.0
        %7282 = vmatpush1.xpose.msra.mxu0 0.0
        %7283 = vmatprep.subr.mxu0 0.0
        %7284 = vmatpush1.xpose.msra.mxu0 0.0
        %7285 = vmatprep.subr.mxu0 0.0
        %7286 = vmatpush1.xpose.msra.mxu0 0.0
        %7287 = vmatprep.subr.mxu0 0.0
        %7288 = vmatpush1.xpose.msra.mxu0 0.0
        %7289 = vmatprep.subr.mxu0 0.0
        %7290 = vmatpush1.xpose.msra.mxu0 0.0
        %7291 = vmatprep.subr.mxu0 0.0
        %7292 = vmatpush1.xpose.msra.mxu0 0.0
        %7293 = vmatprep.subr.mxu0 0.0
        %7294 = vmatpush1.xpose.msra.mxu0 0.0
        %7295 = vmatprep.subr.mxu0 0.0
        %7296 = vmatpush1.xpose.msra.mxu0 0.0
        %7297 = vmatprep.subr.mxu0 0.0
        %7298 = vmatpush1.xpose.msra.mxu0 0.0
        %7299 = vmatprep.subr.mxu0 0.0
        %7300 = vmatpush1.xpose.msra.mxu0 0.0
        %7301 = vmatprep.subr.mxu0 0.0
        %7302 = vmatpush1.xpose.msra.mxu0 0.0
        %7303 = vmatprep.subr.mxu0 0.0
        %7304 = vmatpush1.xpose.msra.mxu0 0.0
        %7305 = vmatprep.subr.mxu0 0.0
        %7306 = vmatpush1.xpose.msra.mxu0 0.0
        %7307 = vmatprep.subr.mxu0 0.0
        %7308 = vmatpush1.xpose.msra.mxu0 0.0
        %7309 = vmatprep.subr.mxu0 0.0
        %7310 = vmatpush1.xpose.msra.mxu0 0.0
        %7311 = vmatprep.subr.mxu0 0.0
        %7312 = vmatpush1.xpose.msra.mxu0 0.0
        %7313 = vmatprep.subr.mxu0 0.0
        %7314 = vmatpush1.xpose.msra.mxu0 0.0
        %7315 = vmatprep.subr.mxu0 0.0
        %7316 = vmatpush1.xpose.msra.mxu0 0.0
        %7317 = vmatprep.subr.mxu0 0.0
        %7318 = vmatpush1.xpose.msra.mxu0 0.0
        %7319 = vmatprep.subr.mxu0 0.0
        %7320 = vmatpush1.xpose.msra.mxu0 0.0
        %7321 = vmatprep.subr.mxu0 0.0
        %7322 = vmatpush1.xpose.msra.mxu0 0.0
        %7323 = vmatprep.subr.mxu0 0.0
        %7324 = vmatpush1.xpose.msra.mxu0 0.0
        %7325 = vmatprep.subr.mxu0 0.0
        %7326 = vmatpush1.xpose.msra.mxu0 0.0
        %7327 = vmatprep.subr.mxu0 0.0
        %7328 = vmatpush1.xpose.msra.mxu0 0.0
        %7329 = vmatprep.subr.mxu0 0.0
        %7330 = vmatpush1.xpose.msra.mxu0 0.0
        %7331 = vmatprep.mubr.f32.mxu0 0.0
        %7332 = vmatmul.mubr.f32.gmra.mrb[0].mxu0 %v7265
        %v7333 = vpop.f32.mrb[0].mxu0
        %v7334 = vadd.f32 0.0, %v7333
        %v7335 = vpop.f32.mrb[0].mxu0
        %7336 = vdwg.mxu0
        %v7337 = vlaneseq
        %v7338 = vshrl.u32 %v7337, 7
        %v7339 = vsub.s32 0, %v7338
        %v7340 = vrot.slane %v7112, %v7339
        %7342 = vbcast.lane.b32.xlu0 %v7340, 256
        %v7343 = vpop.permute.xlu0 %7342
        %v7344 = vlaneseq
        %v7345 = vshrl.u32 %v7344, 7
        %v7346 = vsub.s32 1, %v7345
        %v7347 = vrot.slane %v7112, %v7346
        %7349 = vbcast.lane.b32.xlu0 %v7347, 256
        %v7350 = vpop.permute.xlu0 %7349
        %v7351 = vlaneseq
        %v7352 = vshrl.u32 %v7351, 7
        %v7353 = vsub.s32 2, %v7352
        %v7354 = vrot.slane %v7112, %v7353
        %7356 = vbcast.lane.b32.xlu0 %v7354, 256
        %v7357 = vpop.permute.xlu0 %7356
        %v7358 = vlaneseq
        %v7359 = vshrl.u32 %v7358, 7
        %v7360 = vsub.s32 3, %v7359
        %v7361 = vrot.slane %v7112, %v7360
        %7363 = vbcast.lane.b32.xlu0 %v7361, 256
        %v7364 = vpop.permute.xlu0 %7363
        %v7365 = vlaneseq
        %v7366 = vshrl.u32 %v7365, 7
        %v7367 = vsub.s32 4, %v7366
        %v7368 = vrot.slane %v7112, %v7367
        %7370 = vbcast.lane.b32.xlu0 %v7368, 256
        %v7371 = vpop.permute.xlu0 %7370
        %v7372 = vlaneseq
        %v7373 = vshrl.u32 %v7372, 7
        %v7374 = vsub.s32 5, %v7373
        %v7375 = vrot.slane %v7112, %v7374
        %7377 = vbcast.lane.b32.xlu0 %v7375, 256
        %v7378 = vpop.permute.xlu0 %7377
        %v7379 = vlaneseq
        %v7380 = vshrl.u32 %v7379, 7
        %v7381 = vsub.s32 6, %v7380
        %v7382 = vrot.slane %v7112, %v7381
        %7384 = vbcast.lane.b32.xlu0 %v7382, 256
        %v7385 = vpop.permute.xlu0 %7384
        %v7386 = vlaneseq
        %v7387 = vshrl.u32 %v7386, 7
        %v7388 = vsub.s32 7, %v7387
        %v7389 = vrot.slane %v7112, %v7388
        %7391 = vbcast.lane.b32.xlu0 %v7389, 256
        %v7392 = vpop.permute.xlu0 %7391
        %v7393 = vlaneseq
        %v7394 = vshrl.u32 %v7393, 7
        %v7395 = vsub.s32 0, %v7394
        %v7396 = vrot.slane %v7186, %v7395
        %7398 = vbcast.lane.b32.xlu0 %v7396, 256
        %v7399 = vpop.permute.xlu0 %7398
        %v7400 = vlaneseq
        %v7401 = vshrl.u32 %v7400, 7
        %v7402 = vsub.s32 1, %v7401
        %v7403 = vrot.slane %v7186, %v7402
        %7405 = vbcast.lane.b32.xlu0 %v7403, 256
        %v7406 = vpop.permute.xlu0 %7405
        %v7407 = vlaneseq
        %v7408 = vshrl.u32 %v7407, 7
        %v7409 = vsub.s32 2, %v7408
        %v7410 = vrot.slane %v7186, %v7409
        %7412 = vbcast.lane.b32.xlu0 %v7410, 256
        %v7413 = vpop.permute.xlu0 %7412
        %v7414 = vlaneseq
        %v7415 = vshrl.u32 %v7414, 7
        %v7416 = vsub.s32 3, %v7415
        %v7417 = vrot.slane %v7186, %v7416
        %7419 = vbcast.lane.b32.xlu0 %v7417, 256
        %v7420 = vpop.permute.xlu0 %7419
        %v7421 = vlaneseq
        %v7422 = vshrl.u32 %v7421, 7
        %v7423 = vsub.s32 4, %v7422
        %v7424 = vrot.slane %v7186, %v7423
        %7426 = vbcast.lane.b32.xlu0 %v7424, 256
        %v7427 = vpop.permute.xlu0 %7426
        %v7428 = vlaneseq
        %v7429 = vshrl.u32 %v7428, 7
        %v7430 = vsub.s32 5, %v7429
        %v7431 = vrot.slane %v7186, %v7430
        %7433 = vbcast.lane.b32.xlu0 %v7431, 256
        %v7434 = vpop.permute.xlu0 %7433
        %v7435 = vlaneseq
        %v7436 = vshrl.u32 %v7435, 7
        %v7437 = vsub.s32 6, %v7436
        %v7438 = vrot.slane %v7186, %v7437
        %7440 = vbcast.lane.b32.xlu0 %v7438, 256
        %v7441 = vpop.permute.xlu0 %7440
        %v7442 = vlaneseq
        %v7443 = vshrl.u32 %v7442, 7
        %v7444 = vsub.s32 7, %v7443
        %v7445 = vrot.slane %v7186, %v7444
        %7447 = vbcast.lane.b32.xlu0 %v7445, 256
        %v7448 = vpop.permute.xlu0 %7447
        %v7449 = vlaneseq
        %v7450 = vshrl.u32 %v7449, 7
        %v7451 = vsub.s32 0, %v7450
        %v7452 = vrot.slane %v7260, %v7451
        %7454 = vbcast.lane.b32.xlu0 %v7452, 256
        %v7455 = vpop.permute.xlu0 %7454
        %v7456 = vlaneseq
        %v7457 = vshrl.u32 %v7456, 7
        %v7458 = vsub.s32 1, %v7457
        %v7459 = vrot.slane %v7260, %v7458
        %7461 = vbcast.lane.b32.xlu0 %v7459, 256
        %v7462 = vpop.permute.xlu0 %7461
        %v7463 = vlaneseq
        %v7464 = vshrl.u32 %v7463, 7
        %v7465 = vsub.s32 2, %v7464
        %v7466 = vrot.slane %v7260, %v7465
        %7468 = vbcast.lane.b32.xlu0 %v7466, 256
        %v7469 = vpop.permute.xlu0 %7468
        %v7470 = vlaneseq
        %v7471 = vshrl.u32 %v7470, 7
        %v7472 = vsub.s32 3, %v7471
        %v7473 = vrot.slane %v7260, %v7472
        %7475 = vbcast.lane.b32.xlu0 %v7473, 256
        %v7476 = vpop.permute.xlu0 %7475
        %v7477 = vlaneseq
        %v7478 = vshrl.u32 %v7477, 7
        %v7479 = vsub.s32 4, %v7478
        %v7480 = vrot.slane %v7260, %v7479
        %7482 = vbcast.lane.b32.xlu0 %v7480, 256
        %v7483 = vpop.permute.xlu0 %7482
        %v7484 = vlaneseq
        %v7485 = vshrl.u32 %v7484, 7
        %v7486 = vsub.s32 5, %v7485
        %v7487 = vrot.slane %v7260, %v7486
        %7489 = vbcast.lane.b32.xlu0 %v7487, 256
        %v7490 = vpop.permute.xlu0 %7489
        %v7491 = vlaneseq
        %v7492 = vshrl.u32 %v7491, 7
        %v7493 = vsub.s32 6, %v7492
        %v7494 = vrot.slane %v7260, %v7493
        %7496 = vbcast.lane.b32.xlu0 %v7494, 256
        %v7497 = vpop.permute.xlu0 %7496
        %v7498 = vlaneseq
        %v7499 = vshrl.u32 %v7498, 7
        %v7500 = vsub.s32 7, %v7499
        %v7501 = vrot.slane %v7260, %v7500
        %7503 = vbcast.lane.b32.xlu0 %v7501, 256
        %v7504 = vpop.permute.xlu0 %7503
        %v7505 = vlaneseq
        %v7506 = vshrl.u32 %v7505, 7
        %v7507 = vsub.s32 0, %v7506
        %v7508 = vrot.slane %v7334, %v7507
        %7510 = vbcast.lane.b32.xlu0 %v7508, 256
        %v7511 = vpop.permute.xlu0 %7510
        %v7512 = vlaneseq
        %v7513 = vshrl.u32 %v7512, 7
        %v7514 = vsub.s32 1, %v7513
        %v7515 = vrot.slane %v7334, %v7514
        %7517 = vbcast.lane.b32.xlu0 %v7515, 256
        %v7518 = vpop.permute.xlu0 %7517
        %v7519 = vlaneseq
        %v7520 = vshrl.u32 %v7519, 7
        %v7521 = vsub.s32 2, %v7520
        %v7522 = vrot.slane %v7334, %v7521
        %7524 = vbcast.lane.b32.xlu0 %v7522, 256
        %v7525 = vpop.permute.xlu0 %7524
        %v7526 = vlaneseq
        %v7527 = vshrl.u32 %v7526, 7
        %v7528 = vsub.s32 3, %v7527
        %v7529 = vrot.slane %v7334, %v7528
        %7531 = vbcast.lane.b32.xlu0 %v7529, 256
        %v7532 = vpop.permute.xlu0 %7531
        %v7533 = vlaneseq
        %v7534 = vshrl.u32 %v7533, 7
        %v7535 = vsub.s32 4, %v7534
        %v7536 = vrot.slane %v7334, %v7535
        %7538 = vbcast.lane.b32.xlu0 %v7536, 256
        %v7539 = vpop.permute.xlu0 %7538
        %v7540 = vlaneseq
        %v7541 = vshrl.u32 %v7540, 7
        %v7542 = vsub.s32 5, %v7541
        %v7543 = vrot.slane %v7334, %v7542
        %7545 = vbcast.lane.b32.xlu0 %v7543, 256
        %v7546 = vpop.permute.xlu0 %7545
        %v7547 = vlaneseq
        %v7548 = vshrl.u32 %v7547, 7
        %v7549 = vsub.s32 6, %v7548
        %v7550 = vrot.slane %v7334, %v7549
        %7552 = vbcast.lane.b32.xlu0 %v7550, 256
        %v7553 = vpop.permute.xlu0 %7552
        %v7554 = vlaneseq
        %v7555 = vshrl.u32 %v7554, 7
        %v7556 = vsub.s32 7, %v7555
        %v7557 = vrot.slane %v7334, %v7556
        %7559 = vbcast.lane.b32.xlu0 %v7557, 256
        %v7560 = vpop.permute.xlu0 %7559
        %vm7561 = vcmask 7168
        %v7562 = vsel %vm7561, %v7343, %v7399
        %v7563 = vsel %vm7561, %v7350, %v7406
        %v7564 = vsel %vm7561, %v7357, %v7413
        %v7565 = vsel %vm7561, %v7364, %v7420
        %v7566 = vsel %vm7561, %v7371, %v7427
        %v7567 = vsel %vm7561, %v7378, %v7434
        %v7568 = vsel %vm7561, %v7385, %v7441
        %v7569 = vsel %vm7561, %v7392, %v7448
        %vm7570 = vcmask 15360
        %v7571 = vsel %vm7570, %v7562, %v7455
        %v7572 = vsel %vm7570, %v7563, %v7462
        %v7573 = vsel %vm7570, %v7564, %v7469
        %v7574 = vsel %vm7570, %v7565, %v7476
        %v7575 = vsel %vm7570, %v7566, %v7483
        %v7576 = vsel %vm7570, %v7567, %v7490
        %v7577 = vsel %vm7570, %v7568, %v7497
        %v7578 = vsel %vm7570, %v7569, %v7504
        %v7579 = vsel %vm2583, %v7571, %v7511
        %v7580 = vsel %vm2583, %v7572, %v7518
        %v7581 = vsel %vm2583, %v7573, %v7525
        %v7582 = vsel %vm2583, %v7574, %v7532
        %v7583 = vsel %vm2583, %v7575, %v7539
        %v7584 = vsel %vm2583, %v7576, %v7546
        %v7585 = vsel %vm2583, %v7577, %v7553
        %v7586 = vsel %vm2583, %v7578, %v7560
        %v7587 = vld [vmem:[%s79] sm:$0xff]
        %v7588 = vld [vmem:[%s79 + $0x8] sm:$0xff]
        %v7589 = vld [vmem:[%s79 + $0x10] sm:$0xff]
        %v7590 = vld [vmem:[%s79 + $0x18] sm:$0xff]
        %v7591 = vld [vmem:[%s81] sm:$0x1]
        %v7593 = vlaneseq
        %v7594 = vshrl.u32 %v7593, 7
        %v7595 = vsub.s32 0, %v7594
        %v7596 = vrot.slane %v7591, %v7595
        %v7599 = vsel %vm1506, %v6855, 0
        %v7602 = vsel %vm1506, %v6856, 0
        %v7605 = vsel %vm1506, %v6857, 0
        %v7608 = vsel %vm1506, %v6858, 0
        %v7611 = vsel %vm1506, %v6859, 0
        %v7614 = vsel %vm1506, %v6860, 0
        %v7617 = vsel %vm1506, %v6861, 0
        %v7620 = vsel %vm1506, %v6862, 0
        %7622 = vmatprep.subr.mxu0 0.0
        %7623 = vmatpush1.msra.mxu0 %v7587
        %7624 = vmatprep.subr.mxu0 0.0
        %7625 = vmatpush1.msra.mxu0 %v7588
        %7626 = vmatprep.subr.mxu0 0.0
        %7627 = vmatpush1.msra.mxu0 %v7589
        %7628 = vmatprep.subr.mxu0 0.0
        %7629 = vmatpush1.msra.mxu0 %v7590
        %7630 = vmatprep.subr.mxu0 0.0
        %7631 = vmatpush1.msra.mxu0 0.0
        %7632 = vmatprep.subr.mxu0 0.0
        %7633 = vmatpush1.msra.mxu0 0.0
        %7634 = vmatprep.subr.mxu0 0.0
        %7635 = vmatpush1.msra.mxu0 0.0
        %7636 = vmatprep.subr.mxu0 0.0
        %7637 = vmatpush1.msra.mxu0 0.0
        %7638 = vmatprep.subr.mxu0 0.0
        %7639 = vmatpush1.msra.mxu0 0.0
        %7640 = vmatprep.subr.mxu0 0.0
        %7641 = vmatpush1.msra.mxu0 0.0
        %7642 = vmatprep.subr.mxu0 0.0
        %7643 = vmatpush1.msra.mxu0 0.0
        %7644 = vmatprep.subr.mxu0 0.0
        %7645 = vmatpush1.msra.mxu0 0.0
        %7646 = vmatprep.subr.mxu0 0.0
        %7647 = vmatpush1.msra.mxu0 0.0
        %7648 = vmatprep.subr.mxu0 0.0
        %7649 = vmatpush1.msra.mxu0 0.0
        %7650 = vmatprep.subr.mxu0 0.0
        %7651 = vmatpush1.msra.mxu0 0.0
        %7652 = vmatprep.subr.mxu0 0.0
        %7653 = vmatpush1.msra.mxu0 0.0
        %7654 = vmatprep.subr.mxu0 0.0
        %7655 = vmatpush1.msra.mxu0 0.0
        %7656 = vmatprep.subr.mxu0 0.0
        %7657 = vmatpush1.msra.mxu0 0.0
        %7658 = vmatprep.subr.mxu0 0.0
        %7659 = vmatpush1.msra.mxu0 0.0
        %7660 = vmatprep.subr.mxu0 0.0
        %7661 = vmatpush1.msra.mxu0 0.0
        %7662 = vmatprep.subr.mxu0 0.0
        %7663 = vmatpush1.msra.mxu0 0.0
        %7664 = vmatprep.subr.mxu0 0.0
        %7665 = vmatpush1.msra.mxu0 0.0
        %7666 = vmatprep.subr.mxu0 0.0
        %7667 = vmatpush1.msra.mxu0 0.0
        %7668 = vmatprep.subr.mxu0 0.0
        %7669 = vmatpush1.msra.mxu0 0.0
        %7670 = vmatprep.subr.mxu0 0.0
        %7671 = vmatpush1.msra.mxu0 0.0
        %7672 = vmatprep.subr.mxu0 0.0
        %7673 = vmatpush1.msra.mxu0 0.0
        %7674 = vmatprep.subr.mxu0 0.0
        %7675 = vmatpush1.msra.mxu0 0.0
        %7676 = vmatprep.subr.mxu0 0.0
        %7677 = vmatpush1.msra.mxu0 0.0
        %7678 = vmatprep.subr.mxu0 0.0
        %7679 = vmatpush1.msra.mxu0 0.0
        %7680 = vmatprep.subr.mxu0 0.0
        %7681 = vmatpush1.msra.mxu0 0.0
        %7682 = vmatprep.subr.mxu0 0.0
        %7683 = vmatpush1.msra.mxu0 0.0
        %7684 = vmatprep.subr.mxu0 0.0
        %7685 = vmatpush1.msra.mxu0 0.0
        %7686 = vmatprep.mubr.f32.mxu0 0.0
        %7687 = vmatmul.mubr.f32.gmra.mrb[0].mxu0 %v7599
        %v7688 = vpop.f32.mrb[0].mxu0
        %v7689 = vadd.f32 %v7596, %v7688
        %v7690 = vpop.f32.mrb[0].mxu0
        %7691 = vmatprep.mubr.f32.mxu0 0.0
        %7692 = vmatmul.mubr.f32.gmra.mrb[0].mxu0 %v7602
        %v7693 = vpop.f32.mrb[0].mxu0
        %v7694 = vadd.f32 %v7596, %v7693
        %v7695 = vpop.f32.mrb[0].mxu0
        %7696 = vmatprep.mubr.f32.mxu0 0.0
        %7697 = vmatmul.mubr.f32.gmra.mrb[0].mxu0 %v7605
        %v7698 = vpop.f32.mrb[0].mxu0
        %v7699 = vadd.f32 %v7596, %v7698
        %v7700 = vpop.f32.mrb[0].mxu0
        %7701 = vmatprep.mubr.f32.mxu0 0.0
        %7702 = vmatmul.mubr.f32.gmra.mrb[0].mxu0 %v7608
        %v7703 = vpop.f32.mrb[0].mxu0
        %v7704 = vadd.f32 %v7596, %v7703
        %v7705 = vpop.f32.mrb[0].mxu0
        %7706 = vmatprep.mubr.f32.mxu0 0.0
        %7707 = vmatmul.mubr.f32.gmra.mrb[0].mxu0 %v7611
        %v7708 = vpop.f32.mrb[0].mxu0
        %v7709 = vadd.f32 %v7596, %v7708
        %v7710 = vpop.f32.mrb[0].mxu0
        %7711 = vmatprep.mubr.f32.mxu0 0.0
        %7712 = vmatmul.mubr.f32.gmra.mrb[0].mxu0 %v7614
        %v7713 = vpop.f32.mrb[0].mxu0
        %v7714 = vadd.f32 %v7596, %v7713
        %v7715 = vpop.f32.mrb[0].mxu0
        %7716 = vmatprep.mubr.f32.mxu0 0.0
        %7717 = vmatmul.mubr.f32.gmra.mrb[0].mxu0 %v7617
        %v7718 = vpop.f32.mrb[0].mxu0
        %v7719 = vadd.f32 %v7596, %v7718
        %v7720 = vpop.f32.mrb[0].mxu0
        %7721 = vmatprep.mubr.f32.mxu0 0.0
        %7722 = vmatmul.mubr.f32.gmra.mrb[0].mxu0 %v7620
        %v7723 = vpop.f32.mrb[0].mxu0
        %v7724 = vadd.f32 %v7596, %v7723
        %v7725 = vpop.f32.mrb[0].mxu0
        %7726 = vdwg.mxu0
        %v7727 = vmul.f32 %v7689, %v7689
        %v7728 = vmul.f32 %v7694, %v7694
        %v7729 = vmul.f32 %v7699, %v7699
        %v7730 = vmul.f32 %v7704, %v7704
        %v7731 = vmul.f32 %v7709, %v7709
        %v7732 = vmul.f32 %v7714, %v7714
        %v7733 = vmul.f32 %v7719, %v7719
        %v7734 = vmul.f32 %v7724, %v7724
        %v7735 = vmul.f32 %v7689, %v7727
        %v7736 = vmul.f32 %v7694, %v7728
        %v7737 = vmul.f32 %v7699, %v7729
        %v7738 = vmul.f32 %v7704, %v7730
        %v7739 = vmul.f32 %v7709, %v7731
        %v7740 = vmul.f32 %v7714, %v7732
        %v7741 = vmul.f32 %v7719, %v7733
        %v7742 = vmul.f32 %v7724, %v7734
        %v7743 = vmul.f32 %v7735, 0.044715
        %v7744 = vmul.f32 %v7736, 0.044715
        %v7745 = vmul.f32 %v7737, 0.044715
        %v7746 = vmul.f32 %v7738, 0.044715
        %v7747 = vmul.f32 %v7739, 0.044715
        %v7748 = vmul.f32 %v7740, 0.044715
        %v7749 = vmul.f32 %v7741, 0.044715
        %v7750 = vmul.f32 %v7742, 0.044715
        %v7751 = vadd.f32 %v7689, %v7743
        %v7752 = vadd.f32 %v7694, %v7744
        %v7753 = vadd.f32 %v7699, %v7745
        %v7754 = vadd.f32 %v7704, %v7746
        %v7755 = vadd.f32 %v7709, %v7747
        %v7756 = vadd.f32 %v7714, %v7748
        %v7757 = vadd.f32 %v7719, %v7749
        %v7758 = vadd.f32 %v7724, %v7750
        %v7759 = vmul.f32 %v7751, 0.7978846
        %v7760 = vmul.f32 %v7752, 0.7978846
        %v7761 = vmul.f32 %v7753, 0.7978846
        %v7762 = vmul.f32 %v7754, 0.7978846
        %v7763 = vmul.f32 %v7755, 0.7978846
        %v7764 = vmul.f32 %v7756, 0.7978846
        %v7765 = vmul.f32 %v7757, 0.7978846
        %v7766 = vmul.f32 %v7758, 0.7978846
        %v7767 = vtanh.pop %v7759
        %v7768 = vtanh.pop %v7760
        %v7769 = vtanh.pop %v7761
        %v7770 = vtanh.pop %v7762
        %v7771 = vtanh.pop %v7763
        %v7772 = vtanh.pop %v7764
        %v7773 = vtanh.pop %v7765
        %v7774 = vtanh.pop %v7766
        %v7775 = vadd.f32 %v7767, 1.0
        %v7776 = vadd.f32 %v7768, 1.0
        %v7777 = vadd.f32 %v7769, 1.0
        %v7778 = vadd.f32 %v7770, 1.0
        %v7779 = vadd.f32 %v7771, 1.0
        %v7780 = vadd.f32 %v7772, 1.0
        %v7781 = vadd.f32 %v7773, 1.0
        %v7782 = vadd.f32 %v7774, 1.0
        %v7783 = vmul.f32 %v7775, 0.5
        %v7784 = vmul.f32 %v7776, 0.5
        %v7785 = vmul.f32 %v7777, 0.5
        %v7786 = vmul.f32 %v7778, 0.5
        %v7787 = vmul.f32 %v7779, 0.5
        %v7788 = vmul.f32 %v7780, 0.5
        %v7789 = vmul.f32 %v7781, 0.5
        %v7790 = vmul.f32 %v7782, 0.5
        %v7791 = vmul.f32 %v7689, %v7783
        %v7792 = vmul.f32 %v7694, %v7784
        %v7793 = vmul.f32 %v7699, %v7785
        %v7794 = vmul.f32 %v7704, %v7786
        %v7795 = vmul.f32 %v7709, %v7787
        %v7796 = vmul.f32 %v7714, %v7788
        %v7797 = vmul.f32 %v7719, %v7789
        %v7798 = vmul.f32 %v7724, %v7790
        %v7799 = vld [vmem:[%s83] sm:$0xff]
        %v7800 = vld [vmem:[%s83 + $0x8] sm:$0xff]
        %v7801 = vld [vmem:[%s85] sm:$0x1]
        %v7803 = vlaneseq
        %v7804 = vshrl.u32 %v7803, 7
        %v7805 = vsub.s32 0, %v7804
        %v7806 = vrot.slane %v7801, %v7805
        %v7809 = vsel %vm3006, %v7791, 0
        %v7812 = vsel %vm3006, %v7792, 0
        %v7815 = vsel %vm3006, %v7793, 0
        %v7818 = vsel %vm3006, %v7794, 0
        %v7821 = vsel %vm3006, %v7795, 0
        %v7824 = vsel %vm3006, %v7796, 0
        %v7827 = vsel %vm3006, %v7797, 0
        %v7830 = vsel %vm3006, %v7798, 0
        %7832 = vmatprep.subr.mxu0 0.0
        %7833 = vmatpush1.msra.mxu0 %v7799
        %7834 = vmatprep.subr.mxu0 0.0
        %7835 = vmatpush1.msra.mxu0 %v7800
        %7836 = vmatprep.subr.mxu0 0.0
        %7837 = vmatpush1.msra.mxu0 0.0
        %7838 = vmatprep.subr.mxu0 0.0
        %7839 = vmatpush1.msra.mxu0 0.0
        %7840 = vmatprep.subr.mxu0 0.0
        %7841 = vmatpush1.msra.mxu0 0.0
        %7842 = vmatprep.subr.mxu0 0.0
        %7843 = vmatpush1.msra.mxu0 0.0
        %7844 = vmatprep.subr.mxu0 0.0
        %7845 = vmatpush1.msra.mxu0 0.0
        %7846 = vmatprep.subr.mxu0 0.0
        %7847 = vmatpush1.msra.mxu0 0.0
        %7848 = vmatprep.subr.mxu0 0.0
        %7849 = vmatpush1.msra.mxu0 0.0
        %7850 = vmatprep.subr.mxu0 0.0
        %7851 = vmatpush1.msra.mxu0 0.0
        %7852 = vmatprep.subr.mxu0 0.0
        %7853 = vmatpush1.msra.mxu0 0.0
        %7854 = vmatprep.subr.mxu0 0.0
        %7855 = vmatpush1.msra.mxu0 0.0
        %7856 = vmatprep.subr.mxu0 0.0
        %7857 = vmatpush1.msra.mxu0 0.0
        %7858 = vmatprep.subr.mxu0 0.0
        %7859 = vmatpush1.msra.mxu0 0.0
        %7860 = vmatprep.subr.mxu0 0.0
        %7861 = vmatpush1.msra.mxu0 0.0
        %7862 = vmatprep.subr.mxu0 0.0
        %7863 = vmatpush1.msra.mxu0 0.0
        %7864 = vmatprep.subr.mxu0 0.0
        %7865 = vmatpush1.msra.mxu0 0.0
        %7866 = vmatprep.subr.mxu0 0.0
        %7867 = vmatpush1.msra.mxu0 0.0
        %7868 = vmatprep.subr.mxu0 0.0
        %7869 = vmatpush1.msra.mxu0 0.0
        %7870 = vmatprep.subr.mxu0 0.0
        %7871 = vmatpush1.msra.mxu0 0.0
        %7872 = vmatprep.subr.mxu0 0.0
        %7873 = vmatpush1.msra.mxu0 0.0
        %7874 = vmatprep.subr.mxu0 0.0
        %7875 = vmatpush1.msra.mxu0 0.0
        %7876 = vmatprep.subr.mxu0 0.0
        %7877 = vmatpush1.msra.mxu0 0.0
        %7878 = vmatprep.subr.mxu0 0.0
        %7879 = vmatpush1.msra.mxu0 0.0
        %7880 = vmatprep.subr.mxu0 0.0
        %7881 = vmatpush1.msra.mxu0 0.0
        %7882 = vmatprep.subr.mxu0 0.0
        %7883 = vmatpush1.msra.mxu0 0.0
        %7884 = vmatprep.subr.mxu0 0.0
        %7885 = vmatpush1.msra.mxu0 0.0
        %7886 = vmatprep.subr.mxu0 0.0
        %7887 = vmatpush1.msra.mxu0 0.0
        %7888 = vmatprep.subr.mxu0 0.0
        %7889 = vmatpush1.msra.mxu0 0.0
        %7890 = vmatprep.subr.mxu0 0.0
        %7891 = vmatpush1.msra.mxu0 0.0
        %7892 = vmatprep.subr.mxu0 0.0
        %7893 = vmatpush1.msra.mxu0 0.0
        %7894 = vmatprep.subr.mxu0 0.0
        %7895 = vmatpush1.msra.mxu0 0.0
        %7896 = vmatprep.mubr.f32.mxu0 0.0
        %7897 = vmatmul.mubr.f32.gmra.mrb[0].mxu0 %v7809
        %v7898 = vpop.f32.mrb[0].mxu0
        %v7899 = vadd.f32 %v7806, %v7898
        %v7900 = vpop.f32.mrb[0].mxu0
        %7901 = vmatprep.mubr.f32.mxu0 0.0
        %7902 = vmatmul.mubr.f32.gmra.mrb[0].mxu0 %v7812
        %v7903 = vpop.f32.mrb[0].mxu0
        %v7904 = vadd.f32 %v7806, %v7903
        %v7905 = vpop.f32.mrb[0].mxu0
        %7906 = vmatprep.mubr.f32.mxu0 0.0
        %7907 = vmatmul.mubr.f32.gmra.mrb[0].mxu0 %v7815
        %v7908 = vpop.f32.mrb[0].mxu0
        %v7909 = vadd.f32 %v7806, %v7908
        %v7910 = vpop.f32.mrb[0].mxu0
        %7911 = vmatprep.mubr.f32.mxu0 0.0
        %7912 = vmatmul.mubr.f32.gmra.mrb[0].mxu0 %v7818
        %v7913 = vpop.f32.mrb[0].mxu0
        %v7914 = vadd.f32 %v7806, %v7913
        %v7915 = vpop.f32.mrb[0].mxu0
        %7916 = vmatprep.mubr.f32.mxu0 0.0
        %7917 = vmatmul.mubr.f32.gmra.mrb[0].mxu0 %v7821
        %v7918 = vpop.f32.mrb[0].mxu0
        %v7919 = vadd.f32 %v7806, %v7918
        %v7920 = vpop.f32.mrb[0].mxu0
        %7921 = vmatprep.mubr.f32.mxu0 0.0
        %7922 = vmatmul.mubr.f32.gmra.mrb[0].mxu0 %v7824
        %v7923 = vpop.f32.mrb[0].mxu0
        %v7924 = vadd.f32 %v7806, %v7923
        %v7925 = vpop.f32.mrb[0].mxu0
        %7926 = vmatprep.mubr.f32.mxu0 0.0
        %7927 = vmatmul.mubr.f32.gmra.mrb[0].mxu0 %v7827
        %v7928 = vpop.f32.mrb[0].mxu0
        %v7929 = vadd.f32 %v7806, %v7928
        %v7930 = vpop.f32.mrb[0].mxu0
        %7931 = vmatprep.mubr.f32.mxu0 0.0
        %7932 = vmatmul.mubr.f32.gmra.mrb[0].mxu0 %v7830
        %v7933 = vpop.f32.mrb[0].mxu0
        %v7934 = vadd.f32 %v7806, %v7933
        %v7935 = vpop.f32.mrb[0].mxu0
        %7936 = vdwg.mxu0
        %v7937 = vadd.f32 %v7579, %v7899
        %v7938 = vadd.f32 %v7580, %v7904
        %v7939 = vadd.f32 %v7581, %v7909
        %v7940 = vadd.f32 %v7582, %v7914
        %v7941 = vadd.f32 %v7583, %v7919
        %v7942 = vadd.f32 %v7584, %v7924
        %v7943 = vadd.f32 %v7585, %v7929
        %v7944 = vadd.f32 %v7586, %v7934
        %vm7945 = vcmask 31744
        %7946 = vst.msk [vmem:[%s1385] sm:$0xff] %vm7945, %v7937
        %7947 = vst.msk [vmem:[%s1385 + $0x8] sm:$0xff] %vm7945, %v7938
        %7948 = vst.msk [vmem:[%s1385 + $0x10] sm:$0xff] %vm7945, %v7939
        %7949 = vst.msk [vmem:[%s1385 + $0x18] sm:$0xff] %vm7945, %v7940
        %7950 = vst.msk [vmem:[%s1385 + $0x20] sm:$0xff] %vm7945, %v7941
        %7951 = vst.msk [vmem:[%s1385 + $0x28] sm:$0xff] %vm7945, %v7942
        %7952 = vst.msk [vmem:[%s1385 + $0x30] sm:$0xff] %vm7945, %v7943
        %7953 = vst.msk [vmem:[%s1385 + $0x38] sm:$0xff] %vm7945, %v7944
        %p7954 = scmp.lt.s32.totalorder %s99, 1
        %s7955 = scalar_select %p7954, %s99, 1
        %s7956 = smul.addr %s7955, 8
        %s7957 = smul.addr %s7956, 8
        %s7958 = scalar_lea.vmem %s87, %s7957
        // Predicated region
        $region197: #{forward.1} parent=191 // pred_check
          %p7959 = pneg %p1045
        $region198: #{forward.1} parent=191 // pred_check_branch
          %7961 = sbr.rel (%p7959) target = $region200
        $region199: #{forward.1} parent=191 // pred_region
          _
        $region200: #{forward.1} parent=191 // pred_fallthru
          _
      $region192: #{forward.1} parent=5 // pred_fallthru
        _
      %p7962 = scmp.le.s32.totalorder 2, %s94
      // Predicated region
      $region201: #{forward.1} parent=5 // pred_check
        %p7963 = pneg %p7962
      $region202: #{forward.1} parent=5 // pred_check_branch
        %7965 = sbr.rel (%p7963) target = $region204
      $region203: #{forward.1} parent=5 // pred_region
        %s7966 = ssub.s32 %s94, 2
        // Predicated region
        $region205: #{forward.1} parent=203 // pred_check
          %p7967 = pneg %p1051
        $region206: #{forward.1} parent=203 // pred_check_branch
          %7969 = sbr.rel (%p7967) target = $region208
        $region207: #{forward.1} parent=203 // pred_region
          %p7970 = scmp.lt.s32.totalorder %s100, 1
          %s7971 = scalar_select %p7970, %s100, 1
          %s7972 = smul.addr %s7971, 8
          %s7973 = smul.addr %s7972, 8
          %s7974 = scalar_lea.vmem %s87, %s7973
        $region208: #{forward.1} parent=203 // pred_fallthru
          _
      $region204: #{forward.1} parent=5 // pred_fallthru
        _
    $region6: #{forward.1} parent=1 // loop_footer
      %s98 = sadd.s32 1, %s94
    $region7: #{forward.1} parent=1 // loop_footer_branch
      %93 = sbr.rel target = $region3
    $region8: #{forward.1} parent=1 // loop_exit
      _
    %7975 = vsyncpa [#allocation3], 1
    %s7976 = scalar_lea.sflag [#allocation3], 1
    %7977 = vsyncpa %s7976, 1

</llo_original>
